<compile_context>
chip_gen: v7x
topology: tpu7x:2x2x1
jax: 0.10.0
libtpu: 0.0.40
codegen_flags: <defaults>
</compile_context>

<pallas_src>
import math
from functools import partial

import jax
import jax.numpy as jnp
from jax.experimental import pallas as pl
from jax.experimental.pallas import tpu as pltpu

EPS = 1e-5
WDT = jnp.bfloat16          # conv-weight matmul dtype (f32 accumulation)


# ----------------------------------------------------------------------------
# Parameter construction (deterministic, mirrors the PyTorch __init__)
# ----------------------------------------------------------------------------
_GAIN = math.sqrt(2.0 / (1 + 0.01))


def _init_conv(key, cin, cout, kh, kw):
    fan_in, fan_out = cin * kh * kw, cout * kh * kw
    std = _GAIN * math.sqrt(2.0 / (fan_in + fan_out))
    w = std * jax.random.normal(key, (cout, cin, kh, kw), jnp.float32)
    b = jnp.full((cout,), 0.01, jnp.float32)
    return w, b


def _init_bn(c):
    return (jnp.ones((c,), jnp.float32), jnp.zeros((c,), jnp.float32),
            jnp.zeros((c,), jnp.float32), jnp.ones((c,), jnp.float32))


def _init_factorized(key, cin, cout, bottleneck):
    ks = jax.random.split(key, 4)
    if bottleneck is None:          # bottle_neck=False
        convs = [
            (_init_conv(ks[0], cin, cout, 3, 1), _init_bn(cout)),
            (_init_conv(ks[1], cout, cout, 1, 3), _init_bn(cout)),
        ]
    else:
        b = bottleneck
        convs = [
            (_init_conv(ks[0], cin, b, 1, 1), _init_bn(b)),
            (_init_conv(ks[1], b, b, 3, 1), _init_bn(b)),
            (_init_conv(ks[2], b, b, 1, 3), _init_bn(b)),
            (_init_conv(ks[3], b, cout, 1, 1), _init_bn(cout)),
        ]
    return {"convs": convs}


def init_model(key, input_dim=1, output_dim=2):
    ks = jax.random.split(key, 6)
    params = {
        "l1": _init_factorized(ks[0], input_dim, 16, None),
        "l2": _init_factorized(ks[1], 16, 32, 8),
        "l3": _init_factorized(ks[2], 32, 32, 8),
        "l4": _init_factorized(ks[3], 32, 64, 16),
        "l5": _init_factorized(ks[4], 64, 64, 16),
    }
    std = _GAIN * math.sqrt(2.0 / (64 + output_dim))
    params["final"] = {
        "bn": _init_bn(64),
        "w": std * jax.random.normal(ks[5], (output_dim, 64), jnp.float32),
        "b": jnp.full((output_dim,), 0.01, jnp.float32),
    }
    return params


# ----------------------------------------------------------------------------
# Lower conv / BN / pool parameters into the constant matrices consumed by the
# fused kernel (built once per input geometry, outside the kernel).
# ----------------------------------------------------------------------------
def _fold_bn_conv(w, b, bn):
    gamma, beta, mean, var = bn
    s = gamma / jnp.sqrt(var + EPS)
    return w * s[:, None, None, None], s * (b - mean) + beta


def _tap(wf, i, j):                 # (Cout,Cin,kh,kw) tap -> (Cin, Cout)
    return jnp.transpose(wf[:, :, i, j])


def _block_diag(t, n):              # kron(I_n, t)
    return jnp.kron(jnp.eye(n, dtype=t.dtype), t)


def _decim(n):                      # even / odd selection matrices (n//2, n)
    m = n // 2
    idx = jnp.arange(m)
    even = jnp.zeros((m, n), jnp.float32).at[idx, 2 * idx].set(1.0)
    odd = jnp.zeros((m, n), jnp.float32).at[idx, 2 * idx + 1].set(1.0)
    return even, odd


# number of kernel refs each op kind consumes (kernel and builder must agree)
_N_REFS = {"convH": 6, "convW": 2, "conv1x1": 2, "pool": 4, "head": 3}


def build_plan(params, H, W, cin):
    arrays, plan = [], []

    def emit(kind, arrs):
        assert len(arrs) == _N_REFS[kind]
        plan.append(kind)
        arrays.extend(arrs)

    def emit_conv(w, b, bn, h_cur, w_cur):
        cout, cin_, kh, kw = w.shape
        wf, shift = _fold_bn_conv(w, b, bn)                 # BN scale folded in
        bias_row = jnp.tile(shift, w_cur).reshape(1, w_cur * cout)
        if kh == 3:                                   # (3,1) conv over ROI axis
            k0 = _block_diag(_tap(wf, 0, 0), w_cur).astype(WDT)
            k1 = _block_diag(_tap(wf, 1, 0), w_cur).astype(WDT)
            k2 = _block_diag(_tap(wf, 2, 0), w_cur).astype(WDT)
            s_dn = jnp.eye(h_cur, k=-1, dtype=jnp.float32)  # picks row h-1
            s_up = jnp.eye(h_cur, k=1, dtype=jnp.float32)   # picks row h+1
            emit("convH", [k0, k1, k2, s_dn, s_up, bias_row])
        elif kw == 3:                                 # (1,3) conv over time axis
            taps = [_tap(wf, 0, j) for j in range(3)]
            m = jnp.zeros((w_cur * cin_, w_cur * cout), jnp.float32)
            for wo in range(w_cur):
                for dw in range(3):
                    wi = wo + dw - 1
                    if 0 <= wi < w_cur:                     # "same" zero padding
                        m = m.at[wi * cin_:(wi + 1) * cin_,
                                 wo * cout:(wo + 1) * cout].set(taps[dw])
            emit("convW", [m.astype(WDT), bias_row])
        else:                                         # 1x1 conv
            emit("conv1x1",
                 [_block_diag(_tap(wf, 0, 0), w_cur).astype(WDT), bias_row])
        return cout

    h, w_, c = H, W, cin
    for name in ("l1", "l2", "l3", "l4", "l5"):
        for (cw, cb), bn in params[name]["convs"]:
            c = emit_conv(cw, cb, bn, h, w_)
        if name in ("l1", "l3"):                      # maxpool after l1 and l3
            r_even, r_odd = _decim(h)
            w_even, w_odd = _decim(w_)
            c_even = jnp.kron(w_even.T, jnp.eye(c, dtype=jnp.float32))
            c_odd = jnp.kron(w_odd.T, jnp.eye(c, dtype=jnp.float32))
            emit("pool", [r_even, r_odd, c_even, c_odd])
            h, w_ = h // 2, w_ // 2

    # global average + folded BatchNorm1d + Linear head
    a_avg = jnp.kron(jnp.ones((w_, 1), jnp.float32),
                     jnp.eye(c, dtype=jnp.float32)) / float(h * w_)
    gamma, beta, mean, var = params["final"]["bn"]
    s = gamma / jnp.sqrt(var + EPS)
    wlin = params["final"]["w"]                              # (out, c)
    w_head = (wlin * s[None, :]).T                           # (c, out)
    b_head = (params["final"]["b"] + (beta - mean * s) @ wlin.T).reshape(1, -1)
    emit("head", [a_avg, w_head, b_head])
    return arrays, tuple(plan), int(c)


# ----------------------------------------------------------------------------
# The single fused Pallas kernel: whole forward for one batch element.
# ----------------------------------------------------------------------------
def _fused_kernel(*refs, plan, n_w):
    x_ref = refs[0]
    w_refs = refs[1:1 + n_w]
    out_ref, avg_ref = refs[1 + n_w], refs[2 + n_w]

    pos = [0]

    def take(k):
        r = w_refs[pos[0]:pos[0] + k]
        pos[0] += k
        return r

    def mm(a, b):
        return jnp.dot(a, b, preferred_element_type=jnp.float32)

    act = x_ref[0].astype(jnp.float32)               # (H, W*Cin) lane-dense slab
    for kind in plan:
        if kind in ("conv1x1", "convW"):
            k_ref, b_ref = take(2)
            acc = mm(act.astype(WDT), k_ref[...])
            act = jnp.maximum(acc + b_ref[...], 0.0)
        elif kind == "convH":
            k0, k1, k2, s_dn, s_up, b_ref = take(6)
            a16 = act.astype(WDT)
            t0 = mm(a16, k0[...])                    # tap needing row h-1
            t1 = mm(a16, k1[...])                    # tap at row h
            t2 = mm(a16, k2[...])                    # tap needing row h+1
            acc = t1 + mm(s_dn[...], t0) + mm(s_up[...], t2)
            act = jnp.maximum(acc + b_ref[...], 0.0)
        elif kind == "pool":
            r_even, r_odd, c_even, c_odd = take(4)
            row_max = jnp.maximum(mm(r_even[...], act), mm(r_odd[...], act))
            act = jnp.maximum(mm(row_max, c_even[...]), mm(row_max, c_odd[...]))
        else:  # head: global mean + folded BN1d + Linear
            a_avg, w_head, b_head = take(3)
            v = jnp.sum(act, axis=0, keepdims=True)             # (1, W*C)
            avg = mm(v, a_avg[...])                             # (1, C)
            avg_ref[...] = avg.reshape(avg_ref.shape)
            out = mm(avg, w_head[...]) + b_head[...]
            out_ref[...] = out.reshape(out_ref.shape)


# ----------------------------------------------------------------------------
# Forward pass wrapper
# ----------------------------------------------------------------------------
def forward(params, x_nchw, return_avg=False):
    """x_nchw: (bs, channel, num_ROI, time_step) -- same layout as PyTorch."""
    B, cin, H, W = x_nchw.shape
    # layout plumbing only: fold channels into lanes -> (B, H, W*Cin).
    x = jnp.transpose(x_nchw, (0, 2, 3, 1)).reshape(B, H, W * cin)
    x = x.astype(jnp.float32)

    arrays, plan, c_final = build_plan(params, H, W, cin)
    n_w = len(arrays)
    n_out = params["final"]["w"].shape[0]

    in_specs = [pl.BlockSpec((1, H, W * cin), lambda b: (b, 0, 0))]
    # weight / structural matrices: full-array blocks, fetched once (index 0,0).
    in_specs += [pl.BlockSpec(a.shape, lambda b: (0, 0)) for a in arrays]
    out_specs = (pl.BlockSpec((1, 1, n_out), lambda b: (b, 0, 0)),
                 pl.BlockSpec((1, 1, c_final), lambda b: (b, 0, 0)))
    out_shape = (jax.ShapeDtypeStruct((B, 1, n_out), jnp.float32),
                 jax.ShapeDtypeStruct((B, 1, c_final), jnp.float32))

    out3, avg3 = pl.pallas_call(
        partial(_fused_kernel, plan=plan, n_w=n_w),
        out_shape=out_shape,
        grid=(B,),
        in_specs=in_specs,
        out_specs=out_specs,
        compiler_params=pltpu.CompilerParams(
            dimension_semantics=("parallel",),      # 2nd TensorCore on v7x
            vmem_limit_bytes=32 * 1024 * 1024),     # safe on v5e/v6e/v7x
    )(x, *arrays)

    out = out3.reshape(B, n_out)
    avg = avg3.reshape(B, c_final)
    return (out, avg) if return_avg else out


# ----------------------------------------------------------------------------
if __name__ == "__main__":
    key = jax.random.PRNGKey(0)
    pkey, xkey = jax.random.split(key)
    params = init_model(pkey, input_dim=1, output_dim=2)

    # (bs, channel, num_ROI, time_step) -- small synthetic shapes.
    x = jax.random.normal(xkey, (2, 1, 16, 8), jnp.float32)

    out, avg = forward(params, x, return_avg=True)
    jax.block_until_ready(out)
    jax.block_until_ready(avg)
    assert out.shape == (2, 2) and avg.shape == (2, 64)
    assert bool(jnp.all(jnp.isfinite(out))) and bool(jnp.all(jnp.isfinite(avg)))
    print("KERNEL_OK")
</pallas_src>

<mosaic_0001>
module attributes {stable_mosaic.version = 11 : i64} {
  func.func @_fused_kernel(%arg0: i32, %arg1: memref<1x16x8xf32, #tpu.memory_space<vmem>>, %arg2: memref<8x128xbf16, #tpu.memory_space<vmem>>, %arg3: memref<8x128xbf16, #tpu.memory_space<vmem>>, %arg4: memref<8x128xbf16, #tpu.memory_space<vmem>>, %arg5: memref<16x16xf32, #tpu.memory_space<vmem>>, %arg6: memref<16x16xf32, #tpu.memory_space<vmem>>, %arg7: memref<1x128xf32, #tpu.memory_space<vmem>>, %arg8: memref<128x128xbf16, #tpu.memory_space<vmem>>, %arg9: memref<1x128xf32, #tpu.memory_space<vmem>>, %arg10: memref<8x16xf32, #tpu.memory_space<vmem>>, %arg11: memref<8x16xf32, #tpu.memory_space<vmem>>, %arg12: memref<128x64xf32, #tpu.memory_space<vmem>>, %arg13: memref<128x64xf32, #tpu.memory_space<vmem>>, %arg14: memref<64x32xbf16, #tpu.memory_space<vmem>>, %arg15: memref<1x32xf32, #tpu.memory_space<vmem>>, %arg16: memref<32x32xbf16, #tpu.memory_space<vmem>>, %arg17: memref<32x32xbf16, #tpu.memory_space<vmem>>, %arg18: memref<32x32xbf16, #tpu.memory_space<vmem>>, %arg19: memref<8x8xf32, #tpu.memory_space<vmem>>, %arg20: memref<8x8xf32, #tpu.memory_space<vmem>>, %arg21: memref<1x32xf32, #tpu.memory_space<vmem>>, %arg22: memref<32x32xbf16, #tpu.memory_space<vmem>>, %arg23: memref<1x32xf32, #tpu.memory_space<vmem>>, %arg24: memref<32x128xbf16, #tpu.memory_space<vmem>>, %arg25: memref<1x128xf32, #tpu.memory_space<vmem>>, %arg26: memref<128x32xbf16, #tpu.memory_space<vmem>>, %arg27: memref<1x32xf32, #tpu.memory_space<vmem>>, %arg28: memref<32x32xbf16, #tpu.memory_space<vmem>>, %arg29: memref<32x32xbf16, #tpu.memory_space<vmem>>, %arg30: memref<32x32xbf16, #tpu.memory_space<vmem>>, %arg31: memref<8x8xf32, #tpu.memory_space<vmem>>, %arg32: memref<8x8xf32, #tpu.memory_space<vmem>>, %arg33: memref<1x32xf32, #tpu.memory_space<vmem>>, %arg34: memref<32x32xbf16, #tpu.memory_space<vmem>>, %arg35: memref<1x32xf32, #tpu.memory_space<vmem>>, %arg36: memref<32x128xbf16, #tpu.memory_space<vmem>>, %arg37: memref<1x128xf32, #tpu.memory_space<vmem>>, %arg38: memref<4x8xf32, #tpu.memory_space<vmem>>, %arg39: memref<4x8xf32, #tpu.memory_space<vmem>>, %arg40: memref<128x64xf32, #tpu.memory_space<vmem>>, %arg41: memref<128x64xf32, #tpu.memory_space<vmem>>, %arg42: memref<64x32xbf16, #tpu.memory_space<vmem>>, %arg43: memref<1x32xf32, #tpu.memory_space<vmem>>, %arg44: memref<32x32xbf16, #tpu.memory_space<vmem>>, %arg45: memref<32x32xbf16, #tpu.memory_space<vmem>>, %arg46: memref<32x32xbf16, #tpu.memory_space<vmem>>, %arg47: memref<4x4xf32, #tpu.memory_space<vmem>>, %arg48: memref<4x4xf32, #tpu.memory_space<vmem>>, %arg49: memref<1x32xf32, #tpu.memory_space<vmem>>, %arg50: memref<32x32xbf16, #tpu.memory_space<vmem>>, %arg51: memref<1x32xf32, #tpu.memory_space<vmem>>, %arg52: memref<32x128xbf16, #tpu.memory_space<vmem>>, %arg53: memref<1x128xf32, #tpu.memory_space<vmem>>, %arg54: memref<128x32xbf16, #tpu.memory_space<vmem>>, %arg55: memref<1x32xf32, #tpu.memory_space<vmem>>, %arg56: memref<32x32xbf16, #tpu.memory_space<vmem>>, %arg57: memref<32x32xbf16, #tpu.memory_space<vmem>>, %arg58: memref<32x32xbf16, #tpu.memory_space<vmem>>, %arg59: memref<4x4xf32, #tpu.memory_space<vmem>>, %arg60: memref<4x4xf32, #tpu.memory_space<vmem>>, %arg61: memref<1x32xf32, #tpu.memory_space<vmem>>, %arg62: memref<32x32xbf16, #tpu.memory_space<vmem>>, %arg63: memref<1x32xf32, #tpu.memory_space<vmem>>, %arg64: memref<32x128xbf16, #tpu.memory_space<vmem>>, %arg65: memref<1x128xf32, #tpu.memory_space<vmem>>, %arg66: memref<128x64xf32, #tpu.memory_space<vmem>>, %arg67: memref<64x2xf32, #tpu.memory_space<vmem>>, %arg68: memref<1x2xf32, #tpu.memory_space<vmem>>, %arg69: memref<1x1x2xf32, #tpu.memory_space<vmem>>, %arg70: memref<1x1x64xf32, #tpu.memory_space<vmem>>) attributes {dimension_semantics = [#tpu.dimension_semantics<parallel>], iteration_bounds = array<i64: 2>, scalar_prefetch = 0 : i64, scratch_operands = 0 : i64, tpu.core_type = #tpu.core_type<tc>, window_params = [{transform_indices = @transform_0, window_bounds = array<i64: 1, 16, 8>}, {pipeline_mode = #tpu.pipeline_mode<synchronous>, transform_indices = @transform_1, window_bounds = array<i64: 8, 128>}, {pipeline_mode = #tpu.pipeline_mode<synchronous>, transform_indices = @transform_2, window_bounds = array<i64: 8, 128>}, {pipeline_mode = #tpu.pipeline_mode<synchronous>, transform_indices = @transform_3, window_bounds = array<i64: 8, 128>}, {pipeline_mode = #tpu.pipeline_mode<synchronous>, transform_indices = @transform_4, window_bounds = array<i64: 16, 16>}, {pipeline_mode = #tpu.pipeline_mode<synchronous>, transform_indices = @transform_5, window_bounds = array<i64: 16, 16>}, {pipeline_mode = #tpu.pipeline_mode<synchronous>, transform_indices = @transform_6, window_bounds = array<i64: 1, 128>}, {pipeline_mode = #tpu.pipeline_mode<synchronous>, transform_indices = @transform_7, window_bounds = array<i64: 128, 128>}, {pipeline_mode = #tpu.pipeline_mode<synchronous>, transform_indices = @transform_8, window_bounds = array<i64: 1, 128>}, {pipeline_mode = #tpu.pipeline_mode<synchronous>, transform_indices = @transform_9, window_bounds = array<i64: 8, 16>}, {pipeline_mode = #tpu.pipeline_mode<synchronous>, transform_indices = @transform_10, window_bounds = array<i64: 8, 16>}, {pipeline_mode = #tpu.pipeline_mode<synchronous>, transform_indices = @transform_11, window_bounds = array<i64: 128, 64>}, {pipeline_mode = #tpu.pipeline_mode<synchronous>, transform_indices = @transform_12, window_bounds = array<i64: 128, 64>}, {pipeline_mode = #tpu.pipeline_mode<synchronous>, transform_indices = @transform_13, window_bounds = array<i64: 64, 32>}, {pipeline_mode = #tpu.pipeline_mode<synchronous>, transform_indices = @transform_14, window_bounds = array<i64: 1, 32>}, {pipeline_mode = #tpu.pipeline_mode<synchronous>, transform_indices = @transform_15, window_bounds = array<i64: 32, 32>}, {pipeline_mode = #tpu.pipeline_mode<synchronous>, transform_indices = @transform_16, window_bounds = array<i64: 32, 32>}, {pipeline_mode = #tpu.pipeline_mode<synchronous>, transform_indices = @transform_17, window_bounds = array<i64: 32, 32>}, {pipeline_mode = #tpu.pipeline_mode<synchronous>, transform_indices = @transform_18, window_bounds = array<i64: 8, 8>}, {pipeline_mode = #tpu.pipeline_mode<synchronous>, transform_indices = @transform_19, window_bounds = array<i64: 8, 8>}, {pipeline_mode = #tpu.pipeline_mode<synchronous>, transform_indices = @transform_20, window_bounds = array<i64: 1, 32>}, {pipeline_mode = #tpu.pipeline_mode<synchronous>, transform_indices = @transform_21, window_bounds = array<i64: 32, 32>}, {pipeline_mode = #tpu.pipeline_mode<synchronous>, transform_indices = @transform_22, window_bounds = array<i64: 1, 32>}, {pipeline_mode = #tpu.pipeline_mode<synchronous>, transform_indices = @transform_23, window_bounds = array<i64: 32, 128>}, {pipeline_mode = #tpu.pipeline_mode<synchronous>, transform_indices = @transform_24, window_bounds = array<i64: 1, 128>}, {pipeline_mode = #tpu.pipeline_mode<synchronous>, transform_indices = @transform_25, window_bounds = array<i64: 128, 32>}, {pipeline_mode = #tpu.pipeline_mode<synchronous>, transform_indices = @transform_26, window_bounds = array<i64: 1, 32>}, {pipeline_mode = #tpu.pipeline_mode<synchronous>, transform_indices = @transform_27, window_bounds = array<i64: 32, 32>}, {pipeline_mode = #tpu.pipeline_mode<synchronous>, transform_indices = @transform_28, window_bounds = array<i64: 32, 32>}, {pipeline_mode = #tpu.pipeline_mode<synchronous>, transform_indices = @transform_29, window_bounds = array<i64: 32, 32>}, {pipeline_mode = #tpu.pipeline_mode<synchronous>, transform_indices = @transform_30, window_bounds = array<i64: 8, 8>}, {pipeline_mode = #tpu.pipeline_mode<synchronous>, transform_indices = @transform_31, window_bounds = array<i64: 8, 8>}, {pipeline_mode = #tpu.pipeline_mode<synchronous>, transform_indices = @transform_32, window_bounds = array<i64: 1, 32>}, {pipeline_mode = #tpu.pipeline_mode<synchronous>, transform_indices = @transform_33, window_bounds = array<i64: 32, 32>}, {pipeline_mode = #tpu.pipeline_mode<synchronous>, transform_indices = @transform_34, window_bounds = array<i64: 1, 32>}, {pipeline_mode = #tpu.pipeline_mode<synchronous>, transform_indices = @transform_35, window_bounds = array<i64: 32, 128>}, {pipeline_mode = #tpu.pipeline_mode<synchronous>, transform_indices = @transform_36, window_bounds = array<i64: 1, 128>}, {pipeline_mode = #tpu.pipeline_mode<synchronous>, transform_indices = @transform_37, window_bounds = array<i64: 4, 8>}, {pipeline_mode = #tpu.pipeline_mode<synchronous>, transform_indices = @transform_38, window_bounds = array<i64: 4, 8>}, {pipeline_mode = #tpu.pipeline_mode<synchronous>, transform_indices = @transform_39, window_bounds = array<i64: 128, 64>}, {pipeline_mode = #tpu.pipeline_mode<synchronous>, transform_indices = @transform_40, window_bounds = array<i64: 128, 64>}, {pipeline_mode = #tpu.pipeline_mode<synchronous>, transform_indices = @transform_41, window_bounds = array<i64: 64, 32>}, {pipeline_mode = #tpu.pipeline_mode<synchronous>, transform_indices = @transform_42, window_bounds = array<i64: 1, 32>}, {pipeline_mode = #tpu.pipeline_mode<synchronous>, transform_indices = @transform_43, window_bounds = array<i64: 32, 32>}, {pipeline_mode = #tpu.pipeline_mode<synchronous>, transform_indices = @transform_44, window_bounds = array<i64: 32, 32>}, {pipeline_mode = #tpu.pipeline_mode<synchronous>, transform_indices = @transform_45, window_bounds = array<i64: 32, 32>}, {pipeline_mode = #tpu.pipeline_mode<synchronous>, transform_indices = @transform_46, window_bounds = array<i64: 4, 4>}, {pipeline_mode = #tpu.pipeline_mode<synchronous>, transform_indices = @transform_47, window_bounds = array<i64: 4, 4>}, {pipeline_mode = #tpu.pipeline_mode<synchronous>, transform_indices = @transform_48, window_bounds = array<i64: 1, 32>}, {pipeline_mode = #tpu.pipeline_mode<synchronous>, transform_indices = @transform_49, window_bounds = array<i64: 32, 32>}, {pipeline_mode = #tpu.pipeline_mode<synchronous>, transform_indices = @transform_50, window_bounds = array<i64: 1, 32>}, {pipeline_mode = #tpu.pipeline_mode<synchronous>, transform_indices = @transform_51, window_bounds = array<i64: 32, 128>}, {pipeline_mode = #tpu.pipeline_mode<synchronous>, transform_indices = @transform_52, window_bounds = array<i64: 1, 128>}, {pipeline_mode = #tpu.pipeline_mode<synchronous>, transform_indices = @transform_53, window_bounds = array<i64: 128, 32>}, {pipeline_mode = #tpu.pipeline_mode<synchronous>, transform_indices = @transform_54, window_bounds = array<i64: 1, 32>}, {pipeline_mode = #tpu.pipeline_mode<synchronous>, transform_indices = @transform_55, window_bounds = array<i64: 32, 32>}, {pipeline_mode = #tpu.pipeline_mode<synchronous>, transform_indices = @transform_56, window_bounds = array<i64: 32, 32>}, {pipeline_mode = #tpu.pipeline_mode<synchronous>, transform_indices = @transform_57, window_bounds = array<i64: 32, 32>}, {pipeline_mode = #tpu.pipeline_mode<synchronous>, transform_indices = @transform_58, window_bounds = array<i64: 4, 4>}, {pipeline_mode = #tpu.pipeline_mode<synchronous>, transform_indices = @transform_59, window_bounds = array<i64: 4, 4>}, {pipeline_mode = #tpu.pipeline_mode<synchronous>, transform_indices = @transform_60, window_bounds = array<i64: 1, 32>}, {pipeline_mode = #tpu.pipeline_mode<synchronous>, transform_indices = @transform_61, window_bounds = array<i64: 32, 32>}, {pipeline_mode = #tpu.pipeline_mode<synchronous>, transform_indices = @transform_62, window_bounds = array<i64: 1, 32>}, {pipeline_mode = #tpu.pipeline_mode<synchronous>, transform_indices = @transform_63, window_bounds = array<i64: 32, 128>}, {pipeline_mode = #tpu.pipeline_mode<synchronous>, transform_indices = @transform_64, window_bounds = array<i64: 1, 128>}, {pipeline_mode = #tpu.pipeline_mode<synchronous>, transform_indices = @transform_65, window_bounds = array<i64: 128, 64>}, {pipeline_mode = #tpu.pipeline_mode<synchronous>, transform_indices = @transform_66, window_bounds = array<i64: 64, 2>}, {pipeline_mode = #tpu.pipeline_mode<synchronous>, transform_indices = @transform_67, window_bounds = array<i64: 1, 2>}, {transform_indices = @transform_68, window_bounds = array<i64: 1, 1, 2>}, {transform_indices = @transform_69, window_bounds = array<i64: 1, 1, 64>}]} {
    %c0 = arith.constant 0 : index
    %c0_0 = arith.constant 0 : index
    %c0_1 = arith.constant 0 : index
    %0 = vector.load %arg1[%c0, %c0_0, %c0_1] : memref<1x16x8xf32, #tpu.memory_space<vmem>>, vector<1x16x8xf32>
    %1 = vector.shape_cast %0 : vector<1x16x8xf32> to vector<16x8xf32>
    %2 = arith.truncf %1 : vector<16x8xf32> to vector<16x8xbf16>
    %c0_2 = arith.constant 0 : index
    %c0_3 = arith.constant 0 : index
    %3 = vector.load %arg2[%c0_2, %c0_3] : memref<8x128xbf16, #tpu.memory_space<vmem>>, vector<8x128xbf16>
    %cst = arith.constant dense<0.000000e+00> : vector<16x128xf32>
    %4 = tpu.matmul %2, %3, %cst {dimension_numbers = #tpu.dot_dimension_numbers<[1], [0], [0], [1], [0, 0, 1, 1], [], []>} : vector<16x8xbf16>, vector<8x128xbf16>, vector<16x128xf32> -> vector<16x128xf32>
    %c0_4 = arith.constant 0 : index
    %c0_5 = arith.constant 0 : index
    %5 = vector.load %arg3[%c0_4, %c0_5] : memref<8x128xbf16, #tpu.memory_space<vmem>>, vector<8x128xbf16>
    %cst_6 = arith.constant dense<0.000000e+00> : vector<16x128xf32>
    %6 = tpu.matmul %2, %5, %cst_6 {dimension_numbers = #tpu.dot_dimension_numbers<[1], [0], [0], [1], [0, 0, 1, 1], [], []>} : vector<16x8xbf16>, vector<8x128xbf16>, vector<16x128xf32> -> vector<16x128xf32>
    %c0_7 = arith.constant 0 : index
    %c0_8 = arith.constant 0 : index
    %7 = vector.load %arg4[%c0_7, %c0_8] : memref<8x128xbf16, #tpu.memory_space<vmem>>, vector<8x128xbf16>
    %cst_9 = arith.constant dense<0.000000e+00> : vector<16x128xf32>
    %8 = tpu.matmul %2, %7, %cst_9 {dimension_numbers = #tpu.dot_dimension_numbers<[1], [0], [0], [1], [0, 0, 1, 1], [], []>} : vector<16x8xbf16>, vector<8x128xbf16>, vector<16x128xf32> -> vector<16x128xf32>
    %c0_10 = arith.constant 0 : index
    %c0_11 = arith.constant 0 : index
    %9 = vector.load %arg5[%c0_10, %c0_11] : memref<16x16xf32, #tpu.memory_space<vmem>>, vector<16x16xf32>
    %cst_12 = arith.constant dense<0.000000e+00> : vector<16x128xf32>
    %10 = tpu.matmul %9, %4, %cst_12 {dimension_numbers = #tpu.dot_dimension_numbers<[1], [0], [0], [1], [0, 0, 1, 1], [], []>} : vector<16x16xf32>, vector<16x128xf32>, vector<16x128xf32> -> vector<16x128xf32>
    %11 = arith.addf %6, %10 : vector<16x128xf32>
    %c0_13 = arith.constant 0 : index
    %c0_14 = arith.constant 0 : index
    %12 = vector.load %arg6[%c0_13, %c0_14] : memref<16x16xf32, #tpu.memory_space<vmem>>, vector<16x16xf32>
    %cst_15 = arith.constant dense<0.000000e+00> : vector<16x128xf32>
    %13 = tpu.matmul %12, %8, %cst_15 {dimension_numbers = #tpu.dot_dimension_numbers<[1], [0], [0], [1], [0, 0, 1, 1], [], []>} : vector<16x16xf32>, vector<16x128xf32>, vector<16x128xf32> -> vector<16x128xf32>
    %14 = arith.addf %11, %13 : vector<16x128xf32>
    %c0_16 = arith.constant 0 : index
    %c0_17 = arith.constant 0 : index
    %15 = vector.load %arg7[%c0_16, %c0_17] : memref<1x128xf32, #tpu.memory_space<vmem>>, vector<1x128xf32>
    %16 = vector.broadcast %15 : vector<1x128xf32> to vector<16x128xf32>
    %17 = arith.addf %14, %16 : vector<16x128xf32>
    %cst_18 = arith.constant 0.000000e+00 : f32
    %18 = vector.broadcast %cst_18 : f32 to vector<16x128xf32>
    %19 = arith.maximumf %17, %18 : vector<16x128xf32>
    %20 = arith.truncf %19 : vector<16x128xf32> to vector<16x128xbf16>
    %c0_19 = arith.constant 0 : index
    %c0_20 = arith.constant 0 : index
    %21 = vector.load %arg8[%c0_19, %c0_20] : memref<128x128xbf16, #tpu.memory_space<vmem>>, vector<128x128xbf16>
    %cst_21 = arith.constant dense<0.000000e+00> : vector<16x128xf32>
    %22 = tpu.matmul %20, %21, %cst_21 {dimension_numbers = #tpu.dot_dimension_numbers<[1], [0], [0], [1], [0, 0, 1, 1], [], []>} : vector<16x128xbf16>, vector<128x128xbf16>, vector<16x128xf32> -> vector<16x128xf32>
    %c0_22 = arith.constant 0 : index
    %c0_23 = arith.constant 0 : index
    %23 = vector.load %arg9[%c0_22, %c0_23] : memref<1x128xf32, #tpu.memory_space<vmem>>, vector<1x128xf32>
    %24 = vector.broadcast %23 : vector<1x128xf32> to vector<16x128xf32>
    %25 = arith.addf %22, %24 : vector<16x128xf32>
    %cst_24 = arith.constant 0.000000e+00 : f32
    %26 = vector.broadcast %cst_24 : f32 to vector<16x128xf32>
    %27 = arith.maximumf %25, %26 : vector<16x128xf32>
    %c0_25 = arith.constant 0 : index
    %c0_26 = arith.constant 0 : index
    %28 = vector.load %arg10[%c0_25, %c0_26] : memref<8x16xf32, #tpu.memory_space<vmem>>, vector<8x16xf32>
    %cst_27 = arith.constant dense<0.000000e+00> : vector<8x128xf32>
    %29 = tpu.matmul %28, %27, %cst_27 {dimension_numbers = #tpu.dot_dimension_numbers<[1], [0], [0], [1], [0, 0, 1, 1], [], []>} : vector<8x16xf32>, vector<16x128xf32>, vector<8x128xf32> -> vector<8x128xf32>
    %c0_28 = arith.constant 0 : index
    %c0_29 = arith.constant 0 : index
    %30 = vector.load %arg11[%c0_28, %c0_29] : memref<8x16xf32, #tpu.memory_space<vmem>>, vector<8x16xf32>
    %cst_30 = arith.constant dense<0.000000e+00> : vector<8x128xf32>
    %31 = tpu.matmul %30, %27, %cst_30 {dimension_numbers = #tpu.dot_dimension_numbers<[1], [0], [0], [1], [0, 0, 1, 1], [], []>} : vector<8x16xf32>, vector<16x128xf32>, vector<8x128xf32> -> vector<8x128xf32>
    %32 = arith.maximumf %29, %31 : vector<8x128xf32>
    %c0_31 = arith.constant 0 : index
    %c0_32 = arith.constant 0 : index
    %33 = vector.load %arg12[%c0_31, %c0_32] : memref<128x64xf32, #tpu.memory_space<vmem>>, vector<128x64xf32>
    %cst_33 = arith.constant dense<0.000000e+00> : vector<8x64xf32>
    %34 = tpu.matmul %32, %33, %cst_33 {dimension_numbers = #tpu.dot_dimension_numbers<[1], [0], [0], [1], [0, 0, 1, 1], [], []>} : vector<8x128xf32>, vector<128x64xf32>, vector<8x64xf32> -> vector<8x64xf32>
    %c0_34 = arith.constant 0 : index
    %c0_35 = arith.constant 0 : index
    %35 = vector.load %arg13[%c0_34, %c0_35] : memref<128x64xf32, #tpu.memory_space<vmem>>, vector<128x64xf32>
    %cst_36 = arith.constant dense<0.000000e+00> : vector<8x64xf32>
    %36 = tpu.matmul %32, %35, %cst_36 {dimension_numbers = #tpu.dot_dimension_numbers<[1], [0], [0], [1], [0, 0, 1, 1], [], []>} : vector<8x128xf32>, vector<128x64xf32>, vector<8x64xf32> -> vector<8x64xf32>
    %37 = arith.maximumf %34, %36 : vector<8x64xf32>
    %38 = arith.truncf %37 : vector<8x64xf32> to vector<8x64xbf16>
    %c0_37 = arith.constant 0 : index
    %c0_38 = arith.constant 0 : index
    %39 = vector.load %arg14[%c0_37, %c0_38] : memref<64x32xbf16, #tpu.memory_space<vmem>>, vector<64x32xbf16>
    %cst_39 = arith.constant dense<0.000000e+00> : vector<8x32xf32>
    %40 = tpu.matmul %38, %39, %cst_39 {dimension_numbers = #tpu.dot_dimension_numbers<[1], [0], [0], [1], [0, 0, 1, 1], [], []>} : vector<8x64xbf16>, vector<64x32xbf16>, vector<8x32xf32> -> vector<8x32xf32>
    %c0_40 = arith.constant 0 : index
    %c0_41 = arith.constant 0 : index
    %41 = vector.load %arg15[%c0_40, %c0_41] : memref<1x32xf32, #tpu.memory_space<vmem>>, vector<1x32xf32>
    %42 = vector.broadcast %41 : vector<1x32xf32> to vector<8x32xf32>
    %43 = arith.addf %40, %42 : vector<8x32xf32>
    %cst_42 = arith.constant 0.000000e+00 : f32
    %44 = vector.broadcast %cst_42 : f32 to vector<8x32xf32>
    %45 = arith.maximumf %43, %44 : vector<8x32xf32>
    %46 = arith.truncf %45 : vector<8x32xf32> to vector<8x32xbf16>
    %c0_43 = arith.constant 0 : index
    %c0_44 = arith.constant 0 : index
    %47 = vector.load %arg16[%c0_43, %c0_44] : memref<32x32xbf16, #tpu.memory_space<vmem>>, vector<32x32xbf16>
    %cst_45 = arith.constant dense<0.000000e+00> : vector<8x32xf32>
    %48 = tpu.matmul %46, %47, %cst_45 {dimension_numbers = #tpu.dot_dimension_numbers<[1], [0], [0], [1], [0, 0, 1, 1], [], []>} : vector<8x32xbf16>, vector<32x32xbf16>, vector<8x32xf32> -> vector<8x32xf32>
    %c0_46 = arith.constant 0 : index
    %c0_47 = arith.constant 0 : index
    %49 = vector.load %arg17[%c0_46, %c0_47] : memref<32x32xbf16, #tpu.memory_space<vmem>>, vector<32x32xbf16>
    %cst_48 = arith.constant dense<0.000000e+00> : vector<8x32xf32>
    %50 = tpu.matmul %46, %49, %cst_48 {dimension_numbers = #tpu.dot_dimension_numbers<[1], [0], [0], [1], [0, 0, 1, 1], [], []>} : vector<8x32xbf16>, vector<32x32xbf16>, vector<8x32xf32> -> vector<8x32xf32>
    %c0_49 = arith.constant 0 : index
    %c0_50 = arith.constant 0 : index
    %51 = vector.load %arg18[%c0_49, %c0_50] : memref<32x32xbf16, #tpu.memory_space<vmem>>, vector<32x32xbf16>
    %cst_51 = arith.constant dense<0.000000e+00> : vector<8x32xf32>
    %52 = tpu.matmul %46, %51, %cst_51 {dimension_numbers = #tpu.dot_dimension_numbers<[1], [0], [0], [1], [0, 0, 1, 1], [], []>} : vector<8x32xbf16>, vector<32x32xbf16>, vector<8x32xf32> -> vector<8x32xf32>
    %c0_52 = arith.constant 0 : index
    %c0_53 = arith.constant 0 : index
    %53 = vector.load %arg19[%c0_52, %c0_53] : memref<8x8xf32, #tpu.memory_space<vmem>>, vector<8x8xf32>
    %cst_54 = arith.constant dense<0.000000e+00> : vector<8x32xf32>
    %54 = tpu.matmul %53, %48, %cst_54 {dimension_numbers = #tpu.dot_dimension_numbers<[1], [0], [0], [1], [0, 0, 1, 1], [], []>} : vector<8x8xf32>, vector<8x32xf32>, vector<8x32xf32> -> vector<8x32xf32>
    %55 = arith.addf %50, %54 : vector<8x32xf32>
    %c0_55 = arith.constant 0 : index
    %c0_56 = arith.constant 0 : index
    %56 = vector.load %arg20[%c0_55, %c0_56] : memref<8x8xf32, #tpu.memory_space<vmem>>, vector<8x8xf32>
    %cst_57 = arith.constant dense<0.000000e+00> : vector<8x32xf32>
    %57 = tpu.matmul %56, %52, %cst_57 {dimension_numbers = #tpu.dot_dimension_numbers<[1], [0], [0], [1], [0, 0, 1, 1], [], []>} : vector<8x8xf32>, vector<8x32xf32>, vector<8x32xf32> -> vector<8x32xf32>
    %58 = arith.addf %55, %57 : vector<8x32xf32>
    %c0_58 = arith.constant 0 : index
    %c0_59 = arith.constant 0 : index
    %59 = vector.load %arg21[%c0_58, %c0_59] : memref<1x32xf32, #tpu.memory_space<vmem>>, vector<1x32xf32>
    %60 = vector.broadcast %59 : vector<1x32xf32> to vector<8x32xf32>
    %61 = arith.addf %58, %60 : vector<8x32xf32>
    %cst_60 = arith.constant 0.000000e+00 : f32
    %62 = vector.broadcast %cst_60 : f32 to vector<8x32xf32>
    %63 = arith.maximumf %61, %62 : vector<8x32xf32>
    %64 = arith.truncf %63 : vector<8x32xf32> to vector<8x32xbf16>
    %c0_61 = arith.constant 0 : index
    %c0_62 = arith.constant 0 : index
    %65 = vector.load %arg22[%c0_61, %c0_62] : memref<32x32xbf16, #tpu.memory_space<vmem>>, vector<32x32xbf16>
    %cst_63 = arith.constant dense<0.000000e+00> : vector<8x32xf32>
    %66 = tpu.matmul %64, %65, %cst_63 {dimension_numbers = #tpu.dot_dimension_numbers<[1], [0], [0], [1], [0, 0, 1, 1], [], []>} : vector<8x32xbf16>, vector<32x32xbf16>, vector<8x32xf32> -> vector<8x32xf32>
    %c0_64 = arith.constant 0 : index
    %c0_65 = arith.constant 0 : index
    %67 = vector.load %arg23[%c0_64, %c0_65] : memref<1x32xf32, #tpu.memory_space<vmem>>, vector<1x32xf32>
    %68 = vector.broadcast %67 : vector<1x32xf32> to vector<8x32xf32>
    %69 = arith.addf %66, %68 : vector<8x32xf32>
    %cst_66 = arith.constant 0.000000e+00 : f32
    %70 = vector.broadcast %cst_66 : f32 to vector<8x32xf32>
    %71 = arith.maximumf %69, %70 : vector<8x32xf32>
    %72 = arith.truncf %71 : vector<8x32xf32> to vector<8x32xbf16>
    %c0_67 = arith.constant 0 : index
    %c0_68 = arith.constant 0 : index
    %73 = vector.load %arg24[%c0_67, %c0_68] : memref<32x128xbf16, #tpu.memory_space<vmem>>, vector<32x128xbf16>
    %cst_69 = arith.constant dense<0.000000e+00> : vector<8x128xf32>
    %74 = tpu.matmul %72, %73, %cst_69 {dimension_numbers = #tpu.dot_dimension_numbers<[1], [0], [0], [1], [0, 0, 1, 1], [], []>} : vector<8x32xbf16>, vector<32x128xbf16>, vector<8x128xf32> -> vector<8x128xf32>
    %c0_70 = arith.constant 0 : index
    %c0_71 = arith.constant 0 : index
    %75 = vector.load %arg25[%c0_70, %c0_71] : memref<1x128xf32, #tpu.memory_space<vmem>>, vector<1x128xf32>
    %76 = vector.broadcast %75 : vector<1x128xf32> to vector<8x128xf32>
    %77 = arith.addf %74, %76 : vector<8x128xf32>
    %cst_72 = arith.constant 0.000000e+00 : f32
    %78 = vector.broadcast %cst_72 : f32 to vector<8x128xf32>
    %79 = arith.maximumf %77, %78 : vector<8x128xf32>
    %80 = arith.truncf %79 : vector<8x128xf32> to vector<8x128xbf16>
    %c0_73 = arith.constant 0 : index
    %c0_74 = arith.constant 0 : index
    %81 = vector.load %arg26[%c0_73, %c0_74] : memref<128x32xbf16, #tpu.memory_space<vmem>>, vector<128x32xbf16>
    %cst_75 = arith.constant dense<0.000000e+00> : vector<8x32xf32>
    %82 = tpu.matmul %80, %81, %cst_75 {dimension_numbers = #tpu.dot_dimension_numbers<[1], [0], [0], [1], [0, 0, 1, 1], [], []>} : vector<8x128xbf16>, vector<128x32xbf16>, vector<8x32xf32> -> vector<8x32xf32>
    %c0_76 = arith.constant 0 : index
    %c0_77 = arith.constant 0 : index
    %83 = vector.load %arg27[%c0_76, %c0_77] : memref<1x32xf32, #tpu.memory_space<vmem>>, vector<1x32xf32>
    %84 = vector.broadcast %83 : vector<1x32xf32> to vector<8x32xf32>
    %85 = arith.addf %82, %84 : vector<8x32xf32>
    %cst_78 = arith.constant 0.000000e+00 : f32
    %86 = vector.broadcast %cst_78 : f32 to vector<8x32xf32>
    %87 = arith.maximumf %85, %86 : vector<8x32xf32>
    %88 = arith.truncf %87 : vector<8x32xf32> to vector<8x32xbf16>
    %c0_79 = arith.constant 0 : index
    %c0_80 = arith.constant 0 : index
    %89 = vector.load %arg28[%c0_79, %c0_80] : memref<32x32xbf16, #tpu.memory_space<vmem>>, vector<32x32xbf16>
    %cst_81 = arith.constant dense<0.000000e+00> : vector<8x32xf32>
    %90 = tpu.matmul %88, %89, %cst_81 {dimension_numbers = #tpu.dot_dimension_numbers<[1], [0], [0], [1], [0, 0, 1, 1], [], []>} : vector<8x32xbf16>, vector<32x32xbf16>, vector<8x32xf32> -> vector<8x32xf32>
    %c0_82 = arith.constant 0 : index
    %c0_83 = arith.constant 0 : index
    %91 = vector.load %arg29[%c0_82, %c0_83] : memref<32x32xbf16, #tpu.memory_space<vmem>>, vector<32x32xbf16>
    %cst_84 = arith.constant dense<0.000000e+00> : vector<8x32xf32>
    %92 = tpu.matmul %88, %91, %cst_84 {dimension_numbers = #tpu.dot_dimension_numbers<[1], [0], [0], [1], [0, 0, 1, 1], [], []>} : vector<8x32xbf16>, vector<32x32xbf16>, vector<8x32xf32> -> vector<8x32xf32>
    %c0_85 = arith.constant 0 : index
    %c0_86 = arith.constant 0 : index
    %93 = vector.load %arg30[%c0_85, %c0_86] : memref<32x32xbf16, #tpu.memory_space<vmem>>, vector<32x32xbf16>
    %cst_87 = arith.constant dense<0.000000e+00> : vector<8x32xf32>
    %94 = tpu.matmul %88, %93, %cst_87 {dimension_numbers = #tpu.dot_dimension_numbers<[1], [0], [0], [1], [0, 0, 1, 1], [], []>} : vector<8x32xbf16>, vector<32x32xbf16>, vector<8x32xf32> -> vector<8x32xf32>
    %c0_88 = arith.constant 0 : index
    %c0_89 = arith.constant 0 : index
    %95 = vector.load %arg31[%c0_88, %c0_89] : memref<8x8xf32, #tpu.memory_space<vmem>>, vector<8x8xf32>
    %cst_90 = arith.constant dense<0.000000e+00> : vector<8x32xf32>
    %96 = tpu.matmul %95, %90, %cst_90 {dimension_numbers = #tpu.dot_dimension_numbers<[1], [0], [0], [1], [0, 0, 1, 1], [], []>} : vector<8x8xf32>, vector<8x32xf32>, vector<8x32xf32> -> vector<8x32xf32>
    %97 = arith.addf %92, %96 : vector<8x32xf32>
    %c0_91 = arith.constant 0 : index
    %c0_92 = arith.constant 0 : index
    %98 = vector.load %arg32[%c0_91, %c0_92] : memref<8x8xf32, #tpu.memory_space<vmem>>, vector<8x8xf32>
    %cst_93 = arith.constant dense<0.000000e+00> : vector<8x32xf32>
    %99 = tpu.matmul %98, %94, %cst_93 {dimension_numbers = #tpu.dot_dimension_numbers<[1], [0], [0], [1], [0, 0, 1, 1], [], []>} : vector<8x8xf32>, vector<8x32xf32>, vector<8x32xf32> -> vector<8x32xf32>
    %100 = arith.addf %97, %99 : vector<8x32xf32>
    %c0_94 = arith.constant 0 : index
    %c0_95 = arith.constant 0 : index
    %101 = vector.load %arg33[%c0_94, %c0_95] : memref<1x32xf32, #tpu.memory_space<vmem>>, vector<1x32xf32>
    %102 = vector.broadcast %101 : vector<1x32xf32> to vector<8x32xf32>
    %103 = arith.addf %100, %102 : vector<8x32xf32>
    %cst_96 = arith.constant 0.000000e+00 : f32
    %104 = vector.broadcast %cst_96 : f32 to vector<8x32xf32>
    %105 = arith.maximumf %103, %104 : vector<8x32xf32>
    %106 = arith.truncf %105 : vector<8x32xf32> to vector<8x32xbf16>
    %c0_97 = arith.constant 0 : index
    %c0_98 = arith.constant 0 : index
    %107 = vector.load %arg34[%c0_97, %c0_98] : memref<32x32xbf16, #tpu.memory_space<vmem>>, vector<32x32xbf16>
    %cst_99 = arith.constant dense<0.000000e+00> : vector<8x32xf32>
    %108 = tpu.matmul %106, %107, %cst_99 {dimension_numbers = #tpu.dot_dimension_numbers<[1], [0], [0], [1], [0, 0, 1, 1], [], []>} : vector<8x32xbf16>, vector<32x32xbf16>, vector<8x32xf32> -> vector<8x32xf32>
    %c0_100 = arith.constant 0 : index
    %c0_101 = arith.constant 0 : index
    %109 = vector.load %arg35[%c0_100, %c0_101] : memref<1x32xf32, #tpu.memory_space<vmem>>, vector<1x32xf32>
    %110 = vector.broadcast %109 : vector<1x32xf32> to vector<8x32xf32>
    %111 = arith.addf %108, %110 : vector<8x32xf32>
    %cst_102 = arith.constant 0.000000e+00 : f32
    %112 = vector.broadcast %cst_102 : f32 to vector<8x32xf32>
    %113 = arith.maximumf %111, %112 : vector<8x32xf32>
    %114 = arith.truncf %113 : vector<8x32xf32> to vector<8x32xbf16>
    %c0_103 = arith.constant 0 : index
    %c0_104 = arith.constant 0 : index
    %115 = vector.load %arg36[%c0_103, %c0_104] : memref<32x128xbf16, #tpu.memory_space<vmem>>, vector<32x128xbf16>
    %cst_105 = arith.constant dense<0.000000e+00> : vector<8x128xf32>
    %116 = tpu.matmul %114, %115, %cst_105 {dimension_numbers = #tpu.dot_dimension_numbers<[1], [0], [0], [1], [0, 0, 1, 1], [], []>} : vector<8x32xbf16>, vector<32x128xbf16>, vector<8x128xf32> -> vector<8x128xf32>
    %c0_106 = arith.constant 0 : index
    %c0_107 = arith.constant 0 : index
    %117 = vector.load %arg37[%c0_106, %c0_107] : memref<1x128xf32, #tpu.memory_space<vmem>>, vector<1x128xf32>
    %118 = vector.broadcast %117 : vector<1x128xf32> to vector<8x128xf32>
    %119 = arith.addf %116, %118 : vector<8x128xf32>
    %cst_108 = arith.constant 0.000000e+00 : f32
    %120 = vector.broadcast %cst_108 : f32 to vector<8x128xf32>
    %121 = arith.maximumf %119, %120 : vector<8x128xf32>
    %c0_109 = arith.constant 0 : index
    %c0_110 = arith.constant 0 : index
    %122 = vector.load %arg38[%c0_109, %c0_110] : memref<4x8xf32, #tpu.memory_space<vmem>>, vector<4x8xf32>
    %cst_111 = arith.constant dense<0.000000e+00> : vector<4x128xf32>
    %123 = tpu.matmul %122, %121, %cst_111 {dimension_numbers = #tpu.dot_dimension_numbers<[1], [0], [0], [1], [0, 0, 1, 1], [], []>} : vector<4x8xf32>, vector<8x128xf32>, vector<4x128xf32> -> vector<4x128xf32>
    %c0_112 = arith.constant 0 : index
    %c0_113 = arith.constant 0 : index
    %124 = vector.load %arg39[%c0_112, %c0_113] : memref<4x8xf32, #tpu.memory_space<vmem>>, vector<4x8xf32>
    %cst_114 = arith.constant dense<0.000000e+00> : vector<4x128xf32>
    %125 = tpu.matmul %124, %121, %cst_114 {dimension_numbers = #tpu.dot_dimension_numbers<[1], [0], [0], [1], [0, 0, 1, 1], [], []>} : vector<4x8xf32>, vector<8x128xf32>, vector<4x128xf32> -> vector<4x128xf32>
    %126 = arith.maximumf %123, %125 : vector<4x128xf32>
    %c0_115 = arith.constant 0 : index
    %c0_116 = arith.constant 0 : index
    %127 = vector.load %arg40[%c0_115, %c0_116] : memref<128x64xf32, #tpu.memory_space<vmem>>, vector<128x64xf32>
    %cst_117 = arith.constant dense<0.000000e+00> : vector<4x64xf32>
    %128 = tpu.matmul %126, %127, %cst_117 {dimension_numbers = #tpu.dot_dimension_numbers<[1], [0], [0], [1], [0, 0, 1, 1], [], []>} : vector<4x128xf32>, vector<128x64xf32>, vector<4x64xf32> -> vector<4x64xf32>
    %c0_118 = arith.constant 0 : index
    %c0_119 = arith.constant 0 : index
    %129 = vector.load %arg41[%c0_118, %c0_119] : memref<128x64xf32, #tpu.memory_space<vmem>>, vector<128x64xf32>
    %cst_120 = arith.constant dense<0.000000e+00> : vector<4x64xf32>
    %130 = tpu.matmul %126, %129, %cst_120 {dimension_numbers = #tpu.dot_dimension_numbers<[1], [0], [0], [1], [0, 0, 1, 1], [], []>} : vector<4x128xf32>, vector<128x64xf32>, vector<4x64xf32> -> vector<4x64xf32>
    %131 = arith.maximumf %128, %130 : vector<4x64xf32>
    %132 = arith.truncf %131 : vector<4x64xf32> to vector<4x64xbf16>
    %c0_121 = arith.constant 0 : index
    %c0_122 = arith.constant 0 : index
    %133 = vector.load %arg42[%c0_121, %c0_122] : memref<64x32xbf16, #tpu.memory_space<vmem>>, vector<64x32xbf16>
    %cst_123 = arith.constant dense<0.000000e+00> : vector<4x32xf32>
    %134 = tpu.matmul %132, %133, %cst_123 {dimension_numbers = #tpu.dot_dimension_numbers<[1], [0], [0], [1], [0, 0, 1, 1], [], []>} : vector<4x64xbf16>, vector<64x32xbf16>, vector<4x32xf32> -> vector<4x32xf32>
    %c0_124 = arith.constant 0 : index
    %c0_125 = arith.constant 0 : index
    %135 = vector.load %arg43[%c0_124, %c0_125] : memref<1x32xf32, #tpu.memory_space<vmem>>, vector<1x32xf32>
    %136 = vector.broadcast %135 : vector<1x32xf32> to vector<4x32xf32>
    %137 = arith.addf %134, %136 : vector<4x32xf32>
    %cst_126 = arith.constant 0.000000e+00 : f32
    %138 = vector.broadcast %cst_126 : f32 to vector<4x32xf32>
    %139 = arith.maximumf %137, %138 : vector<4x32xf32>
    %140 = arith.truncf %139 : vector<4x32xf32> to vector<4x32xbf16>
    %c0_127 = arith.constant 0 : index
    %c0_128 = arith.constant 0 : index
    %141 = vector.load %arg44[%c0_127, %c0_128] : memref<32x32xbf16, #tpu.memory_space<vmem>>, vector<32x32xbf16>
    %cst_129 = arith.constant dense<0.000000e+00> : vector<4x32xf32>
    %142 = tpu.matmul %140, %141, %cst_129 {dimension_numbers = #tpu.dot_dimension_numbers<[1], [0], [0], [1], [0, 0, 1, 1], [], []>} : vector<4x32xbf16>, vector<32x32xbf16>, vector<4x32xf32> -> vector<4x32xf32>
    %c0_130 = arith.constant 0 : index
    %c0_131 = arith.constant 0 : index
    %143 = vector.load %arg45[%c0_130, %c0_131] : memref<32x32xbf16, #tpu.memory_space<vmem>>, vector<32x32xbf16>
    %cst_132 = arith.constant dense<0.000000e+00> : vector<4x32xf32>
    %144 = tpu.matmul %140, %143, %cst_132 {dimension_numbers = #tpu.dot_dimension_numbers<[1], [0], [0], [1], [0, 0, 1, 1], [], []>} : vector<4x32xbf16>, vector<32x32xbf16>, vector<4x32xf32> -> vector<4x32xf32>
    %c0_133 = arith.constant 0 : index
    %c0_134 = arith.constant 0 : index
    %145 = vector.load %arg46[%c0_133, %c0_134] : memref<32x32xbf16, #tpu.memory_space<vmem>>, vector<32x32xbf16>
    %cst_135 = arith.constant dense<0.000000e+00> : vector<4x32xf32>
    %146 = tpu.matmul %140, %145, %cst_135 {dimension_numbers = #tpu.dot_dimension_numbers<[1], [0], [0], [1], [0, 0, 1, 1], [], []>} : vector<4x32xbf16>, vector<32x32xbf16>, vector<4x32xf32> -> vector<4x32xf32>
    %c0_136 = arith.constant 0 : index
    %c0_137 = arith.constant 0 : index
    %147 = vector.load %arg47[%c0_136, %c0_137] : memref<4x4xf32, #tpu.memory_space<vmem>>, vector<4x4xf32>
    %cst_138 = arith.constant dense<0.000000e+00> : vector<4x32xf32>
    %148 = tpu.matmul %147, %142, %cst_138 {dimension_numbers = #tpu.dot_dimension_numbers<[1], [0], [0], [1], [0, 0, 1, 1], [], []>} : vector<4x4xf32>, vector<4x32xf32>, vector<4x32xf32> -> vector<4x32xf32>
    %149 = arith.addf %144, %148 : vector<4x32xf32>
    %c0_139 = arith.constant 0 : index
    %c0_140 = arith.constant 0 : index
    %150 = vector.load %arg48[%c0_139, %c0_140] : memref<4x4xf32, #tpu.memory_space<vmem>>, vector<4x4xf32>
    %cst_141 = arith.constant dense<0.000000e+00> : vector<4x32xf32>
    %151 = tpu.matmul %150, %146, %cst_141 {dimension_numbers = #tpu.dot_dimension_numbers<[1], [0], [0], [1], [0, 0, 1, 1], [], []>} : vector<4x4xf32>, vector<4x32xf32>, vector<4x32xf32> -> vector<4x32xf32>
    %152 = arith.addf %149, %151 : vector<4x32xf32>
    %c0_142 = arith.constant 0 : index
    %c0_143 = arith.constant 0 : index
    %153 = vector.load %arg49[%c0_142, %c0_143] : memref<1x32xf32, #tpu.memory_space<vmem>>, vector<1x32xf32>
    %154 = vector.broadcast %153 : vector<1x32xf32> to vector<4x32xf32>
    %155 = arith.addf %152, %154 : vector<4x32xf32>
    %cst_144 = arith.constant 0.000000e+00 : f32
    %156 = vector.broadcast %cst_144 : f32 to vector<4x32xf32>
    %157 = arith.maximumf %155, %156 : vector<4x32xf32>
    %158 = arith.truncf %157 : vector<4x32xf32> to vector<4x32xbf16>
    %c0_145 = arith.constant 0 : index
    %c0_146 = arith.constant 0 : index
    %159 = vector.load %arg50[%c0_145, %c0_146] : memref<32x32xbf16, #tpu.memory_space<vmem>>, vector<32x32xbf16>
    %cst_147 = arith.constant dense<0.000000e+00> : vector<4x32xf32>
    %160 = tpu.matmul %158, %159, %cst_147 {dimension_numbers = #tpu.dot_dimension_numbers<[1], [0], [0], [1], [0, 0, 1, 1], [], []>} : vector<4x32xbf16>, vector<32x32xbf16>, vector<4x32xf32> -> vector<4x32xf32>
    %c0_148 = arith.constant 0 : index
    %c0_149 = arith.constant 0 : index
    %161 = vector.load %arg51[%c0_148, %c0_149] : memref<1x32xf32, #tpu.memory_space<vmem>>, vector<1x32xf32>
    %162 = vector.broadcast %161 : vector<1x32xf32> to vector<4x32xf32>
    %163 = arith.addf %160, %162 : vector<4x32xf32>
    %cst_150 = arith.constant 0.000000e+00 : f32
    %164 = vector.broadcast %cst_150 : f32 to vector<4x32xf32>
    %165 = arith.maximumf %163, %164 : vector<4x32xf32>
    %166 = arith.truncf %165 : vector<4x32xf32> to vector<4x32xbf16>
    %c0_151 = arith.constant 0 : index
    %c0_152 = arith.constant 0 : index
    %167 = vector.load %arg52[%c0_151, %c0_152] : memref<32x128xbf16, #tpu.memory_space<vmem>>, vector<32x128xbf16>
    %cst_153 = arith.constant dense<0.000000e+00> : vector<4x128xf32>
    %168 = tpu.matmul %166, %167, %cst_153 {dimension_numbers = #tpu.dot_dimension_numbers<[1], [0], [0], [1], [0, 0, 1, 1], [], []>} : vector<4x32xbf16>, vector<32x128xbf16>, vector<4x128xf32> -> vector<4x128xf32>
    %c0_154 = arith.constant 0 : index
    %c0_155 = arith.constant 0 : index
    %169 = vector.load %arg53[%c0_154, %c0_155] : memref<1x128xf32, #tpu.memory_space<vmem>>, vector<1x128xf32>
    %170 = vector.broadcast %169 : vector<1x128xf32> to vector<4x128xf32>
    %171 = arith.addf %168, %170 : vector<4x128xf32>
    %cst_156 = arith.constant 0.000000e+00 : f32
    %172 = vector.broadcast %cst_156 : f32 to vector<4x128xf32>
    %173 = arith.maximumf %171, %172 : vector<4x128xf32>
    %174 = arith.truncf %173 : vector<4x128xf32> to vector<4x128xbf16>
    %c0_157 = arith.constant 0 : index
    %c0_158 = arith.constant 0 : index
    %175 = vector.load %arg54[%c0_157, %c0_158] : memref<128x32xbf16, #tpu.memory_space<vmem>>, vector<128x32xbf16>
    %cst_159 = arith.constant dense<0.000000e+00> : vector<4x32xf32>
    %176 = tpu.matmul %174, %175, %cst_159 {dimension_numbers = #tpu.dot_dimension_numbers<[1], [0], [0], [1], [0, 0, 1, 1], [], []>} : vector<4x128xbf16>, vector<128x32xbf16>, vector<4x32xf32> -> vector<4x32xf32>
    %c0_160 = arith.constant 0 : index
    %c0_161 = arith.constant 0 : index
    %177 = vector.load %arg55[%c0_160, %c0_161] : memref<1x32xf32, #tpu.memory_space<vmem>>, vector<1x32xf32>
    %178 = vector.broadcast %177 : vector<1x32xf32> to vector<4x32xf32>
    %179 = arith.addf %176, %178 : vector<4x32xf32>
    %cst_162 = arith.constant 0.000000e+00 : f32
    %180 = vector.broadcast %cst_162 : f32 to vector<4x32xf32>
    %181 = arith.maximumf %179, %180 : vector<4x32xf32>
    %182 = arith.truncf %181 : vector<4x32xf32> to vector<4x32xbf16>
    %c0_163 = arith.constant 0 : index
    %c0_164 = arith.constant 0 : index
    %183 = vector.load %arg56[%c0_163, %c0_164] : memref<32x32xbf16, #tpu.memory_space<vmem>>, vector<32x32xbf16>
    %cst_165 = arith.constant dense<0.000000e+00> : vector<4x32xf32>
    %184 = tpu.matmul %182, %183, %cst_165 {dimension_numbers = #tpu.dot_dimension_numbers<[1], [0], [0], [1], [0, 0, 1, 1], [], []>} : vector<4x32xbf16>, vector<32x32xbf16>, vector<4x32xf32> -> vector<4x32xf32>
    %c0_166 = arith.constant 0 : index
    %c0_167 = arith.constant 0 : index
    %185 = vector.load %arg57[%c0_166, %c0_167] : memref<32x32xbf16, #tpu.memory_space<vmem>>, vector<32x32xbf16>
    %cst_168 = arith.constant dense<0.000000e+00> : vector<4x32xf32>
    %186 = tpu.matmul %182, %185, %cst_168 {dimension_numbers = #tpu.dot_dimension_numbers<[1], [0], [0], [1], [0, 0, 1, 1], [], []>} : vector<4x32xbf16>, vector<32x32xbf16>, vector<4x32xf32> -> vector<4x32xf32>
    %c0_169 = arith.constant 0 : index
    %c0_170 = arith.constant 0 : index
    %187 = vector.load %arg58[%c0_169, %c0_170] : memref<32x32xbf16, #tpu.memory_space<vmem>>, vector<32x32xbf16>
    %cst_171 = arith.constant dense<0.000000e+00> : vector<4x32xf32>
    %188 = tpu.matmul %182, %187, %cst_171 {dimension_numbers = #tpu.dot_dimension_numbers<[1], [0], [0], [1], [0, 0, 1, 1], [], []>} : vector<4x32xbf16>, vector<32x32xbf16>, vector<4x32xf32> -> vector<4x32xf32>
    %c0_172 = arith.constant 0 : index
    %c0_173 = arith.constant 0 : index
    %189 = vector.load %arg59[%c0_172, %c0_173] : memref<4x4xf32, #tpu.memory_space<vmem>>, vector<4x4xf32>
    %cst_174 = arith.constant dense<0.000000e+00> : vector<4x32xf32>
    %190 = tpu.matmul %189, %184, %cst_174 {dimension_numbers = #tpu.dot_dimension_numbers<[1], [0], [0], [1], [0, 0, 1, 1], [], []>} : vector<4x4xf32>, vector<4x32xf32>, vector<4x32xf32> -> vector<4x32xf32>
    %191 = arith.addf %186, %190 : vector<4x32xf32>
    %c0_175 = arith.constant 0 : index
    %c0_176 = arith.constant 0 : index
    %192 = vector.load %arg60[%c0_175, %c0_176] : memref<4x4xf32, #tpu.memory_space<vmem>>, vector<4x4xf32>
    %cst_177 = arith.constant dense<0.000000e+00> : vector<4x32xf32>
    %193 = tpu.matmul %192, %188, %cst_177 {dimension_numbers = #tpu.dot_dimension_numbers<[1], [0], [0], [1], [0, 0, 1, 1], [], []>} : vector<4x4xf32>, vector<4x32xf32>, vector<4x32xf32> -> vector<4x32xf32>
    %194 = arith.addf %191, %193 : vector<4x32xf32>
    %c0_178 = arith.constant 0 : index
    %c0_179 = arith.constant 0 : index
    %195 = vector.load %arg61[%c0_178, %c0_179] : memref<1x32xf32, #tpu.memory_space<vmem>>, vector<1x32xf32>
    %196 = vector.broadcast %195 : vector<1x32xf32> to vector<4x32xf32>
    %197 = arith.addf %194, %196 : vector<4x32xf32>
    %cst_180 = arith.constant 0.000000e+00 : f32
    %198 = vector.broadcast %cst_180 : f32 to vector<4x32xf32>
    %199 = arith.maximumf %197, %198 : vector<4x32xf32>
    %200 = arith.truncf %199 : vector<4x32xf32> to vector<4x32xbf16>
    %c0_181 = arith.constant 0 : index
    %c0_182 = arith.constant 0 : index
    %201 = vector.load %arg62[%c0_181, %c0_182] : memref<32x32xbf16, #tpu.memory_space<vmem>>, vector<32x32xbf16>
    %cst_183 = arith.constant dense<0.000000e+00> : vector<4x32xf32>
    %202 = tpu.matmul %200, %201, %cst_183 {dimension_numbers = #tpu.dot_dimension_numbers<[1], [0], [0], [1], [0, 0, 1, 1], [], []>} : vector<4x32xbf16>, vector<32x32xbf16>, vector<4x32xf32> -> vector<4x32xf32>
    %c0_184 = arith.constant 0 : index
    %c0_185 = arith.constant 0 : index
    %203 = vector.load %arg63[%c0_184, %c0_185] : memref<1x32xf32, #tpu.memory_space<vmem>>, vector<1x32xf32>
    %204 = vector.broadcast %203 : vector<1x32xf32> to vector<4x32xf32>
    %205 = arith.addf %202, %204 : vector<4x32xf32>
    %cst_186 = arith.constant 0.000000e+00 : f32
    %206 = vector.broadcast %cst_186 : f32 to vector<4x32xf32>
    %207 = arith.maximumf %205, %206 : vector<4x32xf32>
    %208 = arith.truncf %207 : vector<4x32xf32> to vector<4x32xbf16>
    %c0_187 = arith.constant 0 : index
    %c0_188 = arith.constant 0 : index
    %209 = vector.load %arg64[%c0_187, %c0_188] : memref<32x128xbf16, #tpu.memory_space<vmem>>, vector<32x128xbf16>
    %cst_189 = arith.constant dense<0.000000e+00> : vector<4x128xf32>
    %210 = tpu.matmul %208, %209, %cst_189 {dimension_numbers = #tpu.dot_dimension_numbers<[1], [0], [0], [1], [0, 0, 1, 1], [], []>} : vector<4x32xbf16>, vector<32x128xbf16>, vector<4x128xf32> -> vector<4x128xf32>
    %c0_190 = arith.constant 0 : index
    %c0_191 = arith.constant 0 : index
    %211 = vector.load %arg65[%c0_190, %c0_191] : memref<1x128xf32, #tpu.memory_space<vmem>>, vector<1x128xf32>
    %212 = vector.broadcast %211 : vector<1x128xf32> to vector<4x128xf32>
    %213 = arith.addf %210, %212 : vector<4x128xf32>
    %cst_192 = arith.constant 0.000000e+00 : f32
    %214 = vector.broadcast %cst_192 : f32 to vector<4x128xf32>
    %215 = arith.maximumf %213, %214 : vector<4x128xf32>
    %cst_193 = arith.constant dense<0.000000e+00> : vector<128xf32>
    %216 = vector.multi_reduction <add>, %215, %cst_193 [0] : vector<4x128xf32> to vector<128xf32>
    %217 = vector.shape_cast %216 : vector<128xf32> to vector<1x128xf32>
    %c0_194 = arith.constant 0 : index
    %c0_195 = arith.constant 0 : index
    %218 = vector.load %arg66[%c0_194, %c0_195] : memref<128x64xf32, #tpu.memory_space<vmem>>, vector<128x64xf32>
    %cst_196 = arith.constant dense<0.000000e+00> : vector<1x64xf32>
    %219 = tpu.matmul %217, %218, %cst_196 {dimension_numbers = #tpu.dot_dimension_numbers<[1], [0], [0], [1], [0, 0, 1, 1], [], []>} : vector<1x128xf32>, vector<128x64xf32>, vector<1x64xf32> -> vector<1x64xf32>
    %220 = vector.shape_cast %219 : vector<1x64xf32> to vector<1x1x64xf32>
    %c0_197 = arith.constant 0 : index
    %c0_198 = arith.constant 0 : index
    %c0_199 = arith.constant 0 : index
    %221 = vector.load %arg70[%c0_197, %c0_198, %c0_199] : memref<1x1x64xf32, #tpu.memory_space<vmem>>, vector<1x1x64xf32>
    tpu.vector_store %arg70[%c0_197, %c0_198, %c0_199], %220 {strides = array<i32>} : memref<1x1x64xf32, #tpu.memory_space<vmem>>, vector<1x1x64xf32>,
    %c0_200 = arith.constant 0 : index
    %c0_201 = arith.constant 0 : index
    %222 = vector.load %arg67[%c0_200, %c0_201] : memref<64x2xf32, #tpu.memory_space<vmem>>, vector<64x2xf32>
    %cst_202 = arith.constant dense<0.000000e+00> : vector<1x2xf32>
    %223 = tpu.matmul %219, %222, %cst_202 {dimension_numbers = #tpu.dot_dimension_numbers<[1], [0], [0], [1], [0, 0, 1, 1], [], []>} : vector<1x64xf32>, vector<64x2xf32>, vector<1x2xf32> -> vector<1x2xf32>
    %c0_203 = arith.constant 0 : index
    %c0_204 = arith.constant 0 : index
    %224 = vector.load %arg68[%c0_203, %c0_204] : memref<1x2xf32, #tpu.memory_space<vmem>>, vector<1x2xf32>
    %225 = arith.addf %223, %224 : vector<1x2xf32>
    %226 = vector.shape_cast %225 : vector<1x2xf32> to vector<1x1x2xf32>
    %c0_205 = arith.constant 0 : index
    %c0_206 = arith.constant 0 : index
    %c0_207 = arith.constant 0 : index
    %227 = vector.load %arg69[%c0_205, %c0_206, %c0_207] : memref<1x1x2xf32, #tpu.memory_space<vmem>>, vector<1x1x2xf32>
    tpu.vector_store %arg69[%c0_205, %c0_206, %c0_207], %226 {strides = array<i32>} : memref<1x1x2xf32, #tpu.memory_space<vmem>>, vector<1x1x2xf32>,
    return
  }
  func.func @transform_0(%arg0: i32) -> (i32, i32, i32) {
    %c0_i32 = arith.constant 0 : i32
    %c0_i32_0 = arith.constant 0 : i32
    %c0_i32_1 = arith.constant 0 : i32
    return %arg0, %c0_i32, %c0_i32_0 : i32, i32, i32
  }
  func.func @transform_1(%arg0: i32) -> (i32, i32) {
    %c0_i32 = arith.constant 0 : i32
    %c0_i32_0 = arith.constant 0 : i32
    %c0_i32_1 = arith.constant 0 : i32
    return %c0_i32, %c0_i32_0 : i32, i32
  }
  func.func @transform_2(%arg0: i32) -> (i32, i32) {
    %c0_i32 = arith.constant 0 : i32
    %c0_i32_0 = arith.constant 0 : i32
    %c0_i32_1 = arith.constant 0 : i32
    return %c0_i32, %c0_i32_0 : i32, i32
  }
  func.func @transform_3(%arg0: i32) -> (i32, i32) {
    %c0_i32 = arith.constant 0 : i32
    %c0_i32_0 = arith.constant 0 : i32
    %c0_i32_1 = arith.constant 0 : i32
    return %c0_i32, %c0_i32_0 : i32, i32
  }
  func.func @transform_4(%arg0: i32) -> (i32, i32) {
    %c0_i32 = arith.constant 0 : i32
    %c0_i32_0 = arith.constant 0 : i32
    %c0_i32_1 = arith.constant 0 : i32
    return %c0_i32, %c0_i32_0 : i32, i32
  }
  func.func @transform_5(%arg0: i32) -> (i32, i32) {
    %c0_i32 = arith.constant 0 : i32
    %c0_i32_0 = arith.constant 0 : i32
    %c0_i32_1 = arith.constant 0 : i32
    return %c0_i32, %c0_i32_0 : i32, i32
  }
  func.func @transform_6(%arg0: i32) -> (i32, i32) {
    %c0_i32 = arith.constant 0 : i32
    %c0_i32_0 = arith.constant 0 : i32
    %c0_i32_1 = arith.constant 0 : i32
    return %c0_i32, %c0_i32_0 : i32, i32
  }
  func.func @transform_7(%arg0: i32) -> (i32, i32) {
    %c0_i32 = arith.constant 0 : i32
    %c0_i32_0 = arith.constant 0 : i32
    %c0_i32_1 = arith.constant 0 : i32
    return %c0_i32, %c0_i32_0 : i32, i32
  }
  func.func @transform_8(%arg0: i32) -> (i32, i32) {
    %c0_i32 = arith.constant 0 : i32
    %c0_i32_0 = arith.constant 0 : i32
    %c0_i32_1 = arith.constant 0 : i32
    return %c0_i32, %c0_i32_0 : i32, i32
  }
  func.func @transform_9(%arg0: i32) -> (i32, i32) {
    %c0_i32 = arith.constant 0 : i32
    %c0_i32_0 = arith.constant 0 : i32
    %c0_i32_1 = arith.constant 0 : i32
    return %c0_i32, %c0_i32_0 : i32, i32
  }
  func.func @transform_10(%arg0: i32) -> (i32, i32) {
    %c0_i32 = arith.constant 0 : i32
    %c0_i32_0 = arith.constant 0 : i32
    %c0_i32_1 = arith.constant 0 : i32
    return %c0_i32, %c0_i32_0 : i32, i32
  }
  func.func @transform_11(%arg0: i32) -> (i32, i32) {
    %c0_i32 = arith.constant 0 : i32
    %c0_i32_0 = arith.constant 0 : i32
    %c0_i32_1 = arith.constant 0 : i32
    return %c0_i32, %c0_i32_0 : i32, i32
  }
  func.func @transform_12(%arg0: i32) -> (i32, i32) {
    %c0_i32 = arith.constant 0 : i32
    %c0_i32_0 = arith.constant 0 : i32
    %c0_i32_1 = arith.constant 0 : i32
    return %c0_i32, %c0_i32_0 : i32, i32
  }
  func.func @transform_13(%arg0: i32) -> (i32, i32) {
    %c0_i32 = arith.constant 0 : i32
    %c0_i32_0 = arith.constant 0 : i32
    %c0_i32_1 = arith.constant 0 : i32
    return %c0_i32, %c0_i32_0 : i32, i32
  }
  func.func @transform_14(%arg0: i32) -> (i32, i32) {
    %c0_i32 = arith.constant 0 : i32
    %c0_i32_0 = arith.constant 0 : i32
    %c0_i32_1 = arith.constant 0 : i32
    return %c0_i32, %c0_i32_0 : i32, i32
  }
  func.func @transform_15(%arg0: i32) -> (i32, i32) {
    %c0_i32 = arith.constant 0 : i32
    %c0_i32_0 = arith.constant 0 : i32
    %c0_i32_1 = arith.constant 0 : i32
    return %c0_i32, %c0_i32_0 : i32, i32
  }
  func.func @transform_16(%arg0: i32) -> (i32, i32) {
    %c0_i32 = arith.constant 0 : i32
    %c0_i32_0 = arith.constant 0 : i32
    %c0_i32_1 = arith.constant 0 : i32
    return %c0_i32, %c0_i32_0 : i32, i32
  }
  func.func @transform_17(%arg0: i32) -> (i32, i32) {
    %c0_i32 = arith.constant 0 : i32
    %c0_i32_0 = arith.constant 0 : i32
    %c0_i32_1 = arith.constant 0 : i32
    return %c0_i32, %c0_i32_0 : i32, i32
  }
  func.func @transform_18(%arg0: i32) -> (i32, i32) {
    %c0_i32 = arith.constant 0 : i32
    %c0_i32_0 = arith.constant 0 : i32
    %c0_i32_1 = arith.constant 0 : i32
    return %c0_i32, %c0_i32_0 : i32, i32
  }
  func.func @transform_19(%arg0: i32) -> (i32, i32) {
    %c0_i32 = arith.constant 0 : i32
    %c0_i32_0 = arith.constant 0 : i32
    %c0_i32_1 = arith.constant 0 : i32
    return %c0_i32, %c0_i32_0 : i32, i32
  }
  func.func @transform_20(%arg0: i32) -> (i32, i32) {
    %c0_i32 = arith.constant 0 : i32
    %c0_i32_0 = arith.constant 0 : i32
    %c0_i32_1 = arith.constant 0 : i32
    return %c0_i32, %c0_i32_0 : i32, i32
  }
  func.func @transform_21(%arg0: i32) -> (i32, i32) {
    %c0_i32 = arith.constant 0 : i32
    %c0_i32_0 = arith.constant 0 : i32
    %c0_i32_1 = arith.constant 0 : i32
    return %c0_i32, %c0_i32_0 : i32, i32
  }
  func.func @transform_22(%arg0: i32) -> (i32, i32) {
    %c0_i32 = arith.constant 0 : i32
    %c0_i32_0 = arith.constant 0 : i32
    %c0_i32_1 = arith.constant 0 : i32
    return %c0_i32, %c0_i32_0 : i32, i32
  }
  func.func @transform_23(%arg0: i32) -> (i32, i32) {
    %c0_i32 = arith.constant 0 : i32
    %c0_i32_0 = arith.constant 0 : i32
    %c0_i32_1 = arith.constant 0 : i32
    return %c0_i32, %c0_i32_0 : i32, i32
  }
  func.func @transform_24(%arg0: i32) -> (i32, i32) {
    %c0_i32 = arith.constant 0 : i32
    %c0_i32_0 = arith.constant 0 : i32
    %c0_i32_1 = arith.constant 0 : i32
    return %c0_i32, %c0_i32_0 : i32, i32
  }
  func.func @transform_25(%arg0: i32) -> (i32, i32) {
    %c0_i32 = arith.constant 0 : i32
    %c0_i32_0 = arith.constant 0 : i32
    %c0_i32_1 = arith.constant 0 : i32
    return %c0_i32, %c0_i32_0 : i32, i32
  }
  func.func @transform_26(%arg0: i32) -> (i32, i32) {
    %c0_i32 = arith.constant 0 : i32
    %c0_i32_0 = arith.constant 0 : i32
    %c0_i32_1 = arith.constant 0 : i32
    return %c0_i32, %c0_i32_0 : i32, i32
  }
  func.func @transform_27(%arg0: i32) -> (i32, i32) {
    %c0_i32 = arith.constant 0 : i32
    %c0_i32_0 = arith.constant 0 : i32
    %c0_i32_1 = arith.constant 0 : i32
    return %c0_i32, %c0_i32_0 : i32, i32
  }
  func.func @transform_28(%arg0: i32) -> (i32, i32) {
    %c0_i32 = arith.constant 0 : i32
    %c0_i32_0 = arith.constant 0 : i32
    %c0_i32_1 = arith.constant 0 : i32
    return %c0_i32, %c0_i32_0 : i32, i32
  }
  func.func @transform_29(%arg0: i32) -> (i32, i32) {
    %c0_i32 = arith.constant 0 : i32
    %c0_i32_0 = arith.constant 0 : i32
    %c0_i32_1 = arith.constant 0 : i32
    return %c0_i32, %c0_i32_0 : i32, i32
  }
  func.func @transform_30(%arg0: i32) -> (i32, i32) {
    %c0_i32 = arith.constant 0 : i32
    %c0_i32_0 = arith.constant 0 : i32
    %c0_i32_1 = arith.constant 0 : i32
    return %c0_i32, %c0_i32_0 : i32, i32
  }
  func.func @transform_31(%arg0: i32) -> (i32, i32) {
    %c0_i32 = arith.constant 0 : i32
    %c0_i32_0 = arith.constant 0 : i32
    %c0_i32_1 = arith.constant 0 : i32
    return %c0_i32, %c0_i32_0 : i32, i32
  }
  func.func @transform_32(%arg0: i32) -> (i32, i32) {
    %c0_i32 = arith.constant 0 : i32
    %c0_i32_0 = arith.constant 0 : i32
    %c0_i32_1 = arith.constant 0 : i32
    return %c0_i32, %c0_i32_0 : i32, i32
  }
  func.func @transform_33(%arg0: i32) -> (i32, i32) {
    %c0_i32 = arith.constant 0 : i32
    %c0_i32_0 = arith.constant 0 : i32
    %c0_i32_1 = arith.constant 0 : i32
    return %c0_i32, %c0_i32_0 : i32, i32
  }
  func.func @transform_34(%arg0: i32) -> (i32, i32) {
    %c0_i32 = arith.constant 0 : i32
    %c0_i32_0 = arith.constant 0 : i32
    %c0_i32_1 = arith.constant 0 : i32
    return %c0_i32, %c0_i32_0 : i32, i32
  }
  func.func @transform_35(%arg0: i32) -> (i32, i32) {
    %c0_i32 = arith.constant 0 : i32
    %c0_i32_0 = arith.constant 0 : i32
    %c0_i32_1 = arith.constant 0 : i32
    return %c0_i32, %c0_i32_0 : i32, i32
  }
  func.func @transform_36(%arg0: i32) -> (i32, i32) {
    %c0_i32 = arith.constant 0 : i32
    %c0_i32_0 = arith.constant 0 : i32
    %c0_i32_1 = arith.constant 0 : i32
    return %c0_i32, %c0_i32_0 : i32, i32
  }
  func.func @transform_37(%arg0: i32) -> (i32, i32) {
    %c0_i32 = arith.constant 0 : i32
    %c0_i32_0 = arith.constant 0 : i32
    %c0_i32_1 = arith.constant 0 : i32
    return %c0_i32, %c0_i32_0 : i32, i32
  }
  func.func @transform_38(%arg0: i32) -> (i32, i32) {
    %c0_i32 = arith.constant 0 : i32
    %c0_i32_0 = arith.constant 0 : i32
    %c0_i32_1 = arith.constant 0 : i32
    return %c0_i32, %c0_i32_0 : i32, i32
  }
  func.func @transform_39(%arg0: i32) -> (i32, i32) {
    %c0_i32 = arith.constant 0 : i32
    %c0_i32_0 = arith.constant 0 : i32
    %c0_i32_1 = arith.constant 0 : i32
    return %c0_i32, %c0_i32_0 : i32, i32
  }
  func.func @transform_40(%arg0: i32) -> (i32, i32) {
    %c0_i32 = arith.constant 0 : i32
    %c0_i32_0 = arith.constant 0 : i32
    %c0_i32_1 = arith.constant 0 : i32
    return %c0_i32, %c0_i32_0 : i32, i32
  }
  func.func @transform_41(%arg0: i32) -> (i32, i32) {
    %c0_i32 = arith.constant 0 : i32
    %c0_i32_0 = arith.constant 0 : i32
    %c0_i32_1 = arith.constant 0 : i32
    return %c0_i32, %c0_i32_0 : i32, i32
  }
  func.func @transform_42(%arg0: i32) -> (i32, i32) {
    %c0_i32 = arith.constant 0 : i32
    %c0_i32_0 = arith.constant 0 : i32
    %c0_i32_1 = arith.constant 0 : i32
    return %c0_i32, %c0_i32_0 : i32, i32
  }
  func.func @transform_43(%arg0: i32) -> (i32, i32) {
    %c0_i32 = arith.constant 0 : i32
    %c0_i32_0 = arith.constant 0 : i32
    %c0_i32_1 = arith.constant 0 : i32
    return %c0_i32, %c0_i32_0 : i32, i32
  }
  func.func @transform_44(%arg0: i32) -> (i32, i32) {
    %c0_i32 = arith.constant 0 : i32
    %c0_i32_0 = arith.constant 0 : i32
    %c0_i32_1 = arith.constant 0 : i32
    return %c0_i32, %c0_i32_0 : i32, i32
  }
  func.func @transform_45(%arg0: i32) -> (i32, i32) {
    %c0_i32 = arith.constant 0 : i32
    %c0_i32_0 = arith.constant 0 : i32
    %c0_i32_1 = arith.constant 0 : i32
    return %c0_i32, %c0_i32_0 : i32, i32
  }
  func.func @transform_46(%arg0: i32) -> (i32, i32) {
    %c0_i32 = arith.constant 0 : i32
    %c0_i32_0 = arith.constant 0 : i32
    %c0_i32_1 = arith.constant 0 : i32
    return %c0_i32, %c0_i32_0 : i32, i32
  }
  func.func @transform_47(%arg0: i32) -> (i32, i32) {
    %c0_i32 = arith.constant 0 : i32
    %c0_i32_0 = arith.constant 0 : i32
    %c0_i32_1 = arith.constant 0 : i32
    return %c0_i32, %c0_i32_0 : i32, i32
  }
  func.func @transform_48(%arg0: i32) -> (i32, i32) {
    %c0_i32 = arith.constant 0 : i32
    %c0_i32_0 = arith.constant 0 : i32
    %c0_i32_1 = arith.constant 0 : i32
    return %c0_i32, %c0_i32_0 : i32, i32
  }
  func.func @transform_49(%arg0: i32) -> (i32, i32) {
    %c0_i32 = arith.constant 0 : i32
    %c0_i32_0 = arith.constant 0 : i32
    %c0_i32_1 = arith.constant 0 : i32
    return %c0_i32, %c0_i32_0 : i32, i32
  }
  func.func @transform_50(%arg0: i32) -> (i32, i32) {
    %c0_i32 = arith.constant 0 : i32
    %c0_i32_0 = arith.constant 0 : i32
    %c0_i32_1 = arith.constant 0 : i32
    return %c0_i32, %c0_i32_0 : i32, i32
  }
  func.func @transform_51(%arg0: i32) -> (i32, i32) {
    %c0_i32 = arith.constant 0 : i32
    %c0_i32_0 = arith.constant 0 : i32
    %c0_i32_1 = arith.constant 0 : i32
    return %c0_i32, %c0_i32_0 : i32, i32
  }
  func.func @transform_52(%arg0: i32) -> (i32, i32) {
    %c0_i32 = arith.constant 0 : i32
    %c0_i32_0 = arith.constant 0 : i32
    %c0_i32_1 = arith.constant 0 : i32
    return %c0_i32, %c0_i32_0 : i32, i32
  }
  func.func @transform_53(%arg0: i32) -> (i32, i32) {
    %c0_i32 = arith.constant 0 : i32
    %c0_i32_0 = arith.constant 0 : i32
    %c0_i32_1 = arith.constant 0 : i32
    return %c0_i32, %c0_i32_0 : i32, i32
  }
  func.func @transform_54(%arg0: i32) -> (i32, i32) {
    %c0_i32 = arith.constant 0 : i32
    %c0_i32_0 = arith.constant 0 : i32
    %c0_i32_1 = arith.constant 0 : i32
    return %c0_i32, %c0_i32_0 : i32, i32
  }
  func.func @transform_55(%arg0: i32) -> (i32, i32) {
    %c0_i32 = arith.constant 0 : i32
    %c0_i32_0 = arith.constant 0 : i32
    %c0_i32_1 = arith.constant 0 : i32
    return %c0_i32, %c0_i32_0 : i32, i32
  }
  func.func @transform_56(%arg0: i32) -> (i32, i32) {
    %c0_i32 = arith.constant 0 : i32
    %c0_i32_0 = arith.constant 0 : i32
    %c0_i32_1 = arith.constant 0 : i32
    return %c0_i32, %c0_i32_0 : i32, i32
  }
  func.func @transform_57(%arg0: i32) -> (i32, i32) {
    %c0_i32 = arith.constant 0 : i32
    %c0_i32_0 = arith.constant 0 : i32
    %c0_i32_1 = arith.constant 0 : i32
    return %c0_i32, %c0_i32_0 : i32, i32
  }
  func.func @transform_58(%arg0: i32) -> (i32, i32) {
    %c0_i32 = arith.constant 0 : i32
    %c0_i32_0 = arith.constant 0 : i32
    %c0_i32_1 = arith.constant 0 : i32
    return %c0_i32, %c0_i32_0 : i32, i32
  }
  func.func @transform_59(%arg0: i32) -> (i32, i32) {
    %c0_i32 = arith.constant 0 : i32
    %c0_i32_0 = arith.constant 0 : i32
    %c0_i32_1 = arith.constant 0 : i32
    return %c0_i32, %c0_i32_0 : i32, i32
  }
  func.func @transform_60(%arg0: i32) -> (i32, i32) {
    %c0_i32 = arith.constant 0 : i32
    %c0_i32_0 = arith.constant 0 : i32
    %c0_i32_1 = arith.constant 0 : i32
    return %c0_i32, %c0_i32_0 : i32, i32
  }
  func.func @transform_61(%arg0: i32) -> (i32, i32) {
    %c0_i32 = arith.constant 0 : i32
    %c0_i32_0 = arith.constant 0 : i32
    %c0_i32_1 = arith.constant 0 : i32
    return %c0_i32, %c0_i32_0 : i32, i32
  }
  func.func @transform_62(%arg0: i32) -> (i32, i32) {
    %c0_i32 = arith.constant 0 : i32
    %c0_i32_0 = arith.constant 0 : i32
    %c0_i32_1 = arith.constant 0 : i32
    return %c0_i32, %c0_i32_0 : i32, i32
  }
  func.func @transform_63(%arg0: i32) -> (i32, i32) {
    %c0_i32 = arith.constant 0 : i32
    %c0_i32_0 = arith.constant 0 : i32
    %c0_i32_1 = arith.constant 0 : i32
    return %c0_i32, %c0_i32_0 : i32, i32
  }
  func.func @transform_64(%arg0: i32) -> (i32, i32) {
    %c0_i32 = arith.constant 0 : i32
    %c0_i32_0 = arith.constant 0 : i32
    %c0_i32_1 = arith.constant 0 : i32
    return %c0_i32, %c0_i32_0 : i32, i32
  }
  func.func @transform_65(%arg0: i32) -> (i32, i32) {
    %c0_i32 = arith.constant 0 : i32
    %c0_i32_0 = arith.constant 0 : i32
    %c0_i32_1 = arith.constant 0 : i32
    return %c0_i32, %c0_i32_0 : i32, i32
  }
  func.func @transform_66(%arg0: i32) -> (i32, i32) {
    %c0_i32 = arith.constant 0 : i32
    %c0_i32_0 = arith.constant 0 : i32
    %c0_i32_1 = arith.constant 0 : i32
    return %c0_i32, %c0_i32_0 : i32, i32
  }
  func.func @transform_67(%arg0: i32) -> (i32, i32) {
    %c0_i32 = arith.constant 0 : i32
    %c0_i32_0 = arith.constant 0 : i32
    %c0_i32_1 = arith.constant 0 : i32
    return %c0_i32, %c0_i32_0 : i32, i32
  }
  func.func @transform_68(%arg0: i32) -> (i32, i32, i32) {
    %c0_i32 = arith.constant 0 : i32
    %c0_i32_0 = arith.constant 0 : i32
    %c0_i32_1 = arith.constant 0 : i32
    return %arg0, %c0_i32, %c0_i32_0 : i32, i32, i32
  }
  func.func @transform_69(%arg0: i32) -> (i32, i32, i32) {
    %c0_i32 = arith.constant 0 : i32
    %c0_i32_0 = arith.constant 0 : i32
    %c0_i32_1 = arith.constant 0 : i32
    return %arg0, %c0_i32, %c0_i32_0 : i32, i32, i32
  }
}

</mosaic_0001>

<llo_original>
// kernel: tpu_custom_call.1
$region0: #{tpu_custom_call.1}
  #allocation0 [shape = 'u32[]', space=smem, size = 0x4, offset = 0x4, fixed_abs, tag = 'smem constant byte address 0x4 - core index']
  #allocation1 [shape = 'u32[144,128]{1,0:T(1,128)}', space=vmem, size = 0x12000, scoped, tag = 'internal scratch']
  %s0 = inlined_call_operand.smem [shape: u32[70], index: -1, kind: input, shape index: {}]
  %s1 = sld [smem:[%s0]]
  %s2 = scalar_lea.smem %s0, 1
  %s3 = sld [smem:[%s2]]
  %s4 = scalar_lea.smem %s0, 2
  %s5 = sld [smem:[%s4]]
  %s6 = scalar_lea.smem %s0, 3
  %s7 = sld [smem:[%s6]]
  %s8 = scalar_lea.smem %s0, 4
  %s9 = sld [smem:[%s8]]
  %s10 = scalar_lea.smem %s0, 5
  %s11 = sld [smem:[%s10]]
  %s12 = scalar_lea.smem %s0, 6
  %s13 = sld [smem:[%s12]]
  %s14 = scalar_lea.smem %s0, 7
  %s15 = sld [smem:[%s14]]
  %s16 = scalar_lea.smem %s0, 8
  %s17 = sld [smem:[%s16]]
  %s18 = scalar_lea.smem %s0, 9
  %s19 = sld [smem:[%s18]]
  %s20 = scalar_lea.smem %s0, 10
  %s21 = sld [smem:[%s20]]
  %s22 = scalar_lea.smem %s0, 11
  %s23 = sld [smem:[%s22]]
  %s24 = scalar_lea.smem %s0, 12
  %s25 = sld [smem:[%s24]]
  %s26 = scalar_lea.smem %s0, 13
  %s27 = sld [smem:[%s26]]
  %s28 = scalar_lea.smem %s0, 14
  %s29 = sld [smem:[%s28]]
  %s30 = scalar_lea.smem %s0, 15
  %s31 = sld [smem:[%s30]]
  %s32 = scalar_lea.smem %s0, 16
  %s33 = sld [smem:[%s32]]
  %s34 = scalar_lea.smem %s0, 17
  %s35 = sld [smem:[%s34]]
  %s36 = scalar_lea.smem %s0, 18
  %s37 = sld [smem:[%s36]]
  %s38 = scalar_lea.smem %s0, 19
  %s39 = sld [smem:[%s38]]
  %s40 = scalar_lea.smem %s0, 20
  %s41 = sld [smem:[%s40]]
  %s42 = scalar_lea.smem %s0, 21
  %s43 = sld [smem:[%s42]]
  %s44 = scalar_lea.smem %s0, 22
  %s45 = sld [smem:[%s44]]
  %s46 = scalar_lea.smem %s0, 23
  %s47 = sld [smem:[%s46]]
  %s48 = scalar_lea.smem %s0, 24
  %s49 = sld [smem:[%s48]]
  %s50 = scalar_lea.smem %s0, 25
  %s51 = sld [smem:[%s50]]
  %s52 = scalar_lea.smem %s0, 26
  %s53 = sld [smem:[%s52]]
  %s54 = scalar_lea.smem %s0, 27
  %s55 = sld [smem:[%s54]]
  %s56 = scalar_lea.smem %s0, 28
  %s57 = sld [smem:[%s56]]
  %s58 = scalar_lea.smem %s0, 29
  %s59 = sld [smem:[%s58]]
  %s60 = scalar_lea.smem %s0, 30
  %s61 = sld [smem:[%s60]]
  %s62 = scalar_lea.smem %s0, 31
  %s63 = sld [smem:[%s62]]
  %s64 = scalar_lea.smem %s0, 32
  %s65 = sld [smem:[%s64]]
  %s66 = scalar_lea.smem %s0, 33
  %s67 = sld [smem:[%s66]]
  %s68 = scalar_lea.smem %s0, 34
  %s69 = sld [smem:[%s68]]
  %s70 = scalar_lea.smem %s0, 35
  %s71 = sld [smem:[%s70]]
  %s72 = scalar_lea.smem %s0, 36
  %s73 = sld [smem:[%s72]]
  %s74 = scalar_lea.smem %s0, 37
  %s75 = sld [smem:[%s74]]
  %s76 = scalar_lea.smem %s0, 38
  %s77 = sld [smem:[%s76]]
  %s78 = scalar_lea.smem %s0, 39
  %s79 = sld [smem:[%s78]]
  %s80 = scalar_lea.smem %s0, 40
  %s81 = sld [smem:[%s80]]
  %s82 = scalar_lea.smem %s0, 41
  %s83 = sld [smem:[%s82]]
  %s84 = scalar_lea.smem %s0, 42
  %s85 = sld [smem:[%s84]]
  %s86 = scalar_lea.smem %s0, 43
  %s87 = sld [smem:[%s86]]
  %s88 = scalar_lea.smem %s0, 44
  %s89 = sld [smem:[%s88]]
  %s90 = scalar_lea.smem %s0, 45
  %s91 = sld [smem:[%s90]]
  %s92 = scalar_lea.smem %s0, 46
  %s93 = sld [smem:[%s92]]
  %s94 = scalar_lea.smem %s0, 47
  %s95 = sld [smem:[%s94]]
  %s96 = scalar_lea.smem %s0, 48
  %s97 = sld [smem:[%s96]]
  %s98 = scalar_lea.smem %s0, 49
  %s99 = sld [smem:[%s98]]
  %s100 = scalar_lea.smem %s0, 50
  %s101 = sld [smem:[%s100]]
  %s102 = scalar_lea.smem %s0, 51
  %s103 = sld [smem:[%s102]]
  %s104 = scalar_lea.smem %s0, 52
  %s105 = sld [smem:[%s104]]
  %s106 = scalar_lea.smem %s0, 53
  %s107 = sld [smem:[%s106]]
  %s108 = scalar_lea.smem %s0, 54
  %s109 = sld [smem:[%s108]]
  %s110 = scalar_lea.smem %s0, 55
  %s111 = sld [smem:[%s110]]
  %s112 = scalar_lea.smem %s0, 56
  %s113 = sld [smem:[%s112]]
  %s114 = scalar_lea.smem %s0, 57
  %s115 = sld [smem:[%s114]]
  %s116 = scalar_lea.smem %s0, 58
  %s117 = sld [smem:[%s116]]
  %s118 = scalar_lea.smem %s0, 59
  %s119 = sld [smem:[%s118]]
  %s120 = scalar_lea.smem %s0, 60
  %s121 = sld [smem:[%s120]]
  %s122 = scalar_lea.smem %s0, 61
  %s123 = sld [smem:[%s122]]
  %s124 = scalar_lea.smem %s0, 62
  %s125 = sld [smem:[%s124]]
  %s126 = scalar_lea.smem %s0, 63
  %s127 = sld [smem:[%s126]]
  %s128 = scalar_lea.smem %s0, 64
  %s129 = sld [smem:[%s128]]
  %s130 = scalar_lea.smem %s0, 65
  %s131 = sld [smem:[%s130]]
  %s132 = scalar_lea.smem %s0, 66
  %s133 = sld [smem:[%s132]]
  %s134 = scalar_lea.smem %s0, 67
  %s135 = sld [smem:[%s134]]
  %s136 = scalar_lea.smem %s0, 68
  %s137 = sld [smem:[%s136]]
  %s138 = scalar_lea.smem %s0, 69
  %s139 = sld [smem:[%s138]]
  %140 = xla_tuple %s137, %s139
  %s141 = sld [smem:[#allocation0]]
  $region401: #{tpu_custom_call.1} parent=0
    _
  %s143 = ssub.s32 1, %s141
  %s144 = scalar_select 0, %s143, %s141
  $region1: #{tpu_custom_call.1} parent=0
    #allocation2 [shape = 'u8[512]{0}', space=vmem, size = 0x400, scoped, tag = 'input window, operand 6, single buffered']
    #allocation3 [shape = 's32[2]{0}', space=sflag, size = 0x8, scoped, tag = 'scoped memory for tpu_custom_call.1']
    #allocation4 [shape = 's32[2]{0}', space=sflag, size = 0x8, scoped, tag = 'scoped memory for tpu_custom_call.1']
    #allocation5 [shape = 'u8[512]{0}', space=vmem, size = 0x400, scoped, tag = 'input window, operand 8, single buffered']
    #allocation6 [shape = 's32[1]{0}', space=sflag, size = 0x4, scoped, tag = 'scoped memory for tpu_custom_call.1']
    #allocation7 [shape = 'u8[512]{0}', space=vmem, size = 0x400, scoped, tag = 'input window, operand 14, single buffered']
    #allocation8 [shape = 'u8[512]{0}', space=vmem, size = 0x400, scoped, tag = 'input window, operand 20, single buffered']
    #allocation9 [shape = 's32[1]{0}', space=sflag, size = 0x4, scoped, tag = 'scoped memory for tpu_custom_call.1']
    #allocation10 [shape = 'u8[512]{0}', space=vmem, size = 0x400, scoped, tag = 'input window, operand 22, single buffered']
    #allocation11 [shape = 'u8[512]{0}', space=vmem, size = 0x400, scoped, tag = 'input window, operand 24, single buffered']
    #allocation12 [shape = 's32[1]{0}', space=sflag, size = 0x4, scoped, tag = 'scoped memory for tpu_custom_call.1']
    #allocation13 [shape = 'u8[512]{0}', space=vmem, size = 0x400, scoped, tag = 'input window, operand 26, single buffered']
    #allocation14 [shape = 'u8[512]{0}', space=vmem, size = 0x400, scoped, tag = 'input window, operand 32, single buffered']
    #allocation15 [shape = 's32[1]{0}', space=sflag, size = 0x4, scoped, tag = 'scoped memory for tpu_custom_call.1']
    #allocation16 [shape = 'u8[512]{0}', space=vmem, size = 0x400, scoped, tag = 'input window, operand 34, single buffered']
    #allocation17 [shape = 'u8[512]{0}', space=vmem, size = 0x400, scoped, tag = 'input window, operand 36, single buffered']
    #allocation18 [shape = 's32[1]{0}', space=sflag, size = 0x4, scoped, tag = 'scoped memory for tpu_custom_call.1']
    #allocation19 [shape = 'u8[512]{0}', space=vmem, size = 0x400, scoped, tag = 'input window, operand 42, single buffered']
    #allocation20 [shape = 'u8[2048]{0}', space=vmem, size = 0x800, scoped, tag = 'input window, operand 47, single buffered']
    #allocation21 [shape = 's32[1]{0}', space=sflag, size = 0x4, scoped, tag = 'scoped memory for tpu_custom_call.1']
    #allocation22 [shape = 'u8[512]{0}', space=vmem, size = 0x400, scoped, tag = 'input window, operand 48, single buffered']
    #allocation23 [shape = 'u8[512]{0}', space=vmem, size = 0x400, scoped, tag = 'input window, operand 50, single buffered']
    #allocation24 [shape = 's32[1]{0}', space=sflag, size = 0x4, scoped, tag = 'scoped memory for tpu_custom_call.1']
    #allocation25 [shape = 'u8[512]{0}', space=vmem, size = 0x400, scoped, tag = 'input window, operand 52, single buffered']
    #allocation26 [shape = 'u8[512]{0}', space=vmem, size = 0x400, scoped, tag = 'input window, operand 54, single buffered']
    #allocation27 [shape = 's32[1]{0}', space=sflag, size = 0x4, scoped, tag = 'scoped memory for tpu_custom_call.1']
    #allocation28 [shape = 'u8[2048]{0}', space=vmem, size = 0x800, scoped, tag = 'input window, operand 58, single buffered']
    #allocation29 [shape = 'u8[2048]{0}', space=vmem, size = 0x800, scoped, tag = 'input window, operand 59, single buffered']
    #allocation30 [shape = 's32[1]{0}', space=sflag, size = 0x4, scoped, tag = 'scoped memory for tpu_custom_call.1']
    #allocation31 [shape = 'u8[512]{0}', space=vmem, size = 0x400, scoped, tag = 'input window, operand 60, single buffered']
    #allocation32 [shape = 'u8[512]{0}', space=vmem, size = 0x400, scoped, tag = 'input window, operand 62, single buffered']
    #allocation33 [shape = 's32[1]{0}', space=sflag, size = 0x4, scoped, tag = 'scoped memory for tpu_custom_call.1']
    #allocation34 [shape = 'u8[512]{0}', space=vmem, size = 0x400, scoped, tag = 'input window, operand 64, single buffered']
    #allocation35 [shape = 'u8[512]{0}', space=vmem, size = 0x400, scoped, tag = 'input window, operand 67, single buffered']
    #allocation36 [shape = 's32[1]{0}', space=sflag, size = 0x4, scoped, tag = 'scoped memory for tpu_custom_call.1']
    #allocation37 [shape = 'u8[1024]{0}', space=vmem, size = 0x400, scoped, tag = 'output window, operand 0']
    #allocation38 [shape = 'u8[1024]{0}', space=vmem, size = 0x400, scoped, tag = 'output window, operand 1']
    #allocation39 [shape = 's32[2]{0}', space=sflag, size = 0x8, scoped, tag = 'scoped memory for tpu_custom_call.1']
    %145 = vsyncpa [#allocation3], 0
    %146 = vsyncpa [#allocation6], 0
    %147 = vsyncpa [#allocation9], 0
    %148 = vsyncpa [#allocation12], 0
    %149 = vsyncpa [#allocation15], 0
    %150 = vsyncpa [#allocation18], 0
    %151 = vsyncpa [#allocation21], 0
    %152 = vsyncpa [#allocation24], 0
    %153 = vsyncpa [#allocation27], 0
    %154 = vsyncpa [#allocation30], 0
    %155 = vsyncpa [#allocation33], 0
    %156 = vsyncpa [#allocation36], 0
    %157 = vsyncpa [#allocation4], 0
    %s158 = scalar_lea.sflag [#allocation4], 1
    %159 = vsyncpa %s158, 0
    %160 = vsyncpa [#allocation39], 0
    %s161 = scalar_lea.sflag [#allocation39], 1
    %162 = vsyncpa %s161, 0
    loop: start=0, step=1, limit=4
    $region2: #{tpu_custom_call.1} parent=1 // loop_pre_header
      _
    $region3: #{tpu_custom_call.1} parent=1 // loop_header
      %s164 = sphi 0, %s168
      %p165 = scmp.ge.s32.totalorder %s164, 4
      %s174 = sphi 0, %s176
      %s177 = sphi 0, %s174
      %s178 = sphi 0, %s177
      %s194 = sphi 0, %s178
      %s198 = sphi 0, %s198
      %s200 = sphi 0, %s198
      %s201 = sphi 0, %s200
      %s215 = sphi 0, %s201
      %s219 = sphi 0, %s219
      %s221 = sphi 0, %s219
      %s222 = sphi 0, %s221
      %s236 = sphi 0, %s222
      %s240 = sphi 0, %s240
      %s242 = sphi 0, %s240
      %s243 = sphi 0, %s242
      %s257 = sphi 0, %s243
      %s261 = sphi 0, %s261
      %s263 = sphi 0, %s261
      %s264 = sphi 0, %s263
      %s278 = sphi 0, %s264
      %s282 = sphi 0, %s282
      %s284 = sphi 0, %s282
      %s285 = sphi 0, %s284
      %s299 = sphi 0, %s285
      %s303 = sphi 0, %s303
      %s305 = sphi 0, %s303
      %s306 = sphi 0, %s305
      %s320 = sphi 0, %s306
      %s324 = sphi 0, %s324
      %s326 = sphi 0, %s324
      %s327 = sphi 0, %s326
      %s341 = sphi 0, %s327
      %s345 = sphi 0, %s345
      %s347 = sphi 0, %s345
      %s348 = sphi 0, %s347
      %s362 = sphi 0, %s348
      %s366 = sphi 0, %s366
      %s368 = sphi 0, %s366
      %s369 = sphi 0, %s368
      %s383 = sphi 0, %s369
      %s387 = sphi 0, %s387
      %s389 = sphi 0, %s387
      %s390 = sphi 0, %s389
      %s404 = sphi 0, %s390
      %s408 = sphi 0, %s408
      %s410 = sphi 0, %s408
      %s411 = sphi 0, %s410
      %s425 = sphi 0, %s411
      %s429 = sphi 0, %s429
      %s431 = sphi 0, %s429
      %s432 = sphi 0, %s431
      %s446 = sphi 0, %s432
      %s450 = sphi 0, %s450
      %s452 = sphi 0, %s450
      %s453 = sphi 0, %s452
      %s467 = sphi 0, %s453
      %s471 = sphi 0, %s471
      %s473 = sphi 0, %s471
      %s474 = sphi 0, %s473
      %s488 = sphi 0, %s474
      %s492 = sphi 0, %s492
      %s494 = sphi 0, %s492
      %s495 = sphi 0, %s494
      %s509 = sphi 0, %s495
      %s513 = sphi 0, %s513
      %s515 = sphi 0, %s513
      %s516 = sphi 0, %s515
      %s530 = sphi 0, %s516
      %s534 = sphi 0, %s534
      %s536 = sphi 0, %s534
      %s537 = sphi 0, %s536
      %s551 = sphi 0, %s537
      %s555 = sphi 0, %s555
      %s557 = sphi 0, %s555
      %s558 = sphi 0, %s557
      %s572 = sphi 0, %s558
      %s576 = sphi 0, %s576
      %s578 = sphi 0, %s576
      %s579 = sphi 0, %s578
      %s593 = sphi 0, %s579
      %s597 = sphi 0, %s597
      %s599 = sphi 0, %s597
      %s600 = sphi 0, %s599
      %s614 = sphi 0, %s600
      %s618 = sphi 0, %s618
      %s620 = sphi 0, %s618
      %s621 = sphi 0, %s620
      %s635 = sphi 0, %s621
      %s639 = sphi 0, %s639
      %s641 = sphi 0, %s639
      %s642 = sphi 0, %s641
      %s656 = sphi 0, %s642
      %s660 = sphi 0, %s660
      %s662 = sphi 0, %s660
      %s663 = sphi 0, %s662
      %s677 = sphi 0, %s663
      %s681 = sphi 0, %s681
      %s683 = sphi 0, %s681
      %s684 = sphi 0, %s683
      %s698 = sphi 0, %s684
      %s702 = sphi 0, %s702
      %s704 = sphi 0, %s702
      %s705 = sphi 0, %s704
      %s719 = sphi 0, %s705
      %s723 = sphi 0, %s723
      %s725 = sphi 0, %s723
      %s726 = sphi 0, %s725
      %s740 = sphi 0, %s726
      %s744 = sphi 0, %s744
      %s746 = sphi 0, %s744
      %s747 = sphi 0, %s746
      %s761 = sphi 0, %s747
      %s765 = sphi 0, %s765
      %s767 = sphi 0, %s765
      %s768 = sphi 0, %s767
      %s782 = sphi 0, %s768
      %s786 = sphi 0, %s786
      %s788 = sphi 0, %s786
      %s789 = sphi 0, %s788
      %s803 = sphi 0, %s789
      %s807 = sphi 0, %s807
      %s809 = sphi 0, %s807
      %s810 = sphi 0, %s809
      %s824 = sphi 0, %s810
      %s828 = sphi 0, %s828
      %s830 = sphi 0, %s828
      %s831 = sphi 0, %s830
      %s845 = sphi 0, %s831
      %s849 = sphi 0, %s849
      %s851 = sphi 0, %s849
      %s852 = sphi 0, %s851
      %s866 = sphi 0, %s852
      %s870 = sphi 0, %s870
      %s872 = sphi 0, %s870
      %s873 = sphi 0, %s872
      %s887 = sphi 0, %s873
      %s891 = sphi 0, %s891
      %s893 = sphi 0, %s891
      %s894 = sphi 0, %s893
      %s908 = sphi 0, %s894
      %s912 = sphi 0, %s912
      %s914 = sphi 0, %s912
      %s915 = sphi 0, %s914
      %s929 = sphi 0, %s915
      %s933 = sphi 0, %s933
      %s935 = sphi 0, %s933
      %s936 = sphi 0, %s935
      %s950 = sphi 0, %s936
      %s954 = sphi 0, %s954
      %s956 = sphi 0, %s954
      %s957 = sphi 0, %s956
      %s971 = sphi 0, %s957
      %s975 = sphi 0, %s975
      %s977 = sphi 0, %s975
      %s978 = sphi 0, %s977
      %s992 = sphi 0, %s978
      %s996 = sphi 0, %s996
      %s998 = sphi 0, %s996
      %s999 = sphi 0, %s998
      %s1013 = sphi 0, %s999
      %s1017 = sphi 0, %s1017
      %s1019 = sphi 0, %s1017
      %s1020 = sphi 0, %s1019
      %s1034 = sphi 0, %s1020
      %s1038 = sphi 0, %s1038
      %s1040 = sphi 0, %s1038
      %s1041 = sphi 0, %s1040
      %s1055 = sphi 0, %s1041
      %s1059 = sphi 0, %s1059
      %s1061 = sphi 0, %s1059
      %s1062 = sphi 0, %s1061
      %s1076 = sphi 0, %s1062
      %s1080 = sphi 0, %s1080
      %s1082 = sphi 0, %s1080
      %s1083 = sphi 0, %s1082
      %s1097 = sphi 0, %s1083
      %s1101 = sphi 0, %s1101
      %s1103 = sphi 0, %s1101
      %s1104 = sphi 0, %s1103
      %s1118 = sphi 0, %s1104
      %s1122 = sphi 0, %s1122
      %s1124 = sphi 0, %s1122
      %s1125 = sphi 0, %s1124
      %s1139 = sphi 0, %s1125
      %s1143 = sphi 0, %s1143
      %s1145 = sphi 0, %s1143
      %s1146 = sphi 0, %s1145
      %s1160 = sphi 0, %s1146
      %s1164 = sphi 0, %s1164
      %s1166 = sphi 0, %s1164
      %s1167 = sphi 0, %s1166
      %s1181 = sphi 0, %s1167
      %s1185 = sphi 0, %s1185
      %s1187 = sphi 0, %s1185
      %s1188 = sphi 0, %s1187
      %s1202 = sphi 0, %s1188
      %s1206 = sphi 0, %s1206
      %s1208 = sphi 0, %s1206
      %s1209 = sphi 0, %s1208
      %s1223 = sphi 0, %s1209
      %s1227 = sphi 0, %s1227
      %s1229 = sphi 0, %s1227
      %s1230 = sphi 0, %s1229
      %s1244 = sphi 0, %s1230
      %s1248 = sphi 0, %s1248
      %s1250 = sphi 0, %s1248
      %s1251 = sphi 0, %s1250
      %s1265 = sphi 0, %s1251
      %s1269 = sphi 0, %s1269
      %s1271 = sphi 0, %s1269
      %s1272 = sphi 0, %s1271
      %s1286 = sphi 0, %s1272
      %s1290 = sphi 0, %s1290
      %s1292 = sphi 0, %s1290
      %s1293 = sphi 0, %s1292
      %s1307 = sphi 0, %s1293
      %s1311 = sphi 0, %s1311
      %s1313 = sphi 0, %s1311
      %s1314 = sphi 0, %s1313
      %s1328 = sphi 0, %s1314
      %s1332 = sphi 0, %s1332
      %s1334 = sphi 0, %s1332
      %s1335 = sphi 0, %s1334
      %s1349 = sphi 0, %s1335
      %s1353 = sphi 0, %s1353
      %s1355 = sphi 0, %s1353
      %s1356 = sphi 0, %s1355
      %s1370 = sphi 0, %s1356
      %s1374 = sphi 0, %s1374
      %s1376 = sphi 0, %s1374
      %s1377 = sphi 0, %s1376
      %s1391 = sphi 0, %s1377
      %s1395 = sphi 0, %s1395
      %s1397 = sphi 0, %s1395
      %s1398 = sphi 0, %s1397
      %s1412 = sphi 0, %s1398
      %s1416 = sphi 0, %s1416
      %s1418 = sphi 0, %s1416
      %s1419 = sphi 0, %s1418
      %s1433 = sphi 0, %s1419
      %s1437 = sphi 0, %s1437
      %s1439 = sphi 0, %s1437
      %s1440 = sphi 0, %s1439
      %s1454 = sphi 0, %s1440
      %s1458 = sphi 0, %s1458
      %s1460 = sphi 0, %s1458
      %s1461 = sphi 0, %s1460
      %s1475 = sphi 0, %s1461
      %s1479 = sphi 0, %s1479
      %s1481 = sphi 0, %s1479
      %s1482 = sphi 0, %s1481
      %s1496 = sphi 0, %s1482
      %s1500 = sphi 0, %s1500
      %s1502 = sphi 0, %s1500
      %s1503 = sphi 0, %s1502
      %s1517 = sphi 0, %s1503
      %s1521 = sphi 0, %s1521
      %s1523 = sphi 0, %s1521
      %s1524 = sphi 0, %s1523
      %s1538 = sphi 0, %s1524
      %s1542 = sphi 0, %s1542
      %s1544 = sphi 0, %s1542
      %s1545 = sphi 0, %s1544
      %s1559 = sphi 0, %s1545
      %s1563 = sphi 0, %s1563
      %s1565 = sphi 0, %s1563
      %s1566 = sphi 0, %s1565
      %s1580 = sphi 0, %s1566
      %s1584 = sphi 0, %s1584
      %s1586 = sphi 0, %s1584
      %s1587 = sphi 0, %s1586
      %s1601 = sphi 0, %s1587
      %s1607 = sphi 0, %s1609
      %s1610 = sphi 0, %s1607
      %s1611 = sphi 0, %s1610
      %s1627 = sphi 0, %s1611
      %s1633 = sphi 0, %s1635
      %s1636 = sphi 0, %s1633
      %s1637 = sphi 0, %s1636
      %s1653 = sphi 0, %s1637
    $region4: #{tpu_custom_call.1} parent=1 // loop_header_branch
      %167 = sbr.rel (%p165) target = $region8
    $region5: #{tpu_custom_call.1} parent=1 // loop_body
      %s169 = ssub.s32 %s164, 1
      %s170 = ssub.s32 %s164, 2
      %s171 = sadd.s32 %s164, 1
      %s172 = ssub.s32 %s164, %s171
      %p173 = scmp.eq.s32.totalorder %s172, 0
      %s175 = sadd.s32 %s174, 1
      %s176 = scalar_select %p173, %s174, %s175
      %p179 = pneg %p173
      %p180 = scmp.eq.s32.totalorder %s164, 1
      %p181 = por %p179, %p180
      %p182 = scmp.ne.s32.totalorder %s174, %s177
      %p183 = scmp.eq.s32.totalorder %s164, 0
      %p184 = por %p182, %p183
      %p185 = scmp.ne.s32.totalorder %s174, %s177
      %p186 = scmp.eq.s32.totalorder %s169, 1
      %p187 = por %p185, %p186
      %p188 = scmp.ne.s32.totalorder %s177, %s178
      %p189 = scmp.eq.s32.totalorder %s169, 0
      %p190 = por %p188, %p189
      %p191 = scmp.ne.s32.totalorder %s177, %s178
      %p192 = scmp.eq.s32.totalorder %s170, 1
      %p193 = por %p191, %p192
      %p195 = scmp.ne.s32.totalorder %s178, %s194
      %p196 = scmp.eq.s32.totalorder %s170, 0
      %p197 = por %p195, %p196
      %s199 = sadd.s32 %s198, 1
      %p202 = scmp.eq.s32.totalorder %s164, 1
      %p203 = scmp.ne.s32.totalorder %s198, %s200
      %p204 = scmp.eq.s32.totalorder %s164, 0
      %p205 = por %p203, %p204
      %p206 = scmp.ne.s32.totalorder %s198, %s200
      %p207 = scmp.eq.s32.totalorder %s169, 1
      %p208 = por %p206, %p207
      %p209 = scmp.ne.s32.totalorder %s200, %s201
      %p210 = scmp.eq.s32.totalorder %s169, 0
      %p211 = por %p209, %p210
      %p212 = scmp.ne.s32.totalorder %s200, %s201
      %p213 = scmp.eq.s32.totalorder %s170, 1
      %p214 = por %p212, %p213
      %p216 = scmp.ne.s32.totalorder %s201, %s215
      %p217 = scmp.eq.s32.totalorder %s170, 0
      %p218 = por %p216, %p217
      %s220 = sadd.s32 %s219, 1
      %p223 = scmp.eq.s32.totalorder %s164, 1
      %p224 = scmp.ne.s32.totalorder %s219, %s221
      %p225 = scmp.eq.s32.totalorder %s164, 0
      %p226 = por %p224, %p225
      %p227 = scmp.ne.s32.totalorder %s219, %s221
      %p228 = scmp.eq.s32.totalorder %s169, 1
      %p229 = por %p227, %p228
      %p230 = scmp.ne.s32.totalorder %s221, %s222
      %p231 = scmp.eq.s32.totalorder %s169, 0
      %p232 = por %p230, %p231
      %p233 = scmp.ne.s32.totalorder %s221, %s222
      %p234 = scmp.eq.s32.totalorder %s170, 1
      %p235 = por %p233, %p234
      %p237 = scmp.ne.s32.totalorder %s222, %s236
      %p238 = scmp.eq.s32.totalorder %s170, 0
      %p239 = por %p237, %p238
      %s241 = sadd.s32 %s240, 1
      %p244 = scmp.eq.s32.totalorder %s164, 1
      %p245 = scmp.ne.s32.totalorder %s240, %s242
      %p246 = scmp.eq.s32.totalorder %s164, 0
      %p247 = por %p245, %p246
      %p248 = scmp.ne.s32.totalorder %s240, %s242
      %p249 = scmp.eq.s32.totalorder %s169, 1
      %p250 = por %p248, %p249
      %p251 = scmp.ne.s32.totalorder %s242, %s243
      %p252 = scmp.eq.s32.totalorder %s169, 0
      %p253 = por %p251, %p252
      %p254 = scmp.ne.s32.totalorder %s242, %s243
      %p255 = scmp.eq.s32.totalorder %s170, 1
      %p256 = por %p254, %p255
      %p258 = scmp.ne.s32.totalorder %s243, %s257
      %p259 = scmp.eq.s32.totalorder %s170, 0
      %p260 = por %p258, %p259
      %s262 = sadd.s32 %s261, 1
      %p265 = scmp.eq.s32.totalorder %s164, 1
      %p266 = scmp.ne.s32.totalorder %s261, %s263
      %p267 = scmp.eq.s32.totalorder %s164, 0
      %p268 = por %p266, %p267
      %p269 = scmp.ne.s32.totalorder %s261, %s263
      %p270 = scmp.eq.s32.totalorder %s169, 1
      %p271 = por %p269, %p270
      %p272 = scmp.ne.s32.totalorder %s263, %s264
      %p273 = scmp.eq.s32.totalorder %s169, 0
      %p274 = por %p272, %p273
      %p275 = scmp.ne.s32.totalorder %s263, %s264
      %p276 = scmp.eq.s32.totalorder %s170, 1
      %p277 = por %p275, %p276
      %p279 = scmp.ne.s32.totalorder %s264, %s278
      %p280 = scmp.eq.s32.totalorder %s170, 0
      %p281 = por %p279, %p280
      %s283 = sadd.s32 %s282, 1
      %p286 = scmp.eq.s32.totalorder %s164, 1
      %p287 = scmp.ne.s32.totalorder %s282, %s284
      %p288 = scmp.eq.s32.totalorder %s164, 0
      %p289 = por %p287, %p288
      %p290 = scmp.ne.s32.totalorder %s282, %s284
      %p291 = scmp.eq.s32.totalorder %s169, 1
      %p292 = por %p290, %p291
      %p293 = scmp.ne.s32.totalorder %s284, %s285
      %p294 = scmp.eq.s32.totalorder %s169, 0
      %p295 = por %p293, %p294
      %p296 = scmp.ne.s32.totalorder %s284, %s285
      %p297 = scmp.eq.s32.totalorder %s170, 1
      %p298 = por %p296, %p297
      %p300 = scmp.ne.s32.totalorder %s285, %s299
      %p301 = scmp.eq.s32.totalorder %s170, 0
      %p302 = por %p300, %p301
      %s304 = sadd.s32 %s303, 1
      %p307 = scmp.eq.s32.totalorder %s164, 1
      %p308 = scmp.ne.s32.totalorder %s303, %s305
      %p309 = scmp.eq.s32.totalorder %s164, 0
      %p310 = por %p308, %p309
      %p311 = scmp.ne.s32.totalorder %s303, %s305
      %p312 = scmp.eq.s32.totalorder %s169, 1
      %p313 = por %p311, %p312
      %p314 = scmp.ne.s32.totalorder %s305, %s306
      %p315 = scmp.eq.s32.totalorder %s169, 0
      %p316 = por %p314, %p315
      %p317 = scmp.ne.s32.totalorder %s305, %s306
      %p318 = scmp.eq.s32.totalorder %s170, 1
      %p319 = por %p317, %p318
      %p321 = scmp.ne.s32.totalorder %s306, %s320
      %p322 = scmp.eq.s32.totalorder %s170, 0
      %p323 = por %p321, %p322
      %s325 = sadd.s32 %s324, 1
      %p328 = scmp.eq.s32.totalorder %s164, 1
      %p329 = scmp.ne.s32.totalorder %s324, %s326
      %p330 = scmp.eq.s32.totalorder %s164, 0
      %p331 = por %p329, %p330
      %p332 = scmp.ne.s32.totalorder %s324, %s326
      %p333 = scmp.eq.s32.totalorder %s169, 1
      %p334 = por %p332, %p333
      %p335 = scmp.ne.s32.totalorder %s326, %s327
      %p336 = scmp.eq.s32.totalorder %s169, 0
      %p337 = por %p335, %p336
      %p338 = scmp.ne.s32.totalorder %s326, %s327
      %p339 = scmp.eq.s32.totalorder %s170, 1
      %p340 = por %p338, %p339
      %p342 = scmp.ne.s32.totalorder %s327, %s341
      %p343 = scmp.eq.s32.totalorder %s170, 0
      %p344 = por %p342, %p343
      %s346 = sadd.s32 %s345, 1
      %p349 = scmp.eq.s32.totalorder %s164, 1
      %p350 = scmp.ne.s32.totalorder %s345, %s347
      %p351 = scmp.eq.s32.totalorder %s164, 0
      %p352 = por %p350, %p351
      %p353 = scmp.ne.s32.totalorder %s345, %s347
      %p354 = scmp.eq.s32.totalorder %s169, 1
      %p355 = por %p353, %p354
      %p356 = scmp.ne.s32.totalorder %s347, %s348
      %p357 = scmp.eq.s32.totalorder %s169, 0
      %p358 = por %p356, %p357
      %p359 = scmp.ne.s32.totalorder %s347, %s348
      %p360 = scmp.eq.s32.totalorder %s170, 1
      %p361 = por %p359, %p360
      %p363 = scmp.ne.s32.totalorder %s348, %s362
      %p364 = scmp.eq.s32.totalorder %s170, 0
      %p365 = por %p363, %p364
      %s367 = sadd.s32 %s366, 1
      %p370 = scmp.eq.s32.totalorder %s164, 1
      %p371 = scmp.ne.s32.totalorder %s366, %s368
      %p372 = scmp.eq.s32.totalorder %s164, 0
      %p373 = por %p371, %p372
      %p374 = scmp.ne.s32.totalorder %s366, %s368
      %p375 = scmp.eq.s32.totalorder %s169, 1
      %p376 = por %p374, %p375
      %p377 = scmp.ne.s32.totalorder %s368, %s369
      %p378 = scmp.eq.s32.totalorder %s169, 0
      %p379 = por %p377, %p378
      %p380 = scmp.ne.s32.totalorder %s368, %s369
      %p381 = scmp.eq.s32.totalorder %s170, 1
      %p382 = por %p380, %p381
      %p384 = scmp.ne.s32.totalorder %s369, %s383
      %p385 = scmp.eq.s32.totalorder %s170, 0
      %p386 = por %p384, %p385
      %s388 = sadd.s32 %s387, 1
      %p391 = scmp.eq.s32.totalorder %s164, 1
      %p392 = scmp.ne.s32.totalorder %s387, %s389
      %p393 = scmp.eq.s32.totalorder %s164, 0
      %p394 = por %p392, %p393
      %p395 = scmp.ne.s32.totalorder %s387, %s389
      %p396 = scmp.eq.s32.totalorder %s169, 1
      %p397 = por %p395, %p396
      %p398 = scmp.ne.s32.totalorder %s389, %s390
      %p399 = scmp.eq.s32.totalorder %s169, 0
      %p400 = por %p398, %p399
      %p401 = scmp.ne.s32.totalorder %s389, %s390
      %p402 = scmp.eq.s32.totalorder %s170, 1
      %p403 = por %p401, %p402
      %p405 = scmp.ne.s32.totalorder %s390, %s404
      %p406 = scmp.eq.s32.totalorder %s170, 0
      %p407 = por %p405, %p406
      %s409 = sadd.s32 %s408, 1
      %p412 = scmp.eq.s32.totalorder %s164, 1
      %p413 = scmp.ne.s32.totalorder %s408, %s410
      %p414 = scmp.eq.s32.totalorder %s164, 0
      %p415 = por %p413, %p414
      %p416 = scmp.ne.s32.totalorder %s408, %s410
      %p417 = scmp.eq.s32.totalorder %s169, 1
      %p418 = por %p416, %p417
      %p419 = scmp.ne.s32.totalorder %s410, %s411
      %p420 = scmp.eq.s32.totalorder %s169, 0
      %p421 = por %p419, %p420
      %p422 = scmp.ne.s32.totalorder %s410, %s411
      %p423 = scmp.eq.s32.totalorder %s170, 1
      %p424 = por %p422, %p423
      %p426 = scmp.ne.s32.totalorder %s411, %s425
      %p427 = scmp.eq.s32.totalorder %s170, 0
      %p428 = por %p426, %p427
      %s430 = sadd.s32 %s429, 1
      %p433 = scmp.eq.s32.totalorder %s164, 1
      %p434 = scmp.ne.s32.totalorder %s429, %s431
      %p435 = scmp.eq.s32.totalorder %s164, 0
      %p436 = por %p434, %p435
      %p437 = scmp.ne.s32.totalorder %s429, %s431
      %p438 = scmp.eq.s32.totalorder %s169, 1
      %p439 = por %p437, %p438
      %p440 = scmp.ne.s32.totalorder %s431, %s432
      %p441 = scmp.eq.s32.totalorder %s169, 0
      %p442 = por %p440, %p441
      %p443 = scmp.ne.s32.totalorder %s431, %s432
      %p444 = scmp.eq.s32.totalorder %s170, 1
      %p445 = por %p443, %p444
      %p447 = scmp.ne.s32.totalorder %s432, %s446
      %p448 = scmp.eq.s32.totalorder %s170, 0
      %p449 = por %p447, %p448
      %s451 = sadd.s32 %s450, 1
      %p454 = scmp.eq.s32.totalorder %s164, 1
      %p455 = scmp.ne.s32.totalorder %s450, %s452
      %p456 = scmp.eq.s32.totalorder %s164, 0
      %p457 = por %p455, %p456
      %p458 = scmp.ne.s32.totalorder %s450, %s452
      %p459 = scmp.eq.s32.totalorder %s169, 1
      %p460 = por %p458, %p459
      %p461 = scmp.ne.s32.totalorder %s452, %s453
      %p462 = scmp.eq.s32.totalorder %s169, 0
      %p463 = por %p461, %p462
      %p464 = scmp.ne.s32.totalorder %s452, %s453
      %p465 = scmp.eq.s32.totalorder %s170, 1
      %p466 = por %p464, %p465
      %p468 = scmp.ne.s32.totalorder %s453, %s467
      %p469 = scmp.eq.s32.totalorder %s170, 0
      %p470 = por %p468, %p469
      %s472 = sadd.s32 %s471, 1
      %p475 = scmp.eq.s32.totalorder %s164, 1
      %p476 = scmp.ne.s32.totalorder %s471, %s473
      %p477 = scmp.eq.s32.totalorder %s164, 0
      %p478 = por %p476, %p477
      %p479 = scmp.ne.s32.totalorder %s471, %s473
      %p480 = scmp.eq.s32.totalorder %s169, 1
      %p481 = por %p479, %p480
      %p482 = scmp.ne.s32.totalorder %s473, %s474
      %p483 = scmp.eq.s32.totalorder %s169, 0
      %p484 = por %p482, %p483
      %p485 = scmp.ne.s32.totalorder %s473, %s474
      %p486 = scmp.eq.s32.totalorder %s170, 1
      %p487 = por %p485, %p486
      %p489 = scmp.ne.s32.totalorder %s474, %s488
      %p490 = scmp.eq.s32.totalorder %s170, 0
      %p491 = por %p489, %p490
      %s493 = sadd.s32 %s492, 1
      %p496 = scmp.eq.s32.totalorder %s164, 1
      %p497 = scmp.ne.s32.totalorder %s492, %s494
      %p498 = scmp.eq.s32.totalorder %s164, 0
      %p499 = por %p497, %p498
      %p500 = scmp.ne.s32.totalorder %s492, %s494
      %p501 = scmp.eq.s32.totalorder %s169, 1
      %p502 = por %p500, %p501
      %p503 = scmp.ne.s32.totalorder %s494, %s495
      %p504 = scmp.eq.s32.totalorder %s169, 0
      %p505 = por %p503, %p504
      %p506 = scmp.ne.s32.totalorder %s494, %s495
      %p507 = scmp.eq.s32.totalorder %s170, 1
      %p508 = por %p506, %p507
      %p510 = scmp.ne.s32.totalorder %s495, %s509
      %p511 = scmp.eq.s32.totalorder %s170, 0
      %p512 = por %p510, %p511
      %s514 = sadd.s32 %s513, 1
      %p517 = scmp.eq.s32.totalorder %s164, 1
      %p518 = scmp.ne.s32.totalorder %s513, %s515
      %p519 = scmp.eq.s32.totalorder %s164, 0
      %p520 = por %p518, %p519
      %p521 = scmp.ne.s32.totalorder %s513, %s515
      %p522 = scmp.eq.s32.totalorder %s169, 1
      %p523 = por %p521, %p522
      %p524 = scmp.ne.s32.totalorder %s515, %s516
      %p525 = scmp.eq.s32.totalorder %s169, 0
      %p526 = por %p524, %p525
      %p527 = scmp.ne.s32.totalorder %s515, %s516
      %p528 = scmp.eq.s32.totalorder %s170, 1
      %p529 = por %p527, %p528
      %p531 = scmp.ne.s32.totalorder %s516, %s530
      %p532 = scmp.eq.s32.totalorder %s170, 0
      %p533 = por %p531, %p532
      %s535 = sadd.s32 %s534, 1
      %p538 = scmp.eq.s32.totalorder %s164, 1
      %p539 = scmp.ne.s32.totalorder %s534, %s536
      %p540 = scmp.eq.s32.totalorder %s164, 0
      %p541 = por %p539, %p540
      %p542 = scmp.ne.s32.totalorder %s534, %s536
      %p543 = scmp.eq.s32.totalorder %s169, 1
      %p544 = por %p542, %p543
      %p545 = scmp.ne.s32.totalorder %s536, %s537
      %p546 = scmp.eq.s32.totalorder %s169, 0
      %p547 = por %p545, %p546
      %p548 = scmp.ne.s32.totalorder %s536, %s537
      %p549 = scmp.eq.s32.totalorder %s170, 1
      %p550 = por %p548, %p549
      %p552 = scmp.ne.s32.totalorder %s537, %s551
      %p553 = scmp.eq.s32.totalorder %s170, 0
      %p554 = por %p552, %p553
      %s556 = sadd.s32 %s555, 1
      %p559 = scmp.eq.s32.totalorder %s164, 1
      %p560 = scmp.ne.s32.totalorder %s555, %s557
      %p561 = scmp.eq.s32.totalorder %s164, 0
      %p562 = por %p560, %p561
      %p563 = scmp.ne.s32.totalorder %s555, %s557
      %p564 = scmp.eq.s32.totalorder %s169, 1
      %p565 = por %p563, %p564
      %p566 = scmp.ne.s32.totalorder %s557, %s558
      %p567 = scmp.eq.s32.totalorder %s169, 0
      %p568 = por %p566, %p567
      %p569 = scmp.ne.s32.totalorder %s557, %s558
      %p570 = scmp.eq.s32.totalorder %s170, 1
      %p571 = por %p569, %p570
      %p573 = scmp.ne.s32.totalorder %s558, %s572
      %p574 = scmp.eq.s32.totalorder %s170, 0
      %p575 = por %p573, %p574
      %s577 = sadd.s32 %s576, 1
      %p580 = scmp.eq.s32.totalorder %s164, 1
      %p581 = scmp.ne.s32.totalorder %s576, %s578
      %p582 = scmp.eq.s32.totalorder %s164, 0
      %p583 = por %p581, %p582
      %p584 = scmp.ne.s32.totalorder %s576, %s578
      %p585 = scmp.eq.s32.totalorder %s169, 1
      %p586 = por %p584, %p585
      %p587 = scmp.ne.s32.totalorder %s578, %s579
      %p588 = scmp.eq.s32.totalorder %s169, 0
      %p589 = por %p587, %p588
      %p590 = scmp.ne.s32.totalorder %s578, %s579
      %p591 = scmp.eq.s32.totalorder %s170, 1
      %p592 = por %p590, %p591
      %p594 = scmp.ne.s32.totalorder %s579, %s593
      %p595 = scmp.eq.s32.totalorder %s170, 0
      %p596 = por %p594, %p595
      %s598 = sadd.s32 %s597, 1
      %p601 = scmp.eq.s32.totalorder %s164, 1
      %p602 = scmp.ne.s32.totalorder %s597, %s599
      %p603 = scmp.eq.s32.totalorder %s164, 0
      %p604 = por %p602, %p603
      %p605 = scmp.ne.s32.totalorder %s597, %s599
      %p606 = scmp.eq.s32.totalorder %s169, 1
      %p607 = por %p605, %p606
      %p608 = scmp.ne.s32.totalorder %s599, %s600
      %p609 = scmp.eq.s32.totalorder %s169, 0
      %p610 = por %p608, %p609
      %p611 = scmp.ne.s32.totalorder %s599, %s600
      %p612 = scmp.eq.s32.totalorder %s170, 1
      %p613 = por %p611, %p612
      %p615 = scmp.ne.s32.totalorder %s600, %s614
      %p616 = scmp.eq.s32.totalorder %s170, 0
      %p617 = por %p615, %p616
      %s619 = sadd.s32 %s618, 1
      %p622 = scmp.eq.s32.totalorder %s164, 1
      %p623 = scmp.ne.s32.totalorder %s618, %s620
      %p624 = scmp.eq.s32.totalorder %s164, 0
      %p625 = por %p623, %p624
      %p626 = scmp.ne.s32.totalorder %s618, %s620
      %p627 = scmp.eq.s32.totalorder %s169, 1
      %p628 = por %p626, %p627
      %p629 = scmp.ne.s32.totalorder %s620, %s621
      %p630 = scmp.eq.s32.totalorder %s169, 0
      %p631 = por %p629, %p630
      %p632 = scmp.ne.s32.totalorder %s620, %s621
      %p633 = scmp.eq.s32.totalorder %s170, 1
      %p634 = por %p632, %p633
      %p636 = scmp.ne.s32.totalorder %s621, %s635
      %p637 = scmp.eq.s32.totalorder %s170, 0
      %p638 = por %p636, %p637
      %s640 = sadd.s32 %s639, 1
      %p643 = scmp.eq.s32.totalorder %s164, 1
      %p644 = scmp.ne.s32.totalorder %s639, %s641
      %p645 = scmp.eq.s32.totalorder %s164, 0
      %p646 = por %p644, %p645
      %p647 = scmp.ne.s32.totalorder %s639, %s641
      %p648 = scmp.eq.s32.totalorder %s169, 1
      %p649 = por %p647, %p648
      %p650 = scmp.ne.s32.totalorder %s641, %s642
      %p651 = scmp.eq.s32.totalorder %s169, 0
      %p652 = por %p650, %p651
      %p653 = scmp.ne.s32.totalorder %s641, %s642
      %p654 = scmp.eq.s32.totalorder %s170, 1
      %p655 = por %p653, %p654
      %p657 = scmp.ne.s32.totalorder %s642, %s656
      %p658 = scmp.eq.s32.totalorder %s170, 0
      %p659 = por %p657, %p658
      %s661 = sadd.s32 %s660, 1
      %p664 = scmp.eq.s32.totalorder %s164, 1
      %p665 = scmp.ne.s32.totalorder %s660, %s662
      %p666 = scmp.eq.s32.totalorder %s164, 0
      %p667 = por %p665, %p666
      %p668 = scmp.ne.s32.totalorder %s660, %s662
      %p669 = scmp.eq.s32.totalorder %s169, 1
      %p670 = por %p668, %p669
      %p671 = scmp.ne.s32.totalorder %s662, %s663
      %p672 = scmp.eq.s32.totalorder %s169, 0
      %p673 = por %p671, %p672
      %p674 = scmp.ne.s32.totalorder %s662, %s663
      %p675 = scmp.eq.s32.totalorder %s170, 1
      %p676 = por %p674, %p675
      %p678 = scmp.ne.s32.totalorder %s663, %s677
      %p679 = scmp.eq.s32.totalorder %s170, 0
      %p680 = por %p678, %p679
      %s682 = sadd.s32 %s681, 1
      %p685 = scmp.eq.s32.totalorder %s164, 1
      %p686 = scmp.ne.s32.totalorder %s681, %s683
      %p687 = scmp.eq.s32.totalorder %s164, 0
      %p688 = por %p686, %p687
      %p689 = scmp.ne.s32.totalorder %s681, %s683
      %p690 = scmp.eq.s32.totalorder %s169, 1
      %p691 = por %p689, %p690
      %p692 = scmp.ne.s32.totalorder %s683, %s684
      %p693 = scmp.eq.s32.totalorder %s169, 0
      %p694 = por %p692, %p693
      %p695 = scmp.ne.s32.totalorder %s683, %s684
      %p696 = scmp.eq.s32.totalorder %s170, 1
      %p697 = por %p695, %p696
      %p699 = scmp.ne.s32.totalorder %s684, %s698
      %p700 = scmp.eq.s32.totalorder %s170, 0
      %p701 = por %p699, %p700
      %s703 = sadd.s32 %s702, 1
      %p706 = scmp.eq.s32.totalorder %s164, 1
      %p707 = scmp.ne.s32.totalorder %s702, %s704
      %p708 = scmp.eq.s32.totalorder %s164, 0
      %p709 = por %p707, %p708
      %p710 = scmp.ne.s32.totalorder %s702, %s704
      %p711 = scmp.eq.s32.totalorder %s169, 1
      %p712 = por %p710, %p711
      %p713 = scmp.ne.s32.totalorder %s704, %s705
      %p714 = scmp.eq.s32.totalorder %s169, 0
      %p715 = por %p713, %p714
      %p716 = scmp.ne.s32.totalorder %s704, %s705
      %p717 = scmp.eq.s32.totalorder %s170, 1
      %p718 = por %p716, %p717
      %p720 = scmp.ne.s32.totalorder %s705, %s719
      %p721 = scmp.eq.s32.totalorder %s170, 0
      %p722 = por %p720, %p721
      %s724 = sadd.s32 %s723, 1
      %p727 = scmp.eq.s32.totalorder %s164, 1
      %p728 = scmp.ne.s32.totalorder %s723, %s725
      %p729 = scmp.eq.s32.totalorder %s164, 0
      %p730 = por %p728, %p729
      %p731 = scmp.ne.s32.totalorder %s723, %s725
      %p732 = scmp.eq.s32.totalorder %s169, 1
      %p733 = por %p731, %p732
      %p734 = scmp.ne.s32.totalorder %s725, %s726
      %p735 = scmp.eq.s32.totalorder %s169, 0
      %p736 = por %p734, %p735
      %p737 = scmp.ne.s32.totalorder %s725, %s726
      %p738 = scmp.eq.s32.totalorder %s170, 1
      %p739 = por %p737, %p738
      %p741 = scmp.ne.s32.totalorder %s726, %s740
      %p742 = scmp.eq.s32.totalorder %s170, 0
      %p743 = por %p741, %p742
      %s745 = sadd.s32 %s744, 1
      %p748 = scmp.eq.s32.totalorder %s164, 1
      %p749 = scmp.ne.s32.totalorder %s744, %s746
      %p750 = scmp.eq.s32.totalorder %s164, 0
      %p751 = por %p749, %p750
      %p752 = scmp.ne.s32.totalorder %s744, %s746
      %p753 = scmp.eq.s32.totalorder %s169, 1
      %p754 = por %p752, %p753
      %p755 = scmp.ne.s32.totalorder %s746, %s747
      %p756 = scmp.eq.s32.totalorder %s169, 0
      %p757 = por %p755, %p756
      %p758 = scmp.ne.s32.totalorder %s746, %s747
      %p759 = scmp.eq.s32.totalorder %s170, 1
      %p760 = por %p758, %p759
      %p762 = scmp.ne.s32.totalorder %s747, %s761
      %p763 = scmp.eq.s32.totalorder %s170, 0
      %p764 = por %p762, %p763
      %s766 = sadd.s32 %s765, 1
      %p769 = scmp.eq.s32.totalorder %s164, 1
      %p770 = scmp.ne.s32.totalorder %s765, %s767
      %p771 = scmp.eq.s32.totalorder %s164, 0
      %p772 = por %p770, %p771
      %p773 = scmp.ne.s32.totalorder %s765, %s767
      %p774 = scmp.eq.s32.totalorder %s169, 1
      %p775 = por %p773, %p774
      %p776 = scmp.ne.s32.totalorder %s767, %s768
      %p777 = scmp.eq.s32.totalorder %s169, 0
      %p778 = por %p776, %p777
      %p779 = scmp.ne.s32.totalorder %s767, %s768
      %p780 = scmp.eq.s32.totalorder %s170, 1
      %p781 = por %p779, %p780
      %p783 = scmp.ne.s32.totalorder %s768, %s782
      %p784 = scmp.eq.s32.totalorder %s170, 0
      %p785 = por %p783, %p784
      %s787 = sadd.s32 %s786, 1
      %p790 = scmp.eq.s32.totalorder %s164, 1
      %p791 = scmp.ne.s32.totalorder %s786, %s788
      %p792 = scmp.eq.s32.totalorder %s164, 0
      %p793 = por %p791, %p792
      %p794 = scmp.ne.s32.totalorder %s786, %s788
      %p795 = scmp.eq.s32.totalorder %s169, 1
      %p796 = por %p794, %p795
      %p797 = scmp.ne.s32.totalorder %s788, %s789
      %p798 = scmp.eq.s32.totalorder %s169, 0
      %p799 = por %p797, %p798
      %p800 = scmp.ne.s32.totalorder %s788, %s789
      %p801 = scmp.eq.s32.totalorder %s170, 1
      %p802 = por %p800, %p801
      %p804 = scmp.ne.s32.totalorder %s789, %s803
      %p805 = scmp.eq.s32.totalorder %s170, 0
      %p806 = por %p804, %p805
      %s808 = sadd.s32 %s807, 1
      %p811 = scmp.eq.s32.totalorder %s164, 1
      %p812 = scmp.ne.s32.totalorder %s807, %s809
      %p813 = scmp.eq.s32.totalorder %s164, 0
      %p814 = por %p812, %p813
      %p815 = scmp.ne.s32.totalorder %s807, %s809
      %p816 = scmp.eq.s32.totalorder %s169, 1
      %p817 = por %p815, %p816
      %p818 = scmp.ne.s32.totalorder %s809, %s810
      %p819 = scmp.eq.s32.totalorder %s169, 0
      %p820 = por %p818, %p819
      %p821 = scmp.ne.s32.totalorder %s809, %s810
      %p822 = scmp.eq.s32.totalorder %s170, 1
      %p823 = por %p821, %p822
      %p825 = scmp.ne.s32.totalorder %s810, %s824
      %p826 = scmp.eq.s32.totalorder %s170, 0
      %p827 = por %p825, %p826
      %s829 = sadd.s32 %s828, 1
      %p832 = scmp.eq.s32.totalorder %s164, 1
      %p833 = scmp.ne.s32.totalorder %s828, %s830
      %p834 = scmp.eq.s32.totalorder %s164, 0
      %p835 = por %p833, %p834
      %p836 = scmp.ne.s32.totalorder %s828, %s830
      %p837 = scmp.eq.s32.totalorder %s169, 1
      %p838 = por %p836, %p837
      %p839 = scmp.ne.s32.totalorder %s830, %s831
      %p840 = scmp.eq.s32.totalorder %s169, 0
      %p841 = por %p839, %p840
      %p842 = scmp.ne.s32.totalorder %s830, %s831
      %p843 = scmp.eq.s32.totalorder %s170, 1
      %p844 = por %p842, %p843
      %p846 = scmp.ne.s32.totalorder %s831, %s845
      %p847 = scmp.eq.s32.totalorder %s170, 0
      %p848 = por %p846, %p847
      %s850 = sadd.s32 %s849, 1
      %p853 = scmp.eq.s32.totalorder %s164, 1
      %p854 = scmp.ne.s32.totalorder %s849, %s851
      %p855 = scmp.eq.s32.totalorder %s164, 0
      %p856 = por %p854, %p855
      %p857 = scmp.ne.s32.totalorder %s849, %s851
      %p858 = scmp.eq.s32.totalorder %s169, 1
      %p859 = por %p857, %p858
      %p860 = scmp.ne.s32.totalorder %s851, %s852
      %p861 = scmp.eq.s32.totalorder %s169, 0
      %p862 = por %p860, %p861
      %p863 = scmp.ne.s32.totalorder %s851, %s852
      %p864 = scmp.eq.s32.totalorder %s170, 1
      %p865 = por %p863, %p864
      %p867 = scmp.ne.s32.totalorder %s852, %s866
      %p868 = scmp.eq.s32.totalorder %s170, 0
      %p869 = por %p867, %p868
      %s871 = sadd.s32 %s870, 1
      %p874 = scmp.eq.s32.totalorder %s164, 1
      %p875 = scmp.ne.s32.totalorder %s870, %s872
      %p876 = scmp.eq.s32.totalorder %s164, 0
      %p877 = por %p875, %p876
      %p878 = scmp.ne.s32.totalorder %s870, %s872
      %p879 = scmp.eq.s32.totalorder %s169, 1
      %p880 = por %p878, %p879
      %p881 = scmp.ne.s32.totalorder %s872, %s873
      %p882 = scmp.eq.s32.totalorder %s169, 0
      %p883 = por %p881, %p882
      %p884 = scmp.ne.s32.totalorder %s872, %s873
      %p885 = scmp.eq.s32.totalorder %s170, 1
      %p886 = por %p884, %p885
      %p888 = scmp.ne.s32.totalorder %s873, %s887
      %p889 = scmp.eq.s32.totalorder %s170, 0
      %p890 = por %p888, %p889
      %s892 = sadd.s32 %s891, 1
      %p895 = scmp.eq.s32.totalorder %s164, 1
      %p896 = scmp.ne.s32.totalorder %s891, %s893
      %p897 = scmp.eq.s32.totalorder %s164, 0
      %p898 = por %p896, %p897
      %p899 = scmp.ne.s32.totalorder %s891, %s893
      %p900 = scmp.eq.s32.totalorder %s169, 1
      %p901 = por %p899, %p900
      %p902 = scmp.ne.s32.totalorder %s893, %s894
      %p903 = scmp.eq.s32.totalorder %s169, 0
      %p904 = por %p902, %p903
      %p905 = scmp.ne.s32.totalorder %s893, %s894
      %p906 = scmp.eq.s32.totalorder %s170, 1
      %p907 = por %p905, %p906
      %p909 = scmp.ne.s32.totalorder %s894, %s908
      %p910 = scmp.eq.s32.totalorder %s170, 0
      %p911 = por %p909, %p910
      %s913 = sadd.s32 %s912, 1
      %p916 = scmp.eq.s32.totalorder %s164, 1
      %p917 = scmp.ne.s32.totalorder %s912, %s914
      %p918 = scmp.eq.s32.totalorder %s164, 0
      %p919 = por %p917, %p918
      %p920 = scmp.ne.s32.totalorder %s912, %s914
      %p921 = scmp.eq.s32.totalorder %s169, 1
      %p922 = por %p920, %p921
      %p923 = scmp.ne.s32.totalorder %s914, %s915
      %p924 = scmp.eq.s32.totalorder %s169, 0
      %p925 = por %p923, %p924
      %p926 = scmp.ne.s32.totalorder %s914, %s915
      %p927 = scmp.eq.s32.totalorder %s170, 1
      %p928 = por %p926, %p927
      %p930 = scmp.ne.s32.totalorder %s915, %s929
      %p931 = scmp.eq.s32.totalorder %s170, 0
      %p932 = por %p930, %p931
      %s934 = sadd.s32 %s933, 1
      %p937 = scmp.eq.s32.totalorder %s164, 1
      %p938 = scmp.ne.s32.totalorder %s933, %s935
      %p939 = scmp.eq.s32.totalorder %s164, 0
      %p940 = por %p938, %p939
      %p941 = scmp.ne.s32.totalorder %s933, %s935
      %p942 = scmp.eq.s32.totalorder %s169, 1
      %p943 = por %p941, %p942
      %p944 = scmp.ne.s32.totalorder %s935, %s936
      %p945 = scmp.eq.s32.totalorder %s169, 0
      %p946 = por %p944, %p945
      %p947 = scmp.ne.s32.totalorder %s935, %s936
      %p948 = scmp.eq.s32.totalorder %s170, 1
      %p949 = por %p947, %p948
      %p951 = scmp.ne.s32.totalorder %s936, %s950
      %p952 = scmp.eq.s32.totalorder %s170, 0
      %p953 = por %p951, %p952
      %s955 = sadd.s32 %s954, 1
      %p958 = scmp.eq.s32.totalorder %s164, 1
      %p959 = scmp.ne.s32.totalorder %s954, %s956
      %p960 = scmp.eq.s32.totalorder %s164, 0
      %p961 = por %p959, %p960
      %p962 = scmp.ne.s32.totalorder %s954, %s956
      %p963 = scmp.eq.s32.totalorder %s169, 1
      %p964 = por %p962, %p963
      %p965 = scmp.ne.s32.totalorder %s956, %s957
      %p966 = scmp.eq.s32.totalorder %s169, 0
      %p967 = por %p965, %p966
      %p968 = scmp.ne.s32.totalorder %s956, %s957
      %p969 = scmp.eq.s32.totalorder %s170, 1
      %p970 = por %p968, %p969
      %p972 = scmp.ne.s32.totalorder %s957, %s971
      %p973 = scmp.eq.s32.totalorder %s170, 0
      %p974 = por %p972, %p973
      %s976 = sadd.s32 %s975, 1
      %p979 = scmp.eq.s32.totalorder %s164, 1
      %p980 = scmp.ne.s32.totalorder %s975, %s977
      %p981 = scmp.eq.s32.totalorder %s164, 0
      %p982 = por %p980, %p981
      %p983 = scmp.ne.s32.totalorder %s975, %s977
      %p984 = scmp.eq.s32.totalorder %s169, 1
      %p985 = por %p983, %p984
      %p986 = scmp.ne.s32.totalorder %s977, %s978
      %p987 = scmp.eq.s32.totalorder %s169, 0
      %p988 = por %p986, %p987
      %p989 = scmp.ne.s32.totalorder %s977, %s978
      %p990 = scmp.eq.s32.totalorder %s170, 1
      %p991 = por %p989, %p990
      %p993 = scmp.ne.s32.totalorder %s978, %s992
      %p994 = scmp.eq.s32.totalorder %s170, 0
      %p995 = por %p993, %p994
      %s997 = sadd.s32 %s996, 1
      %p1000 = scmp.eq.s32.totalorder %s164, 1
      %p1001 = scmp.ne.s32.totalorder %s996, %s998
      %p1002 = scmp.eq.s32.totalorder %s164, 0
      %p1003 = por %p1001, %p1002
      %p1004 = scmp.ne.s32.totalorder %s996, %s998
      %p1005 = scmp.eq.s32.totalorder %s169, 1
      %p1006 = por %p1004, %p1005
      %p1007 = scmp.ne.s32.totalorder %s998, %s999
      %p1008 = scmp.eq.s32.totalorder %s169, 0
      %p1009 = por %p1007, %p1008
      %p1010 = scmp.ne.s32.totalorder %s998, %s999
      %p1011 = scmp.eq.s32.totalorder %s170, 1
      %p1012 = por %p1010, %p1011
      %p1014 = scmp.ne.s32.totalorder %s999, %s1013
      %p1015 = scmp.eq.s32.totalorder %s170, 0
      %p1016 = por %p1014, %p1015
      %s1018 = sadd.s32 %s1017, 1
      %p1021 = scmp.eq.s32.totalorder %s164, 1
      %p1022 = scmp.ne.s32.totalorder %s1017, %s1019
      %p1023 = scmp.eq.s32.totalorder %s164, 0
      %p1024 = por %p1022, %p1023
      %p1025 = scmp.ne.s32.totalorder %s1017, %s1019
      %p1026 = scmp.eq.s32.totalorder %s169, 1
      %p1027 = por %p1025, %p1026
      %p1028 = scmp.ne.s32.totalorder %s1019, %s1020
      %p1029 = scmp.eq.s32.totalorder %s169, 0
      %p1030 = por %p1028, %p1029
      %p1031 = scmp.ne.s32.totalorder %s1019, %s1020
      %p1032 = scmp.eq.s32.totalorder %s170, 1
      %p1033 = por %p1031, %p1032
      %p1035 = scmp.ne.s32.totalorder %s1020, %s1034
      %p1036 = scmp.eq.s32.totalorder %s170, 0
      %p1037 = por %p1035, %p1036
      %s1039 = sadd.s32 %s1038, 1
      %p1042 = scmp.eq.s32.totalorder %s164, 1
      %p1043 = scmp.ne.s32.totalorder %s1038, %s1040
      %p1044 = scmp.eq.s32.totalorder %s164, 0
      %p1045 = por %p1043, %p1044
      %p1046 = scmp.ne.s32.totalorder %s1038, %s1040
      %p1047 = scmp.eq.s32.totalorder %s169, 1
      %p1048 = por %p1046, %p1047
      %p1049 = scmp.ne.s32.totalorder %s1040, %s1041
      %p1050 = scmp.eq.s32.totalorder %s169, 0
      %p1051 = por %p1049, %p1050
      %p1052 = scmp.ne.s32.totalorder %s1040, %s1041
      %p1053 = scmp.eq.s32.totalorder %s170, 1
      %p1054 = por %p1052, %p1053
      %p1056 = scmp.ne.s32.totalorder %s1041, %s1055
      %p1057 = scmp.eq.s32.totalorder %s170, 0
      %p1058 = por %p1056, %p1057
      %s1060 = sadd.s32 %s1059, 1
      %p1063 = scmp.eq.s32.totalorder %s164, 1
      %p1064 = scmp.ne.s32.totalorder %s1059, %s1061
      %p1065 = scmp.eq.s32.totalorder %s164, 0
      %p1066 = por %p1064, %p1065
      %p1067 = scmp.ne.s32.totalorder %s1059, %s1061
      %p1068 = scmp.eq.s32.totalorder %s169, 1
      %p1069 = por %p1067, %p1068
      %p1070 = scmp.ne.s32.totalorder %s1061, %s1062
      %p1071 = scmp.eq.s32.totalorder %s169, 0
      %p1072 = por %p1070, %p1071
      %p1073 = scmp.ne.s32.totalorder %s1061, %s1062
      %p1074 = scmp.eq.s32.totalorder %s170, 1
      %p1075 = por %p1073, %p1074
      %p1077 = scmp.ne.s32.totalorder %s1062, %s1076
      %p1078 = scmp.eq.s32.totalorder %s170, 0
      %p1079 = por %p1077, %p1078
      %s1081 = sadd.s32 %s1080, 1
      %p1084 = scmp.eq.s32.totalorder %s164, 1
      %p1085 = scmp.ne.s32.totalorder %s1080, %s1082
      %p1086 = scmp.eq.s32.totalorder %s164, 0
      %p1087 = por %p1085, %p1086
      %p1088 = scmp.ne.s32.totalorder %s1080, %s1082
      %p1089 = scmp.eq.s32.totalorder %s169, 1
      %p1090 = por %p1088, %p1089
      %p1091 = scmp.ne.s32.totalorder %s1082, %s1083
      %p1092 = scmp.eq.s32.totalorder %s169, 0
      %p1093 = por %p1091, %p1092
      %p1094 = scmp.ne.s32.totalorder %s1082, %s1083
      %p1095 = scmp.eq.s32.totalorder %s170, 1
      %p1096 = por %p1094, %p1095
      %p1098 = scmp.ne.s32.totalorder %s1083, %s1097
      %p1099 = scmp.eq.s32.totalorder %s170, 0
      %p1100 = por %p1098, %p1099
      %s1102 = sadd.s32 %s1101, 1
      %p1105 = scmp.eq.s32.totalorder %s164, 1
      %p1106 = scmp.ne.s32.totalorder %s1101, %s1103
      %p1107 = scmp.eq.s32.totalorder %s164, 0
      %p1108 = por %p1106, %p1107
      %p1109 = scmp.ne.s32.totalorder %s1101, %s1103
      %p1110 = scmp.eq.s32.totalorder %s169, 1
      %p1111 = por %p1109, %p1110
      %p1112 = scmp.ne.s32.totalorder %s1103, %s1104
      %p1113 = scmp.eq.s32.totalorder %s169, 0
      %p1114 = por %p1112, %p1113
      %p1115 = scmp.ne.s32.totalorder %s1103, %s1104
      %p1116 = scmp.eq.s32.totalorder %s170, 1
      %p1117 = por %p1115, %p1116
      %p1119 = scmp.ne.s32.totalorder %s1104, %s1118
      %p1120 = scmp.eq.s32.totalorder %s170, 0
      %p1121 = por %p1119, %p1120
      %s1123 = sadd.s32 %s1122, 1
      %p1126 = scmp.eq.s32.totalorder %s164, 1
      %p1127 = scmp.ne.s32.totalorder %s1122, %s1124
      %p1128 = scmp.eq.s32.totalorder %s164, 0
      %p1129 = por %p1127, %p1128
      %p1130 = scmp.ne.s32.totalorder %s1122, %s1124
      %p1131 = scmp.eq.s32.totalorder %s169, 1
      %p1132 = por %p1130, %p1131
      %p1133 = scmp.ne.s32.totalorder %s1124, %s1125
      %p1134 = scmp.eq.s32.totalorder %s169, 0
      %p1135 = por %p1133, %p1134
      %p1136 = scmp.ne.s32.totalorder %s1124, %s1125
      %p1137 = scmp.eq.s32.totalorder %s170, 1
      %p1138 = por %p1136, %p1137
      %p1140 = scmp.ne.s32.totalorder %s1125, %s1139
      %p1141 = scmp.eq.s32.totalorder %s170, 0
      %p1142 = por %p1140, %p1141
      %s1144 = sadd.s32 %s1143, 1
      %p1147 = scmp.eq.s32.totalorder %s164, 1
      %p1148 = scmp.ne.s32.totalorder %s1143, %s1145
      %p1149 = scmp.eq.s32.totalorder %s164, 0
      %p1150 = por %p1148, %p1149
      %p1151 = scmp.ne.s32.totalorder %s1143, %s1145
      %p1152 = scmp.eq.s32.totalorder %s169, 1
      %p1153 = por %p1151, %p1152
      %p1154 = scmp.ne.s32.totalorder %s1145, %s1146
      %p1155 = scmp.eq.s32.totalorder %s169, 0
      %p1156 = por %p1154, %p1155
      %p1157 = scmp.ne.s32.totalorder %s1145, %s1146
      %p1158 = scmp.eq.s32.totalorder %s170, 1
      %p1159 = por %p1157, %p1158
      %p1161 = scmp.ne.s32.totalorder %s1146, %s1160
      %p1162 = scmp.eq.s32.totalorder %s170, 0
      %p1163 = por %p1161, %p1162
      %s1165 = sadd.s32 %s1164, 1
      %p1168 = scmp.eq.s32.totalorder %s164, 1
      %p1169 = scmp.ne.s32.totalorder %s1164, %s1166
      %p1170 = scmp.eq.s32.totalorder %s164, 0
      %p1171 = por %p1169, %p1170
      %p1172 = scmp.ne.s32.totalorder %s1164, %s1166
      %p1173 = scmp.eq.s32.totalorder %s169, 1
      %p1174 = por %p1172, %p1173
      %p1175 = scmp.ne.s32.totalorder %s1166, %s1167
      %p1176 = scmp.eq.s32.totalorder %s169, 0
      %p1177 = por %p1175, %p1176
      %p1178 = scmp.ne.s32.totalorder %s1166, %s1167
      %p1179 = scmp.eq.s32.totalorder %s170, 1
      %p1180 = por %p1178, %p1179
      %p1182 = scmp.ne.s32.totalorder %s1167, %s1181
      %p1183 = scmp.eq.s32.totalorder %s170, 0
      %p1184 = por %p1182, %p1183
      %s1186 = sadd.s32 %s1185, 1
      %p1189 = scmp.eq.s32.totalorder %s164, 1
      %p1190 = scmp.ne.s32.totalorder %s1185, %s1187
      %p1191 = scmp.eq.s32.totalorder %s164, 0
      %p1192 = por %p1190, %p1191
      %p1193 = scmp.ne.s32.totalorder %s1185, %s1187
      %p1194 = scmp.eq.s32.totalorder %s169, 1
      %p1195 = por %p1193, %p1194
      %p1196 = scmp.ne.s32.totalorder %s1187, %s1188
      %p1197 = scmp.eq.s32.totalorder %s169, 0
      %p1198 = por %p1196, %p1197
      %p1199 = scmp.ne.s32.totalorder %s1187, %s1188
      %p1200 = scmp.eq.s32.totalorder %s170, 1
      %p1201 = por %p1199, %p1200
      %p1203 = scmp.ne.s32.totalorder %s1188, %s1202
      %p1204 = scmp.eq.s32.totalorder %s170, 0
      %p1205 = por %p1203, %p1204
      %s1207 = sadd.s32 %s1206, 1
      %p1210 = scmp.eq.s32.totalorder %s164, 1
      %p1211 = scmp.ne.s32.totalorder %s1206, %s1208
      %p1212 = scmp.eq.s32.totalorder %s164, 0
      %p1213 = por %p1211, %p1212
      %p1214 = scmp.ne.s32.totalorder %s1206, %s1208
      %p1215 = scmp.eq.s32.totalorder %s169, 1
      %p1216 = por %p1214, %p1215
      %p1217 = scmp.ne.s32.totalorder %s1208, %s1209
      %p1218 = scmp.eq.s32.totalorder %s169, 0
      %p1219 = por %p1217, %p1218
      %p1220 = scmp.ne.s32.totalorder %s1208, %s1209
      %p1221 = scmp.eq.s32.totalorder %s170, 1
      %p1222 = por %p1220, %p1221
      %p1224 = scmp.ne.s32.totalorder %s1209, %s1223
      %p1225 = scmp.eq.s32.totalorder %s170, 0
      %p1226 = por %p1224, %p1225
      %s1228 = sadd.s32 %s1227, 1
      %p1231 = scmp.eq.s32.totalorder %s164, 1
      %p1232 = scmp.ne.s32.totalorder %s1227, %s1229
      %p1233 = scmp.eq.s32.totalorder %s164, 0
      %p1234 = por %p1232, %p1233
      %p1235 = scmp.ne.s32.totalorder %s1227, %s1229
      %p1236 = scmp.eq.s32.totalorder %s169, 1
      %p1237 = por %p1235, %p1236
      %p1238 = scmp.ne.s32.totalorder %s1229, %s1230
      %p1239 = scmp.eq.s32.totalorder %s169, 0
      %p1240 = por %p1238, %p1239
      %p1241 = scmp.ne.s32.totalorder %s1229, %s1230
      %p1242 = scmp.eq.s32.totalorder %s170, 1
      %p1243 = por %p1241, %p1242
      %p1245 = scmp.ne.s32.totalorder %s1230, %s1244
      %p1246 = scmp.eq.s32.totalorder %s170, 0
      %p1247 = por %p1245, %p1246
      %s1249 = sadd.s32 %s1248, 1
      %p1252 = scmp.eq.s32.totalorder %s164, 1
      %p1253 = scmp.ne.s32.totalorder %s1248, %s1250
      %p1254 = scmp.eq.s32.totalorder %s164, 0
      %p1255 = por %p1253, %p1254
      %p1256 = scmp.ne.s32.totalorder %s1248, %s1250
      %p1257 = scmp.eq.s32.totalorder %s169, 1
      %p1258 = por %p1256, %p1257
      %p1259 = scmp.ne.s32.totalorder %s1250, %s1251
      %p1260 = scmp.eq.s32.totalorder %s169, 0
      %p1261 = por %p1259, %p1260
      %p1262 = scmp.ne.s32.totalorder %s1250, %s1251
      %p1263 = scmp.eq.s32.totalorder %s170, 1
      %p1264 = por %p1262, %p1263
      %p1266 = scmp.ne.s32.totalorder %s1251, %s1265
      %p1267 = scmp.eq.s32.totalorder %s170, 0
      %p1268 = por %p1266, %p1267
      %s1270 = sadd.s32 %s1269, 1
      %p1273 = scmp.eq.s32.totalorder %s164, 1
      %p1274 = scmp.ne.s32.totalorder %s1269, %s1271
      %p1275 = scmp.eq.s32.totalorder %s164, 0
      %p1276 = por %p1274, %p1275
      %p1277 = scmp.ne.s32.totalorder %s1269, %s1271
      %p1278 = scmp.eq.s32.totalorder %s169, 1
      %p1279 = por %p1277, %p1278
      %p1280 = scmp.ne.s32.totalorder %s1271, %s1272
      %p1281 = scmp.eq.s32.totalorder %s169, 0
      %p1282 = por %p1280, %p1281
      %p1283 = scmp.ne.s32.totalorder %s1271, %s1272
      %p1284 = scmp.eq.s32.totalorder %s170, 1
      %p1285 = por %p1283, %p1284
      %p1287 = scmp.ne.s32.totalorder %s1272, %s1286
      %p1288 = scmp.eq.s32.totalorder %s170, 0
      %p1289 = por %p1287, %p1288
      %s1291 = sadd.s32 %s1290, 1
      %p1294 = scmp.eq.s32.totalorder %s164, 1
      %p1295 = scmp.ne.s32.totalorder %s1290, %s1292
      %p1296 = scmp.eq.s32.totalorder %s164, 0
      %p1297 = por %p1295, %p1296
      %p1298 = scmp.ne.s32.totalorder %s1290, %s1292
      %p1299 = scmp.eq.s32.totalorder %s169, 1
      %p1300 = por %p1298, %p1299
      %p1301 = scmp.ne.s32.totalorder %s1292, %s1293
      %p1302 = scmp.eq.s32.totalorder %s169, 0
      %p1303 = por %p1301, %p1302
      %p1304 = scmp.ne.s32.totalorder %s1292, %s1293
      %p1305 = scmp.eq.s32.totalorder %s170, 1
      %p1306 = por %p1304, %p1305
      %p1308 = scmp.ne.s32.totalorder %s1293, %s1307
      %p1309 = scmp.eq.s32.totalorder %s170, 0
      %p1310 = por %p1308, %p1309
      %s1312 = sadd.s32 %s1311, 1
      %p1315 = scmp.eq.s32.totalorder %s164, 1
      %p1316 = scmp.ne.s32.totalorder %s1311, %s1313
      %p1317 = scmp.eq.s32.totalorder %s164, 0
      %p1318 = por %p1316, %p1317
      %p1319 = scmp.ne.s32.totalorder %s1311, %s1313
      %p1320 = scmp.eq.s32.totalorder %s169, 1
      %p1321 = por %p1319, %p1320
      %p1322 = scmp.ne.s32.totalorder %s1313, %s1314
      %p1323 = scmp.eq.s32.totalorder %s169, 0
      %p1324 = por %p1322, %p1323
      %p1325 = scmp.ne.s32.totalorder %s1313, %s1314
      %p1326 = scmp.eq.s32.totalorder %s170, 1
      %p1327 = por %p1325, %p1326
      %p1329 = scmp.ne.s32.totalorder %s1314, %s1328
      %p1330 = scmp.eq.s32.totalorder %s170, 0
      %p1331 = por %p1329, %p1330
      %s1333 = sadd.s32 %s1332, 1
      %p1336 = scmp.eq.s32.totalorder %s164, 1
      %p1337 = scmp.ne.s32.totalorder %s1332, %s1334
      %p1338 = scmp.eq.s32.totalorder %s164, 0
      %p1339 = por %p1337, %p1338
      %p1340 = scmp.ne.s32.totalorder %s1332, %s1334
      %p1341 = scmp.eq.s32.totalorder %s169, 1
      %p1342 = por %p1340, %p1341
      %p1343 = scmp.ne.s32.totalorder %s1334, %s1335
      %p1344 = scmp.eq.s32.totalorder %s169, 0
      %p1345 = por %p1343, %p1344
      %p1346 = scmp.ne.s32.totalorder %s1334, %s1335
      %p1347 = scmp.eq.s32.totalorder %s170, 1
      %p1348 = por %p1346, %p1347
      %p1350 = scmp.ne.s32.totalorder %s1335, %s1349
      %p1351 = scmp.eq.s32.totalorder %s170, 0
      %p1352 = por %p1350, %p1351
      %s1354 = sadd.s32 %s1353, 1
      %p1357 = scmp.eq.s32.totalorder %s164, 1
      %p1358 = scmp.ne.s32.totalorder %s1353, %s1355
      %p1359 = scmp.eq.s32.totalorder %s164, 0
      %p1360 = por %p1358, %p1359
      %p1361 = scmp.ne.s32.totalorder %s1353, %s1355
      %p1362 = scmp.eq.s32.totalorder %s169, 1
      %p1363 = por %p1361, %p1362
      %p1364 = scmp.ne.s32.totalorder %s1355, %s1356
      %p1365 = scmp.eq.s32.totalorder %s169, 0
      %p1366 = por %p1364, %p1365
      %p1367 = scmp.ne.s32.totalorder %s1355, %s1356
      %p1368 = scmp.eq.s32.totalorder %s170, 1
      %p1369 = por %p1367, %p1368
      %p1371 = scmp.ne.s32.totalorder %s1356, %s1370
      %p1372 = scmp.eq.s32.totalorder %s170, 0
      %p1373 = por %p1371, %p1372
      %s1375 = sadd.s32 %s1374, 1
      %p1378 = scmp.eq.s32.totalorder %s164, 1
      %p1379 = scmp.ne.s32.totalorder %s1374, %s1376
      %p1380 = scmp.eq.s32.totalorder %s164, 0
      %p1381 = por %p1379, %p1380
      %p1382 = scmp.ne.s32.totalorder %s1374, %s1376
      %p1383 = scmp.eq.s32.totalorder %s169, 1
      %p1384 = por %p1382, %p1383
      %p1385 = scmp.ne.s32.totalorder %s1376, %s1377
      %p1386 = scmp.eq.s32.totalorder %s169, 0
      %p1387 = por %p1385, %p1386
      %p1388 = scmp.ne.s32.totalorder %s1376, %s1377
      %p1389 = scmp.eq.s32.totalorder %s170, 1
      %p1390 = por %p1388, %p1389
      %p1392 = scmp.ne.s32.totalorder %s1377, %s1391
      %p1393 = scmp.eq.s32.totalorder %s170, 0
      %p1394 = por %p1392, %p1393
      %s1396 = sadd.s32 %s1395, 1
      %p1399 = scmp.eq.s32.totalorder %s164, 1
      %p1400 = scmp.ne.s32.totalorder %s1395, %s1397
      %p1401 = scmp.eq.s32.totalorder %s164, 0
      %p1402 = por %p1400, %p1401
      %p1403 = scmp.ne.s32.totalorder %s1395, %s1397
      %p1404 = scmp.eq.s32.totalorder %s169, 1
      %p1405 = por %p1403, %p1404
      %p1406 = scmp.ne.s32.totalorder %s1397, %s1398
      %p1407 = scmp.eq.s32.totalorder %s169, 0
      %p1408 = por %p1406, %p1407
      %p1409 = scmp.ne.s32.totalorder %s1397, %s1398
      %p1410 = scmp.eq.s32.totalorder %s170, 1
      %p1411 = por %p1409, %p1410
      %p1413 = scmp.ne.s32.totalorder %s1398, %s1412
      %p1414 = scmp.eq.s32.totalorder %s170, 0
      %p1415 = por %p1413, %p1414
      %s1417 = sadd.s32 %s1416, 1
      %p1420 = scmp.eq.s32.totalorder %s164, 1
      %p1421 = scmp.ne.s32.totalorder %s1416, %s1418
      %p1422 = scmp.eq.s32.totalorder %s164, 0
      %p1423 = por %p1421, %p1422
      %p1424 = scmp.ne.s32.totalorder %s1416, %s1418
      %p1425 = scmp.eq.s32.totalorder %s169, 1
      %p1426 = por %p1424, %p1425
      %p1427 = scmp.ne.s32.totalorder %s1418, %s1419
      %p1428 = scmp.eq.s32.totalorder %s169, 0
      %p1429 = por %p1427, %p1428
      %p1430 = scmp.ne.s32.totalorder %s1418, %s1419
      %p1431 = scmp.eq.s32.totalorder %s170, 1
      %p1432 = por %p1430, %p1431
      %p1434 = scmp.ne.s32.totalorder %s1419, %s1433
      %p1435 = scmp.eq.s32.totalorder %s170, 0
      %p1436 = por %p1434, %p1435
      %s1438 = sadd.s32 %s1437, 1
      %p1441 = scmp.eq.s32.totalorder %s164, 1
      %p1442 = scmp.ne.s32.totalorder %s1437, %s1439
      %p1443 = scmp.eq.s32.totalorder %s164, 0
      %p1444 = por %p1442, %p1443
      %p1445 = scmp.ne.s32.totalorder %s1437, %s1439
      %p1446 = scmp.eq.s32.totalorder %s169, 1
      %p1447 = por %p1445, %p1446
      %p1448 = scmp.ne.s32.totalorder %s1439, %s1440
      %p1449 = scmp.eq.s32.totalorder %s169, 0
      %p1450 = por %p1448, %p1449
      %p1451 = scmp.ne.s32.totalorder %s1439, %s1440
      %p1452 = scmp.eq.s32.totalorder %s170, 1
      %p1453 = por %p1451, %p1452
      %p1455 = scmp.ne.s32.totalorder %s1440, %s1454
      %p1456 = scmp.eq.s32.totalorder %s170, 0
      %p1457 = por %p1455, %p1456
      %s1459 = sadd.s32 %s1458, 1
      %p1462 = scmp.eq.s32.totalorder %s164, 1
      %p1463 = scmp.ne.s32.totalorder %s1458, %s1460
      %p1464 = scmp.eq.s32.totalorder %s164, 0
      %p1465 = por %p1463, %p1464
      %p1466 = scmp.ne.s32.totalorder %s1458, %s1460
      %p1467 = scmp.eq.s32.totalorder %s169, 1
      %p1468 = por %p1466, %p1467
      %p1469 = scmp.ne.s32.totalorder %s1460, %s1461
      %p1470 = scmp.eq.s32.totalorder %s169, 0
      %p1471 = por %p1469, %p1470
      %p1472 = scmp.ne.s32.totalorder %s1460, %s1461
      %p1473 = scmp.eq.s32.totalorder %s170, 1
      %p1474 = por %p1472, %p1473
      %p1476 = scmp.ne.s32.totalorder %s1461, %s1475
      %p1477 = scmp.eq.s32.totalorder %s170, 0
      %p1478 = por %p1476, %p1477
      %s1480 = sadd.s32 %s1479, 1
      %p1483 = scmp.eq.s32.totalorder %s164, 1
      %p1484 = scmp.ne.s32.totalorder %s1479, %s1481
      %p1485 = scmp.eq.s32.totalorder %s164, 0
      %p1486 = por %p1484, %p1485
      %p1487 = scmp.ne.s32.totalorder %s1479, %s1481
      %p1488 = scmp.eq.s32.totalorder %s169, 1
      %p1489 = por %p1487, %p1488
      %p1490 = scmp.ne.s32.totalorder %s1481, %s1482
      %p1491 = scmp.eq.s32.totalorder %s169, 0
      %p1492 = por %p1490, %p1491
      %p1493 = scmp.ne.s32.totalorder %s1481, %s1482
      %p1494 = scmp.eq.s32.totalorder %s170, 1
      %p1495 = por %p1493, %p1494
      %p1497 = scmp.ne.s32.totalorder %s1482, %s1496
      %p1498 = scmp.eq.s32.totalorder %s170, 0
      %p1499 = por %p1497, %p1498
      %s1501 = sadd.s32 %s1500, 1
      %p1504 = scmp.eq.s32.totalorder %s164, 1
      %p1505 = scmp.ne.s32.totalorder %s1500, %s1502
      %p1506 = scmp.eq.s32.totalorder %s164, 0
      %p1507 = por %p1505, %p1506
      %p1508 = scmp.ne.s32.totalorder %s1500, %s1502
      %p1509 = scmp.eq.s32.totalorder %s169, 1
      %p1510 = por %p1508, %p1509
      %p1511 = scmp.ne.s32.totalorder %s1502, %s1503
      %p1512 = scmp.eq.s32.totalorder %s169, 0
      %p1513 = por %p1511, %p1512
      %p1514 = scmp.ne.s32.totalorder %s1502, %s1503
      %p1515 = scmp.eq.s32.totalorder %s170, 1
      %p1516 = por %p1514, %p1515
      %p1518 = scmp.ne.s32.totalorder %s1503, %s1517
      %p1519 = scmp.eq.s32.totalorder %s170, 0
      %p1520 = por %p1518, %p1519
      %s1522 = sadd.s32 %s1521, 1
      %p1525 = scmp.eq.s32.totalorder %s164, 1
      %p1526 = scmp.ne.s32.totalorder %s1521, %s1523
      %p1527 = scmp.eq.s32.totalorder %s164, 0
      %p1528 = por %p1526, %p1527
      %p1529 = scmp.ne.s32.totalorder %s1521, %s1523
      %p1530 = scmp.eq.s32.totalorder %s169, 1
      %p1531 = por %p1529, %p1530
      %p1532 = scmp.ne.s32.totalorder %s1523, %s1524
      %p1533 = scmp.eq.s32.totalorder %s169, 0
      %p1534 = por %p1532, %p1533
      %p1535 = scmp.ne.s32.totalorder %s1523, %s1524
      %p1536 = scmp.eq.s32.totalorder %s170, 1
      %p1537 = por %p1535, %p1536
      %p1539 = scmp.ne.s32.totalorder %s1524, %s1538
      %p1540 = scmp.eq.s32.totalorder %s170, 0
      %p1541 = por %p1539, %p1540
      %s1543 = sadd.s32 %s1542, 1
      %p1546 = scmp.eq.s32.totalorder %s164, 1
      %p1547 = scmp.ne.s32.totalorder %s1542, %s1544
      %p1548 = scmp.eq.s32.totalorder %s164, 0
      %p1549 = por %p1547, %p1548
      %p1550 = scmp.ne.s32.totalorder %s1542, %s1544
      %p1551 = scmp.eq.s32.totalorder %s169, 1
      %p1552 = por %p1550, %p1551
      %p1553 = scmp.ne.s32.totalorder %s1544, %s1545
      %p1554 = scmp.eq.s32.totalorder %s169, 0
      %p1555 = por %p1553, %p1554
      %p1556 = scmp.ne.s32.totalorder %s1544, %s1545
      %p1557 = scmp.eq.s32.totalorder %s170, 1
      %p1558 = por %p1556, %p1557
      %p1560 = scmp.ne.s32.totalorder %s1545, %s1559
      %p1561 = scmp.eq.s32.totalorder %s170, 0
      %p1562 = por %p1560, %p1561
      %s1564 = sadd.s32 %s1563, 1
      %p1567 = scmp.eq.s32.totalorder %s164, 1
      %p1568 = scmp.ne.s32.totalorder %s1563, %s1565
      %p1569 = scmp.eq.s32.totalorder %s164, 0
      %p1570 = por %p1568, %p1569
      %p1571 = scmp.ne.s32.totalorder %s1563, %s1565
      %p1572 = scmp.eq.s32.totalorder %s169, 1
      %p1573 = por %p1571, %p1572
      %p1574 = scmp.ne.s32.totalorder %s1565, %s1566
      %p1575 = scmp.eq.s32.totalorder %s169, 0
      %p1576 = por %p1574, %p1575
      %p1577 = scmp.ne.s32.totalorder %s1565, %s1566
      %p1578 = scmp.eq.s32.totalorder %s170, 1
      %p1579 = por %p1577, %p1578
      %p1581 = scmp.ne.s32.totalorder %s1566, %s1580
      %p1582 = scmp.eq.s32.totalorder %s170, 0
      %p1583 = por %p1581, %p1582
      %s1585 = sadd.s32 %s1584, 1
      %p1588 = scmp.eq.s32.totalorder %s164, 1
      %p1589 = scmp.ne.s32.totalorder %s1584, %s1586
      %p1590 = scmp.eq.s32.totalorder %s164, 0
      %p1591 = por %p1589, %p1590
      %p1592 = scmp.ne.s32.totalorder %s1584, %s1586
      %p1593 = scmp.eq.s32.totalorder %s169, 1
      %p1594 = por %p1592, %p1593
      %p1595 = scmp.ne.s32.totalorder %s1586, %s1587
      %p1596 = scmp.eq.s32.totalorder %s169, 0
      %p1597 = por %p1595, %p1596
      %p1598 = scmp.ne.s32.totalorder %s1586, %s1587
      %p1599 = scmp.eq.s32.totalorder %s170, 1
      %p1600 = por %p1598, %p1599
      %p1602 = scmp.ne.s32.totalorder %s1587, %s1601
      %p1603 = scmp.eq.s32.totalorder %s170, 0
      %p1604 = por %p1602, %p1603
      %s1605 = ssub.s32 %s164, %s171
      %p1606 = scmp.eq.s32.totalorder %s1605, 0
      %s1608 = sadd.s32 %s1607, 1
      %s1609 = scalar_select %p1606, %s1607, %s1608
      %p1612 = pneg %p1606
      %p1613 = scmp.eq.s32.totalorder %s164, 1
      %p1614 = por %p1612, %p1613
      %p1615 = scmp.ne.s32.totalorder %s1607, %s1610
      %p1616 = scmp.eq.s32.totalorder %s164, 0
      %p1617 = por %p1615, %p1616
      %p1618 = scmp.ne.s32.totalorder %s1607, %s1610
      %p1619 = scmp.eq.s32.totalorder %s169, 1
      %p1620 = por %p1618, %p1619
      %p1621 = scmp.ne.s32.totalorder %s1610, %s1611
      %p1622 = scmp.eq.s32.totalorder %s169, 0
      %p1623 = por %p1621, %p1622
      %p1624 = scmp.ne.s32.totalorder %s1610, %s1611
      %p1625 = scmp.eq.s32.totalorder %s170, 1
      %p1626 = por %p1624, %p1625
      %p1628 = scmp.ne.s32.totalorder %s1611, %s1627
      %p1629 = scmp.eq.s32.totalorder %s170, 0
      %p1630 = por %p1628, %p1629
      %s1631 = ssub.s32 %s164, %s171
      %p1632 = scmp.eq.s32.totalorder %s1631, 0
      %s1634 = sadd.s32 %s1633, 1
      %s1635 = scalar_select %p1632, %s1633, %s1634
      %p1638 = pneg %p1632
      %p1639 = scmp.eq.s32.totalorder %s164, 1
      %p1640 = por %p1638, %p1639
      %p1641 = scmp.ne.s32.totalorder %s1633, %s1636
      %p1642 = scmp.eq.s32.totalorder %s164, 0
      %p1643 = por %p1641, %p1642
      %p1644 = scmp.ne.s32.totalorder %s1633, %s1636
      %p1645 = scmp.eq.s32.totalorder %s169, 1
      %p1646 = por %p1644, %p1645
      %p1647 = scmp.ne.s32.totalorder %s1636, %s1637
      %p1648 = scmp.eq.s32.totalorder %s169, 0
      %p1649 = por %p1647, %p1648
      %p1650 = scmp.ne.s32.totalorder %s1636, %s1637
      %p1651 = scmp.eq.s32.totalorder %s170, 1
      %p1652 = por %p1650, %p1651
      %p1654 = scmp.ne.s32.totalorder %s1637, %s1653
      %p1655 = scmp.eq.s32.totalorder %s170, 0
      %p1656 = por %p1654, %p1655
      %p1657 = scmp.le.s32.totalorder 1, %s164
      %p1658 = scmp.lt.s32.totalorder %s164, 3
      %p1659 = pnand %p1657, %p1658
      %p1660 = pneg %p1659
      // Predicated region
      $region9: #{tpu_custom_call.1} parent=5 // pred_check
        _
      $region10: #{tpu_custom_call.1} parent=5 // pred_check_branch
        %1662 = sbr.rel (%p1659) target = $region12
      $region11: #{tpu_custom_call.1} parent=5 // pred_region
        %s1663 = ssub.s32 %s164, 1
        // Predicated region
        $region13: #{tpu_custom_call.1} parent=11 // pred_check
          %p1664 = pneg %p211
        $region14: #{tpu_custom_call.1} parent=11 // pred_check_branch
          %1666 = sbr.rel (%p1664) target = $region16
        $region15: #{tpu_custom_call.1} parent=11 // pred_region
          _
        $region16: #{tpu_custom_call.1} parent=11 // pred_fallthru
          _
        // Predicated region
        $region17: #{tpu_custom_call.1} parent=11 // pred_check
          %p1667 = pneg %p232
        $region18: #{tpu_custom_call.1} parent=11 // pred_check_branch
          %1669 = sbr.rel (%p1667) target = $region20
        $region19: #{tpu_custom_call.1} parent=11 // pred_region
          _
        $region20: #{tpu_custom_call.1} parent=11 // pred_fallthru
          _
        // Predicated region
        $region21: #{tpu_custom_call.1} parent=11 // pred_check
          %p1670 = pneg %p253
        $region22: #{tpu_custom_call.1} parent=11 // pred_check_branch
          %1672 = sbr.rel (%p1670) target = $region24
        $region23: #{tpu_custom_call.1} parent=11 // pred_region
          _
        $region24: #{tpu_custom_call.1} parent=11 // pred_fallthru
          _
        // Predicated region
        $region25: #{tpu_custom_call.1} parent=11 // pred_check
          %p1673 = pneg %p274
        $region26: #{tpu_custom_call.1} parent=11 // pred_check_branch
          %1675 = sbr.rel (%p1673) target = $region28
        $region27: #{tpu_custom_call.1} parent=11 // pred_region
          _
        $region28: #{tpu_custom_call.1} parent=11 // pred_fallthru
          _
        // Predicated region
        $region29: #{tpu_custom_call.1} parent=11 // pred_check
          %p1676 = pneg %p295
        $region30: #{tpu_custom_call.1} parent=11 // pred_check_branch
          %1678 = sbr.rel (%p1676) target = $region32
        $region31: #{tpu_custom_call.1} parent=11 // pred_region
          _
        $region32: #{tpu_custom_call.1} parent=11 // pred_fallthru
          _
        // Predicated region
        $region33: #{tpu_custom_call.1} parent=11 // pred_check
          %p1679 = pneg %p316
        $region34: #{tpu_custom_call.1} parent=11 // pred_check_branch
          %1681 = sbr.rel (%p1679) target = $region36
        $region35: #{tpu_custom_call.1} parent=11 // pred_region
          %s1683 = ssub.s32 16, 16
          %1684 = vsyncadd [#allocation3], %s1683
          %s1686 = sshll.u32 [#allocation2], 4
          %s1687 = int_to_ptr.vmem [resolvable:$true] %s1686
          %1689 = dma.hbm_to_vmem [thread:$0]  %s13, 16, %s1687, [#allocation3]
        $region36: #{tpu_custom_call.1} parent=11 // pred_fallthru
          _
        // Predicated region
        $region37: #{tpu_custom_call.1} parent=11 // pred_check
          %p1690 = pneg %p337
        $region38: #{tpu_custom_call.1} parent=11 // pred_check_branch
          %1692 = sbr.rel (%p1690) target = $region40
        $region39: #{tpu_custom_call.1} parent=11 // pred_region
          _
        $region40: #{tpu_custom_call.1} parent=11 // pred_fallthru
          _
        // Predicated region
        $region41: #{tpu_custom_call.1} parent=11 // pred_check
          %p1693 = pneg %p358
        $region42: #{tpu_custom_call.1} parent=11 // pred_check_branch
          %1695 = sbr.rel (%p1693) target = $region44
        $region43: #{tpu_custom_call.1} parent=11 // pred_region
          %s1697 = ssub.s32 16, 16
          %1698 = vsyncadd [#allocation6], %s1697
          %s1700 = sshll.u32 [#allocation5], 4
          %s1701 = int_to_ptr.vmem [resolvable:$true] %s1700
          %1703 = dma.hbm_to_vmem [thread:$0]  %s17, 16, %s1701, [#allocation6]
        $region44: #{tpu_custom_call.1} parent=11 // pred_fallthru
          _
        // Predicated region
        $region45: #{tpu_custom_call.1} parent=11 // pred_check
          %p1704 = pneg %p379
        $region46: #{tpu_custom_call.1} parent=11 // pred_check_branch
          %1706 = sbr.rel (%p1704) target = $region48
        $region47: #{tpu_custom_call.1} parent=11 // pred_region
          _
        $region48: #{tpu_custom_call.1} parent=11 // pred_fallthru
          _
        // Predicated region
        $region49: #{tpu_custom_call.1} parent=11 // pred_check
          %p1707 = pneg %p400
        $region50: #{tpu_custom_call.1} parent=11 // pred_check_branch
          %1709 = sbr.rel (%p1707) target = $region52
        $region51: #{tpu_custom_call.1} parent=11 // pred_region
          _
        $region52: #{tpu_custom_call.1} parent=11 // pred_fallthru
          _
        // Predicated region
        $region53: #{tpu_custom_call.1} parent=11 // pred_check
          %p1710 = pneg %p421
        $region54: #{tpu_custom_call.1} parent=11 // pred_check_branch
          %1712 = sbr.rel (%p1710) target = $region56
        $region55: #{tpu_custom_call.1} parent=11 // pred_region
          _
        $region56: #{tpu_custom_call.1} parent=11 // pred_fallthru
          _
        // Predicated region
        $region57: #{tpu_custom_call.1} parent=11 // pred_check
          %p1713 = pneg %p442
        $region58: #{tpu_custom_call.1} parent=11 // pred_check_branch
          %1715 = sbr.rel (%p1713) target = $region60
        $region59: #{tpu_custom_call.1} parent=11 // pred_region
          _
        $region60: #{tpu_custom_call.1} parent=11 // pred_fallthru
          _
        // Predicated region
        $region61: #{tpu_custom_call.1} parent=11 // pred_check
          %p1716 = pneg %p463
        $region62: #{tpu_custom_call.1} parent=11 // pred_check_branch
          %1718 = sbr.rel (%p1716) target = $region64
        $region63: #{tpu_custom_call.1} parent=11 // pred_region
          _
        $region64: #{tpu_custom_call.1} parent=11 // pred_fallthru
          _
        // Predicated region
        $region65: #{tpu_custom_call.1} parent=11 // pred_check
          %p1719 = pneg %p484
        $region66: #{tpu_custom_call.1} parent=11 // pred_check_branch
          %1721 = sbr.rel (%p1719) target = $region68
        $region67: #{tpu_custom_call.1} parent=11 // pred_region
          %s1723 = ssub.s32 16, 16
          %1724 = vsyncadd [#allocation6], %s1723
          %s1726 = sshll.u32 [#allocation7], 4
          %s1727 = int_to_ptr.vmem [resolvable:$true] %s1726
          %1729 = dma.hbm_to_vmem [thread:$0]  %s29, 16, %s1727, [#allocation6]
        $region68: #{tpu_custom_call.1} parent=11 // pred_fallthru
          _
        // Predicated region
        $region69: #{tpu_custom_call.1} parent=11 // pred_check
          %p1730 = pneg %p505
        $region70: #{tpu_custom_call.1} parent=11 // pred_check_branch
          %1732 = sbr.rel (%p1730) target = $region72
        $region71: #{tpu_custom_call.1} parent=11 // pred_region
          _
        $region72: #{tpu_custom_call.1} parent=11 // pred_fallthru
          _
        // Predicated region
        $region73: #{tpu_custom_call.1} parent=11 // pred_check
          %p1733 = pneg %p526
        $region74: #{tpu_custom_call.1} parent=11 // pred_check_branch
          %1735 = sbr.rel (%p1733) target = $region76
        $region75: #{tpu_custom_call.1} parent=11 // pred_region
          _
        $region76: #{tpu_custom_call.1} parent=11 // pred_fallthru
          _
        // Predicated region
        $region77: #{tpu_custom_call.1} parent=11 // pred_check
          %p1736 = pneg %p547
        $region78: #{tpu_custom_call.1} parent=11 // pred_check_branch
          %1738 = sbr.rel (%p1736) target = $region80
        $region79: #{tpu_custom_call.1} parent=11 // pred_region
          _
        $region80: #{tpu_custom_call.1} parent=11 // pred_fallthru
          _
        // Predicated region
        $region81: #{tpu_custom_call.1} parent=11 // pred_check
          %p1739 = pneg %p568
        $region82: #{tpu_custom_call.1} parent=11 // pred_check_branch
          %1741 = sbr.rel (%p1739) target = $region84
        $region83: #{tpu_custom_call.1} parent=11 // pred_region
          _
        $region84: #{tpu_custom_call.1} parent=11 // pred_fallthru
          _
        // Predicated region
        $region85: #{tpu_custom_call.1} parent=11 // pred_check
          %p1742 = pneg %p589
        $region86: #{tpu_custom_call.1} parent=11 // pred_check_branch
          %1744 = sbr.rel (%p1742) target = $region88
        $region87: #{tpu_custom_call.1} parent=11 // pred_region
          _
        $region88: #{tpu_custom_call.1} parent=11 // pred_fallthru
          _
        // Predicated region
        $region89: #{tpu_custom_call.1} parent=11 // pred_check
          %p1745 = pneg %p610
        $region90: #{tpu_custom_call.1} parent=11 // pred_check_branch
          %1747 = sbr.rel (%p1745) target = $region92
        $region91: #{tpu_custom_call.1} parent=11 // pred_region
          %s1749 = ssub.s32 16, 16
          %1750 = vsyncadd [#allocation9], %s1749
          %s1752 = sshll.u32 [#allocation8], 4
          %s1753 = int_to_ptr.vmem [resolvable:$true] %s1752
          %1755 = dma.hbm_to_vmem [thread:$0]  %s41, 16, %s1753, [#allocation9]
        $region92: #{tpu_custom_call.1} parent=11 // pred_fallthru
          _
        // Predicated region
        $region93: #{tpu_custom_call.1} parent=11 // pred_check
          %p1756 = pneg %p631
        $region94: #{tpu_custom_call.1} parent=11 // pred_check_branch
          %1758 = sbr.rel (%p1756) target = $region96
        $region95: #{tpu_custom_call.1} parent=11 // pred_region
          _
        $region96: #{tpu_custom_call.1} parent=11 // pred_fallthru
          _
        // Predicated region
        $region97: #{tpu_custom_call.1} parent=11 // pred_check
          %p1759 = pneg %p652
        $region98: #{tpu_custom_call.1} parent=11 // pred_check_branch
          %1761 = sbr.rel (%p1759) target = $region100
        $region99: #{tpu_custom_call.1} parent=11 // pred_region
          %s1763 = ssub.s32 16, 16
          %1764 = vsyncadd [#allocation9], %s1763
          %s1766 = sshll.u32 [#allocation10], 4
          %s1767 = int_to_ptr.vmem [resolvable:$true] %s1766
          %1769 = dma.hbm_to_vmem [thread:$0]  %s45, 16, %s1767, [#allocation9]
        $region100: #{tpu_custom_call.1} parent=11 // pred_fallthru
          _
        // Predicated region
        $region101: #{tpu_custom_call.1} parent=11 // pred_check
          %p1770 = pneg %p673
        $region102: #{tpu_custom_call.1} parent=11 // pred_check_branch
          %1772 = sbr.rel (%p1770) target = $region104
        $region103: #{tpu_custom_call.1} parent=11 // pred_region
          _
        $region104: #{tpu_custom_call.1} parent=11 // pred_fallthru
          _
        // Predicated region
        $region105: #{tpu_custom_call.1} parent=11 // pred_check
          %p1773 = pneg %p694
        $region106: #{tpu_custom_call.1} parent=11 // pred_check_branch
          %1775 = sbr.rel (%p1773) target = $region108
        $region107: #{tpu_custom_call.1} parent=11 // pred_region
          %s1777 = ssub.s32 16, 16
          %1778 = vsyncadd [#allocation12], %s1777
          %s1780 = sshll.u32 [#allocation11], 4
          %s1781 = int_to_ptr.vmem [resolvable:$true] %s1780
          %1783 = dma.hbm_to_vmem [thread:$0]  %s49, 16, %s1781, [#allocation12]
        $region108: #{tpu_custom_call.1} parent=11 // pred_fallthru
          _
        // Predicated region
        $region109: #{tpu_custom_call.1} parent=11 // pred_check
          %p1784 = pneg %p715
        $region110: #{tpu_custom_call.1} parent=11 // pred_check_branch
          %1786 = sbr.rel (%p1784) target = $region112
        $region111: #{tpu_custom_call.1} parent=11 // pred_region
          _
        $region112: #{tpu_custom_call.1} parent=11 // pred_fallthru
          _
        // Predicated region
        $region113: #{tpu_custom_call.1} parent=11 // pred_check
          %p1787 = pneg %p736
        $region114: #{tpu_custom_call.1} parent=11 // pred_check_branch
          %1789 = sbr.rel (%p1787) target = $region116
        $region115: #{tpu_custom_call.1} parent=11 // pred_region
          %s1791 = ssub.s32 16, 16
          %1792 = vsyncadd [#allocation12], %s1791
          %s1794 = sshll.u32 [#allocation13], 4
          %s1795 = int_to_ptr.vmem [resolvable:$true] %s1794
          %1797 = dma.hbm_to_vmem [thread:$0]  %s53, 16, %s1795, [#allocation12]
        $region116: #{tpu_custom_call.1} parent=11 // pred_fallthru
          _
        // Predicated region
        $region117: #{tpu_custom_call.1} parent=11 // pred_check
          %p1798 = pneg %p757
        $region118: #{tpu_custom_call.1} parent=11 // pred_check_branch
          %1800 = sbr.rel (%p1798) target = $region120
        $region119: #{tpu_custom_call.1} parent=11 // pred_region
          _
        $region120: #{tpu_custom_call.1} parent=11 // pred_fallthru
          _
        // Predicated region
        $region121: #{tpu_custom_call.1} parent=11 // pred_check
          %p1801 = pneg %p778
        $region122: #{tpu_custom_call.1} parent=11 // pred_check_branch
          %1803 = sbr.rel (%p1801) target = $region124
        $region123: #{tpu_custom_call.1} parent=11 // pred_region
          _
        $region124: #{tpu_custom_call.1} parent=11 // pred_fallthru
          _
        // Predicated region
        $region125: #{tpu_custom_call.1} parent=11 // pred_check
          %p1804 = pneg %p799
        $region126: #{tpu_custom_call.1} parent=11 // pred_check_branch
          %1806 = sbr.rel (%p1804) target = $region128
        $region127: #{tpu_custom_call.1} parent=11 // pred_region
          _
        $region128: #{tpu_custom_call.1} parent=11 // pred_fallthru
          _
        // Predicated region
        $region129: #{tpu_custom_call.1} parent=11 // pred_check
          %p1807 = pneg %p820
        $region130: #{tpu_custom_call.1} parent=11 // pred_check_branch
          %1809 = sbr.rel (%p1807) target = $region132
        $region131: #{tpu_custom_call.1} parent=11 // pred_region
          _
        $region132: #{tpu_custom_call.1} parent=11 // pred_fallthru
          _
        // Predicated region
        $region133: #{tpu_custom_call.1} parent=11 // pred_check
          %p1810 = pneg %p841
        $region134: #{tpu_custom_call.1} parent=11 // pred_check_branch
          %1812 = sbr.rel (%p1810) target = $region136
        $region135: #{tpu_custom_call.1} parent=11 // pred_region
          _
        $region136: #{tpu_custom_call.1} parent=11 // pred_fallthru
          _
        // Predicated region
        $region137: #{tpu_custom_call.1} parent=11 // pred_check
          %p1813 = pneg %p862
        $region138: #{tpu_custom_call.1} parent=11 // pred_check_branch
          %1815 = sbr.rel (%p1813) target = $region140
        $region139: #{tpu_custom_call.1} parent=11 // pred_region
          %s1817 = ssub.s32 16, 16
          %1818 = vsyncadd [#allocation15], %s1817
          %s1820 = sshll.u32 [#allocation14], 4
          %s1821 = int_to_ptr.vmem [resolvable:$true] %s1820
          %1823 = dma.hbm_to_vmem [thread:$0]  %s65, 16, %s1821, [#allocation15]
        $region140: #{tpu_custom_call.1} parent=11 // pred_fallthru
          _
        // Predicated region
        $region141: #{tpu_custom_call.1} parent=11 // pred_check
          %p1824 = pneg %p883
        $region142: #{tpu_custom_call.1} parent=11 // pred_check_branch
          %1826 = sbr.rel (%p1824) target = $region144
        $region143: #{tpu_custom_call.1} parent=11 // pred_region
          _
        $region144: #{tpu_custom_call.1} parent=11 // pred_fallthru
          _
        // Predicated region
        $region145: #{tpu_custom_call.1} parent=11 // pred_check
          %p1827 = pneg %p904
        $region146: #{tpu_custom_call.1} parent=11 // pred_check_branch
          %1829 = sbr.rel (%p1827) target = $region148
        $region147: #{tpu_custom_call.1} parent=11 // pred_region
          %s1831 = ssub.s32 16, 16
          %1832 = vsyncadd [#allocation15], %s1831
          %s1834 = sshll.u32 [#allocation16], 4
          %s1835 = int_to_ptr.vmem [resolvable:$true] %s1834
          %1837 = dma.hbm_to_vmem [thread:$0]  %s69, 16, %s1835, [#allocation15]
        $region148: #{tpu_custom_call.1} parent=11 // pred_fallthru
          _
        // Predicated region
        $region149: #{tpu_custom_call.1} parent=11 // pred_check
          %p1838 = pneg %p925
        $region150: #{tpu_custom_call.1} parent=11 // pred_check_branch
          %1840 = sbr.rel (%p1838) target = $region152
        $region151: #{tpu_custom_call.1} parent=11 // pred_region
          _
        $region152: #{tpu_custom_call.1} parent=11 // pred_fallthru
          _
        // Predicated region
        $region153: #{tpu_custom_call.1} parent=11 // pred_check
          %p1841 = pneg %p946
        $region154: #{tpu_custom_call.1} parent=11 // pred_check_branch
          %1843 = sbr.rel (%p1841) target = $region156
        $region155: #{tpu_custom_call.1} parent=11 // pred_region
          %s1845 = ssub.s32 16, 16
          %1846 = vsyncadd [#allocation18], %s1845
          %s1848 = sshll.u32 [#allocation17], 4
          %s1849 = int_to_ptr.vmem [resolvable:$true] %s1848
          %1851 = dma.hbm_to_vmem [thread:$0]  %s73, 16, %s1849, [#allocation18]
        $region156: #{tpu_custom_call.1} parent=11 // pred_fallthru
          _
        // Predicated region
        $region157: #{tpu_custom_call.1} parent=11 // pred_check
          %p1852 = pneg %p967
        $region158: #{tpu_custom_call.1} parent=11 // pred_check_branch
          %1854 = sbr.rel (%p1852) target = $region160
        $region159: #{tpu_custom_call.1} parent=11 // pred_region
          _
        $region160: #{tpu_custom_call.1} parent=11 // pred_fallthru
          _
        // Predicated region
        $region161: #{tpu_custom_call.1} parent=11 // pred_check
          %p1855 = pneg %p988
        $region162: #{tpu_custom_call.1} parent=11 // pred_check_branch
          %1857 = sbr.rel (%p1855) target = $region164
        $region163: #{tpu_custom_call.1} parent=11 // pred_region
          _
        $region164: #{tpu_custom_call.1} parent=11 // pred_fallthru
          _
        // Predicated region
        $region165: #{tpu_custom_call.1} parent=11 // pred_check
          %p1858 = pneg %p1009
        $region166: #{tpu_custom_call.1} parent=11 // pred_check_branch
          %1860 = sbr.rel (%p1858) target = $region168
        $region167: #{tpu_custom_call.1} parent=11 // pred_region
          _
        $region168: #{tpu_custom_call.1} parent=11 // pred_fallthru
          _
        // Predicated region
        $region169: #{tpu_custom_call.1} parent=11 // pred_check
          %p1861 = pneg %p1030
        $region170: #{tpu_custom_call.1} parent=11 // pred_check_branch
          %1863 = sbr.rel (%p1861) target = $region172
        $region171: #{tpu_custom_call.1} parent=11 // pred_region
          _
        $region172: #{tpu_custom_call.1} parent=11 // pred_fallthru
          _
        // Predicated region
        $region173: #{tpu_custom_call.1} parent=11 // pred_check
          %p1864 = pneg %p1051
        $region174: #{tpu_custom_call.1} parent=11 // pred_check_branch
          %1866 = sbr.rel (%p1864) target = $region176
        $region175: #{tpu_custom_call.1} parent=11 // pred_region
          _
        $region176: #{tpu_custom_call.1} parent=11 // pred_fallthru
          _
        // Predicated region
        $region177: #{tpu_custom_call.1} parent=11 // pred_check
          %p1867 = pneg %p1072
        $region178: #{tpu_custom_call.1} parent=11 // pred_check_branch
          %1869 = sbr.rel (%p1867) target = $region180
        $region179: #{tpu_custom_call.1} parent=11 // pred_region
          %s1871 = ssub.s32 16, 16
          %1872 = vsyncadd [#allocation18], %s1871
          %s1874 = sshll.u32 [#allocation19], 4
          %s1875 = int_to_ptr.vmem [resolvable:$true] %s1874
          %1877 = dma.hbm_to_vmem [thread:$0]  %s85, 16, %s1875, [#allocation18]
        $region180: #{tpu_custom_call.1} parent=11 // pred_fallthru
          _
        // Predicated region
        $region181: #{tpu_custom_call.1} parent=11 // pred_check
          %p1878 = pneg %p1093
        $region182: #{tpu_custom_call.1} parent=11 // pred_check_branch
          %1880 = sbr.rel (%p1878) target = $region184
        $region183: #{tpu_custom_call.1} parent=11 // pred_region
          _
        $region184: #{tpu_custom_call.1} parent=11 // pred_fallthru
          _
        // Predicated region
        $region185: #{tpu_custom_call.1} parent=11 // pred_check
          %p1881 = pneg %p1114
        $region186: #{tpu_custom_call.1} parent=11 // pred_check_branch
          %1883 = sbr.rel (%p1881) target = $region188
        $region187: #{tpu_custom_call.1} parent=11 // pred_region
          _
        $region188: #{tpu_custom_call.1} parent=11 // pred_fallthru
          _
        // Predicated region
        $region189: #{tpu_custom_call.1} parent=11 // pred_check
          %p1884 = pneg %p1135
        $region190: #{tpu_custom_call.1} parent=11 // pred_check_branch
          %1886 = sbr.rel (%p1884) target = $region192
        $region191: #{tpu_custom_call.1} parent=11 // pred_region
          _
        $region192: #{tpu_custom_call.1} parent=11 // pred_fallthru
          _
        // Predicated region
        $region193: #{tpu_custom_call.1} parent=11 // pred_check
          %p1887 = pneg %p1156
        $region194: #{tpu_custom_call.1} parent=11 // pred_check_branch
          %1889 = sbr.rel (%p1887) target = $region196
        $region195: #{tpu_custom_call.1} parent=11 // pred_region
          _
        $region196: #{tpu_custom_call.1} parent=11 // pred_fallthru
          _
        // Predicated region
        $region197: #{tpu_custom_call.1} parent=11 // pred_check
          %p1890 = pneg %p1177
        $region198: #{tpu_custom_call.1} parent=11 // pred_check_branch
          %1892 = sbr.rel (%p1890) target = $region200
        $region199: #{tpu_custom_call.1} parent=11 // pred_region
          %s1894 = ssub.s32 64, 64
          %1895 = vsyncadd [#allocation21], %s1894
          %s1897 = sshll.u32 [#allocation20], 4
          %s1898 = int_to_ptr.vmem [resolvable:$true] %s1897
          %1900 = dma.hbm_to_vmem [thread:$0]  %s95, 64, %s1898, [#allocation21]
        $region200: #{tpu_custom_call.1} parent=11 // pred_fallthru
          _
        // Predicated region
        $region201: #{tpu_custom_call.1} parent=11 // pred_check
          %p1901 = pneg %p1198
        $region202: #{tpu_custom_call.1} parent=11 // pred_check_branch
          %1903 = sbr.rel (%p1901) target = $region204
        $region203: #{tpu_custom_call.1} parent=11 // pred_region
          %s1905 = ssub.s32 16, 16
          %1906 = vsyncadd [#allocation21], %s1905
          %s1908 = sshll.u32 [#allocation22], 4
          %s1909 = int_to_ptr.vmem [resolvable:$true] %s1908
          %1911 = dma.hbm_to_vmem [thread:$0]  %s97, 16, %s1909, [#allocation21]
        $region204: #{tpu_custom_call.1} parent=11 // pred_fallthru
          _
        // Predicated region
        $region205: #{tpu_custom_call.1} parent=11 // pred_check
          %p1912 = pneg %p1219
        $region206: #{tpu_custom_call.1} parent=11 // pred_check_branch
          %1914 = sbr.rel (%p1912) target = $region208
        $region207: #{tpu_custom_call.1} parent=11 // pred_region
          _
        $region208: #{tpu_custom_call.1} parent=11 // pred_fallthru
          _
        // Predicated region
        $region209: #{tpu_custom_call.1} parent=11 // pred_check
          %p1915 = pneg %p1240
        $region210: #{tpu_custom_call.1} parent=11 // pred_check_branch
          %1917 = sbr.rel (%p1915) target = $region212
        $region211: #{tpu_custom_call.1} parent=11 // pred_region
          %s1919 = ssub.s32 16, 16
          %1920 = vsyncadd [#allocation24], %s1919
          %s1922 = sshll.u32 [#allocation23], 4
          %s1923 = int_to_ptr.vmem [resolvable:$true] %s1922
          %1925 = dma.hbm_to_vmem [thread:$0]  %s101, 16, %s1923, [#allocation24]
        $region212: #{tpu_custom_call.1} parent=11 // pred_fallthru
          _
        // Predicated region
        $region213: #{tpu_custom_call.1} parent=11 // pred_check
          %p1926 = pneg %p1261
        $region214: #{tpu_custom_call.1} parent=11 // pred_check_branch
          %1928 = sbr.rel (%p1926) target = $region216
        $region215: #{tpu_custom_call.1} parent=11 // pred_region
          _
        $region216: #{tpu_custom_call.1} parent=11 // pred_fallthru
          _
        // Predicated region
        $region217: #{tpu_custom_call.1} parent=11 // pred_check
          %p1929 = pneg %p1282
        $region218: #{tpu_custom_call.1} parent=11 // pred_check_branch
          %1931 = sbr.rel (%p1929) target = $region220
        $region219: #{tpu_custom_call.1} parent=11 // pred_region
          %s1933 = ssub.s32 16, 16
          %1934 = vsyncadd [#allocation24], %s1933
          %s1936 = sshll.u32 [#allocation25], 4
          %s1937 = int_to_ptr.vmem [resolvable:$true] %s1936
          %1939 = dma.hbm_to_vmem [thread:$0]  %s105, 16, %s1937, [#allocation24]
        $region220: #{tpu_custom_call.1} parent=11 // pred_fallthru
          _
        // Predicated region
        $region221: #{tpu_custom_call.1} parent=11 // pred_check
          %p1940 = pneg %p1303
        $region222: #{tpu_custom_call.1} parent=11 // pred_check_branch
          %1942 = sbr.rel (%p1940) target = $region224
        $region223: #{tpu_custom_call.1} parent=11 // pred_region
          _
        $region224: #{tpu_custom_call.1} parent=11 // pred_fallthru
          _
        // Predicated region
        $region225: #{tpu_custom_call.1} parent=11 // pred_check
          %p1943 = pneg %p1324
        $region226: #{tpu_custom_call.1} parent=11 // pred_check_branch
          %1945 = sbr.rel (%p1943) target = $region228
        $region227: #{tpu_custom_call.1} parent=11 // pred_region
          %s1947 = ssub.s32 16, 16
          %1948 = vsyncadd [#allocation27], %s1947
          %s1950 = sshll.u32 [#allocation26], 4
          %s1951 = int_to_ptr.vmem [resolvable:$true] %s1950
          %1953 = dma.hbm_to_vmem [thread:$0]  %s109, 16, %s1951, [#allocation27]
        $region228: #{tpu_custom_call.1} parent=11 // pred_fallthru
          _
        // Predicated region
        $region229: #{tpu_custom_call.1} parent=11 // pred_check
          %p1954 = pneg %p1345
        $region230: #{tpu_custom_call.1} parent=11 // pred_check_branch
          %1956 = sbr.rel (%p1954) target = $region232
        $region231: #{tpu_custom_call.1} parent=11 // pred_region
          _
        $region232: #{tpu_custom_call.1} parent=11 // pred_fallthru
          _
        // Predicated region
        $region233: #{tpu_custom_call.1} parent=11 // pred_check
          %p1957 = pneg %p1366
        $region234: #{tpu_custom_call.1} parent=11 // pred_check_branch
          %1959 = sbr.rel (%p1957) target = $region236
        $region235: #{tpu_custom_call.1} parent=11 // pred_region
          _
        $region236: #{tpu_custom_call.1} parent=11 // pred_fallthru
          _
        // Predicated region
        $region237: #{tpu_custom_call.1} parent=11 // pred_check
          %p1960 = pneg %p1387
        $region238: #{tpu_custom_call.1} parent=11 // pred_check_branch
          %1962 = sbr.rel (%p1960) target = $region240
        $region239: #{tpu_custom_call.1} parent=11 // pred_region
          _
        $region240: #{tpu_custom_call.1} parent=11 // pred_fallthru
          _
        // Predicated region
        $region241: #{tpu_custom_call.1} parent=11 // pred_check
          %p1963 = pneg %p1408
        $region242: #{tpu_custom_call.1} parent=11 // pred_check_branch
          %1965 = sbr.rel (%p1963) target = $region244
        $region243: #{tpu_custom_call.1} parent=11 // pred_region
          %s1967 = ssub.s32 64, 64
          %1968 = vsyncadd [#allocation27], %s1967
          %s1970 = sshll.u32 [#allocation28], 4
          %s1971 = int_to_ptr.vmem [resolvable:$true] %s1970
          %1973 = dma.hbm_to_vmem [thread:$0]  %s117, 64, %s1971, [#allocation27]
        $region244: #{tpu_custom_call.1} parent=11 // pred_fallthru
          _
        // Predicated region
        $region245: #{tpu_custom_call.1} parent=11 // pred_check
          %p1974 = pneg %p1429
        $region246: #{tpu_custom_call.1} parent=11 // pred_check_branch
          %1976 = sbr.rel (%p1974) target = $region248
        $region247: #{tpu_custom_call.1} parent=11 // pred_region
          %s1978 = ssub.s32 64, 64
          %1979 = vsyncadd [#allocation30], %s1978
          %s1981 = sshll.u32 [#allocation29], 4
          %s1982 = int_to_ptr.vmem [resolvable:$true] %s1981
          %1984 = dma.hbm_to_vmem [thread:$0]  %s119, 64, %s1982, [#allocation30]
        $region248: #{tpu_custom_call.1} parent=11 // pred_fallthru
          _
        // Predicated region
        $region249: #{tpu_custom_call.1} parent=11 // pred_check
          %p1985 = pneg %p1450
        $region250: #{tpu_custom_call.1} parent=11 // pred_check_branch
          %1987 = sbr.rel (%p1985) target = $region252
        $region251: #{tpu_custom_call.1} parent=11 // pred_region
          %s1989 = ssub.s32 16, 16
          %1990 = vsyncadd [#allocation30], %s1989
          %s1992 = sshll.u32 [#allocation31], 4
          %s1993 = int_to_ptr.vmem [resolvable:$true] %s1992
          %1995 = dma.hbm_to_vmem [thread:$0]  %s121, 16, %s1993, [#allocation30]
        $region252: #{tpu_custom_call.1} parent=11 // pred_fallthru
          _
        // Predicated region
        $region253: #{tpu_custom_call.1} parent=11 // pred_check
          %p1996 = pneg %p1471
        $region254: #{tpu_custom_call.1} parent=11 // pred_check_branch
          %1998 = sbr.rel (%p1996) target = $region256
        $region255: #{tpu_custom_call.1} parent=11 // pred_region
          _
        $region256: #{tpu_custom_call.1} parent=11 // pred_fallthru
          _
        // Predicated region
        $region257: #{tpu_custom_call.1} parent=11 // pred_check
          %p1999 = pneg %p1492
        $region258: #{tpu_custom_call.1} parent=11 // pred_check_branch
          %2001 = sbr.rel (%p1999) target = $region260
        $region259: #{tpu_custom_call.1} parent=11 // pred_region
          %s2003 = ssub.s32 16, 16
          %2004 = vsyncadd [#allocation33], %s2003
          %s2006 = sshll.u32 [#allocation32], 4
          %s2007 = int_to_ptr.vmem [resolvable:$true] %s2006
          %2009 = dma.hbm_to_vmem [thread:$0]  %s125, 16, %s2007, [#allocation33]
        $region260: #{tpu_custom_call.1} parent=11 // pred_fallthru
          _
        // Predicated region
        $region261: #{tpu_custom_call.1} parent=11 // pred_check
          %p2010 = pneg %p1513
        $region262: #{tpu_custom_call.1} parent=11 // pred_check_branch
          %2012 = sbr.rel (%p2010) target = $region264
        $region263: #{tpu_custom_call.1} parent=11 // pred_region
          _
        $region264: #{tpu_custom_call.1} parent=11 // pred_fallthru
          _
        // Predicated region
        $region265: #{tpu_custom_call.1} parent=11 // pred_check
          %p2013 = pneg %p1534
        $region266: #{tpu_custom_call.1} parent=11 // pred_check_branch
          %2015 = sbr.rel (%p2013) target = $region268
        $region267: #{tpu_custom_call.1} parent=11 // pred_region
          %s2017 = ssub.s32 16, 16
          %2018 = vsyncadd [#allocation33], %s2017
          %s2020 = sshll.u32 [#allocation34], 4
          %s2021 = int_to_ptr.vmem [resolvable:$true] %s2020
          %2023 = dma.hbm_to_vmem [thread:$0]  %s129, 16, %s2021, [#allocation33]
        $region268: #{tpu_custom_call.1} parent=11 // pred_fallthru
          _
        // Predicated region
        $region269: #{tpu_custom_call.1} parent=11 // pred_check
          %p2024 = pneg %p1555
        $region270: #{tpu_custom_call.1} parent=11 // pred_check_branch
          %2026 = sbr.rel (%p2024) target = $region272
        $region271: #{tpu_custom_call.1} parent=11 // pred_region
          _
        $region272: #{tpu_custom_call.1} parent=11 // pred_fallthru
          _
        // Predicated region
        $region273: #{tpu_custom_call.1} parent=11 // pred_check
          %p2027 = pneg %p1576
        $region274: #{tpu_custom_call.1} parent=11 // pred_check_branch
          %2029 = sbr.rel (%p2027) target = $region276
        $region275: #{tpu_custom_call.1} parent=11 // pred_region
          _
        $region276: #{tpu_custom_call.1} parent=11 // pred_fallthru
          _
        // Predicated region
        $region277: #{tpu_custom_call.1} parent=11 // pred_check
          %p2030 = pneg %p1597
        $region278: #{tpu_custom_call.1} parent=11 // pred_check_branch
          %2032 = sbr.rel (%p2030) target = $region280
        $region279: #{tpu_custom_call.1} parent=11 // pred_region
          %s2034 = ssub.s32 16, 16
          %2035 = vsyncadd [#allocation36], %s2034
          %s2037 = sshll.u32 [#allocation35], 4
          %s2038 = int_to_ptr.vmem [resolvable:$true] %s2037
          %2040 = dma.hbm_to_vmem [thread:$0]  %s135, 16, %s2038, [#allocation36]
        $region280: #{tpu_custom_call.1} parent=11 // pred_fallthru
          _
      $region12: #{tpu_custom_call.1} parent=5 // pred_fallthru
        _
      %p2041 = scmp.lt.s32.totalorder %s164, 2
      // Predicated region
      $region281: #{tpu_custom_call.1} parent=5 // pred_check
        %p2042 = pneg %p2041
      $region282: #{tpu_custom_call.1} parent=5 // pred_check_branch
        %2044 = sbr.rel (%p2042) target = $region284
      $region283: #{tpu_custom_call.1} parent=5 // pred_region
        // Predicated region
        $region285: #{tpu_custom_call.1} parent=283 // pred_check
          %p2045 = pneg %p184
        $region286: #{tpu_custom_call.1} parent=283 // pred_check_branch
          %2047 = sbr.rel (%p2045) target = $region288
        $region287: #{tpu_custom_call.1} parent=283 // pred_region
          %p2048 = scmp.lt.s32.totalorder %s164, 1
          %s2049 = scalar_select %p2048, %s164, 1
          %s2050 = smul.addr %s2049, 2
          %s2051 = smul.addr %s2050, 8
          %s2052 = scalar_lea.vmem %s1, %s2051
        $region288: #{tpu_custom_call.1} parent=283 // pred_fallthru
          _
      $region284: #{tpu_custom_call.1} parent=5 // pred_fallthru
        _
      %p2053 = scmp.le.s32.totalorder 1, %s164
      %p2054 = scmp.lt.s32.totalorder %s164, 3
      %p2055 = pnand %p2053, %p2054
      %p2056 = pneg %p2055
      // Predicated region
      $region289: #{tpu_custom_call.1} parent=5 // pred_check
        _
      $region290: #{tpu_custom_call.1} parent=5 // pred_check_branch
        %2058 = sbr.rel (%p2055) target = $region292
      $region291: #{tpu_custom_call.1} parent=5 // pred_region
        %s2059 = ssub.s32 %s164, 1
        // Predicated region
        $region293: #{tpu_custom_call.1} parent=291 // pred_check
          %p2060 = pneg %p316
        $region294: #{tpu_custom_call.1} parent=291 // pred_check_branch
          %2062 = sbr.rel (%p2060) target = $region296
        $region295: #{tpu_custom_call.1} parent=291 // pred_region
          %2063 = dma.done [#allocation3], 16
        $region296: #{tpu_custom_call.1} parent=291 // pred_fallthru
          _
        // Predicated region
        $region297: #{tpu_custom_call.1} parent=291 // pred_check
          %p2064 = pneg %p358
        $region298: #{tpu_custom_call.1} parent=291 // pred_check_branch
          %2066 = sbr.rel (%p2064) target = $region300
        $region299: #{tpu_custom_call.1} parent=291 // pred_region
          %2067 = dma.done [#allocation6], 16
        $region300: #{tpu_custom_call.1} parent=291 // pred_fallthru
          _
        // Predicated region
        $region301: #{tpu_custom_call.1} parent=291 // pred_check
          %p2068 = pneg %p484
        $region302: #{tpu_custom_call.1} parent=291 // pred_check_branch
          %2070 = sbr.rel (%p2068) target = $region304
        $region303: #{tpu_custom_call.1} parent=291 // pred_region
          %2071 = dma.done [#allocation6], 16
        $region304: #{tpu_custom_call.1} parent=291 // pred_fallthru
          _
        // Predicated region
        $region305: #{tpu_custom_call.1} parent=291 // pred_check
          %p2072 = pneg %p610
        $region306: #{tpu_custom_call.1} parent=291 // pred_check_branch
          %2074 = sbr.rel (%p2072) target = $region308
        $region307: #{tpu_custom_call.1} parent=291 // pred_region
          %2075 = dma.done [#allocation9], 16
        $region308: #{tpu_custom_call.1} parent=291 // pred_fallthru
          _
        // Predicated region
        $region309: #{tpu_custom_call.1} parent=291 // pred_check
          %p2076 = pneg %p652
        $region310: #{tpu_custom_call.1} parent=291 // pred_check_branch
          %2078 = sbr.rel (%p2076) target = $region312
        $region311: #{tpu_custom_call.1} parent=291 // pred_region
          %2079 = dma.done [#allocation9], 16
        $region312: #{tpu_custom_call.1} parent=291 // pred_fallthru
          _
        // Predicated region
        $region313: #{tpu_custom_call.1} parent=291 // pred_check
          %p2080 = pneg %p694
        $region314: #{tpu_custom_call.1} parent=291 // pred_check_branch
          %2082 = sbr.rel (%p2080) target = $region316
        $region315: #{tpu_custom_call.1} parent=291 // pred_region
          %2083 = dma.done [#allocation12], 16
        $region316: #{tpu_custom_call.1} parent=291 // pred_fallthru
          _
        // Predicated region
        $region317: #{tpu_custom_call.1} parent=291 // pred_check
          %p2084 = pneg %p736
        $region318: #{tpu_custom_call.1} parent=291 // pred_check_branch
          %2086 = sbr.rel (%p2084) target = $region320
        $region319: #{tpu_custom_call.1} parent=291 // pred_region
          %2087 = dma.done [#allocation12], 16
        $region320: #{tpu_custom_call.1} parent=291 // pred_fallthru
          _
        // Predicated region
        $region321: #{tpu_custom_call.1} parent=291 // pred_check
          %p2088 = pneg %p862
        $region322: #{tpu_custom_call.1} parent=291 // pred_check_branch
          %2090 = sbr.rel (%p2088) target = $region324
        $region323: #{tpu_custom_call.1} parent=291 // pred_region
          %2091 = dma.done [#allocation15], 16
        $region324: #{tpu_custom_call.1} parent=291 // pred_fallthru
          _
        // Predicated region
        $region325: #{tpu_custom_call.1} parent=291 // pred_check
          %p2092 = pneg %p904
        $region326: #{tpu_custom_call.1} parent=291 // pred_check_branch
          %2094 = sbr.rel (%p2092) target = $region328
        $region327: #{tpu_custom_call.1} parent=291 // pred_region
          %2095 = dma.done [#allocation15], 16
        $region328: #{tpu_custom_call.1} parent=291 // pred_fallthru
          _
        // Predicated region
        $region329: #{tpu_custom_call.1} parent=291 // pred_check
          %p2096 = pneg %p946
        $region330: #{tpu_custom_call.1} parent=291 // pred_check_branch
          %2098 = sbr.rel (%p2096) target = $region332
        $region331: #{tpu_custom_call.1} parent=291 // pred_region
          %2099 = dma.done [#allocation18], 16
        $region332: #{tpu_custom_call.1} parent=291 // pred_fallthru
          _
        // Predicated region
        $region333: #{tpu_custom_call.1} parent=291 // pred_check
          %p2100 = pneg %p1072
        $region334: #{tpu_custom_call.1} parent=291 // pred_check_branch
          %2102 = sbr.rel (%p2100) target = $region336
        $region335: #{tpu_custom_call.1} parent=291 // pred_region
          %2103 = dma.done [#allocation18], 16
        $region336: #{tpu_custom_call.1} parent=291 // pred_fallthru
          _
        // Predicated region
        $region337: #{tpu_custom_call.1} parent=291 // pred_check
          %p2104 = pneg %p1177
        $region338: #{tpu_custom_call.1} parent=291 // pred_check_branch
          %2106 = sbr.rel (%p2104) target = $region340
        $region339: #{tpu_custom_call.1} parent=291 // pred_region
          %2107 = dma.done [#allocation21], 64
        $region340: #{tpu_custom_call.1} parent=291 // pred_fallthru
          _
        // Predicated region
        $region341: #{tpu_custom_call.1} parent=291 // pred_check
          %p2108 = pneg %p1198
        $region342: #{tpu_custom_call.1} parent=291 // pred_check_branch
          %2110 = sbr.rel (%p2108) target = $region344
        $region343: #{tpu_custom_call.1} parent=291 // pred_region
          %2111 = dma.done [#allocation21], 16
        $region344: #{tpu_custom_call.1} parent=291 // pred_fallthru
          _
        // Predicated region
        $region345: #{tpu_custom_call.1} parent=291 // pred_check
          %p2112 = pneg %p1240
        $region346: #{tpu_custom_call.1} parent=291 // pred_check_branch
          %2114 = sbr.rel (%p2112) target = $region348
        $region347: #{tpu_custom_call.1} parent=291 // pred_region
          %2115 = dma.done [#allocation24], 16
        $region348: #{tpu_custom_call.1} parent=291 // pred_fallthru
          _
        // Predicated region
        $region349: #{tpu_custom_call.1} parent=291 // pred_check
          %p2116 = pneg %p1282
        $region350: #{tpu_custom_call.1} parent=291 // pred_check_branch
          %2118 = sbr.rel (%p2116) target = $region352
        $region351: #{tpu_custom_call.1} parent=291 // pred_region
          %2119 = dma.done [#allocation24], 16
        $region352: #{tpu_custom_call.1} parent=291 // pred_fallthru
          _
        // Predicated region
        $region353: #{tpu_custom_call.1} parent=291 // pred_check
          %p2120 = pneg %p1324
        $region354: #{tpu_custom_call.1} parent=291 // pred_check_branch
          %2122 = sbr.rel (%p2120) target = $region356
        $region355: #{tpu_custom_call.1} parent=291 // pred_region
          %2123 = dma.done [#allocation27], 16
        $region356: #{tpu_custom_call.1} parent=291 // pred_fallthru
          _
        // Predicated region
        $region357: #{tpu_custom_call.1} parent=291 // pred_check
          %p2124 = pneg %p1408
        $region358: #{tpu_custom_call.1} parent=291 // pred_check_branch
          %2126 = sbr.rel (%p2124) target = $region360
        $region359: #{tpu_custom_call.1} parent=291 // pred_region
          %2127 = dma.done [#allocation27], 64
        $region360: #{tpu_custom_call.1} parent=291 // pred_fallthru
          _
        // Predicated region
        $region361: #{tpu_custom_call.1} parent=291 // pred_check
          %p2128 = pneg %p1429
        $region362: #{tpu_custom_call.1} parent=291 // pred_check_branch
          %2130 = sbr.rel (%p2128) target = $region364
        $region363: #{tpu_custom_call.1} parent=291 // pred_region
          %2131 = dma.done [#allocation30], 64
        $region364: #{tpu_custom_call.1} parent=291 // pred_fallthru
          _
        // Predicated region
        $region365: #{tpu_custom_call.1} parent=291 // pred_check
          %p2132 = pneg %p1450
        $region366: #{tpu_custom_call.1} parent=291 // pred_check_branch
          %2134 = sbr.rel (%p2132) target = $region368
        $region367: #{tpu_custom_call.1} parent=291 // pred_region
          %2135 = dma.done [#allocation30], 16
        $region368: #{tpu_custom_call.1} parent=291 // pred_fallthru
          _
        // Predicated region
        $region369: #{tpu_custom_call.1} parent=291 // pred_check
          %p2136 = pneg %p1492
        $region370: #{tpu_custom_call.1} parent=291 // pred_check_branch
          %2138 = sbr.rel (%p2136) target = $region372
        $region371: #{tpu_custom_call.1} parent=291 // pred_region
          %2139 = dma.done [#allocation33], 16
        $region372: #{tpu_custom_call.1} parent=291 // pred_fallthru
          _
        // Predicated region
        $region373: #{tpu_custom_call.1} parent=291 // pred_check
          %p2140 = pneg %p1534
        $region374: #{tpu_custom_call.1} parent=291 // pred_check_branch
          %2142 = sbr.rel (%p2140) target = $region376
        $region375: #{tpu_custom_call.1} parent=291 // pred_region
          %2143 = dma.done [#allocation33], 16
        $region376: #{tpu_custom_call.1} parent=291 // pred_fallthru
          _
        // Predicated region
        $region377: #{tpu_custom_call.1} parent=291 // pred_check
          %p2144 = pneg %p1597
        $region378: #{tpu_custom_call.1} parent=291 // pred_check_branch
          %2146 = sbr.rel (%p2144) target = $region380
        $region379: #{tpu_custom_call.1} parent=291 // pred_region
          %2147 = dma.done [#allocation36], 16
        $region380: #{tpu_custom_call.1} parent=291 // pred_fallthru
          _
        %p2148 = scmp.lt.s32.totalorder %s169, 1
        %s2149 = scalar_select %p2148, %s169, 1
        %s2150 = smul.addr %s2149, 2
        %s2151 = smul.addr %s2150, 8
        %s2152 = scalar_lea.vmem %s1, %s2151
        %p2153 = pneg %p190
        %p2154 = pneg %p187
        %p2155 = pneg %p211
        %p2156 = pneg %p208
        %p2157 = pneg %p232
        %p2158 = pneg %p229
        %p2159 = pneg %p253
        %p2160 = pneg %p250
        %p2161 = pneg %p274
        %p2162 = pneg %p271
        %p2163 = pneg %p295
        %p2164 = pneg %p292
        %p2165 = pneg %p316
        %p2166 = pneg %p313
        %p2167 = pneg %p337
        %p2168 = pneg %p334
        %p2169 = pneg %p358
        %p2170 = pneg %p355
        %p2171 = pneg %p379
        %p2172 = pneg %p376
        %p2173 = pneg %p400
        %p2174 = pneg %p397
        %p2175 = pneg %p421
        %p2176 = pneg %p418
        %p2177 = pneg %p442
        %p2178 = pneg %p439
        %p2179 = pneg %p463
        %p2180 = pneg %p460
        %p2181 = pneg %p484
        %p2182 = pneg %p481
        %p2183 = pneg %p505
        %p2184 = pneg %p502
        %p2185 = pneg %p526
        %p2186 = pneg %p523
        %p2187 = pneg %p547
        %p2188 = pneg %p544
        %p2189 = pneg %p568
        %p2190 = pneg %p565
        %p2191 = pneg %p589
        %p2192 = pneg %p586
        %p2193 = pneg %p610
        %p2194 = pneg %p607
        %p2195 = pneg %p631
        %p2196 = pneg %p628
        %p2197 = pneg %p652
        %p2198 = pneg %p649
        %p2199 = pneg %p673
        %p2200 = pneg %p670
        %p2201 = pneg %p694
        %p2202 = pneg %p691
        %p2203 = pneg %p715
        %p2204 = pneg %p712
        %p2205 = pneg %p736
        %p2206 = pneg %p733
        %p2207 = pneg %p757
        %p2208 = pneg %p754
        %p2209 = pneg %p778
        %p2210 = pneg %p775
        %p2211 = pneg %p799
        %p2212 = pneg %p796
        %p2213 = pneg %p820
        %p2214 = pneg %p817
        %p2215 = pneg %p841
        %p2216 = pneg %p838
        %p2217 = pneg %p862
        %p2218 = pneg %p859
        %p2219 = pneg %p883
        %p2220 = pneg %p880
        %p2221 = pneg %p904
        %p2222 = pneg %p901
        %p2223 = pneg %p925
        %p2224 = pneg %p922
        %p2225 = pneg %p946
        %p2226 = pneg %p943
        %p2227 = pneg %p967
        %p2228 = pneg %p964
        %p2229 = pneg %p988
        %p2230 = pneg %p985
        %p2231 = pneg %p1009
        %p2232 = pneg %p1006
        %p2233 = pneg %p1030
        %p2234 = pneg %p1027
        %p2235 = pneg %p1051
        %p2236 = pneg %p1048
        %p2237 = pneg %p1072
        %p2238 = pneg %p1069
        %p2239 = pneg %p1093
        %p2240 = pneg %p1090
        %p2241 = pneg %p1114
        %p2242 = pneg %p1111
        %p2243 = pneg %p1135
        %p2244 = pneg %p1132
        %p2245 = pneg %p1156
        %p2246 = pneg %p1153
        %p2247 = pneg %p1177
        %p2248 = pneg %p1174
        %p2249 = pneg %p1198
        %p2250 = pneg %p1195
        %p2251 = pneg %p1219
        %p2252 = pneg %p1216
        %p2253 = pneg %p1240
        %p2254 = pneg %p1237
        %p2255 = pneg %p1261
        %p2256 = pneg %p1258
        %p2257 = pneg %p1282
        %p2258 = pneg %p1279
        %p2259 = pneg %p1303
        %p2260 = pneg %p1300
        %p2261 = pneg %p1324
        %p2262 = pneg %p1321
        %p2263 = pneg %p1345
        %p2264 = pneg %p1342
        %p2265 = pneg %p1366
        %p2266 = pneg %p1363
        %p2267 = pneg %p1387
        %p2268 = pneg %p1384
        %p2269 = pneg %p1408
        %p2270 = pneg %p1405
        %p2271 = pneg %p1429
        %p2272 = pneg %p1426
        %p2273 = pneg %p1450
        %p2274 = pneg %p1447
        %p2275 = pneg %p1471
        %p2276 = pneg %p1468
        %p2277 = pneg %p1492
        %p2278 = pneg %p1489
        %p2279 = pneg %p1513
        %p2280 = pneg %p1510
        %p2281 = pneg %p1534
        %p2282 = pneg %p1531
        %p2283 = pneg %p1555
        %p2284 = pneg %p1552
        %p2285 = pneg %p1576
        %p2286 = pneg %p1573
        %p2287 = pneg %p1597
        %p2288 = pneg %p1594
        %p2289 = pneg %p1623
        %p2290 = pneg %p1620
        %s2291 = sand.u32 %s1610, 1
        %s2292 = scalar_lea.sflag [#allocation4], %s2291
        %s2293 = sand.u32 %s1610, 1
        %s2294 = scalar_lea.vmem [#allocation37], %s2293
        %p2295 = pneg %p1649
        %p2296 = pneg %p1646
        %s2297 = sand.u32 %s1636, 1
        %s2298 = scalar_lea.sflag [#allocation39], %s2297
        %s2299 = sand.u32 %s1636, 1
        %s2300 = scalar_lea.vmem [#allocation38], %s2299
        %p2301 = scmp.lt.s32.totalorder %s169, 1
        %s2302 = scalar_select %p2301, %s169, 1
        %s2303 = smul.addr %s2302, 2
        %s2304 = smul.addr %s2303, 8
        %s2305 = scalar_lea.vmem %s1, %s2304
        %v2307 = vld [vmem:[%s2305] sm:$0xff]
        %v2308 = vld [vmem:[%s2305 + $0x8] sm:$0xff]
        %v2309 = vpack.c.bf16 %v2308, %v2307
        %v2310 = vld [vmem:[%s3] sm:$0xf]
        %vm2311 = vcmask 64512
        %v2313 = vsel %vm2311, %v2309, 0
        %vm2315 = vcmask 1043456
        %v2317 = vsel %vm2315, %v2310, 0
        %2319 = vmatprep.subr.bf16.mxu0 0
        %2320 = vmatpush1.bf16.msra.mxu0 %v2317
        %2321 = vmatprep.subr.bf16.mxu0 0
        %2322 = vmatpush1.bf16.msra.mxu0 0
        %2323 = vmatprep.subr.bf16.mxu0 0
        %2324 = vmatpush1.bf16.msra.mxu0 0
        %2325 = vmatprep.subr.bf16.mxu0 0
        %2326 = vmatpush1.bf16.msra.mxu0 0
        %2327 = vmatprep.subr.bf16.mxu0 0
        %2328 = vmatpush1.bf16.msra.mxu0 0
        %2329 = vmatprep.subr.bf16.mxu0 0
        %2330 = vmatpush1.bf16.msra.mxu0 0
        %2331 = vmatprep.subr.bf16.mxu0 0
        %2332 = vmatpush1.bf16.msra.mxu0 0
        %2333 = vmatprep.subr.bf16.mxu0 0
        %2334 = vmatpush1.bf16.msra.mxu0 0
        %2335 = vmatprep.subr.bf16.mxu0 0
        %2336 = vmatpush1.bf16.msra.mxu0 0
        %2337 = vmatprep.subr.bf16.mxu0 0
        %2338 = vmatpush1.bf16.msra.mxu0 0
        %2339 = vmatprep.subr.bf16.mxu0 0
        %2340 = vmatpush1.bf16.msra.mxu0 0
        %2341 = vmatprep.subr.bf16.mxu0 0
        %2342 = vmatpush1.bf16.msra.mxu0 0
        %2343 = vmatprep.subr.bf16.mxu0 0
        %2344 = vmatpush1.bf16.msra.mxu0 0
        %2345 = vmatprep.subr.bf16.mxu0 0
        %2346 = vmatpush1.bf16.msra.mxu0 0
        %2347 = vmatprep.subr.bf16.mxu0 0
        %2348 = vmatpush1.bf16.msra.mxu0 0
        %2349 = vmatprep.subr.bf16.mxu0 0
        %2350 = vmatpush1.bf16.msra.mxu0 0
        %2351 = vmatprep.mubr.bf16.mxu0 0
        %2352 = vmatmul.mubr.bf16.gmra.mrb[0].mxu0 %v2313
        %v2353 = vpop.f32.mrb[0].mxu0
        %v2354 = vadd.f32 0.0, %v2353
        %v2355 = vpop.f32.mrb[0].mxu0
        %v2356 = vpop.f32.mrb[0].mxu0
        %v2357 = vadd.f32 0.0, %v2356
        %v2358 = vpop.f32.mrb[0].mxu0
        %2359 = vdwg.mxu0
        %v2360 = vld [vmem:[%s5] sm:$0xf]
        %v2361 = vld [vmem:[%s7] sm:$0xf]
        %v2363 = vsel %vm2315, %v2361, 0
        %2365 = vmatprep.subr.bf16.mxu0 0
        %2366 = vmatpush1.bf16.msra.mxu0 %v2363
        %2367 = vmatprep.subr.bf16.mxu0 0
        %2368 = vmatpush1.bf16.msra.mxu0 0
        %2369 = vmatprep.subr.bf16.mxu0 0
        %2370 = vmatpush1.bf16.msra.mxu0 0
        %2371 = vmatprep.subr.bf16.mxu0 0
        %2372 = vmatpush1.bf16.msra.mxu0 0
        %2373 = vmatprep.subr.bf16.mxu0 0
        %2374 = vmatpush1.bf16.msra.mxu0 0
        %2375 = vmatprep.subr.bf16.mxu0 0
        %2376 = vmatpush1.bf16.msra.mxu0 0
        %2377 = vmatprep.subr.bf16.mxu0 0
        %2378 = vmatpush1.bf16.msra.mxu0 0
        %2379 = vmatprep.subr.bf16.mxu0 0
        %2380 = vmatpush1.bf16.msra.mxu0 0
        %2381 = vmatprep.subr.bf16.mxu0 0
        %2382 = vmatpush1.bf16.msra.mxu0 0
        %2383 = vmatprep.subr.bf16.mxu0 0
        %2384 = vmatpush1.bf16.msra.mxu0 0
        %2385 = vmatprep.subr.bf16.mxu0 0
        %2386 = vmatpush1.bf16.msra.mxu0 0
        %2387 = vmatprep.subr.bf16.mxu0 0
        %2388 = vmatpush1.bf16.msra.mxu0 0
        %2389 = vmatprep.subr.bf16.mxu0 0
        %2390 = vmatpush1.bf16.msra.mxu0 0
        %2391 = vmatprep.subr.bf16.mxu0 0
        %2392 = vmatpush1.bf16.msra.mxu0 0
        %2393 = vmatprep.subr.bf16.mxu0 0
        %2394 = vmatpush1.bf16.msra.mxu0 0
        %2395 = vmatprep.subr.bf16.mxu0 0
        %2396 = vmatpush1.bf16.msra.mxu0 0
        %2397 = vmatprep.mubr.bf16.mxu0 0
        %2398 = vmatmul.mubr.bf16.gmra.mrb[0].mxu0 %v2313
        %v2399 = vpop.f32.mrb[0].mxu0
        %v2400 = vadd.f32 0.0, %v2399
        %v2401 = vpop.f32.mrb[0].mxu0
        %v2402 = vpop.f32.mrb[0].mxu0
        %v2403 = vadd.f32 0.0, %v2402
        %v2404 = vpop.f32.mrb[0].mxu0
        %2405 = vdwg.mxu0
        %v2406 = vld [vmem:[%s9] sm:$0xff]
        %v2407 = vld [vmem:[%s9 + $0x8] sm:$0xff]
        %vm2408 = vcmask 130048
        %v2410 = vsel %vm2408, %v2406, 0
        %v2413 = vsel %vm2408, %v2407, 0
        %2415 = vmatprep.subr.mxu0 0.0
        %2416 = vmatpush1.msra.mxu0 %v2354
        %2417 = vmatprep.subr.mxu0 0.0
        %2418 = vmatpush1.msra.mxu0 %v2357
        %2419 = vmatprep.subr.mxu0 0.0
        %2420 = vmatpush1.msra.mxu0 0.0
        %2421 = vmatprep.subr.mxu0 0.0
        %2422 = vmatpush1.msra.mxu0 0.0
        %2423 = vmatprep.subr.mxu0 0.0
        %2424 = vmatpush1.msra.mxu0 0.0
        %2425 = vmatprep.subr.mxu0 0.0
        %2426 = vmatpush1.msra.mxu0 0.0
        %2427 = vmatprep.subr.mxu0 0.0
        %2428 = vmatpush1.msra.mxu0 0.0
        %2429 = vmatprep.subr.mxu0 0.0
        %2430 = vmatpush1.msra.mxu0 0.0
        %2431 = vmatprep.subr.mxu0 0.0
        %2432 = vmatpush1.msra.mxu0 0.0
        %2433 = vmatprep.subr.mxu0 0.0
        %2434 = vmatpush1.msra.mxu0 0.0
        %2435 = vmatprep.subr.mxu0 0.0
        %2436 = vmatpush1.msra.mxu0 0.0
        %2437 = vmatprep.subr.mxu0 0.0
        %2438 = vmatpush1.msra.mxu0 0.0
        %2439 = vmatprep.subr.mxu0 0.0
        %2440 = vmatpush1.msra.mxu0 0.0
        %2441 = vmatprep.subr.mxu0 0.0
        %2442 = vmatpush1.msra.mxu0 0.0
        %2443 = vmatprep.subr.mxu0 0.0
        %2444 = vmatpush1.msra.mxu0 0.0
        %2445 = vmatprep.subr.mxu0 0.0
        %2446 = vmatpush1.msra.mxu0 0.0
        %2447 = vmatprep.subr.mxu0 0.0
        %2448 = vmatpush1.msra.mxu0 0.0
        %2449 = vmatprep.subr.mxu0 0.0
        %2450 = vmatpush1.msra.mxu0 0.0
        %2451 = vmatprep.subr.mxu0 0.0
        %2452 = vmatpush1.msra.mxu0 0.0
        %2453 = vmatprep.subr.mxu0 0.0
        %2454 = vmatpush1.msra.mxu0 0.0
        %2455 = vmatprep.subr.mxu0 0.0
        %2456 = vmatpush1.msra.mxu0 0.0
        %2457 = vmatprep.subr.mxu0 0.0
        %2458 = vmatpush1.msra.mxu0 0.0
        %2459 = vmatprep.subr.mxu0 0.0
        %2460 = vmatpush1.msra.mxu0 0.0
        %2461 = vmatprep.subr.mxu0 0.0
        %2462 = vmatpush1.msra.mxu0 0.0
        %2463 = vmatprep.subr.mxu0 0.0
        %2464 = vmatpush1.msra.mxu0 0.0
        %2465 = vmatprep.subr.mxu0 0.0
        %2466 = vmatpush1.msra.mxu0 0.0
        %2467 = vmatprep.subr.mxu0 0.0
        %2468 = vmatpush1.msra.mxu0 0.0
        %2469 = vmatprep.subr.mxu0 0.0
        %2470 = vmatpush1.msra.mxu0 0.0
        %2471 = vmatprep.subr.mxu0 0.0
        %2472 = vmatpush1.msra.mxu0 0.0
        %2473 = vmatprep.subr.mxu0 0.0
        %2474 = vmatpush1.msra.mxu0 0.0
        %2475 = vmatprep.subr.mxu0 0.0
        %2476 = vmatpush1.msra.mxu0 0.0
        %2477 = vmatprep.subr.mxu0 0.0
        %2478 = vmatpush1.msra.mxu0 0.0
        %2479 = vmatprep.mubr.f32.mxu0 0.0
        %2480 = vmatmul.mubr.f32.gmra.mrb[0].mxu0 %v2410
        %v2481 = vpop.f32.mrb[0].mxu0
        %v2482 = vadd.f32 0.0, %v2481
        %v2483 = vpop.f32.mrb[0].mxu0
        %2484 = vmatprep.mubr.f32.mxu0 0.0
        %2485 = vmatmul.mubr.f32.gmra.mrb[0].mxu0 %v2413
        %v2486 = vpop.f32.mrb[0].mxu0
        %v2487 = vadd.f32 0.0, %v2486
        %v2488 = vpop.f32.mrb[0].mxu0
        %2489 = vdwg.mxu0
        %v2491 = vsel %vm2315, %v2360, 0
        %2493 = vmatprep.subr.bf16.mxu0 0
        %2494 = vmatpush1.bf16.msra.mxu0 %v2491
        %2495 = vmatprep.subr.bf16.mxu0 0
        %2496 = vmatpush1.bf16.msra.mxu0 0
        %2497 = vmatprep.subr.bf16.mxu0 0
        %2498 = vmatpush1.bf16.msra.mxu0 0
        %2499 = vmatprep.subr.bf16.mxu0 0
        %2500 = vmatpush1.bf16.msra.mxu0 0
        %2501 = vmatprep.subr.bf16.mxu0 0
        %2502 = vmatpush1.bf16.msra.mxu0 0
        %2503 = vmatprep.subr.bf16.mxu0 0
        %2504 = vmatpush1.bf16.msra.mxu0 0
        %2505 = vmatprep.subr.bf16.mxu0 0
        %2506 = vmatpush1.bf16.msra.mxu0 0
        %2507 = vmatprep.subr.bf16.mxu0 0
        %2508 = vmatpush1.bf16.msra.mxu0 0
        %2509 = vmatprep.subr.bf16.mxu0 0
        %2510 = vmatpush1.bf16.msra.mxu0 0
        %2511 = vmatprep.subr.bf16.mxu0 0
        %2512 = vmatpush1.bf16.msra.mxu0 0
        %2513 = vmatprep.subr.bf16.mxu0 0
        %2514 = vmatpush1.bf16.msra.mxu0 0
        %2515 = vmatprep.subr.bf16.mxu0 0
        %2516 = vmatpush1.bf16.msra.mxu0 0
        %2517 = vmatprep.subr.bf16.mxu0 0
        %2518 = vmatpush1.bf16.msra.mxu0 0
        %2519 = vmatprep.subr.bf16.mxu0 0
        %2520 = vmatpush1.bf16.msra.mxu0 0
        %2521 = vmatprep.subr.bf16.mxu0 0
        %2522 = vmatpush1.bf16.msra.mxu0 0
        %2523 = vmatprep.subr.bf16.mxu0 0
        %2524 = vmatpush1.bf16.msra.mxu0 0
        %2525 = vmatprep.mubr.bf16.mxu0 0
        %2526 = vmatmul.mubr.bf16.gmra.mrb[0].mxu0 %v2313
        %v2527 = vpop.f32.mrb[0].mxu0
        %v2528 = vadd.f32 %v2482, %v2527
        %v2529 = vpop.f32.mrb[0].mxu0
        %v2530 = vpop.f32.mrb[0].mxu0
        %v2531 = vadd.f32 %v2487, %v2530
        %v2532 = vpop.f32.mrb[0].mxu0
        %2533 = vdwg.mxu0
        %v2534 = vld [vmem:[%s11] sm:$0xff]
        %v2535 = vld [vmem:[%s11 + $0x8] sm:$0xff]
        %v2537 = vsel %vm2408, %v2534, 0
        %v2540 = vsel %vm2408, %v2535, 0
        %2542 = vmatprep.subr.mxu0 0.0
        %2543 = vmatpush1.msra.mxu0 %v2400
        %2544 = vmatprep.subr.mxu0 0.0
        %2545 = vmatpush1.msra.mxu0 %v2403
        %2546 = vmatprep.subr.mxu0 0.0
        %2547 = vmatpush1.msra.mxu0 0.0
        %2548 = vmatprep.subr.mxu0 0.0
        %2549 = vmatpush1.msra.mxu0 0.0
        %2550 = vmatprep.subr.mxu0 0.0
        %2551 = vmatpush1.msra.mxu0 0.0
        %2552 = vmatprep.subr.mxu0 0.0
        %2553 = vmatpush1.msra.mxu0 0.0
        %2554 = vmatprep.subr.mxu0 0.0
        %2555 = vmatpush1.msra.mxu0 0.0
        %2556 = vmatprep.subr.mxu0 0.0
        %2557 = vmatpush1.msra.mxu0 0.0
        %2558 = vmatprep.subr.mxu0 0.0
        %2559 = vmatpush1.msra.mxu0 0.0
        %2560 = vmatprep.subr.mxu0 0.0
        %2561 = vmatpush1.msra.mxu0 0.0
        %2562 = vmatprep.subr.mxu0 0.0
        %2563 = vmatpush1.msra.mxu0 0.0
        %2564 = vmatprep.subr.mxu0 0.0
        %2565 = vmatpush1.msra.mxu0 0.0
        %2566 = vmatprep.subr.mxu0 0.0
        %2567 = vmatpush1.msra.mxu0 0.0
        %2568 = vmatprep.subr.mxu0 0.0
        %2569 = vmatpush1.msra.mxu0 0.0
        %2570 = vmatprep.subr.mxu0 0.0
        %2571 = vmatpush1.msra.mxu0 0.0
        %2572 = vmatprep.subr.mxu0 0.0
        %2573 = vmatpush1.msra.mxu0 0.0
        %2574 = vmatprep.subr.mxu0 0.0
        %2575 = vmatpush1.msra.mxu0 0.0
        %2576 = vmatprep.subr.mxu0 0.0
        %2577 = vmatpush1.msra.mxu0 0.0
        %2578 = vmatprep.subr.mxu0 0.0
        %2579 = vmatpush1.msra.mxu0 0.0
        %2580 = vmatprep.subr.mxu0 0.0
        %2581 = vmatpush1.msra.mxu0 0.0
        %2582 = vmatprep.subr.mxu0 0.0
        %2583 = vmatpush1.msra.mxu0 0.0
        %2584 = vmatprep.subr.mxu0 0.0
        %2585 = vmatpush1.msra.mxu0 0.0
        %2586 = vmatprep.subr.mxu0 0.0
        %2587 = vmatpush1.msra.mxu0 0.0
        %2588 = vmatprep.subr.mxu0 0.0
        %2589 = vmatpush1.msra.mxu0 0.0
        %2590 = vmatprep.subr.mxu0 0.0
        %2591 = vmatpush1.msra.mxu0 0.0
        %2592 = vmatprep.subr.mxu0 0.0
        %2593 = vmatpush1.msra.mxu0 0.0
        %2594 = vmatprep.subr.mxu0 0.0
        %2595 = vmatpush1.msra.mxu0 0.0
        %2596 = vmatprep.subr.mxu0 0.0
        %2597 = vmatpush1.msra.mxu0 0.0
        %2598 = vmatprep.subr.mxu0 0.0
        %2599 = vmatpush1.msra.mxu0 0.0
        %2600 = vmatprep.subr.mxu0 0.0
        %2601 = vmatpush1.msra.mxu0 0.0
        %2602 = vmatprep.subr.mxu0 0.0
        %2603 = vmatpush1.msra.mxu0 0.0
        %2604 = vmatprep.subr.mxu0 0.0
        %2605 = vmatpush1.msra.mxu0 0.0
        %2606 = vmatprep.mubr.f32.mxu0 0.0
        %2607 = vmatmul.mubr.f32.gmra.mrb[0].mxu0 %v2537
        %v2608 = vpop.f32.mrb[0].mxu0
        %v2609 = vadd.f32 0.0, %v2608
        %v2610 = vpop.f32.mrb[0].mxu0
        %2611 = vmatprep.mubr.f32.mxu0 0.0
        %2612 = vmatmul.mubr.f32.gmra.mrb[0].mxu0 %v2540
        %v2613 = vpop.f32.mrb[0].mxu0
        %v2614 = vadd.f32 0.0, %v2613
        %v2615 = vpop.f32.mrb[0].mxu0
        %2616 = vdwg.mxu0
        %v2617 = vadd.f32 %v2528, %v2609
        %v2618 = vadd.f32 %v2531, %v2614
        %v2619 = vld [vmem:[#allocation2] sm:$0x1]
        %v2621 = vlaneseq
        %v2622 = vshrl.u32 %v2621, 7
        %v2623 = vsub.s32 0, %v2622
        %v2624 = vrot.slane %v2619, %v2623
        %v2626 = vadd.f32 %v2617, %v2624
        %v2627 = vadd.f32 %v2618, %v2624
        %v2628 = vmax.f32 %v2626, 0.0
        %v2629 = vmax.f32 %v2627, 0.0
        %v2630 = vpack.c.bf16 %v2629, %v2628
        %v2631 = vld [vmem:[%s15] sm:$0xf]
        %v2632 = vld [vmem:[%s15 + $0x4] sm:$0xf]
        %v2633 = vld [vmem:[%s15 + $0x8] sm:$0xf]
        %v2634 = vld [vmem:[%s15 + $0xc] sm:$0xf]
        %v2635 = vld [vmem:[%s15 + $0x10] sm:$0xf]
        %v2636 = vld [vmem:[%s15 + $0x14] sm:$0xf]
        %v2637 = vld [vmem:[%s15 + $0x18] sm:$0xf]
        %v2638 = vld [vmem:[%s15 + $0x1c] sm:$0xf]
        %v2639 = vld [vmem:[%s15 + $0x20] sm:$0xf]
        %v2640 = vld [vmem:[%s15 + $0x24] sm:$0xf]
        %v2641 = vld [vmem:[%s15 + $0x28] sm:$0xf]
        %v2642 = vld [vmem:[%s15 + $0x2c] sm:$0xf]
        %v2643 = vld [vmem:[%s15 + $0x30] sm:$0xf]
        %v2644 = vld [vmem:[%s15 + $0x34] sm:$0xf]
        %v2645 = vld [vmem:[%s15 + $0x38] sm:$0xf]
        %v2646 = vld [vmem:[%s15 + $0x3c] sm:$0xf]
        %v2647 = vld [vmem:[#allocation5] sm:$0x1]
        %v2649 = vlaneseq
        %v2650 = vshrl.u32 %v2649, 7
        %v2651 = vsub.s32 0, %v2650
        %v2652 = vrot.slane %v2647, %v2651
        %v2670 = vunpack.c.l.b16 %v2631
        %v2671 = vunpack.c.l.b16 %v2632
        %v2672 = vunpack.c.l.b16 %v2633
        %v2673 = vunpack.c.l.b16 %v2634
        %v2674 = vunpack.c.l.b16 %v2635
        %v2675 = vunpack.c.l.b16 %v2636
        %v2676 = vunpack.c.l.b16 %v2637
        %v2677 = vunpack.c.l.b16 %v2638
        %v2678 = vunpack.c.l.b16 %v2639
        %v2679 = vunpack.c.l.b16 %v2640
        %v2680 = vunpack.c.l.b16 %v2641
        %v2681 = vunpack.c.l.b16 %v2642
        %v2682 = vunpack.c.l.b16 %v2643
        %v2683 = vunpack.c.l.b16 %v2644
        %v2684 = vunpack.c.l.b16 %v2645
        %v2685 = vunpack.c.l.b16 %v2646
        %v2686 = vpack.c.b16 %v2671, %v2670
        %v2687 = vpack.c.b16 %v2673, %v2672
        %v2688 = vpack.c.b16 %v2675, %v2674
        %v2689 = vpack.c.b16 %v2677, %v2676
        %v2690 = vpack.c.b16 %v2679, %v2678
        %v2691 = vpack.c.b16 %v2681, %v2680
        %v2692 = vpack.c.b16 %v2683, %v2682
        %v2693 = vpack.c.b16 %v2685, %v2684
        %2702 = vmatprep.subr.bf16.mxu0 0
        %2703 = vmatpush1.bf16.msra.mxu0 %v2686
        %2704 = vmatprep.subr.bf16.mxu0 0
        %2705 = vmatpush1.bf16.msra.mxu0 %v2687
        %2706 = vmatprep.subr.bf16.mxu0 0
        %2707 = vmatpush1.bf16.msra.mxu0 %v2688
        %2708 = vmatprep.subr.bf16.mxu0 0
        %2709 = vmatpush1.bf16.msra.mxu0 %v2689
        %2710 = vmatprep.subr.bf16.mxu0 0
        %2711 = vmatpush1.bf16.msra.mxu0 %v2690
        %2712 = vmatprep.subr.bf16.mxu0 0
        %2713 = vmatpush1.bf16.msra.mxu0 %v2691
        %2714 = vmatprep.subr.bf16.mxu0 0
        %2715 = vmatpush1.bf16.msra.mxu0 %v2692
        %2716 = vmatprep.subr.bf16.mxu0 0
        %2717 = vmatpush1.bf16.msra.mxu0 %v2693
        %2718 = vmatprep.subr.bf16.mxu0 0
        %2719 = vmatpush1.bf16.msra.mxu0 0
        %2720 = vmatprep.subr.bf16.mxu0 0
        %2721 = vmatpush1.bf16.msra.mxu0 0
        %2722 = vmatprep.subr.bf16.mxu0 0
        %2723 = vmatpush1.bf16.msra.mxu0 0
        %2724 = vmatprep.subr.bf16.mxu0 0
        %2725 = vmatpush1.bf16.msra.mxu0 0
        %2726 = vmatprep.subr.bf16.mxu0 0
        %2727 = vmatpush1.bf16.msra.mxu0 0
        %2728 = vmatprep.subr.bf16.mxu0 0
        %2729 = vmatpush1.bf16.msra.mxu0 0
        %2730 = vmatprep.subr.bf16.mxu0 0
        %2731 = vmatpush1.bf16.msra.mxu0 0
        %2732 = vmatprep.subr.bf16.mxu0 0
        %2733 = vmatpush1.bf16.msra.mxu0 0
        %2734 = vmatprep.mubr.bf16.mxu0 0
        %2735 = vmatmul.mubr.bf16.gmra.mrb[0].mxu0 %v2630
        %v2736 = vpop.f32.mrb[0].mxu0
        %v2737 = vadd.f32 %v2652, %v2736
        %v2738 = vpop.f32.mrb[0].mxu0
        %v2739 = vpop.f32.mrb[0].mxu0
        %v2740 = vadd.f32 %v2652, %v2739
        %v2741 = vpop.f32.mrb[0].mxu0
        %2742 = vdwg.mxu0
        %v2743 = vmax.f32 %v2737, 0.0
        %v2744 = vmax.f32 %v2740, 0.0
        %v2745 = vld [vmem:[%s19] sm:$0xff]
        %v2747 = vsel %vm2408, %v2745, 0
        %2749 = vmatprep.subr.mxu0 0.0
        %2750 = vmatpush1.msra.mxu0 %v2743
        %2751 = vmatprep.subr.mxu0 0.0
        %2752 = vmatpush1.msra.mxu0 %v2744
        %2753 = vmatprep.subr.mxu0 0.0
        %2754 = vmatpush1.msra.mxu0 0.0
        %2755 = vmatprep.subr.mxu0 0.0
        %2756 = vmatpush1.msra.mxu0 0.0
        %2757 = vmatprep.subr.mxu0 0.0
        %2758 = vmatpush1.msra.mxu0 0.0
        %2759 = vmatprep.subr.mxu0 0.0
        %2760 = vmatpush1.msra.mxu0 0.0
        %2761 = vmatprep.subr.mxu0 0.0
        %2762 = vmatpush1.msra.mxu0 0.0
        %2763 = vmatprep.subr.mxu0 0.0
        %2764 = vmatpush1.msra.mxu0 0.0
        %2765 = vmatprep.subr.mxu0 0.0
        %2766 = vmatpush1.msra.mxu0 0.0
        %2767 = vmatprep.subr.mxu0 0.0
        %2768 = vmatpush1.msra.mxu0 0.0
        %2769 = vmatprep.subr.mxu0 0.0
        %2770 = vmatpush1.msra.mxu0 0.0
        %2771 = vmatprep.subr.mxu0 0.0
        %2772 = vmatpush1.msra.mxu0 0.0
        %2773 = vmatprep.subr.mxu0 0.0
        %2774 = vmatpush1.msra.mxu0 0.0
        %2775 = vmatprep.subr.mxu0 0.0
        %2776 = vmatpush1.msra.mxu0 0.0
        %2777 = vmatprep.subr.mxu0 0.0
        %2778 = vmatpush1.msra.mxu0 0.0
        %2779 = vmatprep.subr.mxu0 0.0
        %2780 = vmatpush1.msra.mxu0 0.0
        %2781 = vmatprep.subr.mxu0 0.0
        %2782 = vmatpush1.msra.mxu0 0.0
        %2783 = vmatprep.subr.mxu0 0.0
        %2784 = vmatpush1.msra.mxu0 0.0
        %2785 = vmatprep.subr.mxu0 0.0
        %2786 = vmatpush1.msra.mxu0 0.0
        %2787 = vmatprep.subr.mxu0 0.0
        %2788 = vmatpush1.msra.mxu0 0.0
        %2789 = vmatprep.subr.mxu0 0.0
        %2790 = vmatpush1.msra.mxu0 0.0
        %2791 = vmatprep.subr.mxu0 0.0
        %2792 = vmatpush1.msra.mxu0 0.0
        %2793 = vmatprep.subr.mxu0 0.0
        %2794 = vmatpush1.msra.mxu0 0.0
        %2795 = vmatprep.subr.mxu0 0.0
        %2796 = vmatpush1.msra.mxu0 0.0
        %2797 = vmatprep.subr.mxu0 0.0
        %2798 = vmatpush1.msra.mxu0 0.0
        %2799 = vmatprep.subr.mxu0 0.0
        %2800 = vmatpush1.msra.mxu0 0.0
        %2801 = vmatprep.subr.mxu0 0.0
        %2802 = vmatpush1.msra.mxu0 0.0
        %2803 = vmatprep.subr.mxu0 0.0
        %2804 = vmatpush1.msra.mxu0 0.0
        %2805 = vmatprep.subr.mxu0 0.0
        %2806 = vmatpush1.msra.mxu0 0.0
        %2807 = vmatprep.subr.mxu0 0.0
        %2808 = vmatpush1.msra.mxu0 0.0
        %2809 = vmatprep.subr.mxu0 0.0
        %2810 = vmatpush1.msra.mxu0 0.0
        %2811 = vmatprep.subr.mxu0 0.0
        %2812 = vmatpush1.msra.mxu0 0.0
        %2813 = vmatprep.mubr.f32.mxu0 0.0
        %2814 = vmatmul.mubr.f32.gmra.mrb[0].mxu0 %v2747
        %v2815 = vpop.f32.mrb[0].mxu0
        %v2816 = vadd.f32 0.0, %v2815
        %v2817 = vpop.f32.mrb[0].mxu0
        %2818 = vdwg.mxu0
        %v2819 = vld [vmem:[%s21] sm:$0xff]
        %v2821 = vsel %vm2408, %v2819, 0
        %2823 = vmatprep.subr.mxu0 0.0
        %2824 = vmatpush1.msra.mxu0 %v2743
        %2825 = vmatprep.subr.mxu0 0.0
        %2826 = vmatpush1.msra.mxu0 %v2744
        %2827 = vmatprep.subr.mxu0 0.0
        %2828 = vmatpush1.msra.mxu0 0.0
        %2829 = vmatprep.subr.mxu0 0.0
        %2830 = vmatpush1.msra.mxu0 0.0
        %2831 = vmatprep.subr.mxu0 0.0
        %2832 = vmatpush1.msra.mxu0 0.0
        %2833 = vmatprep.subr.mxu0 0.0
        %2834 = vmatpush1.msra.mxu0 0.0
        %2835 = vmatprep.subr.mxu0 0.0
        %2836 = vmatpush1.msra.mxu0 0.0
        %2837 = vmatprep.subr.mxu0 0.0
        %2838 = vmatpush1.msra.mxu0 0.0
        %2839 = vmatprep.subr.mxu0 0.0
        %2840 = vmatpush1.msra.mxu0 0.0
        %2841 = vmatprep.subr.mxu0 0.0
        %2842 = vmatpush1.msra.mxu0 0.0
        %2843 = vmatprep.subr.mxu0 0.0
        %2844 = vmatpush1.msra.mxu0 0.0
        %2845 = vmatprep.subr.mxu0 0.0
        %2846 = vmatpush1.msra.mxu0 0.0
        %2847 = vmatprep.subr.mxu0 0.0
        %2848 = vmatpush1.msra.mxu0 0.0
        %2849 = vmatprep.subr.mxu0 0.0
        %2850 = vmatpush1.msra.mxu0 0.0
        %2851 = vmatprep.subr.mxu0 0.0
        %2852 = vmatpush1.msra.mxu0 0.0
        %2853 = vmatprep.subr.mxu0 0.0
        %2854 = vmatpush1.msra.mxu0 0.0
        %2855 = vmatprep.subr.mxu0 0.0
        %2856 = vmatpush1.msra.mxu0 0.0
        %2857 = vmatprep.subr.mxu0 0.0
        %2858 = vmatpush1.msra.mxu0 0.0
        %2859 = vmatprep.subr.mxu0 0.0
        %2860 = vmatpush1.msra.mxu0 0.0
        %2861 = vmatprep.subr.mxu0 0.0
        %2862 = vmatpush1.msra.mxu0 0.0
        %2863 = vmatprep.subr.mxu0 0.0
        %2864 = vmatpush1.msra.mxu0 0.0
        %2865 = vmatprep.subr.mxu0 0.0
        %2866 = vmatpush1.msra.mxu0 0.0
        %2867 = vmatprep.subr.mxu0 0.0
        %2868 = vmatpush1.msra.mxu0 0.0
        %2869 = vmatprep.subr.mxu0 0.0
        %2870 = vmatpush1.msra.mxu0 0.0
        %2871 = vmatprep.subr.mxu0 0.0
        %2872 = vmatpush1.msra.mxu0 0.0
        %2873 = vmatprep.subr.mxu0 0.0
        %2874 = vmatpush1.msra.mxu0 0.0
        %2875 = vmatprep.subr.mxu0 0.0
        %2876 = vmatpush1.msra.mxu0 0.0
        %2877 = vmatprep.subr.mxu0 0.0
        %2878 = vmatpush1.msra.mxu0 0.0
        %2879 = vmatprep.subr.mxu0 0.0
        %2880 = vmatpush1.msra.mxu0 0.0
        %2881 = vmatprep.subr.mxu0 0.0
        %2882 = vmatpush1.msra.mxu0 0.0
        %2883 = vmatprep.subr.mxu0 0.0
        %2884 = vmatpush1.msra.mxu0 0.0
        %2885 = vmatprep.subr.mxu0 0.0
        %2886 = vmatpush1.msra.mxu0 0.0
        %2887 = vmatprep.mubr.f32.mxu0 0.0
        %2888 = vmatmul.mubr.f32.gmra.mrb[0].mxu0 %v2821
        %v2889 = vpop.f32.mrb[0].mxu0
        %v2890 = vadd.f32 0.0, %v2889
        %v2891 = vpop.f32.mrb[0].mxu0
        %2892 = vdwg.mxu0
        %v2893 = vmax.f32 %v2816, %v2890
        %v2894 = vld [vmem:[%s23] sm:$0xff]
        %v2895 = vld [vmem:[%s23 + $0x8] sm:$0xff]
        %v2896 = vld [vmem:[%s23 + $0x10] sm:$0xff]
        %v2897 = vld [vmem:[%s23 + $0x18] sm:$0xff]
        %v2898 = vld [vmem:[%s23 + $0x20] sm:$0xff]
        %v2899 = vld [vmem:[%s23 + $0x28] sm:$0xff]
        %v2900 = vld [vmem:[%s23 + $0x30] sm:$0xff]
        %v2901 = vld [vmem:[%s23 + $0x38] sm:$0xff]
        %v2902 = vld [vmem:[%s23 + $0x40] sm:$0xff]
        %v2903 = vld [vmem:[%s23 + $0x48] sm:$0xff]
        %v2904 = vld [vmem:[%s23 + $0x50] sm:$0xff]
        %v2905 = vld [vmem:[%s23 + $0x58] sm:$0xff]
        %v2906 = vld [vmem:[%s23 + $0x60] sm:$0xff]
        %v2907 = vld [vmem:[%s23 + $0x68] sm:$0xff]
        %v2908 = vld [vmem:[%s23 + $0x70] sm:$0xff]
        %v2909 = vld [vmem:[%s23 + $0x78] sm:$0xff]
        %2910 = vmatprep.subr.mxu0 0.0
        %2911 = vmatpush1.msra.mxu0 %v2894
        %2912 = vmatprep.subr.mxu0 0.0
        %2913 = vmatpush1.msra.mxu0 %v2895
        %2914 = vmatprep.subr.mxu0 0.0
        %2915 = vmatpush1.msra.mxu0 %v2896
        %2916 = vmatprep.subr.mxu0 0.0
        %2917 = vmatpush1.msra.mxu0 %v2897
        %2918 = vmatprep.subr.mxu0 0.0
        %2919 = vmatpush1.msra.mxu0 %v2898
        %2920 = vmatprep.subr.mxu0 0.0
        %2921 = vmatpush1.msra.mxu0 %v2899
        %2922 = vmatprep.subr.mxu0 0.0
        %2923 = vmatpush1.msra.mxu0 %v2900
        %2924 = vmatprep.subr.mxu0 0.0
        %2925 = vmatpush1.msra.mxu0 %v2901
        %2926 = vmatprep.subr.mxu0 0.0
        %2927 = vmatpush1.msra.mxu0 %v2902
        %2928 = vmatprep.subr.mxu0 0.0
        %2929 = vmatpush1.msra.mxu0 %v2903
        %2930 = vmatprep.subr.mxu0 0.0
        %2931 = vmatpush1.msra.mxu0 %v2904
        %2932 = vmatprep.subr.mxu0 0.0
        %2933 = vmatpush1.msra.mxu0 %v2905
        %2934 = vmatprep.subr.mxu0 0.0
        %2935 = vmatpush1.msra.mxu0 %v2906
        %2936 = vmatprep.subr.mxu0 0.0
        %2937 = vmatpush1.msra.mxu0 %v2907
        %2938 = vmatprep.subr.mxu0 0.0
        %2939 = vmatpush1.msra.mxu0 %v2908
        %2940 = vmatprep.subr.mxu0 0.0
        %2941 = vmatpush1.msra.mxu0 %v2909
        %2942 = vmatprep.subr.mxu0 0.0
        %2943 = vmatpush1.msra.mxu0 0.0
        %2944 = vmatprep.subr.mxu0 0.0
        %2945 = vmatpush1.msra.mxu0 0.0
        %2946 = vmatprep.subr.mxu0 0.0
        %2947 = vmatpush1.msra.mxu0 0.0
        %2948 = vmatprep.subr.mxu0 0.0
        %2949 = vmatpush1.msra.mxu0 0.0
        %2950 = vmatprep.subr.mxu0 0.0
        %2951 = vmatpush1.msra.mxu0 0.0
        %2952 = vmatprep.subr.mxu0 0.0
        %2953 = vmatpush1.msra.mxu0 0.0
        %2954 = vmatprep.subr.mxu0 0.0
        %2955 = vmatpush1.msra.mxu0 0.0
        %2956 = vmatprep.subr.mxu0 0.0
        %2957 = vmatpush1.msra.mxu0 0.0
        %2958 = vmatprep.subr.mxu0 0.0
        %2959 = vmatpush1.msra.mxu0 0.0
        %2960 = vmatprep.subr.mxu0 0.0
        %2961 = vmatpush1.msra.mxu0 0.0
        %2962 = vmatprep.subr.mxu0 0.0
        %2963 = vmatpush1.msra.mxu0 0.0
        %2964 = vmatprep.subr.mxu0 0.0
        %2965 = vmatpush1.msra.mxu0 0.0
        %2966 = vmatprep.subr.mxu0 0.0
        %2967 = vmatpush1.msra.mxu0 0.0
        %2968 = vmatprep.subr.mxu0 0.0
        %2969 = vmatpush1.msra.mxu0 0.0
        %2970 = vmatprep.subr.mxu0 0.0
        %2971 = vmatpush1.msra.mxu0 0.0
        %2972 = vmatprep.subr.mxu0 0.0
        %2973 = vmatpush1.msra.mxu0 0.0
        %2974 = vmatprep.mubr.f32.mxu0 0.0
        %2975 = vmatmul.mubr.f32.gmra.mrb[0].mxu0 %v2893
        %v2976 = vpop.f32.mrb[0].mxu0
        %v2977 = vadd.f32 0.0, %v2976
        %v2978 = vpop.f32.mrb[0].mxu0
        %2979 = vdwg.mxu0
        %v2980 = vld [vmem:[%s25] sm:$0xff]
        %v2981 = vld [vmem:[%s25 + $0x8] sm:$0xff]
        %v2982 = vld [vmem:[%s25 + $0x10] sm:$0xff]
        %v2983 = vld [vmem:[%s25 + $0x18] sm:$0xff]
        %v2984 = vld [vmem:[%s25 + $0x20] sm:$0xff]
        %v2985 = vld [vmem:[%s25 + $0x28] sm:$0xff]
        %v2986 = vld [vmem:[%s25 + $0x30] sm:$0xff]
        %v2987 = vld [vmem:[%s25 + $0x38] sm:$0xff]
        %v2988 = vld [vmem:[%s25 + $0x40] sm:$0xff]
        %v2989 = vld [vmem:[%s25 + $0x48] sm:$0xff]
        %v2990 = vld [vmem:[%s25 + $0x50] sm:$0xff]
        %v2991 = vld [vmem:[%s25 + $0x58] sm:$0xff]
        %v2992 = vld [vmem:[%s25 + $0x60] sm:$0xff]
        %v2993 = vld [vmem:[%s25 + $0x68] sm:$0xff]
        %v2994 = vld [vmem:[%s25 + $0x70] sm:$0xff]
        %v2995 = vld [vmem:[%s25 + $0x78] sm:$0xff]
        %2996 = vmatprep.subr.mxu0 0.0
        %2997 = vmatpush1.msra.mxu0 %v2980
        %2998 = vmatprep.subr.mxu0 0.0
        %2999 = vmatpush1.msra.mxu0 %v2981
        %3000 = vmatprep.subr.mxu0 0.0
        %3001 = vmatpush1.msra.mxu0 %v2982
        %3002 = vmatprep.subr.mxu0 0.0
        %3003 = vmatpush1.msra.mxu0 %v2983
        %3004 = vmatprep.subr.mxu0 0.0
        %3005 = vmatpush1.msra.mxu0 %v2984
        %3006 = vmatprep.subr.mxu0 0.0
        %3007 = vmatpush1.msra.mxu0 %v2985
        %3008 = vmatprep.subr.mxu0 0.0
        %3009 = vmatpush1.msra.mxu0 %v2986
        %3010 = vmatprep.subr.mxu0 0.0
        %3011 = vmatpush1.msra.mxu0 %v2987
        %3012 = vmatprep.subr.mxu0 0.0
        %3013 = vmatpush1.msra.mxu0 %v2988
        %3014 = vmatprep.subr.mxu0 0.0
        %3015 = vmatpush1.msra.mxu0 %v2989
        %3016 = vmatprep.subr.mxu0 0.0
        %3017 = vmatpush1.msra.mxu0 %v2990
        %3018 = vmatprep.subr.mxu0 0.0
        %3019 = vmatpush1.msra.mxu0 %v2991
        %3020 = vmatprep.subr.mxu0 0.0
        %3021 = vmatpush1.msra.mxu0 %v2992
        %3022 = vmatprep.subr.mxu0 0.0
        %3023 = vmatpush1.msra.mxu0 %v2993
        %3024 = vmatprep.subr.mxu0 0.0
        %3025 = vmatpush1.msra.mxu0 %v2994
        %3026 = vmatprep.subr.mxu0 0.0
        %3027 = vmatpush1.msra.mxu0 %v2995
        %3028 = vmatprep.subr.mxu0 0.0
        %3029 = vmatpush1.msra.mxu0 0.0
        %3030 = vmatprep.subr.mxu0 0.0
        %3031 = vmatpush1.msra.mxu0 0.0
        %3032 = vmatprep.subr.mxu0 0.0
        %3033 = vmatpush1.msra.mxu0 0.0
        %3034 = vmatprep.subr.mxu0 0.0
        %3035 = vmatpush1.msra.mxu0 0.0
        %3036 = vmatprep.subr.mxu0 0.0
        %3037 = vmatpush1.msra.mxu0 0.0
        %3038 = vmatprep.subr.mxu0 0.0
        %3039 = vmatpush1.msra.mxu0 0.0
        %3040 = vmatprep.subr.mxu0 0.0
        %3041 = vmatpush1.msra.mxu0 0.0
        %3042 = vmatprep.subr.mxu0 0.0
        %3043 = vmatpush1.msra.mxu0 0.0
        %3044 = vmatprep.subr.mxu0 0.0
        %3045 = vmatpush1.msra.mxu0 0.0
        %3046 = vmatprep.subr.mxu0 0.0
        %3047 = vmatpush1.msra.mxu0 0.0
        %3048 = vmatprep.subr.mxu0 0.0
        %3049 = vmatpush1.msra.mxu0 0.0
        %3050 = vmatprep.subr.mxu0 0.0
        %3051 = vmatpush1.msra.mxu0 0.0
        %3052 = vmatprep.subr.mxu0 0.0
        %3053 = vmatpush1.msra.mxu0 0.0
        %3054 = vmatprep.subr.mxu0 0.0
        %3055 = vmatpush1.msra.mxu0 0.0
        %3056 = vmatprep.subr.mxu0 0.0
        %3057 = vmatpush1.msra.mxu0 0.0
        %3058 = vmatprep.subr.mxu0 0.0
        %3059 = vmatpush1.msra.mxu0 0.0
        %3060 = vmatprep.mubr.f32.mxu0 0.0
        %3061 = vmatmul.mubr.f32.gmra.mrb[0].mxu0 %v2893
        %v3062 = vpop.f32.mrb[0].mxu0
        %v3063 = vadd.f32 0.0, %v3062
        %v3064 = vpop.f32.mrb[0].mxu0
        %3065 = vdwg.mxu0
        %v3066 = vmax.f32 %v2977, %v3063
        %v3067 = vpack.c.bf16 %v3066, %v3066
        %v3068 = vld [vmem:[%s27] sm:$0xf]
        %v3069 = vld [vmem:[%s27 + $0x4] sm:$0xf]
        %v3070 = vld [vmem:[%s27 + $0x8] sm:$0xf]
        %v3071 = vld [vmem:[%s27 + $0xc] sm:$0xf]
        %v3072 = vld [vmem:[%s27 + $0x10] sm:$0xf]
        %v3073 = vld [vmem:[%s27 + $0x14] sm:$0xf]
        %v3074 = vld [vmem:[%s27 + $0x18] sm:$0xf]
        %v3075 = vld [vmem:[%s27 + $0x1c] sm:$0xf]
        %v3076 = vld [vmem:[#allocation7] sm:$0x1]
        %v3078 = vlaneseq
        %v3079 = vshrl.u32 %v3078, 7
        %v3080 = vsub.s32 0, %v3079
        %v3081 = vrot.slane %v3076, %v3080
        %v3091 = vunpack.c.l.b16 %v3068
        %v3092 = vunpack.c.l.b16 %v3069
        %v3093 = vunpack.c.l.b16 %v3070
        %v3094 = vunpack.c.l.b16 %v3071
        %v3095 = vunpack.c.l.b16 %v3072
        %v3096 = vunpack.c.l.b16 %v3073
        %v3097 = vunpack.c.l.b16 %v3074
        %v3098 = vunpack.c.l.b16 %v3075
        %v3099 = vpack.c.b16 %v3092, %v3091
        %v3100 = vpack.c.b16 %v3094, %v3093
        %v3101 = vpack.c.b16 %v3096, %v3095
        %v3102 = vpack.c.b16 %v3098, %v3097
        %vm3107 = vcmask 523264
        %v3109 = vsel %vm3107, %v3067, 0
        %3111 = vmatprep.subr.bf16.mxu0 0
        %3112 = vmatpush1.bf16.msra.mxu0 %v3099
        %3113 = vmatprep.subr.bf16.mxu0 0
        %3114 = vmatpush1.bf16.msra.mxu0 %v3100
        %3115 = vmatprep.subr.bf16.mxu0 0
        %3116 = vmatpush1.bf16.msra.mxu0 %v3101
        %3117 = vmatprep.subr.bf16.mxu0 0
        %3118 = vmatpush1.bf16.msra.mxu0 %v3102
        %3119 = vmatprep.subr.bf16.mxu0 0
        %3120 = vmatpush1.bf16.msra.mxu0 0
        %3121 = vmatprep.subr.bf16.mxu0 0
        %3122 = vmatpush1.bf16.msra.mxu0 0
        %3123 = vmatprep.subr.bf16.mxu0 0
        %3124 = vmatpush1.bf16.msra.mxu0 0
        %3125 = vmatprep.subr.bf16.mxu0 0
        %3126 = vmatpush1.bf16.msra.mxu0 0
        %3127 = vmatprep.subr.bf16.mxu0 0
        %3128 = vmatpush1.bf16.msra.mxu0 0
        %3129 = vmatprep.subr.bf16.mxu0 0
        %3130 = vmatpush1.bf16.msra.mxu0 0
        %3131 = vmatprep.subr.bf16.mxu0 0
        %3132 = vmatpush1.bf16.msra.mxu0 0
        %3133 = vmatprep.subr.bf16.mxu0 0
        %3134 = vmatpush1.bf16.msra.mxu0 0
        %3135 = vmatprep.subr.bf16.mxu0 0
        %3136 = vmatpush1.bf16.msra.mxu0 0
        %3137 = vmatprep.subr.bf16.mxu0 0
        %3138 = vmatpush1.bf16.msra.mxu0 0
        %3139 = vmatprep.subr.bf16.mxu0 0
        %3140 = vmatpush1.bf16.msra.mxu0 0
        %3141 = vmatprep.subr.bf16.mxu0 0
        %3142 = vmatpush1.bf16.msra.mxu0 0
        %3143 = vmatprep.mubr.bf16.mxu0 0
        %3144 = vmatmul.mubr.bf16.gmra.mrb[0].mxu0 %v3109
        %v3145 = vpop.f32.mrb[0].mxu0
        %v3146 = vadd.f32 %v3081, %v3145
        %v3147 = vpop.f32.mrb[0].mxu0
        %v3148 = vpop.f32.mrb[0].mxu0
        %v3149 = vpop.f32.mrb[0].mxu0
        %3150 = vdwg.mxu0
        %v3151 = vmax.f32 %v3146, 0.0
        %v3152 = vpack.c.bf16 %v3151, %v3151
        %v3153 = vld [vmem:[%s31] sm:$0xf]
        %v3154 = vld [vmem:[%s31 + $0x4] sm:$0xf]
        %v3155 = vld [vmem:[%s31 + $0x8] sm:$0xf]
        %v3156 = vld [vmem:[%s31 + $0xc] sm:$0xf]
        %v3161 = vunpack.c.l.b16 %v3153
        %v3162 = vunpack.c.l.b16 %v3154
        %v3163 = vunpack.c.l.b16 %v3155
        %v3164 = vunpack.c.l.b16 %v3156
        %v3165 = vpack.c.b16 %v3162, %v3161
        %v3166 = vpack.c.b16 %v3164, %v3163
        %vm3169 = vcmask 261120
        %v3171 = vsel %vm3169, %v3152, 0
        %3173 = vmatprep.subr.bf16.mxu0 0
        %3174 = vmatpush1.bf16.msra.mxu0 %v3165
        %3175 = vmatprep.subr.bf16.mxu0 0
        %3176 = vmatpush1.bf16.msra.mxu0 %v3166
        %3177 = vmatprep.subr.bf16.mxu0 0
        %3178 = vmatpush1.bf16.msra.mxu0 0
        %3179 = vmatprep.subr.bf16.mxu0 0
        %3180 = vmatpush1.bf16.msra.mxu0 0
        %3181 = vmatprep.subr.bf16.mxu0 0
        %3182 = vmatpush1.bf16.msra.mxu0 0
        %3183 = vmatprep.subr.bf16.mxu0 0
        %3184 = vmatpush1.bf16.msra.mxu0 0
        %3185 = vmatprep.subr.bf16.mxu0 0
        %3186 = vmatpush1.bf16.msra.mxu0 0
        %3187 = vmatprep.subr.bf16.mxu0 0
        %3188 = vmatpush1.bf16.msra.mxu0 0
        %3189 = vmatprep.subr.bf16.mxu0 0
        %3190 = vmatpush1.bf16.msra.mxu0 0
        %3191 = vmatprep.subr.bf16.mxu0 0
        %3192 = vmatpush1.bf16.msra.mxu0 0
        %3193 = vmatprep.subr.bf16.mxu0 0
        %3194 = vmatpush1.bf16.msra.mxu0 0
        %3195 = vmatprep.subr.bf16.mxu0 0
        %3196 = vmatpush1.bf16.msra.mxu0 0
        %3197 = vmatprep.subr.bf16.mxu0 0
        %3198 = vmatpush1.bf16.msra.mxu0 0
        %3199 = vmatprep.subr.bf16.mxu0 0
        %3200 = vmatpush1.bf16.msra.mxu0 0
        %3201 = vmatprep.subr.bf16.mxu0 0
        %3202 = vmatpush1.bf16.msra.mxu0 0
        %3203 = vmatprep.subr.bf16.mxu0 0
        %3204 = vmatpush1.bf16.msra.mxu0 0
        %3205 = vmatprep.mubr.bf16.mxu0 0
        %3206 = vmatmul.mubr.bf16.gmra.mrb[0].mxu0 %v3171
        %v3207 = vpop.f32.mrb[0].mxu0
        %v3208 = vadd.f32 0.0, %v3207
        %v3209 = vpop.f32.mrb[0].mxu0
        %v3210 = vpop.f32.mrb[0].mxu0
        %v3211 = vpop.f32.mrb[0].mxu0
        %3212 = vdwg.mxu0
        %v3213 = vld [vmem:[%s33] sm:$0xf]
        %v3214 = vld [vmem:[%s33 + $0x4] sm:$0xf]
        %v3215 = vld [vmem:[%s33 + $0x8] sm:$0xf]
        %v3216 = vld [vmem:[%s33 + $0xc] sm:$0xf]
        %v3217 = vld [vmem:[%s35] sm:$0xf]
        %v3218 = vld [vmem:[%s35 + $0x4] sm:$0xf]
        %v3219 = vld [vmem:[%s35 + $0x8] sm:$0xf]
        %v3220 = vld [vmem:[%s35 + $0xc] sm:$0xf]
        %v3225 = vunpack.c.l.b16 %v3217
        %v3226 = vunpack.c.l.b16 %v3218
        %v3227 = vunpack.c.l.b16 %v3219
        %v3228 = vunpack.c.l.b16 %v3220
        %v3229 = vpack.c.b16 %v3226, %v3225
        %v3230 = vpack.c.b16 %v3228, %v3227
        %3233 = vmatprep.subr.bf16.mxu0 0
        %3234 = vmatpush1.bf16.msra.mxu0 %v3229
        %3235 = vmatprep.subr.bf16.mxu0 0
        %3236 = vmatpush1.bf16.msra.mxu0 %v3230
        %3237 = vmatprep.subr.bf16.mxu0 0
        %3238 = vmatpush1.bf16.msra.mxu0 0
        %3239 = vmatprep.subr.bf16.mxu0 0
        %3240 = vmatpush1.bf16.msra.mxu0 0
        %3241 = vmatprep.subr.bf16.mxu0 0
        %3242 = vmatpush1.bf16.msra.mxu0 0
        %3243 = vmatprep.subr.bf16.mxu0 0
        %3244 = vmatpush1.bf16.msra.mxu0 0
        %3245 = vmatprep.subr.bf16.mxu0 0
        %3246 = vmatpush1.bf16.msra.mxu0 0
        %3247 = vmatprep.subr.bf16.mxu0 0
        %3248 = vmatpush1.bf16.msra.mxu0 0
        %3249 = vmatprep.subr.bf16.mxu0 0
        %3250 = vmatpush1.bf16.msra.mxu0 0
        %3251 = vmatprep.subr.bf16.mxu0 0
        %3252 = vmatpush1.bf16.msra.mxu0 0
        %3253 = vmatprep.subr.bf16.mxu0 0
        %3254 = vmatpush1.bf16.msra.mxu0 0
        %3255 = vmatprep.subr.bf16.mxu0 0
        %3256 = vmatpush1.bf16.msra.mxu0 0
        %3257 = vmatprep.subr.bf16.mxu0 0
        %3258 = vmatpush1.bf16.msra.mxu0 0
        %3259 = vmatprep.subr.bf16.mxu0 0
        %3260 = vmatpush1.bf16.msra.mxu0 0
        %3261 = vmatprep.subr.bf16.mxu0 0
        %3262 = vmatpush1.bf16.msra.mxu0 0
        %3263 = vmatprep.subr.bf16.mxu0 0
        %3264 = vmatpush1.bf16.msra.mxu0 0
        %3265 = vmatprep.mubr.bf16.mxu0 0
        %3266 = vmatmul.mubr.bf16.gmra.mrb[0].mxu0 %v3171
        %v3267 = vpop.f32.mrb[0].mxu0
        %v3268 = vadd.f32 0.0, %v3267
        %v3269 = vpop.f32.mrb[0].mxu0
        %v3270 = vpop.f32.mrb[0].mxu0
        %v3271 = vpop.f32.mrb[0].mxu0
        %3272 = vdwg.mxu0
        %v3273 = vld [vmem:[%s37] sm:$0xff]
        %v3275 = vsel %vm2311, %v3273, 0
        %3277 = vmatprep.subr.mxu0 0.0
        %3278 = vmatpush1.msra.mxu0 %v3208
        %3279 = vmatprep.subr.mxu0 0.0
        %3280 = vmatpush1.msra.mxu0 0.0
        %3281 = vmatprep.subr.mxu0 0.0
        %3282 = vmatpush1.msra.mxu0 0.0
        %3283 = vmatprep.subr.mxu0 0.0
        %3284 = vmatpush1.msra.mxu0 0.0
        %3285 = vmatprep.subr.mxu0 0.0
        %3286 = vmatpush1.msra.mxu0 0.0
        %3287 = vmatprep.subr.mxu0 0.0
        %3288 = vmatpush1.msra.mxu0 0.0
        %3289 = vmatprep.subr.mxu0 0.0
        %3290 = vmatpush1.msra.mxu0 0.0
        %3291 = vmatprep.subr.mxu0 0.0
        %3292 = vmatpush1.msra.mxu0 0.0
        %3293 = vmatprep.subr.mxu0 0.0
        %3294 = vmatpush1.msra.mxu0 0.0
        %3295 = vmatprep.subr.mxu0 0.0
        %3296 = vmatpush1.msra.mxu0 0.0
        %3297 = vmatprep.subr.mxu0 0.0
        %3298 = vmatpush1.msra.mxu0 0.0
        %3299 = vmatprep.subr.mxu0 0.0
        %3300 = vmatpush1.msra.mxu0 0.0
        %3301 = vmatprep.subr.mxu0 0.0
        %3302 = vmatpush1.msra.mxu0 0.0
        %3303 = vmatprep.subr.mxu0 0.0
        %3304 = vmatpush1.msra.mxu0 0.0
        %3305 = vmatprep.subr.mxu0 0.0
        %3306 = vmatpush1.msra.mxu0 0.0
        %3307 = vmatprep.subr.mxu0 0.0
        %3308 = vmatpush1.msra.mxu0 0.0
        %3309 = vmatprep.subr.mxu0 0.0
        %3310 = vmatpush1.msra.mxu0 0.0
        %3311 = vmatprep.subr.mxu0 0.0
        %3312 = vmatpush1.msra.mxu0 0.0
        %3313 = vmatprep.subr.mxu0 0.0
        %3314 = vmatpush1.msra.mxu0 0.0
        %3315 = vmatprep.subr.mxu0 0.0
        %3316 = vmatpush1.msra.mxu0 0.0
        %3317 = vmatprep.subr.mxu0 0.0
        %3318 = vmatpush1.msra.mxu0 0.0
        %3319 = vmatprep.subr.mxu0 0.0
        %3320 = vmatpush1.msra.mxu0 0.0
        %3321 = vmatprep.subr.mxu0 0.0
        %3322 = vmatpush1.msra.mxu0 0.0
        %3323 = vmatprep.subr.mxu0 0.0
        %3324 = vmatpush1.msra.mxu0 0.0
        %3325 = vmatprep.subr.mxu0 0.0
        %3326 = vmatpush1.msra.mxu0 0.0
        %3327 = vmatprep.subr.mxu0 0.0
        %3328 = vmatpush1.msra.mxu0 0.0
        %3329 = vmatprep.subr.mxu0 0.0
        %3330 = vmatpush1.msra.mxu0 0.0
        %3331 = vmatprep.subr.mxu0 0.0
        %3332 = vmatpush1.msra.mxu0 0.0
        %3333 = vmatprep.subr.mxu0 0.0
        %3334 = vmatpush1.msra.mxu0 0.0
        %3335 = vmatprep.subr.mxu0 0.0
        %3336 = vmatpush1.msra.mxu0 0.0
        %3337 = vmatprep.subr.mxu0 0.0
        %3338 = vmatpush1.msra.mxu0 0.0
        %3339 = vmatprep.subr.mxu0 0.0
        %3340 = vmatpush1.msra.mxu0 0.0
        %3341 = vmatprep.mubr.f32.mxu0 0.0
        %3342 = vmatmul.mubr.f32.gmra.mrb[0].mxu0 %v3275
        %v3343 = vpop.f32.mrb[0].mxu0
        %v3344 = vadd.f32 0.0, %v3343
        %v3345 = vpop.f32.mrb[0].mxu0
        %3346 = vdwg.mxu0
        %v3351 = vunpack.c.l.b16 %v3213
        %v3352 = vunpack.c.l.b16 %v3214
        %v3353 = vunpack.c.l.b16 %v3215
        %v3354 = vunpack.c.l.b16 %v3216
        %v3355 = vpack.c.b16 %v3352, %v3351
        %v3356 = vpack.c.b16 %v3354, %v3353
        %3359 = vmatprep.subr.bf16.mxu0 0
        %3360 = vmatpush1.bf16.msra.mxu0 %v3355
        %3361 = vmatprep.subr.bf16.mxu0 0
        %3362 = vmatpush1.bf16.msra.mxu0 %v3356
        %3363 = vmatprep.subr.bf16.mxu0 0
        %3364 = vmatpush1.bf16.msra.mxu0 0
        %3365 = vmatprep.subr.bf16.mxu0 0
        %3366 = vmatpush1.bf16.msra.mxu0 0
        %3367 = vmatprep.subr.bf16.mxu0 0
        %3368 = vmatpush1.bf16.msra.mxu0 0
        %3369 = vmatprep.subr.bf16.mxu0 0
        %3370 = vmatpush1.bf16.msra.mxu0 0
        %3371 = vmatprep.subr.bf16.mxu0 0
        %3372 = vmatpush1.bf16.msra.mxu0 0
        %3373 = vmatprep.subr.bf16.mxu0 0
        %3374 = vmatpush1.bf16.msra.mxu0 0
        %3375 = vmatprep.subr.bf16.mxu0 0
        %3376 = vmatpush1.bf16.msra.mxu0 0
        %3377 = vmatprep.subr.bf16.mxu0 0
        %3378 = vmatpush1.bf16.msra.mxu0 0
        %3379 = vmatprep.subr.bf16.mxu0 0
        %3380 = vmatpush1.bf16.msra.mxu0 0
        %3381 = vmatprep.subr.bf16.mxu0 0
        %3382 = vmatpush1.bf16.msra.mxu0 0
        %3383 = vmatprep.subr.bf16.mxu0 0
        %3384 = vmatpush1.bf16.msra.mxu0 0
        %3385 = vmatprep.subr.bf16.mxu0 0
        %3386 = vmatpush1.bf16.msra.mxu0 0
        %3387 = vmatprep.subr.bf16.mxu0 0
        %3388 = vmatpush1.bf16.msra.mxu0 0
        %3389 = vmatprep.subr.bf16.mxu0 0
        %3390 = vmatpush1.bf16.msra.mxu0 0
        %3391 = vmatprep.mubr.bf16.mxu0 0
        %3392 = vmatmul.mubr.bf16.gmra.mrb[0].mxu0 %v3171
        %v3393 = vpop.f32.mrb[0].mxu0
        %v3394 = vadd.f32 %v3344, %v3393
        %v3395 = vpop.f32.mrb[0].mxu0
        %v3396 = vpop.f32.mrb[0].mxu0
        %v3397 = vpop.f32.mrb[0].mxu0
        %3398 = vdwg.mxu0
        %v3399 = vld [vmem:[%s39] sm:$0xff]
        %v3401 = vsel %vm2311, %v3399, 0
        %3403 = vmatprep.subr.mxu0 0.0
        %3404 = vmatpush1.msra.mxu0 %v3268
        %3405 = vmatprep.subr.mxu0 0.0
        %3406 = vmatpush1.msra.mxu0 0.0
        %3407 = vmatprep.subr.mxu0 0.0
        %3408 = vmatpush1.msra.mxu0 0.0
        %3409 = vmatprep.subr.mxu0 0.0
        %3410 = vmatpush1.msra.mxu0 0.0
        %3411 = vmatprep.subr.mxu0 0.0
        %3412 = vmatpush1.msra.mxu0 0.0
        %3413 = vmatprep.subr.mxu0 0.0
        %3414 = vmatpush1.msra.mxu0 0.0
        %3415 = vmatprep.subr.mxu0 0.0
        %3416 = vmatpush1.msra.mxu0 0.0
        %3417 = vmatprep.subr.mxu0 0.0
        %3418 = vmatpush1.msra.mxu0 0.0
        %3419 = vmatprep.subr.mxu0 0.0
        %3420 = vmatpush1.msra.mxu0 0.0
        %3421 = vmatprep.subr.mxu0 0.0
        %3422 = vmatpush1.msra.mxu0 0.0
        %3423 = vmatprep.subr.mxu0 0.0
        %3424 = vmatpush1.msra.mxu0 0.0
        %3425 = vmatprep.subr.mxu0 0.0
        %3426 = vmatpush1.msra.mxu0 0.0
        %3427 = vmatprep.subr.mxu0 0.0
        %3428 = vmatpush1.msra.mxu0 0.0
        %3429 = vmatprep.subr.mxu0 0.0
        %3430 = vmatpush1.msra.mxu0 0.0
        %3431 = vmatprep.subr.mxu0 0.0
        %3432 = vmatpush1.msra.mxu0 0.0
        %3433 = vmatprep.subr.mxu0 0.0
        %3434 = vmatpush1.msra.mxu0 0.0
        %3435 = vmatprep.subr.mxu0 0.0
        %3436 = vmatpush1.msra.mxu0 0.0
        %3437 = vmatprep.subr.mxu0 0.0
        %3438 = vmatpush1.msra.mxu0 0.0
        %3439 = vmatprep.subr.mxu0 0.0
        %3440 = vmatpush1.msra.mxu0 0.0
        %3441 = vmatprep.subr.mxu0 0.0
        %3442 = vmatpush1.msra.mxu0 0.0
        %3443 = vmatprep.subr.mxu0 0.0
        %3444 = vmatpush1.msra.mxu0 0.0
        %3445 = vmatprep.subr.mxu0 0.0
        %3446 = vmatpush1.msra.mxu0 0.0
        %3447 = vmatprep.subr.mxu0 0.0
        %3448 = vmatpush1.msra.mxu0 0.0
        %3449 = vmatprep.subr.mxu0 0.0
        %3450 = vmatpush1.msra.mxu0 0.0
        %3451 = vmatprep.subr.mxu0 0.0
        %3452 = vmatpush1.msra.mxu0 0.0
        %3453 = vmatprep.subr.mxu0 0.0
        %3454 = vmatpush1.msra.mxu0 0.0
        %3455 = vmatprep.subr.mxu0 0.0
        %3456 = vmatpush1.msra.mxu0 0.0
        %3457 = vmatprep.subr.mxu0 0.0
        %3458 = vmatpush1.msra.mxu0 0.0
        %3459 = vmatprep.subr.mxu0 0.0
        %3460 = vmatpush1.msra.mxu0 0.0
        %3461 = vmatprep.subr.mxu0 0.0
        %3462 = vmatpush1.msra.mxu0 0.0
        %3463 = vmatprep.subr.mxu0 0.0
        %3464 = vmatpush1.msra.mxu0 0.0
        %3465 = vmatprep.subr.mxu0 0.0
        %3466 = vmatpush1.msra.mxu0 0.0
        %3467 = vmatprep.mubr.f32.mxu0 0.0
        %3468 = vmatmul.mubr.f32.gmra.mrb[0].mxu0 %v3401
        %v3469 = vpop.f32.mrb[0].mxu0
        %v3470 = vadd.f32 0.0, %v3469
        %v3471 = vpop.f32.mrb[0].mxu0
        %3472 = vdwg.mxu0
        %v3473 = vadd.f32 %v3394, %v3470
        %v3474 = vld [vmem:[#allocation8] sm:$0x1]
        %v3476 = vlaneseq
        %v3477 = vshrl.u32 %v3476, 7
        %v3478 = vsub.s32 0, %v3477
        %v3479 = vrot.slane %v3474, %v3478
        %v3481 = vadd.f32 %v3473, %v3479
        %v3482 = vmax.f32 %v3481, 0.0
        %v3483 = vpack.c.bf16 %v3482, %v3482
        %v3484 = vld [vmem:[%s43] sm:$0xf]
        %v3485 = vld [vmem:[%s43 + $0x4] sm:$0xf]
        %v3486 = vld [vmem:[%s43 + $0x8] sm:$0xf]
        %v3487 = vld [vmem:[%s43 + $0xc] sm:$0xf]
        %v3488 = vld [vmem:[#allocation10] sm:$0x1]
        %v3490 = vlaneseq
        %v3491 = vshrl.u32 %v3490, 7
        %v3492 = vsub.s32 0, %v3491
        %v3493 = vrot.slane %v3488, %v3492
        %v3499 = vunpack.c.l.b16 %v3484
        %v3500 = vunpack.c.l.b16 %v3485
        %v3501 = vunpack.c.l.b16 %v3486
        %v3502 = vunpack.c.l.b16 %v3487
        %v3503 = vpack.c.b16 %v3500, %v3499
        %v3504 = vpack.c.b16 %v3502, %v3501
        %v3508 = vsel %vm3169, %v3483, 0
        %3510 = vmatprep.subr.bf16.mxu0 0
        %3511 = vmatpush1.bf16.msra.mxu0 %v3503
        %3512 = vmatprep.subr.bf16.mxu0 0
        %3513 = vmatpush1.bf16.msra.mxu0 %v3504
        %3514 = vmatprep.subr.bf16.mxu0 0
        %3515 = vmatpush1.bf16.msra.mxu0 0
        %3516 = vmatprep.subr.bf16.mxu0 0
        %3517 = vmatpush1.bf16.msra.mxu0 0
        %3518 = vmatprep.subr.bf16.mxu0 0
        %3519 = vmatpush1.bf16.msra.mxu0 0
        %3520 = vmatprep.subr.bf16.mxu0 0
        %3521 = vmatpush1.bf16.msra.mxu0 0
        %3522 = vmatprep.subr.bf16.mxu0 0
        %3523 = vmatpush1.bf16.msra.mxu0 0
        %3524 = vmatprep.subr.bf16.mxu0 0
        %3525 = vmatpush1.bf16.msra.mxu0 0
        %3526 = vmatprep.subr.bf16.mxu0 0
        %3527 = vmatpush1.bf16.msra.mxu0 0
        %3528 = vmatprep.subr.bf16.mxu0 0
        %3529 = vmatpush1.bf16.msra.mxu0 0
        %3530 = vmatprep.subr.bf16.mxu0 0
        %3531 = vmatpush1.bf16.msra.mxu0 0
        %3532 = vmatprep.subr.bf16.mxu0 0
        %3533 = vmatpush1.bf16.msra.mxu0 0
        %3534 = vmatprep.subr.bf16.mxu0 0
        %3535 = vmatpush1.bf16.msra.mxu0 0
        %3536 = vmatprep.subr.bf16.mxu0 0
        %3537 = vmatpush1.bf16.msra.mxu0 0
        %3538 = vmatprep.subr.bf16.mxu0 0
        %3539 = vmatpush1.bf16.msra.mxu0 0
        %3540 = vmatprep.subr.bf16.mxu0 0
        %3541 = vmatpush1.bf16.msra.mxu0 0
        %3542 = vmatprep.mubr.bf16.mxu0 0
        %3543 = vmatmul.mubr.bf16.gmra.mrb[0].mxu0 %v3508
        %v3544 = vpop.f32.mrb[0].mxu0
        %v3545 = vadd.f32 %v3493, %v3544
        %v3546 = vpop.f32.mrb[0].mxu0
        %v3547 = vpop.f32.mrb[0].mxu0
        %v3548 = vpop.f32.mrb[0].mxu0
        %3549 = vdwg.mxu0
        %v3550 = vmax.f32 %v3545, 0.0
        %v3551 = vpack.c.bf16 %v3550, %v3550
        %v3552 = vld [vmem:[%s47] sm:$0xf]
        %v3553 = vld [vmem:[%s47 + $0x4] sm:$0xf]
        %v3554 = vld [vmem:[%s47 + $0x8] sm:$0xf]
        %v3555 = vld [vmem:[%s47 + $0xc] sm:$0xf]
        %v3556 = vld [vmem:[#allocation11] sm:$0x1]
        %v3558 = vlaneseq
        %v3559 = vshrl.u32 %v3558, 7
        %v3560 = vsub.s32 0, %v3559
        %v3561 = vrot.slane %v3556, %v3560
        %v3567 = vunpack.c.l.b16 %v3552
        %v3568 = vunpack.c.l.b16 %v3553
        %v3569 = vunpack.c.l.b16 %v3554
        %v3570 = vunpack.c.l.b16 %v3555
        %v3571 = vpack.c.b16 %v3568, %v3567
        %v3572 = vpack.c.b16 %v3570, %v3569
        %v3576 = vsel %vm3169, %v3551, 0
        %3578 = vmatprep.subr.bf16.mxu0 0
        %3579 = vmatpush1.bf16.msra.mxu0 %v3571
        %3580 = vmatprep.subr.bf16.mxu0 0
        %3581 = vmatpush1.bf16.msra.mxu0 %v3572
        %3582 = vmatprep.subr.bf16.mxu0 0
        %3583 = vmatpush1.bf16.msra.mxu0 0
        %3584 = vmatprep.subr.bf16.mxu0 0
        %3585 = vmatpush1.bf16.msra.mxu0 0
        %3586 = vmatprep.subr.bf16.mxu0 0
        %3587 = vmatpush1.bf16.msra.mxu0 0
        %3588 = vmatprep.subr.bf16.mxu0 0
        %3589 = vmatpush1.bf16.msra.mxu0 0
        %3590 = vmatprep.subr.bf16.mxu0 0
        %3591 = vmatpush1.bf16.msra.mxu0 0
        %3592 = vmatprep.subr.bf16.mxu0 0
        %3593 = vmatpush1.bf16.msra.mxu0 0
        %3594 = vmatprep.subr.bf16.mxu0 0
        %3595 = vmatpush1.bf16.msra.mxu0 0
        %3596 = vmatprep.subr.bf16.mxu0 0
        %3597 = vmatpush1.bf16.msra.mxu0 0
        %3598 = vmatprep.subr.bf16.mxu0 0
        %3599 = vmatpush1.bf16.msra.mxu0 0
        %3600 = vmatprep.subr.bf16.mxu0 0
        %3601 = vmatpush1.bf16.msra.mxu0 0
        %3602 = vmatprep.subr.bf16.mxu0 0
        %3603 = vmatpush1.bf16.msra.mxu0 0
        %3604 = vmatprep.subr.bf16.mxu0 0
        %3605 = vmatpush1.bf16.msra.mxu0 0
        %3606 = vmatprep.subr.bf16.mxu0 0
        %3607 = vmatpush1.bf16.msra.mxu0 0
        %3608 = vmatprep.subr.bf16.mxu0 0
        %3609 = vmatpush1.bf16.msra.mxu0 0
        %3610 = vmatprep.mubr.bf16.mxu0 0
        %3611 = vmatmul.mubr.bf16.gmra.mrb[0].mxu0 %v3576
        %v3612 = vpop.f32.mrb[0].mxu0
        %v3613 = vadd.f32 %v3561, %v3612
        %v3614 = vpop.f32.mrb[0].mxu0
        %v3615 = vpop.f32.mrb[0].mxu0
        %v3616 = vpop.f32.mrb[0].mxu0
        %3617 = vdwg.mxu0
        %v3618 = vmax.f32 %v3613, 0.0
        %v3619 = vpack.c.bf16 %v3618, %v3618
        %v3620 = vld [vmem:[%s51] sm:$0xf]
        %v3621 = vld [vmem:[%s51 + $0x4] sm:$0xf]
        %v3622 = vld [vmem:[%s51 + $0x8] sm:$0xf]
        %v3623 = vld [vmem:[%s51 + $0xc] sm:$0xf]
        %v3624 = vld [vmem:[%s51 + $0x10] sm:$0xf]
        %v3625 = vld [vmem:[%s51 + $0x14] sm:$0xf]
        %v3626 = vld [vmem:[%s51 + $0x18] sm:$0xf]
        %v3627 = vld [vmem:[%s51 + $0x1c] sm:$0xf]
        %v3628 = vld [vmem:[%s51 + $0x20] sm:$0xf]
        %v3629 = vld [vmem:[%s51 + $0x24] sm:$0xf]
        %v3630 = vld [vmem:[%s51 + $0x28] sm:$0xf]
        %v3631 = vld [vmem:[%s51 + $0x2c] sm:$0xf]
        %v3632 = vld [vmem:[%s51 + $0x30] sm:$0xf]
        %v3633 = vld [vmem:[%s51 + $0x34] sm:$0xf]
        %v3634 = vld [vmem:[%s51 + $0x38] sm:$0xf]
        %v3635 = vld [vmem:[%s51 + $0x3c] sm:$0xf]
        %v3636 = vld [vmem:[#allocation13] sm:$0x1]
        %v3638 = vlaneseq
        %v3639 = vshrl.u32 %v3638, 7
        %v3640 = vsub.s32 0, %v3639
        %v3641 = vrot.slane %v3636, %v3640
        %v3659 = vunpack.c.l.b16 %v3620
        %v3660 = vunpack.c.l.b16 %v3621
        %v3661 = vunpack.c.l.b16 %v3622
        %v3662 = vunpack.c.l.b16 %v3623
        %v3663 = vunpack.c.l.b16 %v3624
        %v3664 = vunpack.c.l.b16 %v3625
        %v3665 = vunpack.c.l.b16 %v3626
        %v3666 = vunpack.c.l.b16 %v3627
        %v3667 = vunpack.c.l.b16 %v3628
        %v3668 = vunpack.c.l.b16 %v3629
        %v3669 = vunpack.c.l.b16 %v3630
        %v3670 = vunpack.c.l.b16 %v3631
        %v3671 = vunpack.c.l.b16 %v3632
        %v3672 = vunpack.c.l.b16 %v3633
        %v3673 = vunpack.c.l.b16 %v3634
        %v3674 = vunpack.c.l.b16 %v3635
        %v3675 = vpack.c.b16 %v3660, %v3659
        %v3676 = vpack.c.b16 %v3662, %v3661
        %v3677 = vpack.c.b16 %v3664, %v3663
        %v3678 = vpack.c.b16 %v3666, %v3665
        %v3679 = vpack.c.b16 %v3668, %v3667
        %v3680 = vpack.c.b16 %v3670, %v3669
        %v3681 = vpack.c.b16 %v3672, %v3671
        %v3682 = vpack.c.b16 %v3674, %v3673
        %3691 = vmatprep.subr.bf16.mxu0 0
        %3692 = vmatpush1.bf16.msra.mxu0 %v3675
        %3693 = vmatprep.subr.bf16.mxu0 0
        %3694 = vmatpush1.bf16.msra.mxu0 %v3676
        %3695 = vmatprep.subr.bf16.mxu0 0
        %3696 = vmatpush1.bf16.msra.mxu0 %v3677
        %3697 = vmatprep.subr.bf16.mxu0 0
        %3698 = vmatpush1.bf16.msra.mxu0 %v3678
        %3699 = vmatprep.subr.bf16.mxu0 0
        %3700 = vmatpush1.bf16.msra.mxu0 %v3679
        %3701 = vmatprep.subr.bf16.mxu0 0
        %3702 = vmatpush1.bf16.msra.mxu0 %v3680
        %3703 = vmatprep.subr.bf16.mxu0 0
        %3704 = vmatpush1.bf16.msra.mxu0 %v3681
        %3705 = vmatprep.subr.bf16.mxu0 0
        %3706 = vmatpush1.bf16.msra.mxu0 %v3682
        %3707 = vmatprep.subr.bf16.mxu0 0
        %3708 = vmatpush1.bf16.msra.mxu0 0
        %3709 = vmatprep.subr.bf16.mxu0 0
        %3710 = vmatpush1.bf16.msra.mxu0 0
        %3711 = vmatprep.subr.bf16.mxu0 0
        %3712 = vmatpush1.bf16.msra.mxu0 0
        %3713 = vmatprep.subr.bf16.mxu0 0
        %3714 = vmatpush1.bf16.msra.mxu0 0
        %3715 = vmatprep.subr.bf16.mxu0 0
        %3716 = vmatpush1.bf16.msra.mxu0 0
        %3717 = vmatprep.subr.bf16.mxu0 0
        %3718 = vmatpush1.bf16.msra.mxu0 0
        %3719 = vmatprep.subr.bf16.mxu0 0
        %3720 = vmatpush1.bf16.msra.mxu0 0
        %3721 = vmatprep.subr.bf16.mxu0 0
        %3722 = vmatpush1.bf16.msra.mxu0 0
        %3723 = vmatprep.mubr.bf16.mxu0 0
        %3724 = vmatmul.mubr.bf16.gmra.mrb[0].mxu0 %v3619
        %v3725 = vpop.f32.mrb[0].mxu0
        %v3726 = vadd.f32 %v3641, %v3725
        %v3727 = vpop.f32.mrb[0].mxu0
        %v3728 = vpop.f32.mrb[0].mxu0
        %v3729 = vpop.f32.mrb[0].mxu0
        %3730 = vdwg.mxu0
        %v3731 = vmax.f32 %v3726, 0.0
        %v3732 = vpack.c.bf16 %v3731, %v3731
        %v3733 = vld [vmem:[%s55] sm:$0xf]
        %v3734 = vld [vmem:[%s55 + $0x4] sm:$0xf]
        %v3735 = vld [vmem:[%s55 + $0x8] sm:$0xf]
        %v3736 = vld [vmem:[%s55 + $0xc] sm:$0xf]
        %v3741 = vunpack.c.l.b16 %v3733
        %v3742 = vunpack.c.l.b16 %v3734
        %v3743 = vunpack.c.l.b16 %v3735
        %v3744 = vunpack.c.l.b16 %v3736
        %v3745 = vpack.c.b16 %v3742, %v3741
        %v3746 = vpack.c.b16 %v3744, %v3743
        %v3750 = vsel %vm3169, %v3732, 0
        %3752 = vmatprep.subr.bf16.mxu0 0
        %3753 = vmatpush1.bf16.msra.mxu0 %v3745
        %3754 = vmatprep.subr.bf16.mxu0 0
        %3755 = vmatpush1.bf16.msra.mxu0 %v3746
        %3756 = vmatprep.subr.bf16.mxu0 0
        %3757 = vmatpush1.bf16.msra.mxu0 0
        %3758 = vmatprep.subr.bf16.mxu0 0
        %3759 = vmatpush1.bf16.msra.mxu0 0
        %3760 = vmatprep.subr.bf16.mxu0 0
        %3761 = vmatpush1.bf16.msra.mxu0 0
        %3762 = vmatprep.subr.bf16.mxu0 0
        %3763 = vmatpush1.bf16.msra.mxu0 0
        %3764 = vmatprep.subr.bf16.mxu0 0
        %3765 = vmatpush1.bf16.msra.mxu0 0
        %3766 = vmatprep.subr.bf16.mxu0 0
        %3767 = vmatpush1.bf16.msra.mxu0 0
        %3768 = vmatprep.subr.bf16.mxu0 0
        %3769 = vmatpush1.bf16.msra.mxu0 0
        %3770 = vmatprep.subr.bf16.mxu0 0
        %3771 = vmatpush1.bf16.msra.mxu0 0
        %3772 = vmatprep.subr.bf16.mxu0 0
        %3773 = vmatpush1.bf16.msra.mxu0 0
        %3774 = vmatprep.subr.bf16.mxu0 0
        %3775 = vmatpush1.bf16.msra.mxu0 0
        %3776 = vmatprep.subr.bf16.mxu0 0
        %3777 = vmatpush1.bf16.msra.mxu0 0
        %3778 = vmatprep.subr.bf16.mxu0 0
        %3779 = vmatpush1.bf16.msra.mxu0 0
        %3780 = vmatprep.subr.bf16.mxu0 0
        %3781 = vmatpush1.bf16.msra.mxu0 0
        %3782 = vmatprep.subr.bf16.mxu0 0
        %3783 = vmatpush1.bf16.msra.mxu0 0
        %3784 = vmatprep.mubr.bf16.mxu0 0
        %3785 = vmatmul.mubr.bf16.gmra.mrb[0].mxu0 %v3750
        %v3786 = vpop.f32.mrb[0].mxu0
        %v3787 = vadd.f32 0.0, %v3786
        %v3788 = vpop.f32.mrb[0].mxu0
        %v3789 = vpop.f32.mrb[0].mxu0
        %v3790 = vpop.f32.mrb[0].mxu0
        %3791 = vdwg.mxu0
        %v3792 = vld [vmem:[%s57] sm:$0xf]
        %v3793 = vld [vmem:[%s57 + $0x4] sm:$0xf]
        %v3794 = vld [vmem:[%s57 + $0x8] sm:$0xf]
        %v3795 = vld [vmem:[%s57 + $0xc] sm:$0xf]
        %v3796 = vld [vmem:[%s59] sm:$0xf]
        %v3797 = vld [vmem:[%s59 + $0x4] sm:$0xf]
        %v3798 = vld [vmem:[%s59 + $0x8] sm:$0xf]
        %v3799 = vld [vmem:[%s59 + $0xc] sm:$0xf]
        %v3804 = vunpack.c.l.b16 %v3796
        %v3805 = vunpack.c.l.b16 %v3797
        %v3806 = vunpack.c.l.b16 %v3798
        %v3807 = vunpack.c.l.b16 %v3799
        %v3808 = vpack.c.b16 %v3805, %v3804
        %v3809 = vpack.c.b16 %v3807, %v3806
        %3812 = vmatprep.subr.bf16.mxu0 0
        %3813 = vmatpush1.bf16.msra.mxu0 %v3808
        %3814 = vmatprep.subr.bf16.mxu0 0
        %3815 = vmatpush1.bf16.msra.mxu0 %v3809
        %3816 = vmatprep.subr.bf16.mxu0 0
        %3817 = vmatpush1.bf16.msra.mxu0 0
        %3818 = vmatprep.subr.bf16.mxu0 0
        %3819 = vmatpush1.bf16.msra.mxu0 0
        %3820 = vmatprep.subr.bf16.mxu0 0
        %3821 = vmatpush1.bf16.msra.mxu0 0
        %3822 = vmatprep.subr.bf16.mxu0 0
        %3823 = vmatpush1.bf16.msra.mxu0 0
        %3824 = vmatprep.subr.bf16.mxu0 0
        %3825 = vmatpush1.bf16.msra.mxu0 0
        %3826 = vmatprep.subr.bf16.mxu0 0
        %3827 = vmatpush1.bf16.msra.mxu0 0
        %3828 = vmatprep.subr.bf16.mxu0 0
        %3829 = vmatpush1.bf16.msra.mxu0 0
        %3830 = vmatprep.subr.bf16.mxu0 0
        %3831 = vmatpush1.bf16.msra.mxu0 0
        %3832 = vmatprep.subr.bf16.mxu0 0
        %3833 = vmatpush1.bf16.msra.mxu0 0
        %3834 = vmatprep.subr.bf16.mxu0 0
        %3835 = vmatpush1.bf16.msra.mxu0 0
        %3836 = vmatprep.subr.bf16.mxu0 0
        %3837 = vmatpush1.bf16.msra.mxu0 0
        %3838 = vmatprep.subr.bf16.mxu0 0
        %3839 = vmatpush1.bf16.msra.mxu0 0
        %3840 = vmatprep.subr.bf16.mxu0 0
        %3841 = vmatpush1.bf16.msra.mxu0 0
        %3842 = vmatprep.subr.bf16.mxu0 0
        %3843 = vmatpush1.bf16.msra.mxu0 0
        %3844 = vmatprep.mubr.bf16.mxu0 0
        %3845 = vmatmul.mubr.bf16.gmra.mrb[0].mxu0 %v3750
        %v3846 = vpop.f32.mrb[0].mxu0
        %v3847 = vadd.f32 0.0, %v3846
        %v3848 = vpop.f32.mrb[0].mxu0
        %v3849 = vpop.f32.mrb[0].mxu0
        %v3850 = vpop.f32.mrb[0].mxu0
        %3851 = vdwg.mxu0
        %v3852 = vld [vmem:[%s61] sm:$0xff]
        %v3854 = vsel %vm2311, %v3852, 0
        %3856 = vmatprep.subr.mxu0 0.0
        %3857 = vmatpush1.msra.mxu0 %v3787
        %3858 = vmatprep.subr.mxu0 0.0
        %3859 = vmatpush1.msra.mxu0 0.0
        %3860 = vmatprep.subr.mxu0 0.0
        %3861 = vmatpush1.msra.mxu0 0.0
        %3862 = vmatprep.subr.mxu0 0.0
        %3863 = vmatpush1.msra.mxu0 0.0
        %3864 = vmatprep.subr.mxu0 0.0
        %3865 = vmatpush1.msra.mxu0 0.0
        %3866 = vmatprep.subr.mxu0 0.0
        %3867 = vmatpush1.msra.mxu0 0.0
        %3868 = vmatprep.subr.mxu0 0.0
        %3869 = vmatpush1.msra.mxu0 0.0
        %3870 = vmatprep.subr.mxu0 0.0
        %3871 = vmatpush1.msra.mxu0 0.0
        %3872 = vmatprep.subr.mxu0 0.0
        %3873 = vmatpush1.msra.mxu0 0.0
        %3874 = vmatprep.subr.mxu0 0.0
        %3875 = vmatpush1.msra.mxu0 0.0
        %3876 = vmatprep.subr.mxu0 0.0
        %3877 = vmatpush1.msra.mxu0 0.0
        %3878 = vmatprep.subr.mxu0 0.0
        %3879 = vmatpush1.msra.mxu0 0.0
        %3880 = vmatprep.subr.mxu0 0.0
        %3881 = vmatpush1.msra.mxu0 0.0
        %3882 = vmatprep.subr.mxu0 0.0
        %3883 = vmatpush1.msra.mxu0 0.0
        %3884 = vmatprep.subr.mxu0 0.0
        %3885 = vmatpush1.msra.mxu0 0.0
        %3886 = vmatprep.subr.mxu0 0.0
        %3887 = vmatpush1.msra.mxu0 0.0
        %3888 = vmatprep.subr.mxu0 0.0
        %3889 = vmatpush1.msra.mxu0 0.0
        %3890 = vmatprep.subr.mxu0 0.0
        %3891 = vmatpush1.msra.mxu0 0.0
        %3892 = vmatprep.subr.mxu0 0.0
        %3893 = vmatpush1.msra.mxu0 0.0
        %3894 = vmatprep.subr.mxu0 0.0
        %3895 = vmatpush1.msra.mxu0 0.0
        %3896 = vmatprep.subr.mxu0 0.0
        %3897 = vmatpush1.msra.mxu0 0.0
        %3898 = vmatprep.subr.mxu0 0.0
        %3899 = vmatpush1.msra.mxu0 0.0
        %3900 = vmatprep.subr.mxu0 0.0
        %3901 = vmatpush1.msra.mxu0 0.0
        %3902 = vmatprep.subr.mxu0 0.0
        %3903 = vmatpush1.msra.mxu0 0.0
        %3904 = vmatprep.subr.mxu0 0.0
        %3905 = vmatpush1.msra.mxu0 0.0
        %3906 = vmatprep.subr.mxu0 0.0
        %3907 = vmatpush1.msra.mxu0 0.0
        %3908 = vmatprep.subr.mxu0 0.0
        %3909 = vmatpush1.msra.mxu0 0.0
        %3910 = vmatprep.subr.mxu0 0.0
        %3911 = vmatpush1.msra.mxu0 0.0
        %3912 = vmatprep.subr.mxu0 0.0
        %3913 = vmatpush1.msra.mxu0 0.0
        %3914 = vmatprep.subr.mxu0 0.0
        %3915 = vmatpush1.msra.mxu0 0.0
        %3916 = vmatprep.subr.mxu0 0.0
        %3917 = vmatpush1.msra.mxu0 0.0
        %3918 = vmatprep.subr.mxu0 0.0
        %3919 = vmatpush1.msra.mxu0 0.0
        %3920 = vmatprep.mubr.f32.mxu0 0.0
        %3921 = vmatmul.mubr.f32.gmra.mrb[0].mxu0 %v3854
        %v3922 = vpop.f32.mrb[0].mxu0
        %v3923 = vadd.f32 0.0, %v3922
        %v3924 = vpop.f32.mrb[0].mxu0
        %3925 = vdwg.mxu0
        %v3930 = vunpack.c.l.b16 %v3792
        %v3931 = vunpack.c.l.b16 %v3793
        %v3932 = vunpack.c.l.b16 %v3794
        %v3933 = vunpack.c.l.b16 %v3795
        %v3934 = vpack.c.b16 %v3931, %v3930
        %v3935 = vpack.c.b16 %v3933, %v3932
        %3938 = vmatprep.subr.bf16.mxu0 0
        %3939 = vmatpush1.bf16.msra.mxu0 %v3934
        %3940 = vmatprep.subr.bf16.mxu0 0
        %3941 = vmatpush1.bf16.msra.mxu0 %v3935
        %3942 = vmatprep.subr.bf16.mxu0 0
        %3943 = vmatpush1.bf16.msra.mxu0 0
        %3944 = vmatprep.subr.bf16.mxu0 0
        %3945 = vmatpush1.bf16.msra.mxu0 0
        %3946 = vmatprep.subr.bf16.mxu0 0
        %3947 = vmatpush1.bf16.msra.mxu0 0
        %3948 = vmatprep.subr.bf16.mxu0 0
        %3949 = vmatpush1.bf16.msra.mxu0 0
        %3950 = vmatprep.subr.bf16.mxu0 0
        %3951 = vmatpush1.bf16.msra.mxu0 0
        %3952 = vmatprep.subr.bf16.mxu0 0
        %3953 = vmatpush1.bf16.msra.mxu0 0
        %3954 = vmatprep.subr.bf16.mxu0 0
        %3955 = vmatpush1.bf16.msra.mxu0 0
        %3956 = vmatprep.subr.bf16.mxu0 0
        %3957 = vmatpush1.bf16.msra.mxu0 0
        %3958 = vmatprep.subr.bf16.mxu0 0
        %3959 = vmatpush1.bf16.msra.mxu0 0
        %3960 = vmatprep.subr.bf16.mxu0 0
        %3961 = vmatpush1.bf16.msra.mxu0 0
        %3962 = vmatprep.subr.bf16.mxu0 0
        %3963 = vmatpush1.bf16.msra.mxu0 0
        %3964 = vmatprep.subr.bf16.mxu0 0
        %3965 = vmatpush1.bf16.msra.mxu0 0
        %3966 = vmatprep.subr.bf16.mxu0 0
        %3967 = vmatpush1.bf16.msra.mxu0 0
        %3968 = vmatprep.subr.bf16.mxu0 0
        %3969 = vmatpush1.bf16.msra.mxu0 0
        %3970 = vmatprep.mubr.bf16.mxu0 0
        %3971 = vmatmul.mubr.bf16.gmra.mrb[0].mxu0 %v3750
        %v3972 = vpop.f32.mrb[0].mxu0
        %v3973 = vadd.f32 %v3923, %v3972
        %v3974 = vpop.f32.mrb[0].mxu0
        %v3975 = vpop.f32.mrb[0].mxu0
        %v3976 = vpop.f32.mrb[0].mxu0
        %3977 = vdwg.mxu0
        %v3978 = vld [vmem:[%s63] sm:$0xff]
        %v3980 = vsel %vm2311, %v3978, 0
        %3982 = vmatprep.subr.mxu0 0.0
        %3983 = vmatpush1.msra.mxu0 %v3847
        %3984 = vmatprep.subr.mxu0 0.0
        %3985 = vmatpush1.msra.mxu0 0.0
        %3986 = vmatprep.subr.mxu0 0.0
        %3987 = vmatpush1.msra.mxu0 0.0
        %3988 = vmatprep.subr.mxu0 0.0
        %3989 = vmatpush1.msra.mxu0 0.0
        %3990 = vmatprep.subr.mxu0 0.0
        %3991 = vmatpush1.msra.mxu0 0.0
        %3992 = vmatprep.subr.mxu0 0.0
        %3993 = vmatpush1.msra.mxu0 0.0
        %3994 = vmatprep.subr.mxu0 0.0
        %3995 = vmatpush1.msra.mxu0 0.0
        %3996 = vmatprep.subr.mxu0 0.0
        %3997 = vmatpush1.msra.mxu0 0.0
        %3998 = vmatprep.subr.mxu0 0.0
        %3999 = vmatpush1.msra.mxu0 0.0
        %4000 = vmatprep.subr.mxu0 0.0
        %4001 = vmatpush1.msra.mxu0 0.0
        %4002 = vmatprep.subr.mxu0 0.0
        %4003 = vmatpush1.msra.mxu0 0.0
        %4004 = vmatprep.subr.mxu0 0.0
        %4005 = vmatpush1.msra.mxu0 0.0
        %4006 = vmatprep.subr.mxu0 0.0
        %4007 = vmatpush1.msra.mxu0 0.0
        %4008 = vmatprep.subr.mxu0 0.0
        %4009 = vmatpush1.msra.mxu0 0.0
        %4010 = vmatprep.subr.mxu0 0.0
        %4011 = vmatpush1.msra.mxu0 0.0
        %4012 = vmatprep.subr.mxu0 0.0
        %4013 = vmatpush1.msra.mxu0 0.0
        %4014 = vmatprep.subr.mxu0 0.0
        %4015 = vmatpush1.msra.mxu0 0.0
        %4016 = vmatprep.subr.mxu0 0.0
        %4017 = vmatpush1.msra.mxu0 0.0
        %4018 = vmatprep.subr.mxu0 0.0
        %4019 = vmatpush1.msra.mxu0 0.0
        %4020 = vmatprep.subr.mxu0 0.0
        %4021 = vmatpush1.msra.mxu0 0.0
        %4022 = vmatprep.subr.mxu0 0.0
        %4023 = vmatpush1.msra.mxu0 0.0
        %4024 = vmatprep.subr.mxu0 0.0
        %4025 = vmatpush1.msra.mxu0 0.0
        %4026 = vmatprep.subr.mxu0 0.0
        %4027 = vmatpush1.msra.mxu0 0.0
        %4028 = vmatprep.subr.mxu0 0.0
        %4029 = vmatpush1.msra.mxu0 0.0
        %4030 = vmatprep.subr.mxu0 0.0
        %4031 = vmatpush1.msra.mxu0 0.0
        %4032 = vmatprep.subr.mxu0 0.0
        %4033 = vmatpush1.msra.mxu0 0.0
        %4034 = vmatprep.subr.mxu0 0.0
        %4035 = vmatpush1.msra.mxu0 0.0
        %4036 = vmatprep.subr.mxu0 0.0
        %4037 = vmatpush1.msra.mxu0 0.0
        %4038 = vmatprep.subr.mxu0 0.0
        %4039 = vmatpush1.msra.mxu0 0.0
        %4040 = vmatprep.subr.mxu0 0.0
        %4041 = vmatpush1.msra.mxu0 0.0
        %4042 = vmatprep.subr.mxu0 0.0
        %4043 = vmatpush1.msra.mxu0 0.0
        %4044 = vmatprep.subr.mxu0 0.0
        %4045 = vmatpush1.msra.mxu0 0.0
        %4046 = vmatprep.mubr.f32.mxu0 0.0
        %4047 = vmatmul.mubr.f32.gmra.mrb[0].mxu0 %v3980
        %v4048 = vpop.f32.mrb[0].mxu0
        %v4049 = vadd.f32 0.0, %v4048
        %v4050 = vpop.f32.mrb[0].mxu0
        %4051 = vdwg.mxu0
        %v4052 = vadd.f32 %v3973, %v4049
        %v4053 = vld [vmem:[#allocation14] sm:$0x1]
        %v4055 = vlaneseq
        %v4056 = vshrl.u32 %v4055, 7
        %v4057 = vsub.s32 0, %v4056
        %v4058 = vrot.slane %v4053, %v4057
        %v4060 = vadd.f32 %v4052, %v4058
        %v4061 = vmax.f32 %v4060, 0.0
        %v4062 = vpack.c.bf16 %v4061, %v4061
        %v4063 = vld [vmem:[%s67] sm:$0xf]
        %v4064 = vld [vmem:[%s67 + $0x4] sm:$0xf]
        %v4065 = vld [vmem:[%s67 + $0x8] sm:$0xf]
        %v4066 = vld [vmem:[%s67 + $0xc] sm:$0xf]
        %v4067 = vld [vmem:[#allocation16] sm:$0x1]
        %v4069 = vlaneseq
        %v4070 = vshrl.u32 %v4069, 7
        %v4071 = vsub.s32 0, %v4070
        %v4072 = vrot.slane %v4067, %v4071
        %v4078 = vunpack.c.l.b16 %v4063
        %v4079 = vunpack.c.l.b16 %v4064
        %v4080 = vunpack.c.l.b16 %v4065
        %v4081 = vunpack.c.l.b16 %v4066
        %v4082 = vpack.c.b16 %v4079, %v4078
        %v4083 = vpack.c.b16 %v4081, %v4080
        %v4087 = vsel %vm3169, %v4062, 0
        %4089 = vmatprep.subr.bf16.mxu0 0
        %4090 = vmatpush1.bf16.msra.mxu0 %v4082
        %4091 = vmatprep.subr.bf16.mxu0 0
        %4092 = vmatpush1.bf16.msra.mxu0 %v4083
        %4093 = vmatprep.subr.bf16.mxu0 0
        %4094 = vmatpush1.bf16.msra.mxu0 0
        %4095 = vmatprep.subr.bf16.mxu0 0
        %4096 = vmatpush1.bf16.msra.mxu0 0
        %4097 = vmatprep.subr.bf16.mxu0 0
        %4098 = vmatpush1.bf16.msra.mxu0 0
        %4099 = vmatprep.subr.bf16.mxu0 0
        %4100 = vmatpush1.bf16.msra.mxu0 0
        %4101 = vmatprep.subr.bf16.mxu0 0
        %4102 = vmatpush1.bf16.msra.mxu0 0
        %4103 = vmatprep.subr.bf16.mxu0 0
        %4104 = vmatpush1.bf16.msra.mxu0 0
        %4105 = vmatprep.subr.bf16.mxu0 0
        %4106 = vmatpush1.bf16.msra.mxu0 0
        %4107 = vmatprep.subr.bf16.mxu0 0
        %4108 = vmatpush1.bf16.msra.mxu0 0
        %4109 = vmatprep.subr.bf16.mxu0 0
        %4110 = vmatpush1.bf16.msra.mxu0 0
        %4111 = vmatprep.subr.bf16.mxu0 0
        %4112 = vmatpush1.bf16.msra.mxu0 0
        %4113 = vmatprep.subr.bf16.mxu0 0
        %4114 = vmatpush1.bf16.msra.mxu0 0
        %4115 = vmatprep.subr.bf16.mxu0 0
        %4116 = vmatpush1.bf16.msra.mxu0 0
        %4117 = vmatprep.subr.bf16.mxu0 0
        %4118 = vmatpush1.bf16.msra.mxu0 0
        %4119 = vmatprep.subr.bf16.mxu0 0
        %4120 = vmatpush1.bf16.msra.mxu0 0
        %4121 = vmatprep.mubr.bf16.mxu0 0
        %4122 = vmatmul.mubr.bf16.gmra.mrb[0].mxu0 %v4087
        %v4123 = vpop.f32.mrb[0].mxu0
        %v4124 = vadd.f32 %v4072, %v4123
        %v4125 = vpop.f32.mrb[0].mxu0
        %v4126 = vpop.f32.mrb[0].mxu0
        %v4127 = vpop.f32.mrb[0].mxu0
        %4128 = vdwg.mxu0
        %v4129 = vmax.f32 %v4124, 0.0
        %v4130 = vpack.c.bf16 %v4129, %v4129
        %v4131 = vld [vmem:[%s71] sm:$0xf]
        %v4132 = vld [vmem:[%s71 + $0x4] sm:$0xf]
        %v4133 = vld [vmem:[%s71 + $0x8] sm:$0xf]
        %v4134 = vld [vmem:[%s71 + $0xc] sm:$0xf]
        %v4135 = vld [vmem:[#allocation17] sm:$0x1]
        %v4137 = vlaneseq
        %v4138 = vshrl.u32 %v4137, 7
        %v4139 = vsub.s32 0, %v4138
        %v4140 = vrot.slane %v4135, %v4139
        %v4146 = vunpack.c.l.b16 %v4131
        %v4147 = vunpack.c.l.b16 %v4132
        %v4148 = vunpack.c.l.b16 %v4133
        %v4149 = vunpack.c.l.b16 %v4134
        %v4150 = vpack.c.b16 %v4147, %v4146
        %v4151 = vpack.c.b16 %v4149, %v4148
        %v4155 = vsel %vm3169, %v4130, 0
        %4157 = vmatprep.subr.bf16.mxu0 0
        %4158 = vmatpush1.bf16.msra.mxu0 %v4150
        %4159 = vmatprep.subr.bf16.mxu0 0
        %4160 = vmatpush1.bf16.msra.mxu0 %v4151
        %4161 = vmatprep.subr.bf16.mxu0 0
        %4162 = vmatpush1.bf16.msra.mxu0 0
        %4163 = vmatprep.subr.bf16.mxu0 0
        %4164 = vmatpush1.bf16.msra.mxu0 0
        %4165 = vmatprep.subr.bf16.mxu0 0
        %4166 = vmatpush1.bf16.msra.mxu0 0
        %4167 = vmatprep.subr.bf16.mxu0 0
        %4168 = vmatpush1.bf16.msra.mxu0 0
        %4169 = vmatprep.subr.bf16.mxu0 0
        %4170 = vmatpush1.bf16.msra.mxu0 0
        %4171 = vmatprep.subr.bf16.mxu0 0
        %4172 = vmatpush1.bf16.msra.mxu0 0
        %4173 = vmatprep.subr.bf16.mxu0 0
        %4174 = vmatpush1.bf16.msra.mxu0 0
        %4175 = vmatprep.subr.bf16.mxu0 0
        %4176 = vmatpush1.bf16.msra.mxu0 0
        %4177 = vmatprep.subr.bf16.mxu0 0
        %4178 = vmatpush1.bf16.msra.mxu0 0
        %4179 = vmatprep.subr.bf16.mxu0 0
        %4180 = vmatpush1.bf16.msra.mxu0 0
        %4181 = vmatprep.subr.bf16.mxu0 0
        %4182 = vmatpush1.bf16.msra.mxu0 0
        %4183 = vmatprep.subr.bf16.mxu0 0
        %4184 = vmatpush1.bf16.msra.mxu0 0
        %4185 = vmatprep.subr.bf16.mxu0 0
        %4186 = vmatpush1.bf16.msra.mxu0 0
        %4187 = vmatprep.subr.bf16.mxu0 0
        %4188 = vmatpush1.bf16.msra.mxu0 0
        %4189 = vmatprep.mubr.bf16.mxu0 0
        %4190 = vmatmul.mubr.bf16.gmra.mrb[0].mxu0 %v4155
        %v4191 = vpop.f32.mrb[0].mxu0
        %v4192 = vadd.f32 %v4140, %v4191
        %v4193 = vpop.f32.mrb[0].mxu0
        %v4194 = vpop.f32.mrb[0].mxu0
        %v4195 = vpop.f32.mrb[0].mxu0
        %4196 = vdwg.mxu0
        %v4197 = vmax.f32 %v4192, 0.0
        %v4198 = vld [vmem:[%s75] sm:$0xf]
        %v4200 = vsel %vm2311, %v4198, 0
        %4202 = vmatprep.subr.mxu0 0.0
        %4203 = vmatpush1.msra.mxu0 %v4197
        %4204 = vmatprep.subr.mxu0 0.0
        %4205 = vmatpush1.msra.mxu0 0.0
        %4206 = vmatprep.subr.mxu0 0.0
        %4207 = vmatpush1.msra.mxu0 0.0
        %4208 = vmatprep.subr.mxu0 0.0
        %4209 = vmatpush1.msra.mxu0 0.0
        %4210 = vmatprep.subr.mxu0 0.0
        %4211 = vmatpush1.msra.mxu0 0.0
        %4212 = vmatprep.subr.mxu0 0.0
        %4213 = vmatpush1.msra.mxu0 0.0
        %4214 = vmatprep.subr.mxu0 0.0
        %4215 = vmatpush1.msra.mxu0 0.0
        %4216 = vmatprep.subr.mxu0 0.0
        %4217 = vmatpush1.msra.mxu0 0.0
        %4218 = vmatprep.subr.mxu0 0.0
        %4219 = vmatpush1.msra.mxu0 0.0
        %4220 = vmatprep.subr.mxu0 0.0
        %4221 = vmatpush1.msra.mxu0 0.0
        %4222 = vmatprep.subr.mxu0 0.0
        %4223 = vmatpush1.msra.mxu0 0.0
        %4224 = vmatprep.subr.mxu0 0.0
        %4225 = vmatpush1.msra.mxu0 0.0
        %4226 = vmatprep.subr.mxu0 0.0
        %4227 = vmatpush1.msra.mxu0 0.0
        %4228 = vmatprep.subr.mxu0 0.0
        %4229 = vmatpush1.msra.mxu0 0.0
        %4230 = vmatprep.subr.mxu0 0.0
        %4231 = vmatpush1.msra.mxu0 0.0
        %4232 = vmatprep.subr.mxu0 0.0
        %4233 = vmatpush1.msra.mxu0 0.0
        %4234 = vmatprep.subr.mxu0 0.0
        %4235 = vmatpush1.msra.mxu0 0.0
        %4236 = vmatprep.subr.mxu0 0.0
        %4237 = vmatpush1.msra.mxu0 0.0
        %4238 = vmatprep.subr.mxu0 0.0
        %4239 = vmatpush1.msra.mxu0 0.0
        %4240 = vmatprep.subr.mxu0 0.0
        %4241 = vmatpush1.msra.mxu0 0.0
        %4242 = vmatprep.subr.mxu0 0.0
        %4243 = vmatpush1.msra.mxu0 0.0
        %4244 = vmatprep.subr.mxu0 0.0
        %4245 = vmatpush1.msra.mxu0 0.0
        %4246 = vmatprep.subr.mxu0 0.0
        %4247 = vmatpush1.msra.mxu0 0.0
        %4248 = vmatprep.subr.mxu0 0.0
        %4249 = vmatpush1.msra.mxu0 0.0
        %4250 = vmatprep.subr.mxu0 0.0
        %4251 = vmatpush1.msra.mxu0 0.0
        %4252 = vmatprep.subr.mxu0 0.0
        %4253 = vmatpush1.msra.mxu0 0.0
        %4254 = vmatprep.subr.mxu0 0.0
        %4255 = vmatpush1.msra.mxu0 0.0
        %4256 = vmatprep.subr.mxu0 0.0
        %4257 = vmatpush1.msra.mxu0 0.0
        %4258 = vmatprep.subr.mxu0 0.0
        %4259 = vmatpush1.msra.mxu0 0.0
        %4260 = vmatprep.subr.mxu0 0.0
        %4261 = vmatpush1.msra.mxu0 0.0
        %4262 = vmatprep.subr.mxu0 0.0
        %4263 = vmatpush1.msra.mxu0 0.0
        %4264 = vmatprep.subr.mxu0 0.0
        %4265 = vmatpush1.msra.mxu0 0.0
        %4266 = vmatprep.mubr.f32.mxu0 0.0
        %4267 = vmatmul.mubr.f32.gmra.mrb[0].mxu0 %v4200
        %v4268 = vpop.f32.mrb[0].mxu0
        %v4269 = vadd.f32 0.0, %v4268
        %v4270 = vpop.f32.mrb[0].mxu0
        %4271 = vdwg.mxu0
        %v4272 = vld [vmem:[%s77] sm:$0xf]
        %v4274 = vsel %vm2311, %v4272, 0
        %4276 = vmatprep.subr.mxu0 0.0
        %4277 = vmatpush1.msra.mxu0 %v4197
        %4278 = vmatprep.subr.mxu0 0.0
        %4279 = vmatpush1.msra.mxu0 0.0
        %4280 = vmatprep.subr.mxu0 0.0
        %4281 = vmatpush1.msra.mxu0 0.0
        %4282 = vmatprep.subr.mxu0 0.0
        %4283 = vmatpush1.msra.mxu0 0.0
        %4284 = vmatprep.subr.mxu0 0.0
        %4285 = vmatpush1.msra.mxu0 0.0
        %4286 = vmatprep.subr.mxu0 0.0
        %4287 = vmatpush1.msra.mxu0 0.0
        %4288 = vmatprep.subr.mxu0 0.0
        %4289 = vmatpush1.msra.mxu0 0.0
        %4290 = vmatprep.subr.mxu0 0.0
        %4291 = vmatpush1.msra.mxu0 0.0
        %4292 = vmatprep.subr.mxu0 0.0
        %4293 = vmatpush1.msra.mxu0 0.0
        %4294 = vmatprep.subr.mxu0 0.0
        %4295 = vmatpush1.msra.mxu0 0.0
        %4296 = vmatprep.subr.mxu0 0.0
        %4297 = vmatpush1.msra.mxu0 0.0
        %4298 = vmatprep.subr.mxu0 0.0
        %4299 = vmatpush1.msra.mxu0 0.0
        %4300 = vmatprep.subr.mxu0 0.0
        %4301 = vmatpush1.msra.mxu0 0.0
        %4302 = vmatprep.subr.mxu0 0.0
        %4303 = vmatpush1.msra.mxu0 0.0
        %4304 = vmatprep.subr.mxu0 0.0
        %4305 = vmatpush1.msra.mxu0 0.0
        %4306 = vmatprep.subr.mxu0 0.0
        %4307 = vmatpush1.msra.mxu0 0.0
        %4308 = vmatprep.subr.mxu0 0.0
        %4309 = vmatpush1.msra.mxu0 0.0
        %4310 = vmatprep.subr.mxu0 0.0
        %4311 = vmatpush1.msra.mxu0 0.0
        %4312 = vmatprep.subr.mxu0 0.0
        %4313 = vmatpush1.msra.mxu0 0.0
        %4314 = vmatprep.subr.mxu0 0.0
        %4315 = vmatpush1.msra.mxu0 0.0
        %4316 = vmatprep.subr.mxu0 0.0
        %4317 = vmatpush1.msra.mxu0 0.0
        %4318 = vmatprep.subr.mxu0 0.0
        %4319 = vmatpush1.msra.mxu0 0.0
        %4320 = vmatprep.subr.mxu0 0.0
        %4321 = vmatpush1.msra.mxu0 0.0
        %4322 = vmatprep.subr.mxu0 0.0
        %4323 = vmatpush1.msra.mxu0 0.0
        %4324 = vmatprep.subr.mxu0 0.0
        %4325 = vmatpush1.msra.mxu0 0.0
        %4326 = vmatprep.subr.mxu0 0.0
        %4327 = vmatpush1.msra.mxu0 0.0
        %4328 = vmatprep.subr.mxu0 0.0
        %4329 = vmatpush1.msra.mxu0 0.0
        %4330 = vmatprep.subr.mxu0 0.0
        %4331 = vmatpush1.msra.mxu0 0.0
        %4332 = vmatprep.subr.mxu0 0.0
        %4333 = vmatpush1.msra.mxu0 0.0
        %4334 = vmatprep.subr.mxu0 0.0
        %4335 = vmatpush1.msra.mxu0 0.0
        %4336 = vmatprep.subr.mxu0 0.0
        %4337 = vmatpush1.msra.mxu0 0.0
        %4338 = vmatprep.subr.mxu0 0.0
        %4339 = vmatpush1.msra.mxu0 0.0
        %4340 = vmatprep.mubr.f32.mxu0 0.0
        %4341 = vmatmul.mubr.f32.gmra.mrb[0].mxu0 %v4274
        %v4342 = vpop.f32.mrb[0].mxu0
        %v4343 = vadd.f32 0.0, %v4342
        %v4344 = vpop.f32.mrb[0].mxu0
        %4345 = vdwg.mxu0
        %v4346 = vmax.f32 %v4269, %v4343
        %v4347 = vld [vmem:[%s79] sm:$0xff]
        %v4348 = vld [vmem:[%s79 + $0x8] sm:$0xff]
        %v4349 = vld [vmem:[%s79 + $0x10] sm:$0xff]
        %v4350 = vld [vmem:[%s79 + $0x18] sm:$0xff]
        %v4351 = vld [vmem:[%s79 + $0x20] sm:$0xff]
        %v4352 = vld [vmem:[%s79 + $0x28] sm:$0xff]
        %v4353 = vld [vmem:[%s79 + $0x30] sm:$0xff]
        %v4354 = vld [vmem:[%s79 + $0x38] sm:$0xff]
        %v4355 = vld [vmem:[%s79 + $0x40] sm:$0xff]
        %v4356 = vld [vmem:[%s79 + $0x48] sm:$0xff]
        %v4357 = vld [vmem:[%s79 + $0x50] sm:$0xff]
        %v4358 = vld [vmem:[%s79 + $0x58] sm:$0xff]
        %v4359 = vld [vmem:[%s79 + $0x60] sm:$0xff]
        %v4360 = vld [vmem:[%s79 + $0x68] sm:$0xff]
        %v4361 = vld [vmem:[%s79 + $0x70] sm:$0xff]
        %v4362 = vld [vmem:[%s79 + $0x78] sm:$0xff]
        %4363 = vmatprep.subr.mxu0 0.0
        %4364 = vmatpush1.msra.mxu0 %v4347
        %4365 = vmatprep.subr.mxu0 0.0
        %4366 = vmatpush1.msra.mxu0 %v4348
        %4367 = vmatprep.subr.mxu0 0.0
        %4368 = vmatpush1.msra.mxu0 %v4349
        %4369 = vmatprep.subr.mxu0 0.0
        %4370 = vmatpush1.msra.mxu0 %v4350
        %4371 = vmatprep.subr.mxu0 0.0
        %4372 = vmatpush1.msra.mxu0 %v4351
        %4373 = vmatprep.subr.mxu0 0.0
        %4374 = vmatpush1.msra.mxu0 %v4352
        %4375 = vmatprep.subr.mxu0 0.0
        %4376 = vmatpush1.msra.mxu0 %v4353
        %4377 = vmatprep.subr.mxu0 0.0
        %4378 = vmatpush1.msra.mxu0 %v4354
        %4379 = vmatprep.subr.mxu0 0.0
        %4380 = vmatpush1.msra.mxu0 %v4355
        %4381 = vmatprep.subr.mxu0 0.0
        %4382 = vmatpush1.msra.mxu0 %v4356
        %4383 = vmatprep.subr.mxu0 0.0
        %4384 = vmatpush1.msra.mxu0 %v4357
        %4385 = vmatprep.subr.mxu0 0.0
        %4386 = vmatpush1.msra.mxu0 %v4358
        %4387 = vmatprep.subr.mxu0 0.0
        %4388 = vmatpush1.msra.mxu0 %v4359
        %4389 = vmatprep.subr.mxu0 0.0
        %4390 = vmatpush1.msra.mxu0 %v4360
        %4391 = vmatprep.subr.mxu0 0.0
        %4392 = vmatpush1.msra.mxu0 %v4361
        %4393 = vmatprep.subr.mxu0 0.0
        %4394 = vmatpush1.msra.mxu0 %v4362
        %4395 = vmatprep.subr.mxu0 0.0
        %4396 = vmatpush1.msra.mxu0 0.0
        %4397 = vmatprep.subr.mxu0 0.0
        %4398 = vmatpush1.msra.mxu0 0.0
        %4399 = vmatprep.subr.mxu0 0.0
        %4400 = vmatpush1.msra.mxu0 0.0
        %4401 = vmatprep.subr.mxu0 0.0
        %4402 = vmatpush1.msra.mxu0 0.0
        %4403 = vmatprep.subr.mxu0 0.0
        %4404 = vmatpush1.msra.mxu0 0.0
        %4405 = vmatprep.subr.mxu0 0.0
        %4406 = vmatpush1.msra.mxu0 0.0
        %4407 = vmatprep.subr.mxu0 0.0
        %4408 = vmatpush1.msra.mxu0 0.0
        %4409 = vmatprep.subr.mxu0 0.0
        %4410 = vmatpush1.msra.mxu0 0.0
        %4411 = vmatprep.subr.mxu0 0.0
        %4412 = vmatpush1.msra.mxu0 0.0
        %4413 = vmatprep.subr.mxu0 0.0
        %4414 = vmatpush1.msra.mxu0 0.0
        %4415 = vmatprep.subr.mxu0 0.0
        %4416 = vmatpush1.msra.mxu0 0.0
        %4417 = vmatprep.subr.mxu0 0.0
        %4418 = vmatpush1.msra.mxu0 0.0
        %4419 = vmatprep.subr.mxu0 0.0
        %4420 = vmatpush1.msra.mxu0 0.0
        %4421 = vmatprep.subr.mxu0 0.0
        %4422 = vmatpush1.msra.mxu0 0.0
        %4423 = vmatprep.subr.mxu0 0.0
        %4424 = vmatpush1.msra.mxu0 0.0
        %4425 = vmatprep.subr.mxu0 0.0
        %4426 = vmatpush1.msra.mxu0 0.0
        %4427 = vmatprep.mubr.f32.mxu0 0.0
        %4428 = vmatmul.mubr.f32.gmra.mrb[0].mxu0 %v4346
        %v4429 = vpop.f32.mrb[0].mxu0
        %v4430 = vadd.f32 0.0, %v4429
        %v4431 = vpop.f32.mrb[0].mxu0
        %4432 = vdwg.mxu0
        %v4433 = vld [vmem:[%s81] sm:$0xff]
        %v4434 = vld [vmem:[%s81 + $0x8] sm:$0xff]
        %v4435 = vld [vmem:[%s81 + $0x10] sm:$0xff]
        %v4436 = vld [vmem:[%s81 + $0x18] sm:$0xff]
        %v4437 = vld [vmem:[%s81 + $0x20] sm:$0xff]
        %v4438 = vld [vmem:[%s81 + $0x28] sm:$0xff]
        %v4439 = vld [vmem:[%s81 + $0x30] sm:$0xff]
        %v4440 = vld [vmem:[%s81 + $0x38] sm:$0xff]
        %v4441 = vld [vmem:[%s81 + $0x40] sm:$0xff]
        %v4442 = vld [vmem:[%s81 + $0x48] sm:$0xff]
        %v4443 = vld [vmem:[%s81 + $0x50] sm:$0xff]
        %v4444 = vld [vmem:[%s81 + $0x58] sm:$0xff]
        %v4445 = vld [vmem:[%s81 + $0x60] sm:$0xff]
        %v4446 = vld [vmem:[%s81 + $0x68] sm:$0xff]
        %v4447 = vld [vmem:[%s81 + $0x70] sm:$0xff]
        %v4448 = vld [vmem:[%s81 + $0x78] sm:$0xff]
        %4449 = vmatprep.subr.mxu0 0.0
        %4450 = vmatpush1.msra.mxu0 %v4433
        %4451 = vmatprep.subr.mxu0 0.0
        %4452 = vmatpush1.msra.mxu0 %v4434
        %4453 = vmatprep.subr.mxu0 0.0
        %4454 = vmatpush1.msra.mxu0 %v4435
        %4455 = vmatprep.subr.mxu0 0.0
        %4456 = vmatpush1.msra.mxu0 %v4436
        %4457 = vmatprep.subr.mxu0 0.0
        %4458 = vmatpush1.msra.mxu0 %v4437
        %4459 = vmatprep.subr.mxu0 0.0
        %4460 = vmatpush1.msra.mxu0 %v4438
        %4461 = vmatprep.subr.mxu0 0.0
        %4462 = vmatpush1.msra.mxu0 %v4439
        %4463 = vmatprep.subr.mxu0 0.0
        %4464 = vmatpush1.msra.mxu0 %v4440
        %4465 = vmatprep.subr.mxu0 0.0
        %4466 = vmatpush1.msra.mxu0 %v4441
        %4467 = vmatprep.subr.mxu0 0.0
        %4468 = vmatpush1.msra.mxu0 %v4442
        %4469 = vmatprep.subr.mxu0 0.0
        %4470 = vmatpush1.msra.mxu0 %v4443
        %4471 = vmatprep.subr.mxu0 0.0
        %4472 = vmatpush1.msra.mxu0 %v4444
        %4473 = vmatprep.subr.mxu0 0.0
        %4474 = vmatpush1.msra.mxu0 %v4445
        %4475 = vmatprep.subr.mxu0 0.0
        %4476 = vmatpush1.msra.mxu0 %v4446
        %4477 = vmatprep.subr.mxu0 0.0
        %4478 = vmatpush1.msra.mxu0 %v4447
        %4479 = vmatprep.subr.mxu0 0.0
        %4480 = vmatpush1.msra.mxu0 %v4448
        %4481 = vmatprep.subr.mxu0 0.0
        %4482 = vmatpush1.msra.mxu0 0.0
        %4483 = vmatprep.subr.mxu0 0.0
        %4484 = vmatpush1.msra.mxu0 0.0
        %4485 = vmatprep.subr.mxu0 0.0
        %4486 = vmatpush1.msra.mxu0 0.0
        %4487 = vmatprep.subr.mxu0 0.0
        %4488 = vmatpush1.msra.mxu0 0.0
        %4489 = vmatprep.subr.mxu0 0.0
        %4490 = vmatpush1.msra.mxu0 0.0
        %4491 = vmatprep.subr.mxu0 0.0
        %4492 = vmatpush1.msra.mxu0 0.0
        %4493 = vmatprep.subr.mxu0 0.0
        %4494 = vmatpush1.msra.mxu0 0.0
        %4495 = vmatprep.subr.mxu0 0.0
        %4496 = vmatpush1.msra.mxu0 0.0
        %4497 = vmatprep.subr.mxu0 0.0
        %4498 = vmatpush1.msra.mxu0 0.0
        %4499 = vmatprep.subr.mxu0 0.0
        %4500 = vmatpush1.msra.mxu0 0.0
        %4501 = vmatprep.subr.mxu0 0.0
        %4502 = vmatpush1.msra.mxu0 0.0
        %4503 = vmatprep.subr.mxu0 0.0
        %4504 = vmatpush1.msra.mxu0 0.0
        %4505 = vmatprep.subr.mxu0 0.0
        %4506 = vmatpush1.msra.mxu0 0.0
        %4507 = vmatprep.subr.mxu0 0.0
        %4508 = vmatpush1.msra.mxu0 0.0
        %4509 = vmatprep.subr.mxu0 0.0
        %4510 = vmatpush1.msra.mxu0 0.0
        %4511 = vmatprep.subr.mxu0 0.0
        %4512 = vmatpush1.msra.mxu0 0.0
        %4513 = vmatprep.mubr.f32.mxu0 0.0
        %4514 = vmatmul.mubr.f32.gmra.mrb[0].mxu0 %v4346
        %v4515 = vpop.f32.mrb[0].mxu0
        %v4516 = vadd.f32 0.0, %v4515
        %v4517 = vpop.f32.mrb[0].mxu0
        %4518 = vdwg.mxu0
        %v4519 = vmax.f32 %v4430, %v4516
        %v4520 = vpack.c.bf16 %v4519, %v4519
        %v4521 = vld [vmem:[%s83] sm:$0xf]
        %v4522 = vld [vmem:[%s83 + $0x4] sm:$0xf]
        %v4523 = vld [vmem:[%s83 + $0x8] sm:$0xf]
        %v4524 = vld [vmem:[%s83 + $0xc] sm:$0xf]
        %v4525 = vld [vmem:[%s83 + $0x10] sm:$0xf]
        %v4526 = vld [vmem:[%s83 + $0x14] sm:$0xf]
        %v4527 = vld [vmem:[%s83 + $0x18] sm:$0xf]
        %v4528 = vld [vmem:[%s83 + $0x1c] sm:$0xf]
        %v4529 = vld [vmem:[#allocation19] sm:$0x1]
        %v4531 = vlaneseq
        %v4532 = vshrl.u32 %v4531, 7
        %v4533 = vsub.s32 0, %v4532
        %v4534 = vrot.slane %v4529, %v4533
        %v4544 = vunpack.c.l.b16 %v4521
        %v4545 = vunpack.c.l.b16 %v4522
        %v4546 = vunpack.c.l.b16 %v4523
        %v4547 = vunpack.c.l.b16 %v4524
        %v4548 = vunpack.c.l.b16 %v4525
        %v4549 = vunpack.c.l.b16 %v4526
        %v4550 = vunpack.c.l.b16 %v4527
        %v4551 = vunpack.c.l.b16 %v4528
        %v4552 = vpack.c.b16 %v4545, %v4544
        %v4553 = vpack.c.b16 %v4547, %v4546
        %v4554 = vpack.c.b16 %v4549, %v4548
        %v4555 = vpack.c.b16 %v4551, %v4550
        %v4561 = vsel %vm3107, %v4520, 0
        %4563 = vmatprep.subr.bf16.mxu0 0
        %4564 = vmatpush1.bf16.msra.mxu0 %v4552
        %4565 = vmatprep.subr.bf16.mxu0 0
        %4566 = vmatpush1.bf16.msra.mxu0 %v4553
        %4567 = vmatprep.subr.bf16.mxu0 0
        %4568 = vmatpush1.bf16.msra.mxu0 %v4554
        %4569 = vmatprep.subr.bf16.mxu0 0
        %4570 = vmatpush1.bf16.msra.mxu0 %v4555
        %4571 = vmatprep.subr.bf16.mxu0 0
        %4572 = vmatpush1.bf16.msra.mxu0 0
        %4573 = vmatprep.subr.bf16.mxu0 0
        %4574 = vmatpush1.bf16.msra.mxu0 0
        %4575 = vmatprep.subr.bf16.mxu0 0
        %4576 = vmatpush1.bf16.msra.mxu0 0
        %4577 = vmatprep.subr.bf16.mxu0 0
        %4578 = vmatpush1.bf16.msra.mxu0 0
        %4579 = vmatprep.subr.bf16.mxu0 0
        %4580 = vmatpush1.bf16.msra.mxu0 0
        %4581 = vmatprep.subr.bf16.mxu0 0
        %4582 = vmatpush1.bf16.msra.mxu0 0
        %4583 = vmatprep.subr.bf16.mxu0 0
        %4584 = vmatpush1.bf16.msra.mxu0 0
        %4585 = vmatprep.subr.bf16.mxu0 0
        %4586 = vmatpush1.bf16.msra.mxu0 0
        %4587 = vmatprep.subr.bf16.mxu0 0
        %4588 = vmatpush1.bf16.msra.mxu0 0
        %4589 = vmatprep.subr.bf16.mxu0 0
        %4590 = vmatpush1.bf16.msra.mxu0 0
        %4591 = vmatprep.subr.bf16.mxu0 0
        %4592 = vmatpush1.bf16.msra.mxu0 0
        %4593 = vmatprep.subr.bf16.mxu0 0
        %4594 = vmatpush1.bf16.msra.mxu0 0
        %4595 = vmatprep.mubr.bf16.mxu0 0
        %4596 = vmatmul.mubr.bf16.gmra.mrb[0].mxu0 %v4561
        %v4597 = vpop.f32.mrb[0].mxu0
        %v4598 = vadd.f32 %v4534, %v4597
        %v4599 = vpop.f32.mrb[0].mxu0
        %v4600 = vpop.f32.mrb[0].mxu0
        %v4601 = vpop.f32.mrb[0].mxu0
        %4602 = vdwg.mxu0
        %v4603 = vmax.f32 %v4598, 0.0
        %v4604 = vpack.c.bf16 %v4603, %v4603
        %v4605 = vld [vmem:[%s87] sm:$0xf]
        %v4606 = vld [vmem:[%s87 + $0x4] sm:$0xf]
        %v4607 = vld [vmem:[%s87 + $0x8] sm:$0xf]
        %v4608 = vld [vmem:[%s87 + $0xc] sm:$0xf]
        %v4613 = vunpack.c.l.b16 %v4605
        %v4614 = vunpack.c.l.b16 %v4606
        %v4615 = vunpack.c.l.b16 %v4607
        %v4616 = vunpack.c.l.b16 %v4608
        %v4617 = vpack.c.b16 %v4614, %v4613
        %v4618 = vpack.c.b16 %v4616, %v4615
        %v4622 = vsel %vm3169, %v4604, 0
        %4624 = vmatprep.subr.bf16.mxu0 0
        %4625 = vmatpush1.bf16.msra.mxu0 %v4617
        %4626 = vmatprep.subr.bf16.mxu0 0
        %4627 = vmatpush1.bf16.msra.mxu0 %v4618
        %4628 = vmatprep.subr.bf16.mxu0 0
        %4629 = vmatpush1.bf16.msra.mxu0 0
        %4630 = vmatprep.subr.bf16.mxu0 0
        %4631 = vmatpush1.bf16.msra.mxu0 0
        %4632 = vmatprep.subr.bf16.mxu0 0
        %4633 = vmatpush1.bf16.msra.mxu0 0
        %4634 = vmatprep.subr.bf16.mxu0 0
        %4635 = vmatpush1.bf16.msra.mxu0 0
        %4636 = vmatprep.subr.bf16.mxu0 0
        %4637 = vmatpush1.bf16.msra.mxu0 0
        %4638 = vmatprep.subr.bf16.mxu0 0
        %4639 = vmatpush1.bf16.msra.mxu0 0
        %4640 = vmatprep.subr.bf16.mxu0 0
        %4641 = vmatpush1.bf16.msra.mxu0 0
        %4642 = vmatprep.subr.bf16.mxu0 0
        %4643 = vmatpush1.bf16.msra.mxu0 0
        %4644 = vmatprep.subr.bf16.mxu0 0
        %4645 = vmatpush1.bf16.msra.mxu0 0
        %4646 = vmatprep.subr.bf16.mxu0 0
        %4647 = vmatpush1.bf16.msra.mxu0 0
        %4648 = vmatprep.subr.bf16.mxu0 0
        %4649 = vmatpush1.bf16.msra.mxu0 0
        %4650 = vmatprep.subr.bf16.mxu0 0
        %4651 = vmatpush1.bf16.msra.mxu0 0
        %4652 = vmatprep.subr.bf16.mxu0 0
        %4653 = vmatpush1.bf16.msra.mxu0 0
        %4654 = vmatprep.subr.bf16.mxu0 0
        %4655 = vmatpush1.bf16.msra.mxu0 0
        %4656 = vmatprep.mubr.bf16.mxu0 0
        %4657 = vmatmul.mubr.bf16.gmra.mrb[0].mxu0 %v4622
        %v4658 = vpop.f32.mrb[0].mxu0
        %v4659 = vadd.f32 0.0, %v4658
        %v4660 = vpop.f32.mrb[0].mxu0
        %v4661 = vpop.f32.mrb[0].mxu0
        %v4662 = vpop.f32.mrb[0].mxu0
        %4663 = vdwg.mxu0
        %v4664 = vld [vmem:[%s89] sm:$0xf]
        %v4665 = vld [vmem:[%s89 + $0x4] sm:$0xf]
        %v4666 = vld [vmem:[%s89 + $0x8] sm:$0xf]
        %v4667 = vld [vmem:[%s89 + $0xc] sm:$0xf]
        %v4668 = vld [vmem:[%s91] sm:$0xf]
        %v4669 = vld [vmem:[%s91 + $0x4] sm:$0xf]
        %v4670 = vld [vmem:[%s91 + $0x8] sm:$0xf]
        %v4671 = vld [vmem:[%s91 + $0xc] sm:$0xf]
        %v4676 = vunpack.c.l.b16 %v4668
        %v4677 = vunpack.c.l.b16 %v4669
        %v4678 = vunpack.c.l.b16 %v4670
        %v4679 = vunpack.c.l.b16 %v4671
        %v4680 = vpack.c.b16 %v4677, %v4676
        %v4681 = vpack.c.b16 %v4679, %v4678
        %4684 = vmatprep.subr.bf16.mxu0 0
        %4685 = vmatpush1.bf16.msra.mxu0 %v4680
        %4686 = vmatprep.subr.bf16.mxu0 0
        %4687 = vmatpush1.bf16.msra.mxu0 %v4681
        %4688 = vmatprep.subr.bf16.mxu0 0
        %4689 = vmatpush1.bf16.msra.mxu0 0
        %4690 = vmatprep.subr.bf16.mxu0 0
        %4691 = vmatpush1.bf16.msra.mxu0 0
        %4692 = vmatprep.subr.bf16.mxu0 0
        %4693 = vmatpush1.bf16.msra.mxu0 0
        %4694 = vmatprep.subr.bf16.mxu0 0
        %4695 = vmatpush1.bf16.msra.mxu0 0
        %4696 = vmatprep.subr.bf16.mxu0 0
        %4697 = vmatpush1.bf16.msra.mxu0 0
        %4698 = vmatprep.subr.bf16.mxu0 0
        %4699 = vmatpush1.bf16.msra.mxu0 0
        %4700 = vmatprep.subr.bf16.mxu0 0
        %4701 = vmatpush1.bf16.msra.mxu0 0
        %4702 = vmatprep.subr.bf16.mxu0 0
        %4703 = vmatpush1.bf16.msra.mxu0 0
        %4704 = vmatprep.subr.bf16.mxu0 0
        %4705 = vmatpush1.bf16.msra.mxu0 0
        %4706 = vmatprep.subr.bf16.mxu0 0
        %4707 = vmatpush1.bf16.msra.mxu0 0
        %4708 = vmatprep.subr.bf16.mxu0 0
        %4709 = vmatpush1.bf16.msra.mxu0 0
        %4710 = vmatprep.subr.bf16.mxu0 0
        %4711 = vmatpush1.bf16.msra.mxu0 0
        %4712 = vmatprep.subr.bf16.mxu0 0
        %4713 = vmatpush1.bf16.msra.mxu0 0
        %4714 = vmatprep.subr.bf16.mxu0 0
        %4715 = vmatpush1.bf16.msra.mxu0 0
        %4716 = vmatprep.mubr.bf16.mxu0 0
        %4717 = vmatmul.mubr.bf16.gmra.mrb[0].mxu0 %v4622
        %v4718 = vpop.f32.mrb[0].mxu0
        %v4719 = vadd.f32 0.0, %v4718
        %v4720 = vpop.f32.mrb[0].mxu0
        %v4721 = vpop.f32.mrb[0].mxu0
        %v4722 = vpop.f32.mrb[0].mxu0
        %4723 = vdwg.mxu0
        %v4724 = vld [vmem:[%s93] sm:$0xf]
        %vm4725 = vcmask 31744
        %v4727 = vsel %vm4725, %v4724, 0
        %v4730 = vsel %vm2315, %v4659, 0
        %4732 = vmatprep.subr.mxu0 0.0
        %4733 = vmatpush1.msra.mxu0 %v4730
        %4734 = vmatprep.subr.mxu0 0.0
        %4735 = vmatpush1.msra.mxu0 0.0
        %4736 = vmatprep.subr.mxu0 0.0
        %4737 = vmatpush1.msra.mxu0 0.0
        %4738 = vmatprep.subr.mxu0 0.0
        %4739 = vmatpush1.msra.mxu0 0.0
        %4740 = vmatprep.subr.mxu0 0.0
        %4741 = vmatpush1.msra.mxu0 0.0
        %4742 = vmatprep.subr.mxu0 0.0
        %4743 = vmatpush1.msra.mxu0 0.0
        %4744 = vmatprep.subr.mxu0 0.0
        %4745 = vmatpush1.msra.mxu0 0.0
        %4746 = vmatprep.subr.mxu0 0.0
        %4747 = vmatpush1.msra.mxu0 0.0
        %4748 = vmatprep.subr.mxu0 0.0
        %4749 = vmatpush1.msra.mxu0 0.0
        %4750 = vmatprep.subr.mxu0 0.0
        %4751 = vmatpush1.msra.mxu0 0.0
        %4752 = vmatprep.subr.mxu0 0.0
        %4753 = vmatpush1.msra.mxu0 0.0
        %4754 = vmatprep.subr.mxu0 0.0
        %4755 = vmatpush1.msra.mxu0 0.0
        %4756 = vmatprep.subr.mxu0 0.0
        %4757 = vmatpush1.msra.mxu0 0.0
        %4758 = vmatprep.subr.mxu0 0.0
        %4759 = vmatpush1.msra.mxu0 0.0
        %4760 = vmatprep.subr.mxu0 0.0
        %4761 = vmatpush1.msra.mxu0 0.0
        %4762 = vmatprep.subr.mxu0 0.0
        %4763 = vmatpush1.msra.mxu0 0.0
        %4764 = vmatprep.subr.mxu0 0.0
        %4765 = vmatpush1.msra.mxu0 0.0
        %4766 = vmatprep.subr.mxu0 0.0
        %4767 = vmatpush1.msra.mxu0 0.0
        %4768 = vmatprep.subr.mxu0 0.0
        %4769 = vmatpush1.msra.mxu0 0.0
        %4770 = vmatprep.subr.mxu0 0.0
        %4771 = vmatpush1.msra.mxu0 0.0
        %4772 = vmatprep.subr.mxu0 0.0
        %4773 = vmatpush1.msra.mxu0 0.0
        %4774 = vmatprep.subr.mxu0 0.0
        %4775 = vmatpush1.msra.mxu0 0.0
        %4776 = vmatprep.subr.mxu0 0.0
        %4777 = vmatpush1.msra.mxu0 0.0
        %4778 = vmatprep.subr.mxu0 0.0
        %4779 = vmatpush1.msra.mxu0 0.0
        %4780 = vmatprep.subr.mxu0 0.0
        %4781 = vmatpush1.msra.mxu0 0.0
        %4782 = vmatprep.subr.mxu0 0.0
        %4783 = vmatpush1.msra.mxu0 0.0
        %4784 = vmatprep.subr.mxu0 0.0
        %4785 = vmatpush1.msra.mxu0 0.0
        %4786 = vmatprep.subr.mxu0 0.0
        %4787 = vmatpush1.msra.mxu0 0.0
        %4788 = vmatprep.subr.mxu0 0.0
        %4789 = vmatpush1.msra.mxu0 0.0
        %4790 = vmatprep.subr.mxu0 0.0
        %4791 = vmatpush1.msra.mxu0 0.0
        %4792 = vmatprep.subr.mxu0 0.0
        %4793 = vmatpush1.msra.mxu0 0.0
        %4794 = vmatprep.subr.mxu0 0.0
        %4795 = vmatpush1.msra.mxu0 0.0
        %4796 = vmatprep.mubr.f32.mxu0 0.0
        %4797 = vmatmul.mubr.f32.gmra.mrb[0].mxu0 %v4727
        %v4798 = vpop.f32.mrb[0].mxu0
        %v4799 = vadd.f32 0.0, %v4798
        %v4800 = vpop.f32.mrb[0].mxu0
        %4801 = vdwg.mxu0
        %v4806 = vunpack.c.l.b16 %v4664
        %v4807 = vunpack.c.l.b16 %v4665
        %v4808 = vunpack.c.l.b16 %v4666
        %v4809 = vunpack.c.l.b16 %v4667
        %v4810 = vpack.c.b16 %v4807, %v4806
        %v4811 = vpack.c.b16 %v4809, %v4808
        %4814 = vmatprep.subr.bf16.mxu0 0
        %4815 = vmatpush1.bf16.msra.mxu0 %v4810
        %4816 = vmatprep.subr.bf16.mxu0 0
        %4817 = vmatpush1.bf16.msra.mxu0 %v4811
        %4818 = vmatprep.subr.bf16.mxu0 0
        %4819 = vmatpush1.bf16.msra.mxu0 0
        %4820 = vmatprep.subr.bf16.mxu0 0
        %4821 = vmatpush1.bf16.msra.mxu0 0
        %4822 = vmatprep.subr.bf16.mxu0 0
        %4823 = vmatpush1.bf16.msra.mxu0 0
        %4824 = vmatprep.subr.bf16.mxu0 0
        %4825 = vmatpush1.bf16.msra.mxu0 0
        %4826 = vmatprep.subr.bf16.mxu0 0
        %4827 = vmatpush1.bf16.msra.mxu0 0
        %4828 = vmatprep.subr.bf16.mxu0 0
        %4829 = vmatpush1.bf16.msra.mxu0 0
        %4830 = vmatprep.subr.bf16.mxu0 0
        %4831 = vmatpush1.bf16.msra.mxu0 0
        %4832 = vmatprep.subr.bf16.mxu0 0
        %4833 = vmatpush1.bf16.msra.mxu0 0
        %4834 = vmatprep.subr.bf16.mxu0 0
        %4835 = vmatpush1.bf16.msra.mxu0 0
        %4836 = vmatprep.subr.bf16.mxu0 0
        %4837 = vmatpush1.bf16.msra.mxu0 0
        %4838 = vmatprep.subr.bf16.mxu0 0
        %4839 = vmatpush1.bf16.msra.mxu0 0
        %4840 = vmatprep.subr.bf16.mxu0 0
        %4841 = vmatpush1.bf16.msra.mxu0 0
        %4842 = vmatprep.subr.bf16.mxu0 0
        %4843 = vmatpush1.bf16.msra.mxu0 0
        %4844 = vmatprep.subr.bf16.mxu0 0
        %4845 = vmatpush1.bf16.msra.mxu0 0
        %4846 = vmatprep.mubr.bf16.mxu0 0
        %4847 = vmatmul.mubr.bf16.gmra.mrb[0].mxu0 %v4622
        %v4848 = vpop.f32.mrb[0].mxu0
        %v4849 = vadd.f32 %v4799, %v4848
        %v4850 = vpop.f32.mrb[0].mxu0
        %v4851 = vpop.f32.mrb[0].mxu0
        %v4852 = vpop.f32.mrb[0].mxu0
        %4853 = vdwg.mxu0
        %v4854 = vld [vmem:[#allocation20] sm:$0xf]
        %v4856 = vsel %vm4725, %v4854, 0
        %v4859 = vsel %vm2315, %v4719, 0
        %4861 = vmatprep.subr.mxu0 0.0
        %4862 = vmatpush1.msra.mxu0 %v4859
        %4863 = vmatprep.subr.mxu0 0.0
        %4864 = vmatpush1.msra.mxu0 0.0
        %4865 = vmatprep.subr.mxu0 0.0
        %4866 = vmatpush1.msra.mxu0 0.0
        %4867 = vmatprep.subr.mxu0 0.0
        %4868 = vmatpush1.msra.mxu0 0.0
        %4869 = vmatprep.subr.mxu0 0.0
        %4870 = vmatpush1.msra.mxu0 0.0
        %4871 = vmatprep.subr.mxu0 0.0
        %4872 = vmatpush1.msra.mxu0 0.0
        %4873 = vmatprep.subr.mxu0 0.0
        %4874 = vmatpush1.msra.mxu0 0.0
        %4875 = vmatprep.subr.mxu0 0.0
        %4876 = vmatpush1.msra.mxu0 0.0
        %4877 = vmatprep.subr.mxu0 0.0
        %4878 = vmatpush1.msra.mxu0 0.0
        %4879 = vmatprep.subr.mxu0 0.0
        %4880 = vmatpush1.msra.mxu0 0.0
        %4881 = vmatprep.subr.mxu0 0.0
        %4882 = vmatpush1.msra.mxu0 0.0
        %4883 = vmatprep.subr.mxu0 0.0
        %4884 = vmatpush1.msra.mxu0 0.0
        %4885 = vmatprep.subr.mxu0 0.0
        %4886 = vmatpush1.msra.mxu0 0.0
        %4887 = vmatprep.subr.mxu0 0.0
        %4888 = vmatpush1.msra.mxu0 0.0
        %4889 = vmatprep.subr.mxu0 0.0
        %4890 = vmatpush1.msra.mxu0 0.0
        %4891 = vmatprep.subr.mxu0 0.0
        %4892 = vmatpush1.msra.mxu0 0.0
        %4893 = vmatprep.subr.mxu0 0.0
        %4894 = vmatpush1.msra.mxu0 0.0
        %4895 = vmatprep.subr.mxu0 0.0
        %4896 = vmatpush1.msra.mxu0 0.0
        %4897 = vmatprep.subr.mxu0 0.0
        %4898 = vmatpush1.msra.mxu0 0.0
        %4899 = vmatprep.subr.mxu0 0.0
        %4900 = vmatpush1.msra.mxu0 0.0
        %4901 = vmatprep.subr.mxu0 0.0
        %4902 = vmatpush1.msra.mxu0 0.0
        %4903 = vmatprep.subr.mxu0 0.0
        %4904 = vmatpush1.msra.mxu0 0.0
        %4905 = vmatprep.subr.mxu0 0.0
        %4906 = vmatpush1.msra.mxu0 0.0
        %4907 = vmatprep.subr.mxu0 0.0
        %4908 = vmatpush1.msra.mxu0 0.0
        %4909 = vmatprep.subr.mxu0 0.0
        %4910 = vmatpush1.msra.mxu0 0.0
        %4911 = vmatprep.subr.mxu0 0.0
        %4912 = vmatpush1.msra.mxu0 0.0
        %4913 = vmatprep.subr.mxu0 0.0
        %4914 = vmatpush1.msra.mxu0 0.0
        %4915 = vmatprep.subr.mxu0 0.0
        %4916 = vmatpush1.msra.mxu0 0.0
        %4917 = vmatprep.subr.mxu0 0.0
        %4918 = vmatpush1.msra.mxu0 0.0
        %4919 = vmatprep.subr.mxu0 0.0
        %4920 = vmatpush1.msra.mxu0 0.0
        %4921 = vmatprep.subr.mxu0 0.0
        %4922 = vmatpush1.msra.mxu0 0.0
        %4923 = vmatprep.subr.mxu0 0.0
        %4924 = vmatpush1.msra.mxu0 0.0
        %4925 = vmatprep.mubr.f32.mxu0 0.0
        %4926 = vmatmul.mubr.f32.gmra.mrb[0].mxu0 %v4856
        %v4927 = vpop.f32.mrb[0].mxu0
        %v4928 = vadd.f32 0.0, %v4927
        %v4929 = vpop.f32.mrb[0].mxu0
        %4930 = vdwg.mxu0
        %v4931 = vadd.f32 %v4849, %v4928
        %v4932 = vld [vmem:[#allocation22] sm:$0x1]
        %v4934 = vlaneseq
        %v4935 = vshrl.u32 %v4934, 7
        %v4936 = vsub.s32 0, %v4935
        %v4937 = vrot.slane %v4932, %v4936
        %v4939 = vadd.f32 %v4931, %v4937
        %v4940 = vmax.f32 %v4939, 0.0
        %v4941 = vpack.c.bf16 %v4940, %v4940
        %v4942 = vld [vmem:[%s99] sm:$0xf]
        %v4943 = vld [vmem:[%s99 + $0x4] sm:$0xf]
        %v4944 = vld [vmem:[%s99 + $0x8] sm:$0xf]
        %v4945 = vld [vmem:[%s99 + $0xc] sm:$0xf]
        %v4946 = vld [vmem:[#allocation23] sm:$0x1]
        %v4948 = vlaneseq
        %v4949 = vshrl.u32 %v4948, 7
        %v4950 = vsub.s32 0, %v4949
        %v4951 = vrot.slane %v4946, %v4950
        %v4957 = vunpack.c.l.b16 %v4942
        %v4958 = vunpack.c.l.b16 %v4943
        %v4959 = vunpack.c.l.b16 %v4944
        %v4960 = vunpack.c.l.b16 %v4945
        %v4961 = vpack.c.b16 %v4958, %v4957
        %v4962 = vpack.c.b16 %v4960, %v4959
        %v4966 = vsel %vm3169, %v4941, 0
        %4968 = vmatprep.subr.bf16.mxu0 0
        %4969 = vmatpush1.bf16.msra.mxu0 %v4961
        %4970 = vmatprep.subr.bf16.mxu0 0
        %4971 = vmatpush1.bf16.msra.mxu0 %v4962
        %4972 = vmatprep.subr.bf16.mxu0 0
        %4973 = vmatpush1.bf16.msra.mxu0 0
        %4974 = vmatprep.subr.bf16.mxu0 0
        %4975 = vmatpush1.bf16.msra.mxu0 0
        %4976 = vmatprep.subr.bf16.mxu0 0
        %4977 = vmatpush1.bf16.msra.mxu0 0
        %4978 = vmatprep.subr.bf16.mxu0 0
        %4979 = vmatpush1.bf16.msra.mxu0 0
        %4980 = vmatprep.subr.bf16.mxu0 0
        %4981 = vmatpush1.bf16.msra.mxu0 0
        %4982 = vmatprep.subr.bf16.mxu0 0
        %4983 = vmatpush1.bf16.msra.mxu0 0
        %4984 = vmatprep.subr.bf16.mxu0 0
        %4985 = vmatpush1.bf16.msra.mxu0 0
        %4986 = vmatprep.subr.bf16.mxu0 0
        %4987 = vmatpush1.bf16.msra.mxu0 0
        %4988 = vmatprep.subr.bf16.mxu0 0
        %4989 = vmatpush1.bf16.msra.mxu0 0
        %4990 = vmatprep.subr.bf16.mxu0 0
        %4991 = vmatpush1.bf16.msra.mxu0 0
        %4992 = vmatprep.subr.bf16.mxu0 0
        %4993 = vmatpush1.bf16.msra.mxu0 0
        %4994 = vmatprep.subr.bf16.mxu0 0
        %4995 = vmatpush1.bf16.msra.mxu0 0
        %4996 = vmatprep.subr.bf16.mxu0 0
        %4997 = vmatpush1.bf16.msra.mxu0 0
        %4998 = vmatprep.subr.bf16.mxu0 0
        %4999 = vmatpush1.bf16.msra.mxu0 0
        %5000 = vmatprep.mubr.bf16.mxu0 0
        %5001 = vmatmul.mubr.bf16.gmra.mrb[0].mxu0 %v4966
        %v5002 = vpop.f32.mrb[0].mxu0
        %v5003 = vadd.f32 %v4951, %v5002
        %v5004 = vpop.f32.mrb[0].mxu0
        %v5005 = vpop.f32.mrb[0].mxu0
        %v5006 = vpop.f32.mrb[0].mxu0
        %5007 = vdwg.mxu0
        %v5008 = vmax.f32 %v5003, 0.0
        %v5009 = vpack.c.bf16 %v5008, %v5008
        %v5010 = vld [vmem:[%s103] sm:$0xf]
        %v5011 = vld [vmem:[%s103 + $0x4] sm:$0xf]
        %v5012 = vld [vmem:[%s103 + $0x8] sm:$0xf]
        %v5013 = vld [vmem:[%s103 + $0xc] sm:$0xf]
        %v5014 = vld [vmem:[#allocation25] sm:$0x1]
        %v5016 = vlaneseq
        %v5017 = vshrl.u32 %v5016, 7
        %v5018 = vsub.s32 0, %v5017
        %v5019 = vrot.slane %v5014, %v5018
        %v5025 = vunpack.c.l.b16 %v5010
        %v5026 = vunpack.c.l.b16 %v5011
        %v5027 = vunpack.c.l.b16 %v5012
        %v5028 = vunpack.c.l.b16 %v5013
        %v5029 = vpack.c.b16 %v5026, %v5025
        %v5030 = vpack.c.b16 %v5028, %v5027
        %v5034 = vsel %vm3169, %v5009, 0
        %5036 = vmatprep.subr.bf16.mxu0 0
        %5037 = vmatpush1.bf16.msra.mxu0 %v5029
        %5038 = vmatprep.subr.bf16.mxu0 0
        %5039 = vmatpush1.bf16.msra.mxu0 %v5030
        %5040 = vmatprep.subr.bf16.mxu0 0
        %5041 = vmatpush1.bf16.msra.mxu0 0
        %5042 = vmatprep.subr.bf16.mxu0 0
        %5043 = vmatpush1.bf16.msra.mxu0 0
        %5044 = vmatprep.subr.bf16.mxu0 0
        %5045 = vmatpush1.bf16.msra.mxu0 0
        %5046 = vmatprep.subr.bf16.mxu0 0
        %5047 = vmatpush1.bf16.msra.mxu0 0
        %5048 = vmatprep.subr.bf16.mxu0 0
        %5049 = vmatpush1.bf16.msra.mxu0 0
        %5050 = vmatprep.subr.bf16.mxu0 0
        %5051 = vmatpush1.bf16.msra.mxu0 0
        %5052 = vmatprep.subr.bf16.mxu0 0
        %5053 = vmatpush1.bf16.msra.mxu0 0
        %5054 = vmatprep.subr.bf16.mxu0 0
        %5055 = vmatpush1.bf16.msra.mxu0 0
        %5056 = vmatprep.subr.bf16.mxu0 0
        %5057 = vmatpush1.bf16.msra.mxu0 0
        %5058 = vmatprep.subr.bf16.mxu0 0
        %5059 = vmatpush1.bf16.msra.mxu0 0
        %5060 = vmatprep.subr.bf16.mxu0 0
        %5061 = vmatpush1.bf16.msra.mxu0 0
        %5062 = vmatprep.subr.bf16.mxu0 0
        %5063 = vmatpush1.bf16.msra.mxu0 0
        %5064 = vmatprep.subr.bf16.mxu0 0
        %5065 = vmatpush1.bf16.msra.mxu0 0
        %5066 = vmatprep.subr.bf16.mxu0 0
        %5067 = vmatpush1.bf16.msra.mxu0 0
        %5068 = vmatprep.mubr.bf16.mxu0 0
        %5069 = vmatmul.mubr.bf16.gmra.mrb[0].mxu0 %v5034
        %v5070 = vpop.f32.mrb[0].mxu0
        %v5071 = vadd.f32 %v5019, %v5070
        %v5072 = vpop.f32.mrb[0].mxu0
        %v5073 = vpop.f32.mrb[0].mxu0
        %v5074 = vpop.f32.mrb[0].mxu0
        %5075 = vdwg.mxu0
        %v5076 = vmax.f32 %v5071, 0.0
        %v5077 = vpack.c.bf16 %v5076, %v5076
        %v5078 = vld [vmem:[%s107] sm:$0xf]
        %v5079 = vld [vmem:[%s107 + $0x4] sm:$0xf]
        %v5080 = vld [vmem:[%s107 + $0x8] sm:$0xf]
        %v5081 = vld [vmem:[%s107 + $0xc] sm:$0xf]
        %v5082 = vld [vmem:[%s107 + $0x10] sm:$0xf]
        %v5083 = vld [vmem:[%s107 + $0x14] sm:$0xf]
        %v5084 = vld [vmem:[%s107 + $0x18] sm:$0xf]
        %v5085 = vld [vmem:[%s107 + $0x1c] sm:$0xf]
        %v5086 = vld [vmem:[%s107 + $0x20] sm:$0xf]
        %v5087 = vld [vmem:[%s107 + $0x24] sm:$0xf]
        %v5088 = vld [vmem:[%s107 + $0x28] sm:$0xf]
        %v5089 = vld [vmem:[%s107 + $0x2c] sm:$0xf]
        %v5090 = vld [vmem:[%s107 + $0x30] sm:$0xf]
        %v5091 = vld [vmem:[%s107 + $0x34] sm:$0xf]
        %v5092 = vld [vmem:[%s107 + $0x38] sm:$0xf]
        %v5093 = vld [vmem:[%s107 + $0x3c] sm:$0xf]
        %v5094 = vld [vmem:[#allocation26] sm:$0x1]
        %v5096 = vlaneseq
        %v5097 = vshrl.u32 %v5096, 7
        %v5098 = vsub.s32 0, %v5097
        %v5099 = vrot.slane %v5094, %v5098
        %v5117 = vunpack.c.l.b16 %v5078
        %v5118 = vunpack.c.l.b16 %v5079
        %v5119 = vunpack.c.l.b16 %v5080
        %v5120 = vunpack.c.l.b16 %v5081
        %v5121 = vunpack.c.l.b16 %v5082
        %v5122 = vunpack.c.l.b16 %v5083
        %v5123 = vunpack.c.l.b16 %v5084
        %v5124 = vunpack.c.l.b16 %v5085
        %v5125 = vunpack.c.l.b16 %v5086
        %v5126 = vunpack.c.l.b16 %v5087
        %v5127 = vunpack.c.l.b16 %v5088
        %v5128 = vunpack.c.l.b16 %v5089
        %v5129 = vunpack.c.l.b16 %v5090
        %v5130 = vunpack.c.l.b16 %v5091
        %v5131 = vunpack.c.l.b16 %v5092
        %v5132 = vunpack.c.l.b16 %v5093
        %v5133 = vpack.c.b16 %v5118, %v5117
        %v5134 = vpack.c.b16 %v5120, %v5119
        %v5135 = vpack.c.b16 %v5122, %v5121
        %v5136 = vpack.c.b16 %v5124, %v5123
        %v5137 = vpack.c.b16 %v5126, %v5125
        %v5138 = vpack.c.b16 %v5128, %v5127
        %v5139 = vpack.c.b16 %v5130, %v5129
        %v5140 = vpack.c.b16 %v5132, %v5131
        %5149 = vmatprep.subr.bf16.mxu0 0
        %5150 = vmatpush1.bf16.msra.mxu0 %v5133
        %5151 = vmatprep.subr.bf16.mxu0 0
        %5152 = vmatpush1.bf16.msra.mxu0 %v5134
        %5153 = vmatprep.subr.bf16.mxu0 0
        %5154 = vmatpush1.bf16.msra.mxu0 %v5135
        %5155 = vmatprep.subr.bf16.mxu0 0
        %5156 = vmatpush1.bf16.msra.mxu0 %v5136
        %5157 = vmatprep.subr.bf16.mxu0 0
        %5158 = vmatpush1.bf16.msra.mxu0 %v5137
        %5159 = vmatprep.subr.bf16.mxu0 0
        %5160 = vmatpush1.bf16.msra.mxu0 %v5138
        %5161 = vmatprep.subr.bf16.mxu0 0
        %5162 = vmatpush1.bf16.msra.mxu0 %v5139
        %5163 = vmatprep.subr.bf16.mxu0 0
        %5164 = vmatpush1.bf16.msra.mxu0 %v5140
        %5165 = vmatprep.subr.bf16.mxu0 0
        %5166 = vmatpush1.bf16.msra.mxu0 0
        %5167 = vmatprep.subr.bf16.mxu0 0
        %5168 = vmatpush1.bf16.msra.mxu0 0
        %5169 = vmatprep.subr.bf16.mxu0 0
        %5170 = vmatpush1.bf16.msra.mxu0 0
        %5171 = vmatprep.subr.bf16.mxu0 0
        %5172 = vmatpush1.bf16.msra.mxu0 0
        %5173 = vmatprep.subr.bf16.mxu0 0
        %5174 = vmatpush1.bf16.msra.mxu0 0
        %5175 = vmatprep.subr.bf16.mxu0 0
        %5176 = vmatpush1.bf16.msra.mxu0 0
        %5177 = vmatprep.subr.bf16.mxu0 0
        %5178 = vmatpush1.bf16.msra.mxu0 0
        %5179 = vmatprep.subr.bf16.mxu0 0
        %5180 = vmatpush1.bf16.msra.mxu0 0
        %5181 = vmatprep.mubr.bf16.mxu0 0
        %5182 = vmatmul.mubr.bf16.gmra.mrb[0].mxu0 %v5077
        %v5183 = vpop.f32.mrb[0].mxu0
        %v5184 = vadd.f32 %v5099, %v5183
        %v5185 = vpop.f32.mrb[0].mxu0
        %v5186 = vpop.f32.mrb[0].mxu0
        %v5187 = vpop.f32.mrb[0].mxu0
        %5188 = vdwg.mxu0
        %v5189 = vmax.f32 %v5184, 0.0
        %v5190 = vpack.c.bf16 %v5189, %v5189
        %v5191 = vld [vmem:[%s111] sm:$0xf]
        %v5192 = vld [vmem:[%s111 + $0x4] sm:$0xf]
        %v5193 = vld [vmem:[%s111 + $0x8] sm:$0xf]
        %v5194 = vld [vmem:[%s111 + $0xc] sm:$0xf]
        %v5199 = vunpack.c.l.b16 %v5191
        %v5200 = vunpack.c.l.b16 %v5192
        %v5201 = vunpack.c.l.b16 %v5193
        %v5202 = vunpack.c.l.b16 %v5194
        %v5203 = vpack.c.b16 %v5200, %v5199
        %v5204 = vpack.c.b16 %v5202, %v5201
        %v5208 = vsel %vm3169, %v5190, 0
        %5210 = vmatprep.subr.bf16.mxu0 0
        %5211 = vmatpush1.bf16.msra.mxu0 %v5203
        %5212 = vmatprep.subr.bf16.mxu0 0
        %5213 = vmatpush1.bf16.msra.mxu0 %v5204
        %5214 = vmatprep.subr.bf16.mxu0 0
        %5215 = vmatpush1.bf16.msra.mxu0 0
        %5216 = vmatprep.subr.bf16.mxu0 0
        %5217 = vmatpush1.bf16.msra.mxu0 0
        %5218 = vmatprep.subr.bf16.mxu0 0
        %5219 = vmatpush1.bf16.msra.mxu0 0
        %5220 = vmatprep.subr.bf16.mxu0 0
        %5221 = vmatpush1.bf16.msra.mxu0 0
        %5222 = vmatprep.subr.bf16.mxu0 0
        %5223 = vmatpush1.bf16.msra.mxu0 0
        %5224 = vmatprep.subr.bf16.mxu0 0
        %5225 = vmatpush1.bf16.msra.mxu0 0
        %5226 = vmatprep.subr.bf16.mxu0 0
        %5227 = vmatpush1.bf16.msra.mxu0 0
        %5228 = vmatprep.subr.bf16.mxu0 0
        %5229 = vmatpush1.bf16.msra.mxu0 0
        %5230 = vmatprep.subr.bf16.mxu0 0
        %5231 = vmatpush1.bf16.msra.mxu0 0
        %5232 = vmatprep.subr.bf16.mxu0 0
        %5233 = vmatpush1.bf16.msra.mxu0 0
        %5234 = vmatprep.subr.bf16.mxu0 0
        %5235 = vmatpush1.bf16.msra.mxu0 0
        %5236 = vmatprep.subr.bf16.mxu0 0
        %5237 = vmatpush1.bf16.msra.mxu0 0
        %5238 = vmatprep.subr.bf16.mxu0 0
        %5239 = vmatpush1.bf16.msra.mxu0 0
        %5240 = vmatprep.subr.bf16.mxu0 0
        %5241 = vmatpush1.bf16.msra.mxu0 0
        %5242 = vmatprep.mubr.bf16.mxu0 0
        %5243 = vmatmul.mubr.bf16.gmra.mrb[0].mxu0 %v5208
        %v5244 = vpop.f32.mrb[0].mxu0
        %v5245 = vadd.f32 0.0, %v5244
        %v5246 = vpop.f32.mrb[0].mxu0
        %v5247 = vpop.f32.mrb[0].mxu0
        %v5248 = vpop.f32.mrb[0].mxu0
        %5249 = vdwg.mxu0
        %v5250 = vld [vmem:[%s113] sm:$0xf]
        %v5251 = vld [vmem:[%s113 + $0x4] sm:$0xf]
        %v5252 = vld [vmem:[%s113 + $0x8] sm:$0xf]
        %v5253 = vld [vmem:[%s113 + $0xc] sm:$0xf]
        %v5254 = vld [vmem:[%s115] sm:$0xf]
        %v5255 = vld [vmem:[%s115 + $0x4] sm:$0xf]
        %v5256 = vld [vmem:[%s115 + $0x8] sm:$0xf]
        %v5257 = vld [vmem:[%s115 + $0xc] sm:$0xf]
        %v5262 = vunpack.c.l.b16 %v5254
        %v5263 = vunpack.c.l.b16 %v5255
        %v5264 = vunpack.c.l.b16 %v5256
        %v5265 = vunpack.c.l.b16 %v5257
        %v5266 = vpack.c.b16 %v5263, %v5262
        %v5267 = vpack.c.b16 %v5265, %v5264
        %5270 = vmatprep.subr.bf16.mxu0 0
        %5271 = vmatpush1.bf16.msra.mxu0 %v5266
        %5272 = vmatprep.subr.bf16.mxu0 0
        %5273 = vmatpush1.bf16.msra.mxu0 %v5267
        %5274 = vmatprep.subr.bf16.mxu0 0
        %5275 = vmatpush1.bf16.msra.mxu0 0
        %5276 = vmatprep.subr.bf16.mxu0 0
        %5277 = vmatpush1.bf16.msra.mxu0 0
        %5278 = vmatprep.subr.bf16.mxu0 0
        %5279 = vmatpush1.bf16.msra.mxu0 0
        %5280 = vmatprep.subr.bf16.mxu0 0
        %5281 = vmatpush1.bf16.msra.mxu0 0
        %5282 = vmatprep.subr.bf16.mxu0 0
        %5283 = vmatpush1.bf16.msra.mxu0 0
        %5284 = vmatprep.subr.bf16.mxu0 0
        %5285 = vmatpush1.bf16.msra.mxu0 0
        %5286 = vmatprep.subr.bf16.mxu0 0
        %5287 = vmatpush1.bf16.msra.mxu0 0
        %5288 = vmatprep.subr.bf16.mxu0 0
        %5289 = vmatpush1.bf16.msra.mxu0 0
        %5290 = vmatprep.subr.bf16.mxu0 0
        %5291 = vmatpush1.bf16.msra.mxu0 0
        %5292 = vmatprep.subr.bf16.mxu0 0
        %5293 = vmatpush1.bf16.msra.mxu0 0
        %5294 = vmatprep.subr.bf16.mxu0 0
        %5295 = vmatpush1.bf16.msra.mxu0 0
        %5296 = vmatprep.subr.bf16.mxu0 0
        %5297 = vmatpush1.bf16.msra.mxu0 0
        %5298 = vmatprep.subr.bf16.mxu0 0
        %5299 = vmatpush1.bf16.msra.mxu0 0
        %5300 = vmatprep.subr.bf16.mxu0 0
        %5301 = vmatpush1.bf16.msra.mxu0 0
        %5302 = vmatprep.mubr.bf16.mxu0 0
        %5303 = vmatmul.mubr.bf16.gmra.mrb[0].mxu0 %v5208
        %v5304 = vpop.f32.mrb[0].mxu0
        %v5305 = vadd.f32 0.0, %v5304
        %v5306 = vpop.f32.mrb[0].mxu0
        %v5307 = vpop.f32.mrb[0].mxu0
        %v5308 = vpop.f32.mrb[0].mxu0
        %5309 = vdwg.mxu0
        %v5310 = vld [vmem:[#allocation28] sm:$0xf]
        %v5312 = vsel %vm4725, %v5310, 0
        %v5315 = vsel %vm2315, %v5245, 0
        %5317 = vmatprep.subr.mxu0 0.0
        %5318 = vmatpush1.msra.mxu0 %v5315
        %5319 = vmatprep.subr.mxu0 0.0
        %5320 = vmatpush1.msra.mxu0 0.0
        %5321 = vmatprep.subr.mxu0 0.0
        %5322 = vmatpush1.msra.mxu0 0.0
        %5323 = vmatprep.subr.mxu0 0.0
        %5324 = vmatpush1.msra.mxu0 0.0
        %5325 = vmatprep.subr.mxu0 0.0
        %5326 = vmatpush1.msra.mxu0 0.0
        %5327 = vmatprep.subr.mxu0 0.0
        %5328 = vmatpush1.msra.mxu0 0.0
        %5329 = vmatprep.subr.mxu0 0.0
        %5330 = vmatpush1.msra.mxu0 0.0
        %5331 = vmatprep.subr.mxu0 0.0
        %5332 = vmatpush1.msra.mxu0 0.0
        %5333 = vmatprep.subr.mxu0 0.0
        %5334 = vmatpush1.msra.mxu0 0.0
        %5335 = vmatprep.subr.mxu0 0.0
        %5336 = vmatpush1.msra.mxu0 0.0
        %5337 = vmatprep.subr.mxu0 0.0
        %5338 = vmatpush1.msra.mxu0 0.0
        %5339 = vmatprep.subr.mxu0 0.0
        %5340 = vmatpush1.msra.mxu0 0.0
        %5341 = vmatprep.subr.mxu0 0.0
        %5342 = vmatpush1.msra.mxu0 0.0
        %5343 = vmatprep.subr.mxu0 0.0
        %5344 = vmatpush1.msra.mxu0 0.0
        %5345 = vmatprep.subr.mxu0 0.0
        %5346 = vmatpush1.msra.mxu0 0.0
        %5347 = vmatprep.subr.mxu0 0.0
        %5348 = vmatpush1.msra.mxu0 0.0
        %5349 = vmatprep.subr.mxu0 0.0
        %5350 = vmatpush1.msra.mxu0 0.0
        %5351 = vmatprep.subr.mxu0 0.0
        %5352 = vmatpush1.msra.mxu0 0.0
        %5353 = vmatprep.subr.mxu0 0.0
        %5354 = vmatpush1.msra.mxu0 0.0
        %5355 = vmatprep.subr.mxu0 0.0
        %5356 = vmatpush1.msra.mxu0 0.0
        %5357 = vmatprep.subr.mxu0 0.0
        %5358 = vmatpush1.msra.mxu0 0.0
        %5359 = vmatprep.subr.mxu0 0.0
        %5360 = vmatpush1.msra.mxu0 0.0
        %5361 = vmatprep.subr.mxu0 0.0
        %5362 = vmatpush1.msra.mxu0 0.0
        %5363 = vmatprep.subr.mxu0 0.0
        %5364 = vmatpush1.msra.mxu0 0.0
        %5365 = vmatprep.subr.mxu0 0.0
        %5366 = vmatpush1.msra.mxu0 0.0
        %5367 = vmatprep.subr.mxu0 0.0
        %5368 = vmatpush1.msra.mxu0 0.0
        %5369 = vmatprep.subr.mxu0 0.0
        %5370 = vmatpush1.msra.mxu0 0.0
        %5371 = vmatprep.subr.mxu0 0.0
        %5372 = vmatpush1.msra.mxu0 0.0
        %5373 = vmatprep.subr.mxu0 0.0
        %5374 = vmatpush1.msra.mxu0 0.0
        %5375 = vmatprep.subr.mxu0 0.0
        %5376 = vmatpush1.msra.mxu0 0.0
        %5377 = vmatprep.subr.mxu0 0.0
        %5378 = vmatpush1.msra.mxu0 0.0
        %5379 = vmatprep.subr.mxu0 0.0
        %5380 = vmatpush1.msra.mxu0 0.0
        %5381 = vmatprep.mubr.f32.mxu0 0.0
        %5382 = vmatmul.mubr.f32.gmra.mrb[0].mxu0 %v5312
        %v5383 = vpop.f32.mrb[0].mxu0
        %v5384 = vadd.f32 0.0, %v5383
        %v5385 = vpop.f32.mrb[0].mxu0
        %5386 = vdwg.mxu0
        %v5391 = vunpack.c.l.b16 %v5250
        %v5392 = vunpack.c.l.b16 %v5251
        %v5393 = vunpack.c.l.b16 %v5252
        %v5394 = vunpack.c.l.b16 %v5253
        %v5395 = vpack.c.b16 %v5392, %v5391
        %v5396 = vpack.c.b16 %v5394, %v5393
        %5399 = vmatprep.subr.bf16.mxu0 0
        %5400 = vmatpush1.bf16.msra.mxu0 %v5395
        %5401 = vmatprep.subr.bf16.mxu0 0
        %5402 = vmatpush1.bf16.msra.mxu0 %v5396
        %5403 = vmatprep.subr.bf16.mxu0 0
        %5404 = vmatpush1.bf16.msra.mxu0 0
        %5405 = vmatprep.subr.bf16.mxu0 0
        %5406 = vmatpush1.bf16.msra.mxu0 0
        %5407 = vmatprep.subr.bf16.mxu0 0
        %5408 = vmatpush1.bf16.msra.mxu0 0
        %5409 = vmatprep.subr.bf16.mxu0 0
        %5410 = vmatpush1.bf16.msra.mxu0 0
        %5411 = vmatprep.subr.bf16.mxu0 0
        %5412 = vmatpush1.bf16.msra.mxu0 0
        %5413 = vmatprep.subr.bf16.mxu0 0
        %5414 = vmatpush1.bf16.msra.mxu0 0
        %5415 = vmatprep.subr.bf16.mxu0 0
        %5416 = vmatpush1.bf16.msra.mxu0 0
        %5417 = vmatprep.subr.bf16.mxu0 0
        %5418 = vmatpush1.bf16.msra.mxu0 0
        %5419 = vmatprep.subr.bf16.mxu0 0
        %5420 = vmatpush1.bf16.msra.mxu0 0
        %5421 = vmatprep.subr.bf16.mxu0 0
        %5422 = vmatpush1.bf16.msra.mxu0 0
        %5423 = vmatprep.subr.bf16.mxu0 0
        %5424 = vmatpush1.bf16.msra.mxu0 0
        %5425 = vmatprep.subr.bf16.mxu0 0
        %5426 = vmatpush1.bf16.msra.mxu0 0
        %5427 = vmatprep.subr.bf16.mxu0 0
        %5428 = vmatpush1.bf16.msra.mxu0 0
        %5429 = vmatprep.subr.bf16.mxu0 0
        %5430 = vmatpush1.bf16.msra.mxu0 0
        %5431 = vmatprep.mubr.bf16.mxu0 0
        %5432 = vmatmul.mubr.bf16.gmra.mrb[0].mxu0 %v5208
        %v5433 = vpop.f32.mrb[0].mxu0
        %v5434 = vadd.f32 %v5384, %v5433
        %v5435 = vpop.f32.mrb[0].mxu0
        %v5436 = vpop.f32.mrb[0].mxu0
        %v5437 = vpop.f32.mrb[0].mxu0
        %5438 = vdwg.mxu0
        %v5439 = vld [vmem:[#allocation29] sm:$0xf]
        %v5441 = vsel %vm4725, %v5439, 0
        %v5444 = vsel %vm2315, %v5305, 0
        %5446 = vmatprep.subr.mxu0 0.0
        %5447 = vmatpush1.msra.mxu0 %v5444
        %5448 = vmatprep.subr.mxu0 0.0
        %5449 = vmatpush1.msra.mxu0 0.0
        %5450 = vmatprep.subr.mxu0 0.0
        %5451 = vmatpush1.msra.mxu0 0.0
        %5452 = vmatprep.subr.mxu0 0.0
        %5453 = vmatpush1.msra.mxu0 0.0
        %5454 = vmatprep.subr.mxu0 0.0
        %5455 = vmatpush1.msra.mxu0 0.0
        %5456 = vmatprep.subr.mxu0 0.0
        %5457 = vmatpush1.msra.mxu0 0.0
        %5458 = vmatprep.subr.mxu0 0.0
        %5459 = vmatpush1.msra.mxu0 0.0
        %5460 = vmatprep.subr.mxu0 0.0
        %5461 = vmatpush1.msra.mxu0 0.0
        %5462 = vmatprep.subr.mxu0 0.0
        %5463 = vmatpush1.msra.mxu0 0.0
        %5464 = vmatprep.subr.mxu0 0.0
        %5465 = vmatpush1.msra.mxu0 0.0
        %5466 = vmatprep.subr.mxu0 0.0
        %5467 = vmatpush1.msra.mxu0 0.0
        %5468 = vmatprep.subr.mxu0 0.0
        %5469 = vmatpush1.msra.mxu0 0.0
        %5470 = vmatprep.subr.mxu0 0.0
        %5471 = vmatpush1.msra.mxu0 0.0
        %5472 = vmatprep.subr.mxu0 0.0
        %5473 = vmatpush1.msra.mxu0 0.0
        %5474 = vmatprep.subr.mxu0 0.0
        %5475 = vmatpush1.msra.mxu0 0.0
        %5476 = vmatprep.subr.mxu0 0.0
        %5477 = vmatpush1.msra.mxu0 0.0
        %5478 = vmatprep.subr.mxu0 0.0
        %5479 = vmatpush1.msra.mxu0 0.0
        %5480 = vmatprep.subr.mxu0 0.0
        %5481 = vmatpush1.msra.mxu0 0.0
        %5482 = vmatprep.subr.mxu0 0.0
        %5483 = vmatpush1.msra.mxu0 0.0
        %5484 = vmatprep.subr.mxu0 0.0
        %5485 = vmatpush1.msra.mxu0 0.0
        %5486 = vmatprep.subr.mxu0 0.0
        %5487 = vmatpush1.msra.mxu0 0.0
        %5488 = vmatprep.subr.mxu0 0.0
        %5489 = vmatpush1.msra.mxu0 0.0
        %5490 = vmatprep.subr.mxu0 0.0
        %5491 = vmatpush1.msra.mxu0 0.0
        %5492 = vmatprep.subr.mxu0 0.0
        %5493 = vmatpush1.msra.mxu0 0.0
        %5494 = vmatprep.subr.mxu0 0.0
        %5495 = vmatpush1.msra.mxu0 0.0
        %5496 = vmatprep.subr.mxu0 0.0
        %5497 = vmatpush1.msra.mxu0 0.0
        %5498 = vmatprep.subr.mxu0 0.0
        %5499 = vmatpush1.msra.mxu0 0.0
        %5500 = vmatprep.subr.mxu0 0.0
        %5501 = vmatpush1.msra.mxu0 0.0
        %5502 = vmatprep.subr.mxu0 0.0
        %5503 = vmatpush1.msra.mxu0 0.0
        %5504 = vmatprep.subr.mxu0 0.0
        %5505 = vmatpush1.msra.mxu0 0.0
        %5506 = vmatprep.subr.mxu0 0.0
        %5507 = vmatpush1.msra.mxu0 0.0
        %5508 = vmatprep.subr.mxu0 0.0
        %5509 = vmatpush1.msra.mxu0 0.0
        %5510 = vmatprep.mubr.f32.mxu0 0.0
        %5511 = vmatmul.mubr.f32.gmra.mrb[0].mxu0 %v5441
        %v5512 = vpop.f32.mrb[0].mxu0
        %v5513 = vadd.f32 0.0, %v5512
        %v5514 = vpop.f32.mrb[0].mxu0
        %5515 = vdwg.mxu0
        %v5516 = vadd.f32 %v5434, %v5513
        %v5517 = vld [vmem:[#allocation31] sm:$0x1]
        %v5519 = vlaneseq
        %v5520 = vshrl.u32 %v5519, 7
        %v5521 = vsub.s32 0, %v5520
        %v5522 = vrot.slane %v5517, %v5521
        %v5524 = vadd.f32 %v5516, %v5522
        %v5525 = vmax.f32 %v5524, 0.0
        %v5526 = vpack.c.bf16 %v5525, %v5525
        %v5527 = vld [vmem:[%s123] sm:$0xf]
        %v5528 = vld [vmem:[%s123 + $0x4] sm:$0xf]
        %v5529 = vld [vmem:[%s123 + $0x8] sm:$0xf]
        %v5530 = vld [vmem:[%s123 + $0xc] sm:$0xf]
        %v5531 = vld [vmem:[#allocation32] sm:$0x1]
        %v5533 = vlaneseq
        %v5534 = vshrl.u32 %v5533, 7
        %v5535 = vsub.s32 0, %v5534
        %v5536 = vrot.slane %v5531, %v5535
        %v5542 = vunpack.c.l.b16 %v5527
        %v5543 = vunpack.c.l.b16 %v5528
        %v5544 = vunpack.c.l.b16 %v5529
        %v5545 = vunpack.c.l.b16 %v5530
        %v5546 = vpack.c.b16 %v5543, %v5542
        %v5547 = vpack.c.b16 %v5545, %v5544
        %v5551 = vsel %vm3169, %v5526, 0
        %5553 = vmatprep.subr.bf16.mxu0 0
        %5554 = vmatpush1.bf16.msra.mxu0 %v5546
        %5555 = vmatprep.subr.bf16.mxu0 0
        %5556 = vmatpush1.bf16.msra.mxu0 %v5547
        %5557 = vmatprep.subr.bf16.mxu0 0
        %5558 = vmatpush1.bf16.msra.mxu0 0
        %5559 = vmatprep.subr.bf16.mxu0 0
        %5560 = vmatpush1.bf16.msra.mxu0 0
        %5561 = vmatprep.subr.bf16.mxu0 0
        %5562 = vmatpush1.bf16.msra.mxu0 0
        %5563 = vmatprep.subr.bf16.mxu0 0
        %5564 = vmatpush1.bf16.msra.mxu0 0
        %5565 = vmatprep.subr.bf16.mxu0 0
        %5566 = vmatpush1.bf16.msra.mxu0 0
        %5567 = vmatprep.subr.bf16.mxu0 0
        %5568 = vmatpush1.bf16.msra.mxu0 0
        %5569 = vmatprep.subr.bf16.mxu0 0
        %5570 = vmatpush1.bf16.msra.mxu0 0
        %5571 = vmatprep.subr.bf16.mxu0 0
        %5572 = vmatpush1.bf16.msra.mxu0 0
        %5573 = vmatprep.subr.bf16.mxu0 0
        %5574 = vmatpush1.bf16.msra.mxu0 0
        %5575 = vmatprep.subr.bf16.mxu0 0
        %5576 = vmatpush1.bf16.msra.mxu0 0
        %5577 = vmatprep.subr.bf16.mxu0 0
        %5578 = vmatpush1.bf16.msra.mxu0 0
        %5579 = vmatprep.subr.bf16.mxu0 0
        %5580 = vmatpush1.bf16.msra.mxu0 0
        %5581 = vmatprep.subr.bf16.mxu0 0
        %5582 = vmatpush1.bf16.msra.mxu0 0
        %5583 = vmatprep.subr.bf16.mxu0 0
        %5584 = vmatpush1.bf16.msra.mxu0 0
        %5585 = vmatprep.mubr.bf16.mxu0 0
        %5586 = vmatmul.mubr.bf16.gmra.mrb[0].mxu0 %v5551
        %v5587 = vpop.f32.mrb[0].mxu0
        %v5588 = vadd.f32 %v5536, %v5587
        %v5589 = vpop.f32.mrb[0].mxu0
        %v5590 = vpop.f32.mrb[0].mxu0
        %v5591 = vpop.f32.mrb[0].mxu0
        %5592 = vdwg.mxu0
        %v5593 = vmax.f32 %v5588, 0.0
        %v5594 = vpack.c.bf16 %v5593, %v5593
        %v5595 = vld [vmem:[%s127] sm:$0xf]
        %v5596 = vld [vmem:[%s127 + $0x4] sm:$0xf]
        %v5597 = vld [vmem:[%s127 + $0x8] sm:$0xf]
        %v5598 = vld [vmem:[%s127 + $0xc] sm:$0xf]
        %v5599 = vld [vmem:[#allocation34] sm:$0x1]
        %v5601 = vlaneseq
        %v5602 = vshrl.u32 %v5601, 7
        %v5603 = vsub.s32 0, %v5602
        %v5604 = vrot.slane %v5599, %v5603
        %v5610 = vunpack.c.l.b16 %v5595
        %v5611 = vunpack.c.l.b16 %v5596
        %v5612 = vunpack.c.l.b16 %v5597
        %v5613 = vunpack.c.l.b16 %v5598
        %v5614 = vpack.c.b16 %v5611, %v5610
        %v5615 = vpack.c.b16 %v5613, %v5612
        %v5619 = vsel %vm3169, %v5594, 0
        %5621 = vmatprep.subr.bf16.mxu0 0
        %5622 = vmatpush1.bf16.msra.mxu0 %v5614
        %5623 = vmatprep.subr.bf16.mxu0 0
        %5624 = vmatpush1.bf16.msra.mxu0 %v5615
        %5625 = vmatprep.subr.bf16.mxu0 0
        %5626 = vmatpush1.bf16.msra.mxu0 0
        %5627 = vmatprep.subr.bf16.mxu0 0
        %5628 = vmatpush1.bf16.msra.mxu0 0
        %5629 = vmatprep.subr.bf16.mxu0 0
        %5630 = vmatpush1.bf16.msra.mxu0 0
        %5631 = vmatprep.subr.bf16.mxu0 0
        %5632 = vmatpush1.bf16.msra.mxu0 0
        %5633 = vmatprep.subr.bf16.mxu0 0
        %5634 = vmatpush1.bf16.msra.mxu0 0
        %5635 = vmatprep.subr.bf16.mxu0 0
        %5636 = vmatpush1.bf16.msra.mxu0 0
        %5637 = vmatprep.subr.bf16.mxu0 0
        %5638 = vmatpush1.bf16.msra.mxu0 0
        %5639 = vmatprep.subr.bf16.mxu0 0
        %5640 = vmatpush1.bf16.msra.mxu0 0
        %5641 = vmatprep.subr.bf16.mxu0 0
        %5642 = vmatpush1.bf16.msra.mxu0 0
        %5643 = vmatprep.subr.bf16.mxu0 0
        %5644 = vmatpush1.bf16.msra.mxu0 0
        %5645 = vmatprep.subr.bf16.mxu0 0
        %5646 = vmatpush1.bf16.msra.mxu0 0
        %5647 = vmatprep.subr.bf16.mxu0 0
        %5648 = vmatpush1.bf16.msra.mxu0 0
        %5649 = vmatprep.subr.bf16.mxu0 0
        %5650 = vmatpush1.bf16.msra.mxu0 0
        %5651 = vmatprep.subr.bf16.mxu0 0
        %5652 = vmatpush1.bf16.msra.mxu0 0
        %5653 = vmatprep.mubr.bf16.mxu0 0
        %5654 = vmatmul.mubr.bf16.gmra.mrb[0].mxu0 %v5619
        %v5655 = vpop.f32.mrb[0].mxu0
        %v5656 = vadd.f32 %v5604, %v5655
        %v5657 = vpop.f32.mrb[0].mxu0
        %v5658 = vpop.f32.mrb[0].mxu0
        %v5659 = vpop.f32.mrb[0].mxu0
        %5660 = vdwg.mxu0
        %v5661 = vmax.f32 %v5656, 0.0
        %v5662 = vsel %vm2315, %v5661, 0.0
        %v5663 = vrot.slane %v5662, 4
        %v5664 = vadd.f32 %v5662, %v5663
        %v5665 = vrot.slane %v5664, 2
        %v5666 = vadd.f32 %v5664, %v5665
        %v5667 = vrot.slane %v5666, 1
        %v5668 = vadd.f32 %v5666, %v5667
        %v5669 = vld [vmem:[%s131] sm:$0xff]
        %v5670 = vld [vmem:[%s131 + $0x8] sm:$0xff]
        %v5671 = vld [vmem:[%s131 + $0x10] sm:$0xff]
        %v5672 = vld [vmem:[%s131 + $0x18] sm:$0xff]
        %v5673 = vld [vmem:[%s131 + $0x20] sm:$0xff]
        %v5674 = vld [vmem:[%s131 + $0x28] sm:$0xff]
        %v5675 = vld [vmem:[%s131 + $0x30] sm:$0xff]
        %v5676 = vld [vmem:[%s131 + $0x38] sm:$0xff]
        %v5677 = vld [vmem:[%s131 + $0x40] sm:$0xff]
        %v5678 = vld [vmem:[%s131 + $0x48] sm:$0xff]
        %v5679 = vld [vmem:[%s131 + $0x50] sm:$0xff]
        %v5680 = vld [vmem:[%s131 + $0x58] sm:$0xff]
        %v5681 = vld [vmem:[%s131 + $0x60] sm:$0xff]
        %v5682 = vld [vmem:[%s131 + $0x68] sm:$0xff]
        %v5683 = vld [vmem:[%s131 + $0x70] sm:$0xff]
        %v5684 = vld [vmem:[%s131 + $0x78] sm:$0xff]
        %5685 = vmatprep.subr.mxu0 0.0
        %5686 = vmatpush1.msra.mxu0 %v5669
        %5687 = vmatprep.subr.mxu0 0.0
        %5688 = vmatpush1.msra.mxu0 %v5670
        %5689 = vmatprep.subr.mxu0 0.0
        %5690 = vmatpush1.msra.mxu0 %v5671
        %5691 = vmatprep.subr.mxu0 0.0
        %5692 = vmatpush1.msra.mxu0 %v5672
        %5693 = vmatprep.subr.mxu0 0.0
        %5694 = vmatpush1.msra.mxu0 %v5673
        %5695 = vmatprep.subr.mxu0 0.0
        %5696 = vmatpush1.msra.mxu0 %v5674
        %5697 = vmatprep.subr.mxu0 0.0
        %5698 = vmatpush1.msra.mxu0 %v5675
        %5699 = vmatprep.subr.mxu0 0.0
        %5700 = vmatpush1.msra.mxu0 %v5676
        %5701 = vmatprep.subr.mxu0 0.0
        %5702 = vmatpush1.msra.mxu0 %v5677
        %5703 = vmatprep.subr.mxu0 0.0
        %5704 = vmatpush1.msra.mxu0 %v5678
        %5705 = vmatprep.subr.mxu0 0.0
        %5706 = vmatpush1.msra.mxu0 %v5679
        %5707 = vmatprep.subr.mxu0 0.0
        %5708 = vmatpush1.msra.mxu0 %v5680
        %5709 = vmatprep.subr.mxu0 0.0
        %5710 = vmatpush1.msra.mxu0 %v5681
        %5711 = vmatprep.subr.mxu0 0.0
        %5712 = vmatpush1.msra.mxu0 %v5682
        %5713 = vmatprep.subr.mxu0 0.0
        %5714 = vmatpush1.msra.mxu0 %v5683
        %5715 = vmatprep.subr.mxu0 0.0
        %5716 = vmatpush1.msra.mxu0 %v5684
        %5717 = vmatprep.subr.mxu0 0.0
        %5718 = vmatpush1.msra.mxu0 0.0
        %5719 = vmatprep.subr.mxu0 0.0
        %5720 = vmatpush1.msra.mxu0 0.0
        %5721 = vmatprep.subr.mxu0 0.0
        %5722 = vmatpush1.msra.mxu0 0.0
        %5723 = vmatprep.subr.mxu0 0.0
        %5724 = vmatpush1.msra.mxu0 0.0
        %5725 = vmatprep.subr.mxu0 0.0
        %5726 = vmatpush1.msra.mxu0 0.0
        %5727 = vmatprep.subr.mxu0 0.0
        %5728 = vmatpush1.msra.mxu0 0.0
        %5729 = vmatprep.subr.mxu0 0.0
        %5730 = vmatpush1.msra.mxu0 0.0
        %5731 = vmatprep.subr.mxu0 0.0
        %5732 = vmatpush1.msra.mxu0 0.0
        %5733 = vmatprep.subr.mxu0 0.0
        %5734 = vmatpush1.msra.mxu0 0.0
        %5735 = vmatprep.subr.mxu0 0.0
        %5736 = vmatpush1.msra.mxu0 0.0
        %5737 = vmatprep.subr.mxu0 0.0
        %5738 = vmatpush1.msra.mxu0 0.0
        %5739 = vmatprep.subr.mxu0 0.0
        %5740 = vmatpush1.msra.mxu0 0.0
        %5741 = vmatprep.subr.mxu0 0.0
        %5742 = vmatpush1.msra.mxu0 0.0
        %5743 = vmatprep.subr.mxu0 0.0
        %5744 = vmatpush1.msra.mxu0 0.0
        %5745 = vmatprep.subr.mxu0 0.0
        %5746 = vmatpush1.msra.mxu0 0.0
        %5747 = vmatprep.subr.mxu0 0.0
        %5748 = vmatpush1.msra.mxu0 0.0
        %5749 = vmatprep.mubr.f32.mxu0 0.0
        %5750 = vmatmul.mubr.f32.gmra.mrb[0].mxu0 %v5668
        %v5751 = vpop.f32.mrb[0].mxu0
        %v5752 = vadd.f32 0.0, %v5751
        %v5753 = vpop.f32.mrb[0].mxu0
        %5754 = vdwg.mxu0
        %vm5755 = vcmask 516096
        %5756 = vst.msk [vmem:[%s2300] sm:$0x1] %vm5755, %v5752
        %v5757 = vld [vmem:[%s133] sm:$0xff]
        %v5758 = vld [vmem:[%s133 + $0x8] sm:$0xff]
        %v5759 = vld [vmem:[%s133 + $0x10] sm:$0xff]
        %v5760 = vld [vmem:[%s133 + $0x18] sm:$0xff]
        %v5761 = vld [vmem:[%s133 + $0x20] sm:$0xff]
        %v5762 = vld [vmem:[%s133 + $0x28] sm:$0xff]
        %v5763 = vld [vmem:[%s133 + $0x30] sm:$0xff]
        %v5764 = vld [vmem:[%s133 + $0x38] sm:$0xff]
        %v5765 = vld [vmem:[#allocation35] sm:$0x1]
        %v5767 = vsel %vm3107, %v5752, 0
        %5769 = vmatprep.subr.mxu0 0.0
        %5770 = vmatpush1.msra.mxu0 %v5757
        %5771 = vmatprep.subr.mxu0 0.0
        %5772 = vmatpush1.msra.mxu0 %v5758
        %5773 = vmatprep.subr.mxu0 0.0
        %5774 = vmatpush1.msra.mxu0 %v5759
        %5775 = vmatprep.subr.mxu0 0.0
        %5776 = vmatpush1.msra.mxu0 %v5760
        %5777 = vmatprep.subr.mxu0 0.0
        %5778 = vmatpush1.msra.mxu0 %v5761
        %5779 = vmatprep.subr.mxu0 0.0
        %5780 = vmatpush1.msra.mxu0 %v5762
        %5781 = vmatprep.subr.mxu0 0.0
        %5782 = vmatpush1.msra.mxu0 %v5763
        %5783 = vmatprep.subr.mxu0 0.0
        %5784 = vmatpush1.msra.mxu0 %v5764
        %5785 = vmatprep.subr.mxu0 0.0
        %5786 = vmatpush1.msra.mxu0 0.0
        %5787 = vmatprep.subr.mxu0 0.0
        %5788 = vmatpush1.msra.mxu0 0.0
        %5789 = vmatprep.subr.mxu0 0.0
        %5790 = vmatpush1.msra.mxu0 0.0
        %5791 = vmatprep.subr.mxu0 0.0
        %5792 = vmatpush1.msra.mxu0 0.0
        %5793 = vmatprep.subr.mxu0 0.0
        %5794 = vmatpush1.msra.mxu0 0.0
        %5795 = vmatprep.subr.mxu0 0.0
        %5796 = vmatpush1.msra.mxu0 0.0
        %5797 = vmatprep.subr.mxu0 0.0
        %5798 = vmatpush1.msra.mxu0 0.0
        %5799 = vmatprep.subr.mxu0 0.0
        %5800 = vmatpush1.msra.mxu0 0.0
        %5801 = vmatprep.subr.mxu0 0.0
        %5802 = vmatpush1.msra.mxu0 0.0
        %5803 = vmatprep.subr.mxu0 0.0
        %5804 = vmatpush1.msra.mxu0 0.0
        %5805 = vmatprep.subr.mxu0 0.0
        %5806 = vmatpush1.msra.mxu0 0.0
        %5807 = vmatprep.subr.mxu0 0.0
        %5808 = vmatpush1.msra.mxu0 0.0
        %5809 = vmatprep.subr.mxu0 0.0
        %5810 = vmatpush1.msra.mxu0 0.0
        %5811 = vmatprep.subr.mxu0 0.0
        %5812 = vmatpush1.msra.mxu0 0.0
        %5813 = vmatprep.subr.mxu0 0.0
        %5814 = vmatpush1.msra.mxu0 0.0
        %5815 = vmatprep.subr.mxu0 0.0
        %5816 = vmatpush1.msra.mxu0 0.0
        %5817 = vmatprep.subr.mxu0 0.0
        %5818 = vmatpush1.msra.mxu0 0.0
        %5819 = vmatprep.subr.mxu0 0.0
        %5820 = vmatpush1.msra.mxu0 0.0
        %5821 = vmatprep.subr.mxu0 0.0
        %5822 = vmatpush1.msra.mxu0 0.0
        %5823 = vmatprep.subr.mxu0 0.0
        %5824 = vmatpush1.msra.mxu0 0.0
        %5825 = vmatprep.subr.mxu0 0.0
        %5826 = vmatpush1.msra.mxu0 0.0
        %5827 = vmatprep.subr.mxu0 0.0
        %5828 = vmatpush1.msra.mxu0 0.0
        %5829 = vmatprep.subr.mxu0 0.0
        %5830 = vmatpush1.msra.mxu0 0.0
        %5831 = vmatprep.subr.mxu0 0.0
        %5832 = vmatpush1.msra.mxu0 0.0
        %5833 = vmatprep.mubr.f32.mxu0 0.0
        %5834 = vmatmul.mubr.f32.gmra.mrb[0].mxu0 %v5767
        %v5835 = vpop.f32.mrb[0].mxu0
        %v5836 = vadd.f32 %v5765, %v5835
        %v5837 = vpop.f32.mrb[0].mxu0
        %5838 = vdwg.mxu0
        %vm5839 = vcmask 8192
        %5840 = vst.msk [vmem:[%s2294] sm:$0x1] %vm5839, %v5836
        %s5841 = sand.u32 %s1610, 1
        %s5842 = scalar_lea.sflag [#allocation4], %s5841
        %s5843 = sand.u32 %s1610, 1
        %s5844 = scalar_lea.vmem [#allocation37], %s5843
        %s5845 = sand.u32 %s1636, 1
        %s5846 = scalar_lea.sflag [#allocation39], %s5845
        %s5847 = sand.u32 %s1636, 1
        %s5848 = scalar_lea.vmem [#allocation38], %s5847
        // Predicated region
        $region381: #{tpu_custom_call.1} parent=291 // pred_check
          %p5849 = pneg %p1620
        $region382: #{tpu_custom_call.1} parent=291 // pred_check_branch
          %5851 = sbr.rel (%p5849) target = $region384
        $region383: #{tpu_custom_call.1} parent=291 // pred_region
          %s5853 = ssub.s32 16, 16
          %5854 = vsyncadd %s5842, %s5853
          %s5855 = smul.addr %s169, 16
          %s5856 = scalar_lea.hbm %s137, %s5855
          %s5858 = sshll.u32 %s5844, 4
          %s5859 = int_to_ptr.vmem [resolvable:$true] %s5858
          %5861 = dma.vmem_to_hbm [thread:$0]  %s5859, 16, %s5856, %s5842
        $region384: #{tpu_custom_call.1} parent=291 // pred_fallthru
          _
        // Predicated region
        $region385: #{tpu_custom_call.1} parent=291 // pred_check
          %p5862 = pneg %p1646
        $region386: #{tpu_custom_call.1} parent=291 // pred_check_branch
          %5864 = sbr.rel (%p5862) target = $region388
        $region387: #{tpu_custom_call.1} parent=291 // pred_region
          %s5866 = ssub.s32 16, 16
          %5867 = vsyncadd %s5846, %s5866
          %s5868 = smul.addr %s169, 16
          %s5869 = scalar_lea.hbm %s139, %s5868
          %s5871 = sshll.u32 %s5848, 4
          %s5872 = int_to_ptr.vmem [resolvable:$true] %s5871
          %5874 = dma.vmem_to_hbm [thread:$0]  %s5872, 16, %s5869, %s5846
        $region388: #{tpu_custom_call.1} parent=291 // pred_fallthru
          _
      $region292: #{tpu_custom_call.1} parent=5 // pred_fallthru
        _
      %p5875 = scmp.le.s32.totalorder 2, %s164
      // Predicated region
      $region389: #{tpu_custom_call.1} parent=5 // pred_check
        %p5876 = pneg %p5875
      $region390: #{tpu_custom_call.1} parent=5 // pred_check_branch
        %5878 = sbr.rel (%p5876) target = $region392
      $region391: #{tpu_custom_call.1} parent=5 // pred_region
        %s5879 = ssub.s32 %s164, 2
        // Predicated region
        $region393: #{tpu_custom_call.1} parent=391 // pred_check
          %p5880 = pneg %p1626
        $region394: #{tpu_custom_call.1} parent=391 // pred_check_branch
          %5882 = sbr.rel (%p5880) target = $region396
        $region395: #{tpu_custom_call.1} parent=391 // pred_region
          %s5883 = sand.u32 %s1611, 1
          %s5884 = scalar_lea.sflag [#allocation4], %s5883
          %s5885 = sand.u32 %s1611, 1
          %s5886 = scalar_lea.vmem [#allocation37], %s5885
          %5887 = dma.done %s5884, 16
        $region396: #{tpu_custom_call.1} parent=391 // pred_fallthru
          _
        // Predicated region
        $region397: #{tpu_custom_call.1} parent=391 // pred_check
          %p5888 = pneg %p1652
        $region398: #{tpu_custom_call.1} parent=391 // pred_check_branch
          %5890 = sbr.rel (%p5888) target = $region400
        $region399: #{tpu_custom_call.1} parent=391 // pred_region
          %s5891 = sand.u32 %s1637, 1
          %s5892 = scalar_lea.sflag [#allocation39], %s5891
          %s5893 = sand.u32 %s1637, 1
          %s5894 = scalar_lea.vmem [#allocation38], %s5893
          %5895 = dma.done %s5892, 16
        $region400: #{tpu_custom_call.1} parent=391 // pred_fallthru
          _
      $region392: #{tpu_custom_call.1} parent=5 // pred_fallthru
        _
    $region6: #{tpu_custom_call.1} parent=1 // loop_footer
      %s168 = sadd.s32 1, %s164
    $region7: #{tpu_custom_call.1} parent=1 // loop_footer_branch
      %163 = sbr.rel target = $region3
    $region8: #{tpu_custom_call.1} parent=1 // loop_exit
      _
    %5896 = vsyncpa [#allocation3], 1
    %s5897 = scalar_lea.sflag [#allocation3], 1
    %5898 = vsyncpa %s5897, 1
    %5899 = vsyncpa [#allocation6], 1
    %5900 = vsyncpa [#allocation9], 1
    %5901 = vsyncpa [#allocation12], 1
    %5902 = vsyncpa [#allocation15], 1
    %5903 = vsyncpa [#allocation18], 1
    %5904 = vsyncpa [#allocation21], 1
    %5905 = vsyncpa [#allocation24], 1
    %5906 = vsyncpa [#allocation27], 1
    %5907 = vsyncpa [#allocation30], 1
    %5908 = vsyncpa [#allocation33], 1
    %5909 = vsyncpa [#allocation36], 1
    %5910 = vsyncpa [#allocation4], 1
    %s5911 = scalar_lea.sflag [#allocation4], 1
    %5912 = vsyncpa %s5911, 1
    %5913 = vsyncpa [#allocation39], 1
    %s5914 = scalar_lea.sflag [#allocation39], 1
    %5915 = vsyncpa %s5914, 1

</llo_original>
